<compile_context>
chip_gen: v6e
topology: v6e:2x2x1
jax: 0.10.0
libtpu: 0.0.40
codegen_flags: <defaults>
</compile_context>

<pallas_src>
import functools

import numpy as np
import jax
import jax.numpy as jnp
from jax import lax
from jax.experimental import pallas as pl
from jax.experimental.pallas import tpu as pltpu


# ----------------------------------------------------------------------------
# Pallas kernel
# ----------------------------------------------------------------------------
def _layernorm(x, gamma, beta, eps=1e-5):
    mu = jnp.mean(x, axis=-1, keepdims=True)
    xc = x - mu
    var = jnp.mean(xc * xc, axis=-1, keepdims=True)
    return xc * lax.rsqrt(var + eps) * gamma + beta


def _softmax_last(x):
    m = jnp.max(x, axis=-1, keepdims=True)
    ex = jnp.exp(x - m)
    return ex * pl.reciprocal(jnp.sum(ex, axis=-1, keepdims=True), approx=True)


def axial_attention_kernel(
    e_ref, eT_ref, mask_ref, maskT_ref,
    gamma_ref, beta_ref,
    wproj_ref, bproj_ref, wo_ref, bo_ref,
    out_ref,
    *, num_edges, num_heads):
    N = num_edges
    H = num_heads
    NN = e_ref.shape[1]
    D = e_ref.shape[2]
    d = D // H

    e = e_ref[0]          # (NN, D)  row = i*N + j   (normal orientation), f32
    eT = eT_ref[0]        # (NN, D)  row = j*N + i   (transposed orientation), f32
    mask = mask_ref[0]    # (N, N)   mask[i, k]
    maskT = maskT_ref[0]  # (N, N)   mask[k, i] laid out as [i, k]

    gamma = gamma_ref[...]
    beta = beta_ref[...]
    # LayerNorm in f32, then bf16 operands for every matmul (f32 accumulation).
    e_ln = _layernorm(e, gamma, beta).astype(jnp.bfloat16)
    eT_ln = _layernorm(eT, gamma, beta).astype(jnp.bfloat16)

    def proj(x, p, h):
        # x: (NN, D) bf16.  Per-head (D, d) weight selected by free leading-dim
        # indexing of the (6, H, D, d) weight ref -- no lane slicing in-kernel.
        y = jnp.dot(x, wproj_ref[p, h], preferred_element_type=jnp.float32)
        y = y + bproj_ref[p, h]                      # (NN, d) + (1, d)
        return y.astype(jnp.bfloat16).reshape(N, N, d)

    # Start the accumulator from the lin_O bias; per-head Va tiles are folded in
    # immediately (no concat, no cross-head live tensors).
    acc = jnp.zeros((NN, D), jnp.float32) + bo_ref[...]

    for h in range(H):
        # ---------------- "in" attention: softmax over k -------------------
        q = proj(eT_ln, 0, h)   # [j, i, d] = scale * Q_in[i, j, :, h]   (scale prefolded)
        k = proj(e_ln, 1, h)    # [j, k, d] = K_in[j, k, :, h]
        v = proj(e_ln, 2, h)    # [j, k, d] = V_in[j, k, :, h]
        s = jnp.einsum('jid,jkd->jik', q, k,
                       preferred_element_type=jnp.float32)   # H_in[i,j,k,h] at [j,i,k]
        a = _softmax_last(s + mask[None])
        va = jnp.einsum('jik,jkd->jid', a.astype(jnp.bfloat16), v,
                        preferred_element_type=jnp.float32)  # Va_in[i,j,:,h] at [j,i,:]
        acc = acc + jnp.dot(va.reshape(NN, d).astype(jnp.bfloat16), wo_ref[0, h],
                            preferred_element_type=jnp.float32)

        # ---------------- "out" attention: softmax over k ------------------
        qo = proj(eT_ln, 3, h)  # [j, i, d] = scale * Q_out[i, j, :, h]
        ko = proj(eT_ln, 4, h)  # [j, k, d] = K_out[k, j, :, h]
        vo = proj(eT_ln, 5, h)  # [j, k, d] = V_out[k, j, :, h]
        t = jnp.einsum('jid,jkd->jik', qo, ko,
                       preferred_element_type=jnp.float32)   # H_out[k,i,j,h] at [j,i,k]
        ao = _softmax_last(t + maskT[None])
        vao = jnp.einsum('jik,jkd->jid', ao.astype(jnp.bfloat16), vo,
                         preferred_element_type=jnp.float32)  # Va_out[i,j,:,h] at [j,i,:]
        acc = acc + jnp.dot(vao.reshape(NN, d).astype(jnp.bfloat16), wo_ref[1, h],
                            preferred_element_type=jnp.float32)

    out_ref[0] = acc.astype(out_ref.dtype)   # transposed orientation (row = j*N + i)


# ----------------------------------------------------------------------------
# Wrapper (host-side weight re-layout + pallas_call + axis glue)
# ----------------------------------------------------------------------------
def axial_attention_pallas(e, mask, params, num_heads):
    B, N, _, D = e.shape
    H = num_heads
    d = D // H
    NN = N * N
    scale = d ** -0.5

    # nn.Linear view(..., d, H) channel ordering: channel c = dd*H + h.
    cols = np.arange(d)[None, :] * H + np.arange(H)[:, None]            # (H, d)
    # lin_O input rows: Va channel r = dd*2H + branch*H + h.
    rows_in = np.arange(d)[None, :] * (2 * H) + np.arange(H)[:, None]   # (H, d)
    rows_out = rows_in + H

    w_qkv_in, b_qkv_in = params['w_qkv_in'], params['b_qkv_in']
    w_qkv_out, b_qkv_out = params['w_qkv_out'], params['b_qkv_out']

    def head_w(w, block, s=1.0):
        # (D, 3D) -> per-head (H, D, d) slab of projection `block` (0=Q,1=K,2=V).
        return jnp.transpose(w[:, block * D + cols], (1, 0, 2)) * s

    def head_b(b, block, s=1.0):
        return b[block * D + cols] * s                                   # (H, d)

    # Attention scale folded into the Q weights / biases (free at runtime).
    w_proj = jnp.stack([
        head_w(w_qkv_in, 0, scale), head_w(w_qkv_in, 1), head_w(w_qkv_in, 2),
        head_w(w_qkv_out, 0, scale), head_w(w_qkv_out, 1), head_w(w_qkv_out, 2),
    ], axis=0).astype(jnp.bfloat16)                                      # (6, H, D, d)
    b_proj = jnp.stack([
        head_b(b_qkv_in, 0, scale), head_b(b_qkv_in, 1), head_b(b_qkv_in, 2),
        head_b(b_qkv_out, 0, scale), head_b(b_qkv_out, 1), head_b(b_qkv_out, 2),
    ], axis=0).reshape(6, H, 1, d).astype(jnp.float32)                   # (6, H, 1, d)

    w_o_heads = jnp.stack([params['w_o'][rows_in], params['w_o'][rows_out]],
                          axis=0).astype(jnp.bfloat16)                   # (2, H, d, D)
    b_o = params['b_o'][None, :].astype(jnp.float32)                     # (1, D)
    gamma = params['ln_g'][None, :].astype(jnp.float32)
    beta = params['ln_b'][None, :].astype(jnp.float32)

    e_flat = e.reshape(B, NN, D)
    eT_flat = jnp.swapaxes(e, 1, 2).reshape(B, NN, D)
    mask2 = mask[..., 0]                       # (B, N, N)   mask[i, k]
    maskT2 = jnp.swapaxes(mask2, 1, 2)         # (B, N, N)   mask[k, i]

    kernel = functools.partial(axial_attention_kernel, num_edges=N, num_heads=H)

    batched3 = lambda b: (b, 0, 0)

    def shared(rank):
        zeros = (0,) * rank
        return lambda b: zeros

    flops = B * (16 * NN * D * D + 8 * (N ** 3) * D)
    transcendentals = B * 2 * H * (N ** 3)
    bytes_accessed = (4 * (3 * B * NN * D + 2 * B * N * N + 3 * D)
                      + 4 * b_proj.size + 2 * (w_proj.size + w_o_heads.size))

    out_T = pl.pallas_call(
        kernel,
        out_shape=jax.ShapeDtypeStruct((B, NN, D), jnp.float32),
        grid=(B,),
        in_specs=[
            pl.BlockSpec((1, NN, D), batched3),        # e (normal), f32
            pl.BlockSpec((1, NN, D), batched3),        # e (transposed), f32
            pl.BlockSpec((1, N, N), batched3),         # mask[i, k]
            pl.BlockSpec((1, N, N), batched3),         # mask[k, i]
            pl.BlockSpec((1, D), shared(2)),           # LN gamma
            pl.BlockSpec((1, D), shared(2)),           # LN beta
            pl.BlockSpec((6, H, D, d), shared(4)),     # per-head Q/K/V weights (bf16)
            pl.BlockSpec((6, H, 1, d), shared(4)),     # per-head Q/K/V biases (f32)
            pl.BlockSpec((2, H, d, D), shared(4)),     # per-head lin_O weights (bf16)
            pl.BlockSpec((1, D), shared(2)),           # lin_O bias (f32)
        ],
        out_specs=pl.BlockSpec((1, NN, D), batched3),
        compiler_params=pltpu.CompilerParams(
            dimension_semantics=("parallel",),
            vmem_limit_bytes=32 * 1024 * 1024),
        cost_estimate=pl.CostEstimate(
            flops=flops,
            transcendentals=transcendentals,
            bytes_accessed=bytes_accessed),
    )(e_flat, eT_flat, mask2, maskT2, gamma, beta,
      w_proj, b_proj, w_o_heads, b_o)

    # Orientation fix (row = j*N + i  ->  [i, j]).
    return jnp.swapaxes(out_T.reshape(B, N, N, D), 1, 2)


# ----------------------------------------------------------------------------
# Pure-JAX reference (mirrors the PyTorch forward exactly, f32)
# ----------------------------------------------------------------------------
def axial_attention_ref(e, mask, p, num_heads):
    B, N, _, D = e.shape
    H = num_heads
    d = D // H
    scale = d ** -0.5

    mu = jnp.mean(e, axis=-1, keepdims=True)
    var = jnp.mean((e - mu) ** 2, axis=-1, keepdims=True)
    e_ln = (e - mu) / jnp.sqrt(var + 1e-5) * p['ln_g'] + p['ln_b']

    qkv_in = e_ln @ p['w_qkv_in'] + p['b_qkv_in']
    Q_in, K_in, V_in = jnp.split(qkv_in, 3, axis=-1)
    Q_in = Q_in.reshape(B, N, N, d, H) * scale
    K_in = K_in.reshape(B, N, N, d, H)
    V_in = V_in.reshape(B, N, N, d, H)
    H_in = jnp.einsum('bijdh,bjkdh->bijkh', Q_in, K_in)
    mask_in = mask[:, :, None, :, :]
    A_in = jax.nn.softmax(H_in + mask_in, axis=3)
    Va_in = jnp.einsum('bijkh,bjkdh->bijdh', A_in, V_in)

    qkv_out = e_ln @ p['w_qkv_out'] + p['b_qkv_out']
    Q_out, K_out, V_out = jnp.split(qkv_out, 3, axis=-1)
    Q_out = Q_out.reshape(B, N, N, d, H) * scale
    K_out = K_out.reshape(B, N, N, d, H)
    V_out = V_out.reshape(B, N, N, d, H)
    H_out = jnp.einsum('bijdh,bkjdh->bkijh', Q_out, K_out)
    mask_out = mask[:, :, :, None, :]
    A_out = jax.nn.softmax(H_out + mask_out, axis=1)
    Va_out = jnp.einsum('bkijh,bkjdh->bijdh', A_out, V_out)

    Va = jnp.concatenate([Va_in, Va_out], axis=-1).reshape(B, N, N, 2 * D)
    return Va @ p['w_o'] + p['b_o']


# ----------------------------------------------------------------------------
# Deterministic synthetic parameters (weights stored (in_features, out_features)
# so the forward is x @ W + b; output-channel ordering matches nn.Linear's).
# ----------------------------------------------------------------------------
def init_params(key, D, H):
    ks = jax.random.split(key, 8)

    def w(k, shape, s):
        return s * jax.random.normal(k, shape, dtype=jnp.float32)

    return {
        'ln_g': 1.0 + 0.1 * jax.random.normal(ks[0], (D,), dtype=jnp.float32),
        'ln_b': 0.1 * jax.random.normal(ks[1], (D,), dtype=jnp.float32),
        'w_qkv_in': w(ks[2], (D, 3 * D), D ** -0.5),
        'b_qkv_in': w(ks[3], (3 * D,), 0.1),
        'w_qkv_out': w(ks[4], (D, 3 * D), D ** -0.5),
        'b_qkv_out': w(ks[5], (3 * D,), 0.1),
        'w_o': w(ks[6], (2 * D, D), (2 * D) ** -0.5),
        'b_o': w(ks[7], (D,), 0.1),
    }


if __name__ == "__main__":
    B, N, D, H = 2, 8, 32, 4          # batch, num_edges, edge_width, num_heads
    key = jax.random.PRNGKey(0)
    k_e, k_m, k_p = jax.random.split(key, 3)

    e = jax.random.normal(k_e, (B, N, N, D), dtype=jnp.float32)
    mask = jnp.where(jax.random.uniform(k_m, (B, N, N, 1)) < 0.85,
                     0.0, -1e9).astype(jnp.float32)
    params = init_params(k_p, D, H)

    fn = jax.jit(functools.partial(axial_attention_pallas, num_heads=H))
    out = jax.block_until_ready(fn(e, mask, params))

    with jax.default_matmul_precision("highest"):
        ref = axial_attention_ref(e, mask, params, H)

    assert out.shape == (B, N, N, D)
    # Tolerance accounts for bf16 MXU operands (f32 accumulation) vs f32 reference.
    np.testing.assert_allclose(np.asarray(out), np.asarray(ref),
                               atol=4e-2, rtol=4e-2)
    print("KERNEL_OK")
</pallas_src>

<mosaic_0001>
module attributes {stable_mosaic.version = 11 : i64} {
  func.func @axial_attention_kernel(%arg0: i32, %arg1: memref<1x64x32xf32, #tpu.memory_space<vmem>>, %arg2: memref<1x64x32xf32, #tpu.memory_space<vmem>>, %arg3: memref<1x8x8xf32, #tpu.memory_space<vmem>>, %arg4: memref<1x8x8xf32, #tpu.memory_space<vmem>>, %arg5: memref<1x32xf32, #tpu.memory_space<vmem>>, %arg6: memref<1x32xf32, #tpu.memory_space<vmem>>, %arg7: memref<6x4x32x8xbf16, #tpu.memory_space<vmem>>, %arg8: memref<6x4x1x8xf32, #tpu.memory_space<vmem>>, %arg9: memref<2x4x8x32xbf16, #tpu.memory_space<vmem>>, %arg10: memref<1x32xf32, #tpu.memory_space<vmem>>, %arg11: memref<1x64x32xf32, #tpu.memory_space<vmem>>) attributes {dimension_semantics = [#tpu.dimension_semantics<parallel>], iteration_bounds = array<i64: 2>, scalar_prefetch = 0 : i64, scratch_operands = 0 : i64, tpu.core_type = #tpu.core_type<tc>, window_params = [{transform_indices = @transform_0, window_bounds = array<i64: 1, 64, 32>}, {transform_indices = @transform_1, window_bounds = array<i64: 1, 64, 32>}, {transform_indices = @transform_2, window_bounds = array<i64: 1, 8, 8>}, {transform_indices = @transform_3, window_bounds = array<i64: 1, 8, 8>}, {pipeline_mode = #tpu.pipeline_mode<synchronous>, transform_indices = @transform_4, window_bounds = array<i64: 1, 32>}, {pipeline_mode = #tpu.pipeline_mode<synchronous>, transform_indices = @transform_5, window_bounds = array<i64: 1, 32>}, {pipeline_mode = #tpu.pipeline_mode<synchronous>, transform_indices = @transform_6, window_bounds = array<i64: 6, 4, 32, 8>}, {pipeline_mode = #tpu.pipeline_mode<synchronous>, transform_indices = @transform_7, window_bounds = array<i64: 6, 4, 1, 8>}, {pipeline_mode = #tpu.pipeline_mode<synchronous>, transform_indices = @transform_8, window_bounds = array<i64: 2, 4, 8, 32>}, {pipeline_mode = #tpu.pipeline_mode<synchronous>, transform_indices = @transform_9, window_bounds = array<i64: 1, 32>}, {transform_indices = @transform_10, window_bounds = array<i64: 1, 64, 32>}]} {
    %c0 = arith.constant 0 : index
    %c0_0 = arith.constant 0 : index
    %c0_1 = arith.constant 0 : index
    %0 = vector.load %arg1[%c0, %c0_0, %c0_1] : memref<1x64x32xf32, #tpu.memory_space<vmem>>, vector<1x64x32xf32>
    %1 = vector.shape_cast %0 : vector<1x64x32xf32> to vector<64x32xf32>
    %c0_2 = arith.constant 0 : index
    %c0_3 = arith.constant 0 : index
    %c0_4 = arith.constant 0 : index
    %2 = vector.load %arg2[%c0_2, %c0_3, %c0_4] : memref<1x64x32xf32, #tpu.memory_space<vmem>>, vector<1x64x32xf32>
    %3 = vector.shape_cast %2 : vector<1x64x32xf32> to vector<64x32xf32>
    %c0_5 = arith.constant 0 : index
    %c0_6 = arith.constant 0 : index
    %c0_7 = arith.constant 0 : index
    %4 = vector.load %arg3[%c0_5, %c0_6, %c0_7] : memref<1x8x8xf32, #tpu.memory_space<vmem>>, vector<1x8x8xf32>
    %5 = vector.shape_cast %4 : vector<1x8x8xf32> to vector<8x8xf32>
    %c0_8 = arith.constant 0 : index
    %c0_9 = arith.constant 0 : index
    %c0_10 = arith.constant 0 : index
    %6 = vector.load %arg4[%c0_8, %c0_9, %c0_10] : memref<1x8x8xf32, #tpu.memory_space<vmem>>, vector<1x8x8xf32>
    %7 = vector.shape_cast %6 : vector<1x8x8xf32> to vector<8x8xf32>
    %c0_11 = arith.constant 0 : index
    %c0_12 = arith.constant 0 : index
    %8 = vector.load %arg5[%c0_11, %c0_12] : memref<1x32xf32, #tpu.memory_space<vmem>>, vector<1x32xf32>
    %c0_13 = arith.constant 0 : index
    %c0_14 = arith.constant 0 : index
    %9 = vector.load %arg6[%c0_13, %c0_14] : memref<1x32xf32, #tpu.memory_space<vmem>>, vector<1x32xf32>
    %cst = arith.constant dense<0.000000e+00> : vector<64xf32>
    %10 = vector.multi_reduction <add>, %1, %cst [1] : vector<64x32xf32> to vector<64xf32>
    %11 = vector.shape_cast %10 : vector<64xf32> to vector<64x1xf32>
    %cst_15 = arith.constant 3.200000e+01 : f32
    %12 = vector.broadcast %cst_15 : f32 to vector<64x1xf32>
    %13 = arith.divf %11, %12 : vector<64x1xf32>
    %14 = vector.broadcast %13 : vector<64x1xf32> to vector<64x32xf32>
    %15 = arith.subf %1, %14 : vector<64x32xf32>
    %16 = arith.mulf %15, %15 : vector<64x32xf32>
    %cst_16 = arith.constant dense<0.000000e+00> : vector<64xf32>
    %17 = vector.multi_reduction <add>, %16, %cst_16 [1] : vector<64x32xf32> to vector<64xf32>
    %18 = vector.shape_cast %17 : vector<64xf32> to vector<64x1xf32>
    %cst_17 = arith.constant 3.200000e+01 : f32
    %19 = vector.broadcast %cst_17 : f32 to vector<64x1xf32>
    %20 = arith.divf %18, %19 : vector<64x1xf32>
    %cst_18 = arith.constant 9.99999974E-6 : f32
    %21 = vector.broadcast %cst_18 : f32 to vector<64x1xf32>
    %22 = arith.addf %20, %21 : vector<64x1xf32>
    %23 = math.rsqrt %22 : vector<64x1xf32>
    %24 = vector.broadcast %23 : vector<64x1xf32> to vector<64x32xf32>
    %25 = arith.mulf %15, %24 : vector<64x32xf32>
    %26 = vector.broadcast %8 : vector<1x32xf32> to vector<64x32xf32>
    %27 = arith.mulf %25, %26 : vector<64x32xf32>
    %28 = vector.broadcast %9 : vector<1x32xf32> to vector<64x32xf32>
    %29 = arith.addf %27, %28 : vector<64x32xf32>
    %30 = arith.truncf %29 : vector<64x32xf32> to vector<64x32xbf16>
    %cst_19 = arith.constant dense<0.000000e+00> : vector<64xf32>
    %31 = vector.multi_reduction <add>, %3, %cst_19 [1] : vector<64x32xf32> to vector<64xf32>
    %32 = vector.shape_cast %31 : vector<64xf32> to vector<64x1xf32>
    %cst_20 = arith.constant 3.200000e+01 : f32
    %33 = vector.broadcast %cst_20 : f32 to vector<64x1xf32>
    %34 = arith.divf %32, %33 : vector<64x1xf32>
    %35 = vector.broadcast %34 : vector<64x1xf32> to vector<64x32xf32>
    %36 = arith.subf %3, %35 : vector<64x32xf32>
    %37 = arith.mulf %36, %36 : vector<64x32xf32>
    %cst_21 = arith.constant dense<0.000000e+00> : vector<64xf32>
    %38 = vector.multi_reduction <add>, %37, %cst_21 [1] : vector<64x32xf32> to vector<64xf32>
    %39 = vector.shape_cast %38 : vector<64xf32> to vector<64x1xf32>
    %cst_22 = arith.constant 3.200000e+01 : f32
    %40 = vector.broadcast %cst_22 : f32 to vector<64x1xf32>
    %41 = arith.divf %39, %40 : vector<64x1xf32>
    %cst_23 = arith.constant 9.99999974E-6 : f32
    %42 = vector.broadcast %cst_23 : f32 to vector<64x1xf32>
    %43 = arith.addf %41, %42 : vector<64x1xf32>
    %44 = math.rsqrt %43 : vector<64x1xf32>
    %45 = vector.broadcast %44 : vector<64x1xf32> to vector<64x32xf32>
    %46 = arith.mulf %36, %45 : vector<64x32xf32>
    %47 = vector.broadcast %8 : vector<1x32xf32> to vector<64x32xf32>
    %48 = arith.mulf %46, %47 : vector<64x32xf32>
    %49 = vector.broadcast %9 : vector<1x32xf32> to vector<64x32xf32>
    %50 = arith.addf %48, %49 : vector<64x32xf32>
    %51 = arith.truncf %50 : vector<64x32xf32> to vector<64x32xbf16>
    %cst_24 = arith.constant 0.000000e+00 : f32
    %52 = vector.broadcast %cst_24 : f32 to vector<64x32xf32>
    %c0_25 = arith.constant 0 : index
    %c0_26 = arith.constant 0 : index
    %53 = vector.load %arg10[%c0_25, %c0_26] : memref<1x32xf32, #tpu.memory_space<vmem>>, vector<1x32xf32>
    %54 = vector.broadcast %53 : vector<1x32xf32> to vector<64x32xf32>
    %55 = arith.addf %52, %54 : vector<64x32xf32>
    %c0_27 = arith.constant 0 : index
    %c0_28 = arith.constant 0 : index
    %c0_29 = arith.constant 0 : index
    %c0_30 = arith.constant 0 : index
    %56 = vector.load %arg7[%c0_27, %c0_28, %c0_29, %c0_30] : memref<6x4x32x8xbf16, #tpu.memory_space<vmem>>, vector<1x1x32x8xbf16>
    %57 = vector.shape_cast %56 : vector<1x1x32x8xbf16> to vector<32x8xbf16>
    %cst_31 = arith.constant dense<0.000000e+00> : vector<64x8xf32>
    %58 = tpu.matmul %51, %57, %cst_31 {dimension_numbers = #tpu.dot_dimension_numbers<[1], [0], [0], [1], [0, 0, 1, 1], [], []>} : vector<64x32xbf16>, vector<32x8xbf16>, vector<64x8xf32> -> vector<64x8xf32>
    %c0_32 = arith.constant 0 : index
    %c0_33 = arith.constant 0 : index
    %c0_34 = arith.constant 0 : index
    %c0_35 = arith.constant 0 : index
    %59 = vector.load %arg8[%c0_32, %c0_33, %c0_34, %c0_35] : memref<6x4x1x8xf32, #tpu.memory_space<vmem>>, vector<1x1x1x8xf32>
    %60 = vector.shape_cast %59 : vector<1x1x1x8xf32> to vector<1x8xf32>
    %61 = vector.broadcast %60 : vector<1x8xf32> to vector<64x8xf32>
    %62 = arith.addf %58, %61 : vector<64x8xf32>
    %63 = arith.truncf %62 : vector<64x8xf32> to vector<64x8xbf16>
    %64 = vector.shape_cast %63 : vector<64x8xbf16> to vector<8x8x8xbf16>
    %c1 = arith.constant 1 : index
    %c0_36 = arith.constant 0 : index
    %c0_37 = arith.constant 0 : index
    %c0_38 = arith.constant 0 : index
    %65 = vector.load %arg7[%c1, %c0_36, %c0_37, %c0_38] : memref<6x4x32x8xbf16, #tpu.memory_space<vmem>>, vector<1x1x32x8xbf16>
    %66 = vector.shape_cast %65 : vector<1x1x32x8xbf16> to vector<32x8xbf16>
    %cst_39 = arith.constant dense<0.000000e+00> : vector<64x8xf32>
    %67 = tpu.matmul %30, %66, %cst_39 {dimension_numbers = #tpu.dot_dimension_numbers<[1], [0], [0], [1], [0, 0, 1, 1], [], []>} : vector<64x32xbf16>, vector<32x8xbf16>, vector<64x8xf32> -> vector<64x8xf32>
    %c1_40 = arith.constant 1 : index
    %c0_41 = arith.constant 0 : index
    %c0_42 = arith.constant 0 : index
    %c0_43 = arith.constant 0 : index
    %68 = vector.load %arg8[%c1_40, %c0_41, %c0_42, %c0_43] : memref<6x4x1x8xf32, #tpu.memory_space<vmem>>, vector<1x1x1x8xf32>
    %69 = vector.shape_cast %68 : vector<1x1x1x8xf32> to vector<1x8xf32>
    %70 = vector.broadcast %69 : vector<1x8xf32> to vector<64x8xf32>
    %71 = arith.addf %67, %70 : vector<64x8xf32>
    %72 = arith.truncf %71 : vector<64x8xf32> to vector<64x8xbf16>
    %73 = vector.shape_cast %72 : vector<64x8xbf16> to vector<8x8x8xbf16>
    %c2 = arith.constant 2 : index
    %c0_44 = arith.constant 0 : index
    %c0_45 = arith.constant 0 : index
    %c0_46 = arith.constant 0 : index
    %74 = vector.load %arg7[%c2, %c0_44, %c0_45, %c0_46] : memref<6x4x32x8xbf16, #tpu.memory_space<vmem>>, vector<1x1x32x8xbf16>
    %75 = vector.shape_cast %74 : vector<1x1x32x8xbf16> to vector<32x8xbf16>
    %cst_47 = arith.constant dense<0.000000e+00> : vector<64x8xf32>
    %76 = tpu.matmul %30, %75, %cst_47 {dimension_numbers = #tpu.dot_dimension_numbers<[1], [0], [0], [1], [0, 0, 1, 1], [], []>} : vector<64x32xbf16>, vector<32x8xbf16>, vector<64x8xf32> -> vector<64x8xf32>
    %c2_48 = arith.constant 2 : index
    %c0_49 = arith.constant 0 : index
    %c0_50 = arith.constant 0 : index
    %c0_51 = arith.constant 0 : index
    %77 = vector.load %arg8[%c2_48, %c0_49, %c0_50, %c0_51] : memref<6x4x1x8xf32, #tpu.memory_space<vmem>>, vector<1x1x1x8xf32>
    %78 = vector.shape_cast %77 : vector<1x1x1x8xf32> to vector<1x8xf32>
    %79 = vector.broadcast %78 : vector<1x8xf32> to vector<64x8xf32>
    %80 = arith.addf %76, %79 : vector<64x8xf32>
    %81 = arith.truncf %80 : vector<64x8xf32> to vector<64x8xbf16>
    %82 = vector.shape_cast %81 : vector<64x8xbf16> to vector<8x8x8xbf16>
    "tpu.trace_start"() <{level = 10 : i32, message = "jid,jkd->jik"}> : () -> ()
    %cst_52 = arith.constant dense<0.000000e+00> : vector<8x8x8xf32>
    %83 = tpu.matmul %64, %73, %cst_52 {dimension_numbers = #tpu.dot_dimension_numbers<[2], [2], [1], [1], [0, 0, 0, 1, 1, 1], [0], [0]>} : vector<8x8x8xbf16>, vector<8x8x8xbf16>, vector<8x8x8xf32> -> vector<8x8x8xf32>
    "tpu.trace_stop"() : () -> ()
    %84 = vector.shape_cast %5 : vector<8x8xf32> to vector<1x8x8xf32>
    %85 = vector.broadcast %84 : vector<1x8x8xf32> to vector<8x8x8xf32>
    %86 = arith.addf %83, %85 : vector<8x8x8xf32>
    %cst_53 = arith.constant dense<0xFF800000> : vector<8x8xf32>
    %87 = vector.multi_reduction <maximumf>, %86, %cst_53 [2] : vector<8x8x8xf32> to vector<8x8xf32>
    %88 = vector.shape_cast %87 : vector<8x8xf32> to vector<8x8x1xf32>
    %89 = vector.broadcast %88 : vector<8x8x1xf32> to vector<8x8x8xf32>
    %90 = arith.subf %86, %89 : vector<8x8x8xf32>
    %91 = math.exp %90 : vector<8x8x8xf32>
    %cst_54 = arith.constant dense<0.000000e+00> : vector<8x8xf32>
    %92 = vector.multi_reduction <add>, %91, %cst_54 [2] : vector<8x8x8xf32> to vector<8x8xf32>
    %93 = vector.shape_cast %92 : vector<8x8xf32> to vector<8x8x1xf32>
    %94 = tpu.reciprocal %93 {approx = true} : vector<8x8x1xf32> -> vector<8x8x1xf32>
    %95 = vector.broadcast %94 : vector<8x8x1xf32> to vector<8x8x8xf32>
    %96 = arith.mulf %91, %95 : vector<8x8x8xf32>
    %97 = arith.truncf %96 : vector<8x8x8xf32> to vector<8x8x8xbf16>
    "tpu.trace_start"() <{level = 10 : i32, message = "jik,jkd->jid"}> : () -> ()
    %cst_55 = arith.constant dense<0.000000e+00> : vector<8x8x8xf32>
    %98 = tpu.matmul %97, %82, %cst_55 {dimension_numbers = #tpu.dot_dimension_numbers<[2], [1], [1], [2], [0, 0, 0, 1, 1, 2], [0], [0]>} : vector<8x8x8xbf16>, vector<8x8x8xbf16>, vector<8x8x8xf32> -> vector<8x8x8xf32>
    "tpu.trace_stop"() : () -> ()
    %99 = vector.shape_cast %98 : vector<8x8x8xf32> to vector<64x8xf32>
    %100 = arith.truncf %99 : vector<64x8xf32> to vector<64x8xbf16>
    %c0_56 = arith.constant 0 : index
    %c0_57 = arith.constant 0 : index
    %c0_58 = arith.constant 0 : index
    %c0_59 = arith.constant 0 : index
    %101 = vector.load %arg9[%c0_56, %c0_57, %c0_58, %c0_59] : memref<2x4x8x32xbf16, #tpu.memory_space<vmem>>, vector<1x1x8x32xbf16>
    %102 = vector.shape_cast %101 : vector<1x1x8x32xbf16> to vector<8x32xbf16>
    %cst_60 = arith.constant dense<0.000000e+00> : vector<64x32xf32>
    %103 = tpu.matmul %100, %102, %cst_60 {dimension_numbers = #tpu.dot_dimension_numbers<[1], [0], [0], [1], [0, 0, 1, 1], [], []>} : vector<64x8xbf16>, vector<8x32xbf16>, vector<64x32xf32> -> vector<64x32xf32>
    %104 = arith.addf %55, %103 : vector<64x32xf32>
    %c3 = arith.constant 3 : index
    %c0_61 = arith.constant 0 : index
    %c0_62 = arith.constant 0 : index
    %c0_63 = arith.constant 0 : index
    %105 = vector.load %arg7[%c3, %c0_61, %c0_62, %c0_63] : memref<6x4x32x8xbf16, #tpu.memory_space<vmem>>, vector<1x1x32x8xbf16>
    %106 = vector.shape_cast %105 : vector<1x1x32x8xbf16> to vector<32x8xbf16>
    %cst_64 = arith.constant dense<0.000000e+00> : vector<64x8xf32>
    %107 = tpu.matmul %51, %106, %cst_64 {dimension_numbers = #tpu.dot_dimension_numbers<[1], [0], [0], [1], [0, 0, 1, 1], [], []>} : vector<64x32xbf16>, vector<32x8xbf16>, vector<64x8xf32> -> vector<64x8xf32>
    %c3_65 = arith.constant 3 : index
    %c0_66 = arith.constant 0 : index
    %c0_67 = arith.constant 0 : index
    %c0_68 = arith.constant 0 : index
    %108 = vector.load %arg8[%c3_65, %c0_66, %c0_67, %c0_68] : memref<6x4x1x8xf32, #tpu.memory_space<vmem>>, vector<1x1x1x8xf32>
    %109 = vector.shape_cast %108 : vector<1x1x1x8xf32> to vector<1x8xf32>
    %110 = vector.broadcast %109 : vector<1x8xf32> to vector<64x8xf32>
    %111 = arith.addf %107, %110 : vector<64x8xf32>
    %112 = arith.truncf %111 : vector<64x8xf32> to vector<64x8xbf16>
    %113 = vector.shape_cast %112 : vector<64x8xbf16> to vector<8x8x8xbf16>
    %c4 = arith.constant 4 : index
    %c0_69 = arith.constant 0 : index
    %c0_70 = arith.constant 0 : index
    %c0_71 = arith.constant 0 : index
    %114 = vector.load %arg7[%c4, %c0_69, %c0_70, %c0_71] : memref<6x4x32x8xbf16, #tpu.memory_space<vmem>>, vector<1x1x32x8xbf16>
    %115 = vector.shape_cast %114 : vector<1x1x32x8xbf16> to vector<32x8xbf16>
    %cst_72 = arith.constant dense<0.000000e+00> : vector<64x8xf32>
    %116 = tpu.matmul %51, %115, %cst_72 {dimension_numbers = #tpu.dot_dimension_numbers<[1], [0], [0], [1], [0, 0, 1, 1], [], []>} : vector<64x32xbf16>, vector<32x8xbf16>, vector<64x8xf32> -> vector<64x8xf32>
    %c4_73 = arith.constant 4 : index
    %c0_74 = arith.constant 0 : index
    %c0_75 = arith.constant 0 : index
    %c0_76 = arith.constant 0 : index
    %117 = vector.load %arg8[%c4_73, %c0_74, %c0_75, %c0_76] : memref<6x4x1x8xf32, #tpu.memory_space<vmem>>, vector<1x1x1x8xf32>
    %118 = vector.shape_cast %117 : vector<1x1x1x8xf32> to vector<1x8xf32>
    %119 = vector.broadcast %118 : vector<1x8xf32> to vector<64x8xf32>
    %120 = arith.addf %116, %119 : vector<64x8xf32>
    %121 = arith.truncf %120 : vector<64x8xf32> to vector<64x8xbf16>
    %122 = vector.shape_cast %121 : vector<64x8xbf16> to vector<8x8x8xbf16>
    %c5 = arith.constant 5 : index
    %c0_77 = arith.constant 0 : index
    %c0_78 = arith.constant 0 : index
    %c0_79 = arith.constant 0 : index
    %123 = vector.load %arg7[%c5, %c0_77, %c0_78, %c0_79] : memref<6x4x32x8xbf16, #tpu.memory_space<vmem>>, vector<1x1x32x8xbf16>
    %124 = vector.shape_cast %123 : vector<1x1x32x8xbf16> to vector<32x8xbf16>
    %cst_80 = arith.constant dense<0.000000e+00> : vector<64x8xf32>
    %125 = tpu.matmul %51, %124, %cst_80 {dimension_numbers = #tpu.dot_dimension_numbers<[1], [0], [0], [1], [0, 0, 1, 1], [], []>} : vector<64x32xbf16>, vector<32x8xbf16>, vector<64x8xf32> -> vector<64x8xf32>
    %c5_81 = arith.constant 5 : index
    %c0_82 = arith.constant 0 : index
    %c0_83 = arith.constant 0 : index
    %c0_84 = arith.constant 0 : index
    %126 = vector.load %arg8[%c5_81, %c0_82, %c0_83, %c0_84] : memref<6x4x1x8xf32, #tpu.memory_space<vmem>>, vector<1x1x1x8xf32>
    %127 = vector.shape_cast %126 : vector<1x1x1x8xf32> to vector<1x8xf32>
    %128 = vector.broadcast %127 : vector<1x8xf32> to vector<64x8xf32>
    %129 = arith.addf %125, %128 : vector<64x8xf32>
    %130 = arith.truncf %129 : vector<64x8xf32> to vector<64x8xbf16>
    %131 = vector.shape_cast %130 : vector<64x8xbf16> to vector<8x8x8xbf16>
    "tpu.trace_start"() <{level = 10 : i32, message = "jid,jkd->jik"}> : () -> ()
    %cst_85 = arith.constant dense<0.000000e+00> : vector<8x8x8xf32>
    %132 = tpu.matmul %113, %122, %cst_85 {dimension_numbers = #tpu.dot_dimension_numbers<[2], [2], [1], [1], [0, 0, 0, 1, 1, 1], [0], [0]>} : vector<8x8x8xbf16>, vector<8x8x8xbf16>, vector<8x8x8xf32> -> vector<8x8x8xf32>
    "tpu.trace_stop"() : () -> ()
    %133 = vector.shape_cast %7 : vector<8x8xf32> to vector<1x8x8xf32>
    %134 = vector.broadcast %133 : vector<1x8x8xf32> to vector<8x8x8xf32>
    %135 = arith.addf %132, %134 : vector<8x8x8xf32>
    %cst_86 = arith.constant dense<0xFF800000> : vector<8x8xf32>
    %136 = vector.multi_reduction <maximumf>, %135, %cst_86 [2] : vector<8x8x8xf32> to vector<8x8xf32>
    %137 = vector.shape_cast %136 : vector<8x8xf32> to vector<8x8x1xf32>
    %138 = vector.broadcast %137 : vector<8x8x1xf32> to vector<8x8x8xf32>
    %139 = arith.subf %135, %138 : vector<8x8x8xf32>
    %140 = math.exp %139 : vector<8x8x8xf32>
    %cst_87 = arith.constant dense<0.000000e+00> : vector<8x8xf32>
    %141 = vector.multi_reduction <add>, %140, %cst_87 [2] : vector<8x8x8xf32> to vector<8x8xf32>
    %142 = vector.shape_cast %141 : vector<8x8xf32> to vector<8x8x1xf32>
    %143 = tpu.reciprocal %142 {approx = true} : vector<8x8x1xf32> -> vector<8x8x1xf32>
    %144 = vector.broadcast %143 : vector<8x8x1xf32> to vector<8x8x8xf32>
    %145 = arith.mulf %140, %144 : vector<8x8x8xf32>
    %146 = arith.truncf %145 : vector<8x8x8xf32> to vector<8x8x8xbf16>
    "tpu.trace_start"() <{level = 10 : i32, message = "jik,jkd->jid"}> : () -> ()
    %cst_88 = arith.constant dense<0.000000e+00> : vector<8x8x8xf32>
    %147 = tpu.matmul %146, %131, %cst_88 {dimension_numbers = #tpu.dot_dimension_numbers<[2], [1], [1], [2], [0, 0, 0, 1, 1, 2], [0], [0]>} : vector<8x8x8xbf16>, vector<8x8x8xbf16>, vector<8x8x8xf32> -> vector<8x8x8xf32>
    "tpu.trace_stop"() : () -> ()
    %148 = vector.shape_cast %147 : vector<8x8x8xf32> to vector<64x8xf32>
    %149 = arith.truncf %148 : vector<64x8xf32> to vector<64x8xbf16>
    %c1_89 = arith.constant 1 : index
    %c0_90 = arith.constant 0 : index
    %c0_91 = arith.constant 0 : index
    %c0_92 = arith.constant 0 : index
    %150 = vector.load %arg9[%c1_89, %c0_90, %c0_91, %c0_92] : memref<2x4x8x32xbf16, #tpu.memory_space<vmem>>, vector<1x1x8x32xbf16>
    %151 = vector.shape_cast %150 : vector<1x1x8x32xbf16> to vector<8x32xbf16>
    %cst_93 = arith.constant dense<0.000000e+00> : vector<64x32xf32>
    %152 = tpu.matmul %149, %151, %cst_93 {dimension_numbers = #tpu.dot_dimension_numbers<[1], [0], [0], [1], [0, 0, 1, 1], [], []>} : vector<64x8xbf16>, vector<8x32xbf16>, vector<64x32xf32> -> vector<64x32xf32>
    %153 = arith.addf %104, %152 : vector<64x32xf32>
    %c0_94 = arith.constant 0 : index
    %c1_95 = arith.constant 1 : index
    %c0_96 = arith.constant 0 : index
    %c0_97 = arith.constant 0 : index
    %154 = vector.load %arg7[%c0_94, %c1_95, %c0_96, %c0_97] : memref<6x4x32x8xbf16, #tpu.memory_space<vmem>>, vector<1x1x32x8xbf16>
    %155 = vector.shape_cast %154 : vector<1x1x32x8xbf16> to vector<32x8xbf16>
    %cst_98 = arith.constant dense<0.000000e+00> : vector<64x8xf32>
    %156 = tpu.matmul %51, %155, %cst_98 {dimension_numbers = #tpu.dot_dimension_numbers<[1], [0], [0], [1], [0, 0, 1, 1], [], []>} : vector<64x32xbf16>, vector<32x8xbf16>, vector<64x8xf32> -> vector<64x8xf32>
    %c0_99 = arith.constant 0 : index
    %c1_100 = arith.constant 1 : index
    %c0_101 = arith.constant 0 : index
    %c0_102 = arith.constant 0 : index
    %157 = vector.load %arg8[%c0_99, %c1_100, %c0_101, %c0_102] : memref<6x4x1x8xf32, #tpu.memory_space<vmem>>, vector<1x1x1x8xf32>
    %158 = vector.shape_cast %157 : vector<1x1x1x8xf32> to vector<1x8xf32>
    %159 = vector.broadcast %158 : vector<1x8xf32> to vector<64x8xf32>
    %160 = arith.addf %156, %159 : vector<64x8xf32>
    %161 = arith.truncf %160 : vector<64x8xf32> to vector<64x8xbf16>
    %162 = vector.shape_cast %161 : vector<64x8xbf16> to vector<8x8x8xbf16>
    %c1_103 = arith.constant 1 : index
    %c1_104 = arith.constant 1 : index
    %c0_105 = arith.constant 0 : index
    %c0_106 = arith.constant 0 : index
    %163 = vector.load %arg7[%c1_103, %c1_104, %c0_105, %c0_106] : memref<6x4x32x8xbf16, #tpu.memory_space<vmem>>, vector<1x1x32x8xbf16>
    %164 = vector.shape_cast %163 : vector<1x1x32x8xbf16> to vector<32x8xbf16>
    %cst_107 = arith.constant dense<0.000000e+00> : vector<64x8xf32>
    %165 = tpu.matmul %30, %164, %cst_107 {dimension_numbers = #tpu.dot_dimension_numbers<[1], [0], [0], [1], [0, 0, 1, 1], [], []>} : vector<64x32xbf16>, vector<32x8xbf16>, vector<64x8xf32> -> vector<64x8xf32>
    %c1_108 = arith.constant 1 : index
    %c1_109 = arith.constant 1 : index
    %c0_110 = arith.constant 0 : index
    %c0_111 = arith.constant 0 : index
    %166 = vector.load %arg8[%c1_108, %c1_109, %c0_110, %c0_111] : memref<6x4x1x8xf32, #tpu.memory_space<vmem>>, vector<1x1x1x8xf32>
    %167 = vector.shape_cast %166 : vector<1x1x1x8xf32> to vector<1x8xf32>
    %168 = vector.broadcast %167 : vector<1x8xf32> to vector<64x8xf32>
    %169 = arith.addf %165, %168 : vector<64x8xf32>
    %170 = arith.truncf %169 : vector<64x8xf32> to vector<64x8xbf16>
    %171 = vector.shape_cast %170 : vector<64x8xbf16> to vector<8x8x8xbf16>
    %c2_112 = arith.constant 2 : index
    %c1_113 = arith.constant 1 : index
    %c0_114 = arith.constant 0 : index
    %c0_115 = arith.constant 0 : index
    %172 = vector.load %arg7[%c2_112, %c1_113, %c0_114, %c0_115] : memref<6x4x32x8xbf16, #tpu.memory_space<vmem>>, vector<1x1x32x8xbf16>
    %173 = vector.shape_cast %172 : vector<1x1x32x8xbf16> to vector<32x8xbf16>
    %cst_116 = arith.constant dense<0.000000e+00> : vector<64x8xf32>
    %174 = tpu.matmul %30, %173, %cst_116 {dimension_numbers = #tpu.dot_dimension_numbers<[1], [0], [0], [1], [0, 0, 1, 1], [], []>} : vector<64x32xbf16>, vector<32x8xbf16>, vector<64x8xf32> -> vector<64x8xf32>
    %c2_117 = arith.constant 2 : index
    %c1_118 = arith.constant 1 : index
    %c0_119 = arith.constant 0 : index
    %c0_120 = arith.constant 0 : index
    %175 = vector.load %arg8[%c2_117, %c1_118, %c0_119, %c0_120] : memref<6x4x1x8xf32, #tpu.memory_space<vmem>>, vector<1x1x1x8xf32>
    %176 = vector.shape_cast %175 : vector<1x1x1x8xf32> to vector<1x8xf32>
    %177 = vector.broadcast %176 : vector<1x8xf32> to vector<64x8xf32>
    %178 = arith.addf %174, %177 : vector<64x8xf32>
    %179 = arith.truncf %178 : vector<64x8xf32> to vector<64x8xbf16>
    %180 = vector.shape_cast %179 : vector<64x8xbf16> to vector<8x8x8xbf16>
    "tpu.trace_start"() <{level = 10 : i32, message = "jid,jkd->jik"}> : () -> ()
    %cst_121 = arith.constant dense<0.000000e+00> : vector<8x8x8xf32>
    %181 = tpu.matmul %162, %171, %cst_121 {dimension_numbers = #tpu.dot_dimension_numbers<[2], [2], [1], [1], [0, 0, 0, 1, 1, 1], [0], [0]>} : vector<8x8x8xbf16>, vector<8x8x8xbf16>, vector<8x8x8xf32> -> vector<8x8x8xf32>
    "tpu.trace_stop"() : () -> ()
    %182 = vector.shape_cast %5 : vector<8x8xf32> to vector<1x8x8xf32>
    %183 = vector.broadcast %182 : vector<1x8x8xf32> to vector<8x8x8xf32>
    %184 = arith.addf %181, %183 : vector<8x8x8xf32>
    %cst_122 = arith.constant dense<0xFF800000> : vector<8x8xf32>
    %185 = vector.multi_reduction <maximumf>, %184, %cst_122 [2] : vector<8x8x8xf32> to vector<8x8xf32>
    %186 = vector.shape_cast %185 : vector<8x8xf32> to vector<8x8x1xf32>
    %187 = vector.broadcast %186 : vector<8x8x1xf32> to vector<8x8x8xf32>
    %188 = arith.subf %184, %187 : vector<8x8x8xf32>
    %189 = math.exp %188 : vector<8x8x8xf32>
    %cst_123 = arith.constant dense<0.000000e+00> : vector<8x8xf32>
    %190 = vector.multi_reduction <add>, %189, %cst_123 [2] : vector<8x8x8xf32> to vector<8x8xf32>
    %191 = vector.shape_cast %190 : vector<8x8xf32> to vector<8x8x1xf32>
    %192 = tpu.reciprocal %191 {approx = true} : vector<8x8x1xf32> -> vector<8x8x1xf32>
    %193 = vector.broadcast %192 : vector<8x8x1xf32> to vector<8x8x8xf32>
    %194 = arith.mulf %189, %193 : vector<8x8x8xf32>
    %195 = arith.truncf %194 : vector<8x8x8xf32> to vector<8x8x8xbf16>
    "tpu.trace_start"() <{level = 10 : i32, message = "jik,jkd->jid"}> : () -> ()
    %cst_124 = arith.constant dense<0.000000e+00> : vector<8x8x8xf32>
    %196 = tpu.matmul %195, %180, %cst_124 {dimension_numbers = #tpu.dot_dimension_numbers<[2], [1], [1], [2], [0, 0, 0, 1, 1, 2], [0], [0]>} : vector<8x8x8xbf16>, vector<8x8x8xbf16>, vector<8x8x8xf32> -> vector<8x8x8xf32>
    "tpu.trace_stop"() : () -> ()
    %197 = vector.shape_cast %196 : vector<8x8x8xf32> to vector<64x8xf32>
    %198 = arith.truncf %197 : vector<64x8xf32> to vector<64x8xbf16>
    %c0_125 = arith.constant 0 : index
    %c1_126 = arith.constant 1 : index
    %c0_127 = arith.constant 0 : index
    %c0_128 = arith.constant 0 : index
    %199 = vector.load %arg9[%c0_125, %c1_126, %c0_127, %c0_128] : memref<2x4x8x32xbf16, #tpu.memory_space<vmem>>, vector<1x1x8x32xbf16>
    %200 = vector.shape_cast %199 : vector<1x1x8x32xbf16> to vector<8x32xbf16>
    %cst_129 = arith.constant dense<0.000000e+00> : vector<64x32xf32>
    %201 = tpu.matmul %198, %200, %cst_129 {dimension_numbers = #tpu.dot_dimension_numbers<[1], [0], [0], [1], [0, 0, 1, 1], [], []>} : vector<64x8xbf16>, vector<8x32xbf16>, vector<64x32xf32> -> vector<64x32xf32>
    %202 = arith.addf %153, %201 : vector<64x32xf32>
    %c3_130 = arith.constant 3 : index
    %c1_131 = arith.constant 1 : index
    %c0_132 = arith.constant 0 : index
    %c0_133 = arith.constant 0 : index
    %203 = vector.load %arg7[%c3_130, %c1_131, %c0_132, %c0_133] : memref<6x4x32x8xbf16, #tpu.memory_space<vmem>>, vector<1x1x32x8xbf16>
    %204 = vector.shape_cast %203 : vector<1x1x32x8xbf16> to vector<32x8xbf16>
    %cst_134 = arith.constant dense<0.000000e+00> : vector<64x8xf32>
    %205 = tpu.matmul %51, %204, %cst_134 {dimension_numbers = #tpu.dot_dimension_numbers<[1], [0], [0], [1], [0, 0, 1, 1], [], []>} : vector<64x32xbf16>, vector<32x8xbf16>, vector<64x8xf32> -> vector<64x8xf32>
    %c3_135 = arith.constant 3 : index
    %c1_136 = arith.constant 1 : index
    %c0_137 = arith.constant 0 : index
    %c0_138 = arith.constant 0 : index
    %206 = vector.load %arg8[%c3_135, %c1_136, %c0_137, %c0_138] : memref<6x4x1x8xf32, #tpu.memory_space<vmem>>, vector<1x1x1x8xf32>
    %207 = vector.shape_cast %206 : vector<1x1x1x8xf32> to vector<1x8xf32>
    %208 = vector.broadcast %207 : vector<1x8xf32> to vector<64x8xf32>
    %209 = arith.addf %205, %208 : vector<64x8xf32>
    %210 = arith.truncf %209 : vector<64x8xf32> to vector<64x8xbf16>
    %211 = vector.shape_cast %210 : vector<64x8xbf16> to vector<8x8x8xbf16>
    %c4_139 = arith.constant 4 : index
    %c1_140 = arith.constant 1 : index
    %c0_141 = arith.constant 0 : index
    %c0_142 = arith.constant 0 : index
    %212 = vector.load %arg7[%c4_139, %c1_140, %c0_141, %c0_142] : memref<6x4x32x8xbf16, #tpu.memory_space<vmem>>, vector<1x1x32x8xbf16>
    %213 = vector.shape_cast %212 : vector<1x1x32x8xbf16> to vector<32x8xbf16>
    %cst_143 = arith.constant dense<0.000000e+00> : vector<64x8xf32>
    %214 = tpu.matmul %51, %213, %cst_143 {dimension_numbers = #tpu.dot_dimension_numbers<[1], [0], [0], [1], [0, 0, 1, 1], [], []>} : vector<64x32xbf16>, vector<32x8xbf16>, vector<64x8xf32> -> vector<64x8xf32>
    %c4_144 = arith.constant 4 : index
    %c1_145 = arith.constant 1 : index
    %c0_146 = arith.constant 0 : index
    %c0_147 = arith.constant 0 : index
    %215 = vector.load %arg8[%c4_144, %c1_145, %c0_146, %c0_147] : memref<6x4x1x8xf32, #tpu.memory_space<vmem>>, vector<1x1x1x8xf32>
    %216 = vector.shape_cast %215 : vector<1x1x1x8xf32> to vector<1x8xf32>
    %217 = vector.broadcast %216 : vector<1x8xf32> to vector<64x8xf32>
    %218 = arith.addf %214, %217 : vector<64x8xf32>
    %219 = arith.truncf %218 : vector<64x8xf32> to vector<64x8xbf16>
    %220 = vector.shape_cast %219 : vector<64x8xbf16> to vector<8x8x8xbf16>
    %c5_148 = arith.constant 5 : index
    %c1_149 = arith.constant 1 : index
    %c0_150 = arith.constant 0 : index
    %c0_151 = arith.constant 0 : index
    %221 = vector.load %arg7[%c5_148, %c1_149, %c0_150, %c0_151] : memref<6x4x32x8xbf16, #tpu.memory_space<vmem>>, vector<1x1x32x8xbf16>
    %222 = vector.shape_cast %221 : vector<1x1x32x8xbf16> to vector<32x8xbf16>
    %cst_152 = arith.constant dense<0.000000e+00> : vector<64x8xf32>
    %223 = tpu.matmul %51, %222, %cst_152 {dimension_numbers = #tpu.dot_dimension_numbers<[1], [0], [0], [1], [0, 0, 1, 1], [], []>} : vector<64x32xbf16>, vector<32x8xbf16>, vector<64x8xf32> -> vector<64x8xf32>
    %c5_153 = arith.constant 5 : index
    %c1_154 = arith.constant 1 : index
    %c0_155 = arith.constant 0 : index
    %c0_156 = arith.constant 0 : index
    %224 = vector.load %arg8[%c5_153, %c1_154, %c0_155, %c0_156] : memref<6x4x1x8xf32, #tpu.memory_space<vmem>>, vector<1x1x1x8xf32>
    %225 = vector.shape_cast %224 : vector<1x1x1x8xf32> to vector<1x8xf32>
    %226 = vector.broadcast %225 : vector<1x8xf32> to vector<64x8xf32>
    %227 = arith.addf %223, %226 : vector<64x8xf32>
    %228 = arith.truncf %227 : vector<64x8xf32> to vector<64x8xbf16>
    %229 = vector.shape_cast %228 : vector<64x8xbf16> to vector<8x8x8xbf16>
    "tpu.trace_start"() <{level = 10 : i32, message = "jid,jkd->jik"}> : () -> ()
    %cst_157 = arith.constant dense<0.000000e+00> : vector<8x8x8xf32>
    %230 = tpu.matmul %211, %220, %cst_157 {dimension_numbers = #tpu.dot_dimension_numbers<[2], [2], [1], [1], [0, 0, 0, 1, 1, 1], [0], [0]>} : vector<8x8x8xbf16>, vector<8x8x8xbf16>, vector<8x8x8xf32> -> vector<8x8x8xf32>
    "tpu.trace_stop"() : () -> ()
    %231 = vector.shape_cast %7 : vector<8x8xf32> to vector<1x8x8xf32>
    %232 = vector.broadcast %231 : vector<1x8x8xf32> to vector<8x8x8xf32>
    %233 = arith.addf %230, %232 : vector<8x8x8xf32>
    %cst_158 = arith.constant dense<0xFF800000> : vector<8x8xf32>
    %234 = vector.multi_reduction <maximumf>, %233, %cst_158 [2] : vector<8x8x8xf32> to vector<8x8xf32>
    %235 = vector.shape_cast %234 : vector<8x8xf32> to vector<8x8x1xf32>
    %236 = vector.broadcast %235 : vector<8x8x1xf32> to vector<8x8x8xf32>
    %237 = arith.subf %233, %236 : vector<8x8x8xf32>
    %238 = math.exp %237 : vector<8x8x8xf32>
    %cst_159 = arith.constant dense<0.000000e+00> : vector<8x8xf32>
    %239 = vector.multi_reduction <add>, %238, %cst_159 [2] : vector<8x8x8xf32> to vector<8x8xf32>
    %240 = vector.shape_cast %239 : vector<8x8xf32> to vector<8x8x1xf32>
    %241 = tpu.reciprocal %240 {approx = true} : vector<8x8x1xf32> -> vector<8x8x1xf32>
    %242 = vector.broadcast %241 : vector<8x8x1xf32> to vector<8x8x8xf32>
    %243 = arith.mulf %238, %242 : vector<8x8x8xf32>
    %244 = arith.truncf %243 : vector<8x8x8xf32> to vector<8x8x8xbf16>
    "tpu.trace_start"() <{level = 10 : i32, message = "jik,jkd->jid"}> : () -> ()
    %cst_160 = arith.constant dense<0.000000e+00> : vector<8x8x8xf32>
    %245 = tpu.matmul %244, %229, %cst_160 {dimension_numbers = #tpu.dot_dimension_numbers<[2], [1], [1], [2], [0, 0, 0, 1, 1, 2], [0], [0]>} : vector<8x8x8xbf16>, vector<8x8x8xbf16>, vector<8x8x8xf32> -> vector<8x8x8xf32>
    "tpu.trace_stop"() : () -> ()
    %246 = vector.shape_cast %245 : vector<8x8x8xf32> to vector<64x8xf32>
    %247 = arith.truncf %246 : vector<64x8xf32> to vector<64x8xbf16>
    %c1_161 = arith.constant 1 : index
    %c1_162 = arith.constant 1 : index
    %c0_163 = arith.constant 0 : index
    %c0_164 = arith.constant 0 : index
    %248 = vector.load %arg9[%c1_161, %c1_162, %c0_163, %c0_164] : memref<2x4x8x32xbf16, #tpu.memory_space<vmem>>, vector<1x1x8x32xbf16>
    %249 = vector.shape_cast %248 : vector<1x1x8x32xbf16> to vector<8x32xbf16>
    %cst_165 = arith.constant dense<0.000000e+00> : vector<64x32xf32>
    %250 = tpu.matmul %247, %249, %cst_165 {dimension_numbers = #tpu.dot_dimension_numbers<[1], [0], [0], [1], [0, 0, 1, 1], [], []>} : vector<64x8xbf16>, vector<8x32xbf16>, vector<64x32xf32> -> vector<64x32xf32>
    %251 = arith.addf %202, %250 : vector<64x32xf32>
    %c0_166 = arith.constant 0 : index
    %c2_167 = arith.constant 2 : index
    %c0_168 = arith.constant 0 : index
    %c0_169 = arith.constant 0 : index
    %252 = vector.load %arg7[%c0_166, %c2_167, %c0_168, %c0_169] : memref<6x4x32x8xbf16, #tpu.memory_space<vmem>>, vector<1x1x32x8xbf16>
    %253 = vector.shape_cast %252 : vector<1x1x32x8xbf16> to vector<32x8xbf16>
    %cst_170 = arith.constant dense<0.000000e+00> : vector<64x8xf32>
    %254 = tpu.matmul %51, %253, %cst_170 {dimension_numbers = #tpu.dot_dimension_numbers<[1], [0], [0], [1], [0, 0, 1, 1], [], []>} : vector<64x32xbf16>, vector<32x8xbf16>, vector<64x8xf32> -> vector<64x8xf32>
    %c0_171 = arith.constant 0 : index
    %c2_172 = arith.constant 2 : index
    %c0_173 = arith.constant 0 : index
    %c0_174 = arith.constant 0 : index
    %255 = vector.load %arg8[%c0_171, %c2_172, %c0_173, %c0_174] : memref<6x4x1x8xf32, #tpu.memory_space<vmem>>, vector<1x1x1x8xf32>
    %256 = vector.shape_cast %255 : vector<1x1x1x8xf32> to vector<1x8xf32>
    %257 = vector.broadcast %256 : vector<1x8xf32> to vector<64x8xf32>
    %258 = arith.addf %254, %257 : vector<64x8xf32>
    %259 = arith.truncf %258 : vector<64x8xf32> to vector<64x8xbf16>
    %260 = vector.shape_cast %259 : vector<64x8xbf16> to vector<8x8x8xbf16>
    %c1_175 = arith.constant 1 : index
    %c2_176 = arith.constant 2 : index
    %c0_177 = arith.constant 0 : index
    %c0_178 = arith.constant 0 : index
    %261 = vector.load %arg7[%c1_175, %c2_176, %c0_177, %c0_178] : memref<6x4x32x8xbf16, #tpu.memory_space<vmem>>, vector<1x1x32x8xbf16>
    %262 = vector.shape_cast %261 : vector<1x1x32x8xbf16> to vector<32x8xbf16>
    %cst_179 = arith.constant dense<0.000000e+00> : vector<64x8xf32>
    %263 = tpu.matmul %30, %262, %cst_179 {dimension_numbers = #tpu.dot_dimension_numbers<[1], [0], [0], [1], [0, 0, 1, 1], [], []>} : vector<64x32xbf16>, vector<32x8xbf16>, vector<64x8xf32> -> vector<64x8xf32>
    %c1_180 = arith.constant 1 : index
    %c2_181 = arith.constant 2 : index
    %c0_182 = arith.constant 0 : index
    %c0_183 = arith.constant 0 : index
    %264 = vector.load %arg8[%c1_180, %c2_181, %c0_182, %c0_183] : memref<6x4x1x8xf32, #tpu.memory_space<vmem>>, vector<1x1x1x8xf32>
    %265 = vector.shape_cast %264 : vector<1x1x1x8xf32> to vector<1x8xf32>
    %266 = vector.broadcast %265 : vector<1x8xf32> to vector<64x8xf32>
    %267 = arith.addf %263, %266 : vector<64x8xf32>
    %268 = arith.truncf %267 : vector<64x8xf32> to vector<64x8xbf16>
    %269 = vector.shape_cast %268 : vector<64x8xbf16> to vector<8x8x8xbf16>
    %c2_184 = arith.constant 2 : index
    %c2_185 = arith.constant 2 : index
    %c0_186 = arith.constant 0 : index
    %c0_187 = arith.constant 0 : index
    %270 = vector.load %arg7[%c2_184, %c2_185, %c0_186, %c0_187] : memref<6x4x32x8xbf16, #tpu.memory_space<vmem>>, vector<1x1x32x8xbf16>
    %271 = vector.shape_cast %270 : vector<1x1x32x8xbf16> to vector<32x8xbf16>
    %cst_188 = arith.constant dense<0.000000e+00> : vector<64x8xf32>
    %272 = tpu.matmul %30, %271, %cst_188 {dimension_numbers = #tpu.dot_dimension_numbers<[1], [0], [0], [1], [0, 0, 1, 1], [], []>} : vector<64x32xbf16>, vector<32x8xbf16>, vector<64x8xf32> -> vector<64x8xf32>
    %c2_189 = arith.constant 2 : index
    %c2_190 = arith.constant 2 : index
    %c0_191 = arith.constant 0 : index
    %c0_192 = arith.constant 0 : index
    %273 = vector.load %arg8[%c2_189, %c2_190, %c0_191, %c0_192] : memref<6x4x1x8xf32, #tpu.memory_space<vmem>>, vector<1x1x1x8xf32>
    %274 = vector.shape_cast %273 : vector<1x1x1x8xf32> to vector<1x8xf32>
    %275 = vector.broadcast %274 : vector<1x8xf32> to vector<64x8xf32>
    %276 = arith.addf %272, %275 : vector<64x8xf32>
    %277 = arith.truncf %276 : vector<64x8xf32> to vector<64x8xbf16>
    %278 = vector.shape_cast %277 : vector<64x8xbf16> to vector<8x8x8xbf16>
    "tpu.trace_start"() <{level = 10 : i32, message = "jid,jkd->jik"}> : () -> ()
    %cst_193 = arith.constant dense<0.000000e+00> : vector<8x8x8xf32>
    %279 = tpu.matmul %260, %269, %cst_193 {dimension_numbers = #tpu.dot_dimension_numbers<[2], [2], [1], [1], [0, 0, 0, 1, 1, 1], [0], [0]>} : vector<8x8x8xbf16>, vector<8x8x8xbf16>, vector<8x8x8xf32> -> vector<8x8x8xf32>
    "tpu.trace_stop"() : () -> ()
    %280 = vector.shape_cast %5 : vector<8x8xf32> to vector<1x8x8xf32>
    %281 = vector.broadcast %280 : vector<1x8x8xf32> to vector<8x8x8xf32>
    %282 = arith.addf %279, %281 : vector<8x8x8xf32>
    %cst_194 = arith.constant dense<0xFF800000> : vector<8x8xf32>
    %283 = vector.multi_reduction <maximumf>, %282, %cst_194 [2] : vector<8x8x8xf32> to vector<8x8xf32>
    %284 = vector.shape_cast %283 : vector<8x8xf32> to vector<8x8x1xf32>
    %285 = vector.broadcast %284 : vector<8x8x1xf32> to vector<8x8x8xf32>
    %286 = arith.subf %282, %285 : vector<8x8x8xf32>
    %287 = math.exp %286 : vector<8x8x8xf32>
    %cst_195 = arith.constant dense<0.000000e+00> : vector<8x8xf32>
    %288 = vector.multi_reduction <add>, %287, %cst_195 [2] : vector<8x8x8xf32> to vector<8x8xf32>
    %289 = vector.shape_cast %288 : vector<8x8xf32> to vector<8x8x1xf32>
    %290 = tpu.reciprocal %289 {approx = true} : vector<8x8x1xf32> -> vector<8x8x1xf32>
    %291 = vector.broadcast %290 : vector<8x8x1xf32> to vector<8x8x8xf32>
    %292 = arith.mulf %287, %291 : vector<8x8x8xf32>
    %293 = arith.truncf %292 : vector<8x8x8xf32> to vector<8x8x8xbf16>
    "tpu.trace_start"() <{level = 10 : i32, message = "jik,jkd->jid"}> : () -> ()
    %cst_196 = arith.constant dense<0.000000e+00> : vector<8x8x8xf32>
    %294 = tpu.matmul %293, %278, %cst_196 {dimension_numbers = #tpu.dot_dimension_numbers<[2], [1], [1], [2], [0, 0, 0, 1, 1, 2], [0], [0]>} : vector<8x8x8xbf16>, vector<8x8x8xbf16>, vector<8x8x8xf32> -> vector<8x8x8xf32>
    "tpu.trace_stop"() : () -> ()
    %295 = vector.shape_cast %294 : vector<8x8x8xf32> to vector<64x8xf32>
    %296 = arith.truncf %295 : vector<64x8xf32> to vector<64x8xbf16>
    %c0_197 = arith.constant 0 : index
    %c2_198 = arith.constant 2 : index
    %c0_199 = arith.constant 0 : index
    %c0_200 = arith.constant 0 : index
    %297 = vector.load %arg9[%c0_197, %c2_198, %c0_199, %c0_200] : memref<2x4x8x32xbf16, #tpu.memory_space<vmem>>, vector<1x1x8x32xbf16>
    %298 = vector.shape_cast %297 : vector<1x1x8x32xbf16> to vector<8x32xbf16>
    %cst_201 = arith.constant dense<0.000000e+00> : vector<64x32xf32>
    %299 = tpu.matmul %296, %298, %cst_201 {dimension_numbers = #tpu.dot_dimension_numbers<[1], [0], [0], [1], [0, 0, 1, 1], [], []>} : vector<64x8xbf16>, vector<8x32xbf16>, vector<64x32xf32> -> vector<64x32xf32>
    %300 = arith.addf %251, %299 : vector<64x32xf32>
    %c3_202 = arith.constant 3 : index
    %c2_203 = arith.constant 2 : index
    %c0_204 = arith.constant 0 : index
    %c0_205 = arith.constant 0 : index
    %301 = vector.load %arg7[%c3_202, %c2_203, %c0_204, %c0_205] : memref<6x4x32x8xbf16, #tpu.memory_space<vmem>>, vector<1x1x32x8xbf16>
    %302 = vector.shape_cast %301 : vector<1x1x32x8xbf16> to vector<32x8xbf16>
    %cst_206 = arith.constant dense<0.000000e+00> : vector<64x8xf32>
    %303 = tpu.matmul %51, %302, %cst_206 {dimension_numbers = #tpu.dot_dimension_numbers<[1], [0], [0], [1], [0, 0, 1, 1], [], []>} : vector<64x32xbf16>, vector<32x8xbf16>, vector<64x8xf32> -> vector<64x8xf32>
    %c3_207 = arith.constant 3 : index
    %c2_208 = arith.constant 2 : index
    %c0_209 = arith.constant 0 : index
    %c0_210 = arith.constant 0 : index
    %304 = vector.load %arg8[%c3_207, %c2_208, %c0_209, %c0_210] : memref<6x4x1x8xf32, #tpu.memory_space<vmem>>, vector<1x1x1x8xf32>
    %305 = vector.shape_cast %304 : vector<1x1x1x8xf32> to vector<1x8xf32>
    %306 = vector.broadcast %305 : vector<1x8xf32> to vector<64x8xf32>
    %307 = arith.addf %303, %306 : vector<64x8xf32>
    %308 = arith.truncf %307 : vector<64x8xf32> to vector<64x8xbf16>
    %309 = vector.shape_cast %308 : vector<64x8xbf16> to vector<8x8x8xbf16>
    %c4_211 = arith.constant 4 : index
    %c2_212 = arith.constant 2 : index
    %c0_213 = arith.constant 0 : index
    %c0_214 = arith.constant 0 : index
    %310 = vector.load %arg7[%c4_211, %c2_212, %c0_213, %c0_214] : memref<6x4x32x8xbf16, #tpu.memory_space<vmem>>, vector<1x1x32x8xbf16>
    %311 = vector.shape_cast %310 : vector<1x1x32x8xbf16> to vector<32x8xbf16>
    %cst_215 = arith.constant dense<0.000000e+00> : vector<64x8xf32>
    %312 = tpu.matmul %51, %311, %cst_215 {dimension_numbers = #tpu.dot_dimension_numbers<[1], [0], [0], [1], [0, 0, 1, 1], [], []>} : vector<64x32xbf16>, vector<32x8xbf16>, vector<64x8xf32> -> vector<64x8xf32>
    %c4_216 = arith.constant 4 : index
    %c2_217 = arith.constant 2 : index
    %c0_218 = arith.constant 0 : index
    %c0_219 = arith.constant 0 : index
    %313 = vector.load %arg8[%c4_216, %c2_217, %c0_218, %c0_219] : memref<6x4x1x8xf32, #tpu.memory_space<vmem>>, vector<1x1x1x8xf32>
    %314 = vector.shape_cast %313 : vector<1x1x1x8xf32> to vector<1x8xf32>
    %315 = vector.broadcast %314 : vector<1x8xf32> to vector<64x8xf32>
    %316 = arith.addf %312, %315 : vector<64x8xf32>
    %317 = arith.truncf %316 : vector<64x8xf32> to vector<64x8xbf16>
    %318 = vector.shape_cast %317 : vector<64x8xbf16> to vector<8x8x8xbf16>
    %c5_220 = arith.constant 5 : index
    %c2_221 = arith.constant 2 : index
    %c0_222 = arith.constant 0 : index
    %c0_223 = arith.constant 0 : index
    %319 = vector.load %arg7[%c5_220, %c2_221, %c0_222, %c0_223] : memref<6x4x32x8xbf16, #tpu.memory_space<vmem>>, vector<1x1x32x8xbf16>
    %320 = vector.shape_cast %319 : vector<1x1x32x8xbf16> to vector<32x8xbf16>
    %cst_224 = arith.constant dense<0.000000e+00> : vector<64x8xf32>
    %321 = tpu.matmul %51, %320, %cst_224 {dimension_numbers = #tpu.dot_dimension_numbers<[1], [0], [0], [1], [0, 0, 1, 1], [], []>} : vector<64x32xbf16>, vector<32x8xbf16>, vector<64x8xf32> -> vector<64x8xf32>
    %c5_225 = arith.constant 5 : index
    %c2_226 = arith.constant 2 : index
    %c0_227 = arith.constant 0 : index
    %c0_228 = arith.constant 0 : index
    %322 = vector.load %arg8[%c5_225, %c2_226, %c0_227, %c0_228] : memref<6x4x1x8xf32, #tpu.memory_space<vmem>>, vector<1x1x1x8xf32>
    %323 = vector.shape_cast %322 : vector<1x1x1x8xf32> to vector<1x8xf32>
    %324 = vector.broadcast %323 : vector<1x8xf32> to vector<64x8xf32>
    %325 = arith.addf %321, %324 : vector<64x8xf32>
    %326 = arith.truncf %325 : vector<64x8xf32> to vector<64x8xbf16>
    %327 = vector.shape_cast %326 : vector<64x8xbf16> to vector<8x8x8xbf16>
    "tpu.trace_start"() <{level = 10 : i32, message = "jid,jkd->jik"}> : () -> ()
    %cst_229 = arith.constant dense<0.000000e+00> : vector<8x8x8xf32>
    %328 = tpu.matmul %309, %318, %cst_229 {dimension_numbers = #tpu.dot_dimension_numbers<[2], [2], [1], [1], [0, 0, 0, 1, 1, 1], [0], [0]>} : vector<8x8x8xbf16>, vector<8x8x8xbf16>, vector<8x8x8xf32> -> vector<8x8x8xf32>
    "tpu.trace_stop"() : () -> ()
    %329 = vector.shape_cast %7 : vector<8x8xf32> to vector<1x8x8xf32>
    %330 = vector.broadcast %329 : vector<1x8x8xf32> to vector<8x8x8xf32>
    %331 = arith.addf %328, %330 : vector<8x8x8xf32>
    %cst_230 = arith.constant dense<0xFF800000> : vector<8x8xf32>
    %332 = vector.multi_reduction <maximumf>, %331, %cst_230 [2] : vector<8x8x8xf32> to vector<8x8xf32>
    %333 = vector.shape_cast %332 : vector<8x8xf32> to vector<8x8x1xf32>
    %334 = vector.broadcast %333 : vector<8x8x1xf32> to vector<8x8x8xf32>
    %335 = arith.subf %331, %334 : vector<8x8x8xf32>
    %336 = math.exp %335 : vector<8x8x8xf32>
    %cst_231 = arith.constant dense<0.000000e+00> : vector<8x8xf32>
    %337 = vector.multi_reduction <add>, %336, %cst_231 [2] : vector<8x8x8xf32> to vector<8x8xf32>
    %338 = vector.shape_cast %337 : vector<8x8xf32> to vector<8x8x1xf32>
    %339 = tpu.reciprocal %338 {approx = true} : vector<8x8x1xf32> -> vector<8x8x1xf32>
    %340 = vector.broadcast %339 : vector<8x8x1xf32> to vector<8x8x8xf32>
    %341 = arith.mulf %336, %340 : vector<8x8x8xf32>
    %342 = arith.truncf %341 : vector<8x8x8xf32> to vector<8x8x8xbf16>
    "tpu.trace_start"() <{level = 10 : i32, message = "jik,jkd->jid"}> : () -> ()
    %cst_232 = arith.constant dense<0.000000e+00> : vector<8x8x8xf32>
    %343 = tpu.matmul %342, %327, %cst_232 {dimension_numbers = #tpu.dot_dimension_numbers<[2], [1], [1], [2], [0, 0, 0, 1, 1, 2], [0], [0]>} : vector<8x8x8xbf16>, vector<8x8x8xbf16>, vector<8x8x8xf32> -> vector<8x8x8xf32>
    "tpu.trace_stop"() : () -> ()
    %344 = vector.shape_cast %343 : vector<8x8x8xf32> to vector<64x8xf32>
    %345 = arith.truncf %344 : vector<64x8xf32> to vector<64x8xbf16>
    %c1_233 = arith.constant 1 : index
    %c2_234 = arith.constant 2 : index
    %c0_235 = arith.constant 0 : index
    %c0_236 = arith.constant 0 : index
    %346 = vector.load %arg9[%c1_233, %c2_234, %c0_235, %c0_236] : memref<2x4x8x32xbf16, #tpu.memory_space<vmem>>, vector<1x1x8x32xbf16>
    %347 = vector.shape_cast %346 : vector<1x1x8x32xbf16> to vector<8x32xbf16>
    %cst_237 = arith.constant dense<0.000000e+00> : vector<64x32xf32>
    %348 = tpu.matmul %345, %347, %cst_237 {dimension_numbers = #tpu.dot_dimension_numbers<[1], [0], [0], [1], [0, 0, 1, 1], [], []>} : vector<64x8xbf16>, vector<8x32xbf16>, vector<64x32xf32> -> vector<64x32xf32>
    %349 = arith.addf %300, %348 : vector<64x32xf32>
    %c0_238 = arith.constant 0 : index
    %c3_239 = arith.constant 3 : index
    %c0_240 = arith.constant 0 : index
    %c0_241 = arith.constant 0 : index
    %350 = vector.load %arg7[%c0_238, %c3_239, %c0_240, %c0_241] : memref<6x4x32x8xbf16, #tpu.memory_space<vmem>>, vector<1x1x32x8xbf16>
    %351 = vector.shape_cast %350 : vector<1x1x32x8xbf16> to vector<32x8xbf16>
    %cst_242 = arith.constant dense<0.000000e+00> : vector<64x8xf32>
    %352 = tpu.matmul %51, %351, %cst_242 {dimension_numbers = #tpu.dot_dimension_numbers<[1], [0], [0], [1], [0, 0, 1, 1], [], []>} : vector<64x32xbf16>, vector<32x8xbf16>, vector<64x8xf32> -> vector<64x8xf32>
    %c0_243 = arith.constant 0 : index
    %c3_244 = arith.constant 3 : index
    %c0_245 = arith.constant 0 : index
    %c0_246 = arith.constant 0 : index
    %353 = vector.load %arg8[%c0_243, %c3_244, %c0_245, %c0_246] : memref<6x4x1x8xf32, #tpu.memory_space<vmem>>, vector<1x1x1x8xf32>
    %354 = vector.shape_cast %353 : vector<1x1x1x8xf32> to vector<1x8xf32>
    %355 = vector.broadcast %354 : vector<1x8xf32> to vector<64x8xf32>
    %356 = arith.addf %352, %355 : vector<64x8xf32>
    %357 = arith.truncf %356 : vector<64x8xf32> to vector<64x8xbf16>
    %358 = vector.shape_cast %357 : vector<64x8xbf16> to vector<8x8x8xbf16>
    %c1_247 = arith.constant 1 : index
    %c3_248 = arith.constant 3 : index
    %c0_249 = arith.constant 0 : index
    %c0_250 = arith.constant 0 : index
    %359 = vector.load %arg7[%c1_247, %c3_248, %c0_249, %c0_250] : memref<6x4x32x8xbf16, #tpu.memory_space<vmem>>, vector<1x1x32x8xbf16>
    %360 = vector.shape_cast %359 : vector<1x1x32x8xbf16> to vector<32x8xbf16>
    %cst_251 = arith.constant dense<0.000000e+00> : vector<64x8xf32>
    %361 = tpu.matmul %30, %360, %cst_251 {dimension_numbers = #tpu.dot_dimension_numbers<[1], [0], [0], [1], [0, 0, 1, 1], [], []>} : vector<64x32xbf16>, vector<32x8xbf16>, vector<64x8xf32> -> vector<64x8xf32>
    %c1_252 = arith.constant 1 : index
    %c3_253 = arith.constant 3 : index
    %c0_254 = arith.constant 0 : index
    %c0_255 = arith.constant 0 : index
    %362 = vector.load %arg8[%c1_252, %c3_253, %c0_254, %c0_255] : memref<6x4x1x8xf32, #tpu.memory_space<vmem>>, vector<1x1x1x8xf32>
    %363 = vector.shape_cast %362 : vector<1x1x1x8xf32> to vector<1x8xf32>
    %364 = vector.broadcast %363 : vector<1x8xf32> to vector<64x8xf32>
    %365 = arith.addf %361, %364 : vector<64x8xf32>
    %366 = arith.truncf %365 : vector<64x8xf32> to vector<64x8xbf16>
    %367 = vector.shape_cast %366 : vector<64x8xbf16> to vector<8x8x8xbf16>
    %c2_256 = arith.constant 2 : index
    %c3_257 = arith.constant 3 : index
    %c0_258 = arith.constant 0 : index
    %c0_259 = arith.constant 0 : index
    %368 = vector.load %arg7[%c2_256, %c3_257, %c0_258, %c0_259] : memref<6x4x32x8xbf16, #tpu.memory_space<vmem>>, vector<1x1x32x8xbf16>
    %369 = vector.shape_cast %368 : vector<1x1x32x8xbf16> to vector<32x8xbf16>
    %cst_260 = arith.constant dense<0.000000e+00> : vector<64x8xf32>
    %370 = tpu.matmul %30, %369, %cst_260 {dimension_numbers = #tpu.dot_dimension_numbers<[1], [0], [0], [1], [0, 0, 1, 1], [], []>} : vector<64x32xbf16>, vector<32x8xbf16>, vector<64x8xf32> -> vector<64x8xf32>
    %c2_261 = arith.constant 2 : index
    %c3_262 = arith.constant 3 : index
    %c0_263 = arith.constant 0 : index
    %c0_264 = arith.constant 0 : index
    %371 = vector.load %arg8[%c2_261, %c3_262, %c0_263, %c0_264] : memref<6x4x1x8xf32, #tpu.memory_space<vmem>>, vector<1x1x1x8xf32>
    %372 = vector.shape_cast %371 : vector<1x1x1x8xf32> to vector<1x8xf32>
    %373 = vector.broadcast %372 : vector<1x8xf32> to vector<64x8xf32>
    %374 = arith.addf %370, %373 : vector<64x8xf32>
    %375 = arith.truncf %374 : vector<64x8xf32> to vector<64x8xbf16>
    %376 = vector.shape_cast %375 : vector<64x8xbf16> to vector<8x8x8xbf16>
    "tpu.trace_start"() <{level = 10 : i32, message = "jid,jkd->jik"}> : () -> ()
    %cst_265 = arith.constant dense<0.000000e+00> : vector<8x8x8xf32>
    %377 = tpu.matmul %358, %367, %cst_265 {dimension_numbers = #tpu.dot_dimension_numbers<[2], [2], [1], [1], [0, 0, 0, 1, 1, 1], [0], [0]>} : vector<8x8x8xbf16>, vector<8x8x8xbf16>, vector<8x8x8xf32> -> vector<8x8x8xf32>
    "tpu.trace_stop"() : () -> ()
    %378 = vector.shape_cast %5 : vector<8x8xf32> to vector<1x8x8xf32>
    %379 = vector.broadcast %378 : vector<1x8x8xf32> to vector<8x8x8xf32>
    %380 = arith.addf %377, %379 : vector<8x8x8xf32>
    %cst_266 = arith.constant dense<0xFF800000> : vector<8x8xf32>
    %381 = vector.multi_reduction <maximumf>, %380, %cst_266 [2] : vector<8x8x8xf32> to vector<8x8xf32>
    %382 = vector.shape_cast %381 : vector<8x8xf32> to vector<8x8x1xf32>
    %383 = vector.broadcast %382 : vector<8x8x1xf32> to vector<8x8x8xf32>
    %384 = arith.subf %380, %383 : vector<8x8x8xf32>
    %385 = math.exp %384 : vector<8x8x8xf32>
    %cst_267 = arith.constant dense<0.000000e+00> : vector<8x8xf32>
    %386 = vector.multi_reduction <add>, %385, %cst_267 [2] : vector<8x8x8xf32> to vector<8x8xf32>
    %387 = vector.shape_cast %386 : vector<8x8xf32> to vector<8x8x1xf32>
    %388 = tpu.reciprocal %387 {approx = true} : vector<8x8x1xf32> -> vector<8x8x1xf32>
    %389 = vector.broadcast %388 : vector<8x8x1xf32> to vector<8x8x8xf32>
    %390 = arith.mulf %385, %389 : vector<8x8x8xf32>
    %391 = arith.truncf %390 : vector<8x8x8xf32> to vector<8x8x8xbf16>
    "tpu.trace_start"() <{level = 10 : i32, message = "jik,jkd->jid"}> : () -> ()
    %cst_268 = arith.constant dense<0.000000e+00> : vector<8x8x8xf32>
    %392 = tpu.matmul %391, %376, %cst_268 {dimension_numbers = #tpu.dot_dimension_numbers<[2], [1], [1], [2], [0, 0, 0, 1, 1, 2], [0], [0]>} : vector<8x8x8xbf16>, vector<8x8x8xbf16>, vector<8x8x8xf32> -> vector<8x8x8xf32>
    "tpu.trace_stop"() : () -> ()
    %393 = vector.shape_cast %392 : vector<8x8x8xf32> to vector<64x8xf32>
    %394 = arith.truncf %393 : vector<64x8xf32> to vector<64x8xbf16>
    %c0_269 = arith.constant 0 : index
    %c3_270 = arith.constant 3 : index
    %c0_271 = arith.constant 0 : index
    %c0_272 = arith.constant 0 : index
    %395 = vector.load %arg9[%c0_269, %c3_270, %c0_271, %c0_272] : memref<2x4x8x32xbf16, #tpu.memory_space<vmem>>, vector<1x1x8x32xbf16>
    %396 = vector.shape_cast %395 : vector<1x1x8x32xbf16> to vector<8x32xbf16>
    %cst_273 = arith.constant dense<0.000000e+00> : vector<64x32xf32>
    %397 = tpu.matmul %394, %396, %cst_273 {dimension_numbers = #tpu.dot_dimension_numbers<[1], [0], [0], [1], [0, 0, 1, 1], [], []>} : vector<64x8xbf16>, vector<8x32xbf16>, vector<64x32xf32> -> vector<64x32xf32>
    %398 = arith.addf %349, %397 : vector<64x32xf32>
    %c3_274 = arith.constant 3 : index
    %c3_275 = arith.constant 3 : index
    %c0_276 = arith.constant 0 : index
    %c0_277 = arith.constant 0 : index
    %399 = vector.load %arg7[%c3_274, %c3_275, %c0_276, %c0_277] : memref<6x4x32x8xbf16, #tpu.memory_space<vmem>>, vector<1x1x32x8xbf16>
    %400 = vector.shape_cast %399 : vector<1x1x32x8xbf16> to vector<32x8xbf16>
    %cst_278 = arith.constant dense<0.000000e+00> : vector<64x8xf32>
    %401 = tpu.matmul %51, %400, %cst_278 {dimension_numbers = #tpu.dot_dimension_numbers<[1], [0], [0], [1], [0, 0, 1, 1], [], []>} : vector<64x32xbf16>, vector<32x8xbf16>, vector<64x8xf32> -> vector<64x8xf32>
    %c3_279 = arith.constant 3 : index
    %c3_280 = arith.constant 3 : index
    %c0_281 = arith.constant 0 : index
    %c0_282 = arith.constant 0 : index
    %402 = vector.load %arg8[%c3_279, %c3_280, %c0_281, %c0_282] : memref<6x4x1x8xf32, #tpu.memory_space<vmem>>, vector<1x1x1x8xf32>
    %403 = vector.shape_cast %402 : vector<1x1x1x8xf32> to vector<1x8xf32>
    %404 = vector.broadcast %403 : vector<1x8xf32> to vector<64x8xf32>
    %405 = arith.addf %401, %404 : vector<64x8xf32>
    %406 = arith.truncf %405 : vector<64x8xf32> to vector<64x8xbf16>
    %407 = vector.shape_cast %406 : vector<64x8xbf16> to vector<8x8x8xbf16>
    %c4_283 = arith.constant 4 : index
    %c3_284 = arith.constant 3 : index
    %c0_285 = arith.constant 0 : index
    %c0_286 = arith.constant 0 : index
    %408 = vector.load %arg7[%c4_283, %c3_284, %c0_285, %c0_286] : memref<6x4x32x8xbf16, #tpu.memory_space<vmem>>, vector<1x1x32x8xbf16>
    %409 = vector.shape_cast %408 : vector<1x1x32x8xbf16> to vector<32x8xbf16>
    %cst_287 = arith.constant dense<0.000000e+00> : vector<64x8xf32>
    %410 = tpu.matmul %51, %409, %cst_287 {dimension_numbers = #tpu.dot_dimension_numbers<[1], [0], [0], [1], [0, 0, 1, 1], [], []>} : vector<64x32xbf16>, vector<32x8xbf16>, vector<64x8xf32> -> vector<64x8xf32>
    %c4_288 = arith.constant 4 : index
    %c3_289 = arith.constant 3 : index
    %c0_290 = arith.constant 0 : index
    %c0_291 = arith.constant 0 : index
    %411 = vector.load %arg8[%c4_288, %c3_289, %c0_290, %c0_291] : memref<6x4x1x8xf32, #tpu.memory_space<vmem>>, vector<1x1x1x8xf32>
    %412 = vector.shape_cast %411 : vector<1x1x1x8xf32> to vector<1x8xf32>
    %413 = vector.broadcast %412 : vector<1x8xf32> to vector<64x8xf32>
    %414 = arith.addf %410, %413 : vector<64x8xf32>
    %415 = arith.truncf %414 : vector<64x8xf32> to vector<64x8xbf16>
    %416 = vector.shape_cast %415 : vector<64x8xbf16> to vector<8x8x8xbf16>
    %c5_292 = arith.constant 5 : index
    %c3_293 = arith.constant 3 : index
    %c0_294 = arith.constant 0 : index
    %c0_295 = arith.constant 0 : index
    %417 = vector.load %arg7[%c5_292, %c3_293, %c0_294, %c0_295] : memref<6x4x32x8xbf16, #tpu.memory_space<vmem>>, vector<1x1x32x8xbf16>
    %418 = vector.shape_cast %417 : vector<1x1x32x8xbf16> to vector<32x8xbf16>
    %cst_296 = arith.constant dense<0.000000e+00> : vector<64x8xf32>
    %419 = tpu.matmul %51, %418, %cst_296 {dimension_numbers = #tpu.dot_dimension_numbers<[1], [0], [0], [1], [0, 0, 1, 1], [], []>} : vector<64x32xbf16>, vector<32x8xbf16>, vector<64x8xf32> -> vector<64x8xf32>
    %c5_297 = arith.constant 5 : index
    %c3_298 = arith.constant 3 : index
    %c0_299 = arith.constant 0 : index
    %c0_300 = arith.constant 0 : index
    %420 = vector.load %arg8[%c5_297, %c3_298, %c0_299, %c0_300] : memref<6x4x1x8xf32, #tpu.memory_space<vmem>>, vector<1x1x1x8xf32>
    %421 = vector.shape_cast %420 : vector<1x1x1x8xf32> to vector<1x8xf32>
    %422 = vector.broadcast %421 : vector<1x8xf32> to vector<64x8xf32>
    %423 = arith.addf %419, %422 : vector<64x8xf32>
    %424 = arith.truncf %423 : vector<64x8xf32> to vector<64x8xbf16>
    %425 = vector.shape_cast %424 : vector<64x8xbf16> to vector<8x8x8xbf16>
    "tpu.trace_start"() <{level = 10 : i32, message = "jid,jkd->jik"}> : () -> ()
    %cst_301 = arith.constant dense<0.000000e+00> : vector<8x8x8xf32>
    %426 = tpu.matmul %407, %416, %cst_301 {dimension_numbers = #tpu.dot_dimension_numbers<[2], [2], [1], [1], [0, 0, 0, 1, 1, 1], [0], [0]>} : vector<8x8x8xbf16>, vector<8x8x8xbf16>, vector<8x8x8xf32> -> vector<8x8x8xf32>
    "tpu.trace_stop"() : () -> ()
    %427 = vector.shape_cast %7 : vector<8x8xf32> to vector<1x8x8xf32>
    %428 = vector.broadcast %427 : vector<1x8x8xf32> to vector<8x8x8xf32>
    %429 = arith.addf %426, %428 : vector<8x8x8xf32>
    %cst_302 = arith.constant dense<0xFF800000> : vector<8x8xf32>
    %430 = vector.multi_reduction <maximumf>, %429, %cst_302 [2] : vector<8x8x8xf32> to vector<8x8xf32>
    %431 = vector.shape_cast %430 : vector<8x8xf32> to vector<8x8x1xf32>
    %432 = vector.broadcast %431 : vector<8x8x1xf32> to vector<8x8x8xf32>
    %433 = arith.subf %429, %432 : vector<8x8x8xf32>
    %434 = math.exp %433 : vector<8x8x8xf32>
    %cst_303 = arith.constant dense<0.000000e+00> : vector<8x8xf32>
    %435 = vector.multi_reduction <add>, %434, %cst_303 [2] : vector<8x8x8xf32> to vector<8x8xf32>
    %436 = vector.shape_cast %435 : vector<8x8xf32> to vector<8x8x1xf32>
    %437 = tpu.reciprocal %436 {approx = true} : vector<8x8x1xf32> -> vector<8x8x1xf32>
    %438 = vector.broadcast %437 : vector<8x8x1xf32> to vector<8x8x8xf32>
    %439 = arith.mulf %434, %438 : vector<8x8x8xf32>
    %440 = arith.truncf %439 : vector<8x8x8xf32> to vector<8x8x8xbf16>
    "tpu.trace_start"() <{level = 10 : i32, message = "jik,jkd->jid"}> : () -> ()
    %cst_304 = arith.constant dense<0.000000e+00> : vector<8x8x8xf32>
    %441 = tpu.matmul %440, %425, %cst_304 {dimension_numbers = #tpu.dot_dimension_numbers<[2], [1], [1], [2], [0, 0, 0, 1, 1, 2], [0], [0]>} : vector<8x8x8xbf16>, vector<8x8x8xbf16>, vector<8x8x8xf32> -> vector<8x8x8xf32>
    "tpu.trace_stop"() : () -> ()
    %442 = vector.shape_cast %441 : vector<8x8x8xf32> to vector<64x8xf32>
    %443 = arith.truncf %442 : vector<64x8xf32> to vector<64x8xbf16>
    %c1_305 = arith.constant 1 : index
    %c3_306 = arith.constant 3 : index
    %c0_307 = arith.constant 0 : index
    %c0_308 = arith.constant 0 : index
    %444 = vector.load %arg9[%c1_305, %c3_306, %c0_307, %c0_308] : memref<2x4x8x32xbf16, #tpu.memory_space<vmem>>, vector<1x1x8x32xbf16>
    %445 = vector.shape_cast %444 : vector<1x1x8x32xbf16> to vector<8x32xbf16>
    %cst_309 = arith.constant dense<0.000000e+00> : vector<64x32xf32>
    %446 = tpu.matmul %443, %445, %cst_309 {dimension_numbers = #tpu.dot_dimension_numbers<[1], [0], [0], [1], [0, 0, 1, 1], [], []>} : vector<64x8xbf16>, vector<8x32xbf16>, vector<64x32xf32> -> vector<64x32xf32>
    %447 = arith.addf %398, %446 : vector<64x32xf32>
    %c0_310 = arith.constant 0 : index
    %c0_311 = arith.constant 0 : index
    %c0_312 = arith.constant 0 : index
    %448 = vector.load %arg11[%c0_310, %c0_311, %c0_312] : memref<1x64x32xf32, #tpu.memory_space<vmem>>, vector<1x64x32xf32>
    %449 = vector.shape_cast %448 : vector<1x64x32xf32> to vector<64x32xf32>
    %450 = vector.shape_cast %447 : vector<64x32xf32> to vector<1x64x32xf32>
    tpu.vector_store %arg11[%c0_310, %c0_311, %c0_312], %450 {strides = array<i32>} : memref<1x64x32xf32, #tpu.memory_space<vmem>>, vector<1x64x32xf32>,
    return
  }
  func.func @transform_0(%arg0: i32) -> (i32, i32, i32) {
    %c0_i32 = arith.constant 0 : i32
    %c0_i32_0 = arith.constant 0 : i32
    %c0_i32_1 = arith.constant 0 : i32
    return %arg0, %c0_i32, %c0_i32_0 : i32, i32, i32
  }
  func.func @transform_1(%arg0: i32) -> (i32, i32, i32) {
    %c0_i32 = arith.constant 0 : i32
    %c0_i32_0 = arith.constant 0 : i32
    %c0_i32_1 = arith.constant 0 : i32
    return %arg0, %c0_i32, %c0_i32_0 : i32, i32, i32
  }
  func.func @transform_2(%arg0: i32) -> (i32, i32, i32) {
    %c0_i32 = arith.constant 0 : i32
    %c0_i32_0 = arith.constant 0 : i32
    %c0_i32_1 = arith.constant 0 : i32
    return %arg0, %c0_i32, %c0_i32_0 : i32, i32, i32
  }
  func.func @transform_3(%arg0: i32) -> (i32, i32, i32) {
    %c0_i32 = arith.constant 0 : i32
    %c0_i32_0 = arith.constant 0 : i32
    %c0_i32_1 = arith.constant 0 : i32
    return %arg0, %c0_i32, %c0_i32_0 : i32, i32, i32
  }
  func.func @transform_4(%arg0: i32) -> (i32, i32) {
    %c0_i32 = arith.constant 0 : i32
    %c0_i32_0 = arith.constant 0 : i32
    %c0_i32_1 = arith.constant 0 : i32
    return %c0_i32, %c0_i32_0 : i32, i32
  }
  func.func @transform_5(%arg0: i32) -> (i32, i32) {
    %c0_i32 = arith.constant 0 : i32
    %c0_i32_0 = arith.constant 0 : i32
    %c0_i32_1 = arith.constant 0 : i32
    return %c0_i32, %c0_i32_0 : i32, i32
  }
  func.func @transform_6(%arg0: i32) -> (i32, i32, i32, i32) {
    %c0_i32 = arith.constant 0 : i32
    %c0_i32_0 = arith.constant 0 : i32
    %c0_i32_1 = arith.constant 0 : i32
    %c0_i32_2 = arith.constant 0 : i32
    %c0_i32_3 = arith.constant 0 : i32
    return %c0_i32, %c0_i32_0, %c0_i32_1, %c0_i32_2 : i32, i32, i32, i32
  }
  func.func @transform_7(%arg0: i32) -> (i32, i32, i32, i32) {
    %c0_i32 = arith.constant 0 : i32
    %c0_i32_0 = arith.constant 0 : i32
    %c0_i32_1 = arith.constant 0 : i32
    %c0_i32_2 = arith.constant 0 : i32
    %c0_i32_3 = arith.constant 0 : i32
    return %c0_i32, %c0_i32_0, %c0_i32_1, %c0_i32_2 : i32, i32, i32, i32
  }
  func.func @transform_8(%arg0: i32) -> (i32, i32, i32, i32) {
    %c0_i32 = arith.constant 0 : i32
    %c0_i32_0 = arith.constant 0 : i32
    %c0_i32_1 = arith.constant 0 : i32
    %c0_i32_2 = arith.constant 0 : i32
    %c0_i32_3 = arith.constant 0 : i32
    return %c0_i32, %c0_i32_0, %c0_i32_1, %c0_i32_2 : i32, i32, i32, i32
  }
  func.func @transform_9(%arg0: i32) -> (i32, i32) {
    %c0_i32 = arith.constant 0 : i32
    %c0_i32_0 = arith.constant 0 : i32
    %c0_i32_1 = arith.constant 0 : i32
    return %c0_i32, %c0_i32_0 : i32, i32
  }
  func.func @transform_10(%arg0: i32) -> (i32, i32, i32) {
    %c0_i32 = arith.constant 0 : i32
    %c0_i32_0 = arith.constant 0 : i32
    %c0_i32_1 = arith.constant 0 : i32
    return %arg0, %c0_i32, %c0_i32_0 : i32, i32, i32
  }
}

</mosaic_0001>

<llo_original>
// kernel: axial_attention_pallas.1
$region0: #{axial_attention_pallas.1}
  #allocation0 [shape = 'u32[]', space=smem, size = 0x4, offset = 0x4, fixed_abs, tag = 'smem constant byte address 0x4 - core index']
  #allocation1 [shape = 'u32[144,128]{1,0:T(1,128)}', space=vmem, size = 0x12000, scoped, tag = 'internal scratch']
  %s0 = inlined_call_operand.vmem [shape: f32[2,64,32], index: 0, kind: input, shape index: {}]
  %s1 = inlined_call_operand.vmem [shape: f32[2,64,32], index: 1, kind: input, shape index: {}]
  %s2 = inlined_call_operand.vmem [shape: f32[2,8,8], index: 2, kind: input, shape index: {}]
  %s3 = inlined_call_operand.vmem [shape: f32[2,8,8], index: 3, kind: input, shape index: {}]
  %s4 = inlined_call_operand.vmem [shape: f32[1,32], index: 4, kind: input, shape index: {}]
  %s5 = inlined_call_operand.vmem [shape: f32[1,32], index: 5, kind: input, shape index: {}]
  %s6 = inlined_call_operand.vmem [shape: bf16[6,4,32,8], index: 6, kind: input, shape index: {}]
  %s7 = inlined_call_operand.vmem [shape: f32[6,4,1,8], index: 7, kind: input, shape index: {}]
  %s8 = inlined_call_operand.vmem [shape: bf16[2,4,8,32], index: 8, kind: input, shape index: {}]
  %s9 = inlined_call_operand.vmem [shape: f32[1,32], index: 9, kind: input, shape index: {}]
  %s10 = inlined_call_operand.vmem [shape: f32[2,64,32], index: 10, kind: output, shape index: {}]
  %s11 = sld [smem:[#allocation0]]
  $region73: #{axial_attention_pallas.1} parent=0
    _
  %s13 = ssub.s32 1, %s11
  %s14 = scalar_select 0, %s13, %s11
  loop: start=0, step=1, limit=4
  $region2: #{axial_attention_pallas.1} parent=0 // loop_pre_header
    _
  $region3: #{axial_attention_pallas.1} parent=0 // loop_header
    %s16 = sphi 0, %s20
    %p17 = scmp.ge.s32.totalorder %s16, 4
    %s26 = sphi 0, %s28
    %s29 = sphi 0, %s26
    %s30 = sphi 0, %s29
    %s46 = sphi 0, %s30
    %s52 = sphi 0, %s54
    %s55 = sphi 0, %s52
    %s56 = sphi 0, %s55
    %s72 = sphi 0, %s56
    %s78 = sphi 0, %s80
    %s81 = sphi 0, %s78
    %s82 = sphi 0, %s81
    %s98 = sphi 0, %s82
    %s104 = sphi 0, %s106
    %s107 = sphi 0, %s104
    %s108 = sphi 0, %s107
    %s124 = sphi 0, %s108
    %s128 = sphi 0, %s128
    %s130 = sphi 0, %s128
    %s131 = sphi 0, %s130
    %s145 = sphi 0, %s131
    %s149 = sphi 0, %s149
    %s151 = sphi 0, %s149
    %s152 = sphi 0, %s151
    %s166 = sphi 0, %s152
    %s170 = sphi 0, %s170
    %s172 = sphi 0, %s170
    %s173 = sphi 0, %s172
    %s187 = sphi 0, %s173
    %s191 = sphi 0, %s191
    %s193 = sphi 0, %s191
    %s194 = sphi 0, %s193
    %s208 = sphi 0, %s194
    %s212 = sphi 0, %s212
    %s214 = sphi 0, %s212
    %s215 = sphi 0, %s214
    %s229 = sphi 0, %s215
    %s233 = sphi 0, %s233
    %s235 = sphi 0, %s233
    %s236 = sphi 0, %s235
    %s250 = sphi 0, %s236
    %s256 = sphi 0, %s258
    %s259 = sphi 0, %s256
    %s260 = sphi 0, %s259
    %s276 = sphi 0, %s260
  $region4: #{axial_attention_pallas.1} parent=0 // loop_header_branch
    %19 = sbr.rel (%p17) target = $region8
  $region5: #{axial_attention_pallas.1} parent=0 // loop_body
    %s21 = ssub.s32 %s16, 1
    %s22 = ssub.s32 %s16, 2
    %s23 = sadd.s32 %s16, 1
    %s24 = ssub.s32 %s16, %s23
    %p25 = scmp.eq.s32.totalorder %s24, 0
    %s27 = sadd.s32 %s26, 1
    %s28 = scalar_select %p25, %s26, %s27
    %p31 = pneg %p25
    %p32 = scmp.eq.s32.totalorder %s16, 1
    %p33 = por %p31, %p32
    %p34 = scmp.ne.s32.totalorder %s26, %s29
    %p35 = scmp.eq.s32.totalorder %s16, 0
    %p36 = por %p34, %p35
    %p37 = scmp.ne.s32.totalorder %s26, %s29
    %p38 = scmp.eq.s32.totalorder %s21, 1
    %p39 = por %p37, %p38
    %p40 = scmp.ne.s32.totalorder %s29, %s30
    %p41 = scmp.eq.s32.totalorder %s21, 0
    %p42 = por %p40, %p41
    %p43 = scmp.ne.s32.totalorder %s29, %s30
    %p44 = scmp.eq.s32.totalorder %s22, 1
    %p45 = por %p43, %p44
    %p47 = scmp.ne.s32.totalorder %s30, %s46
    %p48 = scmp.eq.s32.totalorder %s22, 0
    %p49 = por %p47, %p48
    %s50 = ssub.s32 %s16, %s23
    %p51 = scmp.eq.s32.totalorder %s50, 0
    %s53 = sadd.s32 %s52, 1
    %s54 = scalar_select %p51, %s52, %s53
    %p57 = pneg %p51
    %p58 = scmp.eq.s32.totalorder %s16, 1
    %p59 = por %p57, %p58
    %p60 = scmp.ne.s32.totalorder %s52, %s55
    %p61 = scmp.eq.s32.totalorder %s16, 0
    %p62 = por %p60, %p61
    %p63 = scmp.ne.s32.totalorder %s52, %s55
    %p64 = scmp.eq.s32.totalorder %s21, 1
    %p65 = por %p63, %p64
    %p66 = scmp.ne.s32.totalorder %s55, %s56
    %p67 = scmp.eq.s32.totalorder %s21, 0
    %p68 = por %p66, %p67
    %p69 = scmp.ne.s32.totalorder %s55, %s56
    %p70 = scmp.eq.s32.totalorder %s22, 1
    %p71 = por %p69, %p70
    %p73 = scmp.ne.s32.totalorder %s56, %s72
    %p74 = scmp.eq.s32.totalorder %s22, 0
    %p75 = por %p73, %p74
    %s76 = ssub.s32 %s16, %s23
    %p77 = scmp.eq.s32.totalorder %s76, 0
    %s79 = sadd.s32 %s78, 1
    %s80 = scalar_select %p77, %s78, %s79
    %p83 = pneg %p77
    %p84 = scmp.eq.s32.totalorder %s16, 1
    %p85 = por %p83, %p84
    %p86 = scmp.ne.s32.totalorder %s78, %s81
    %p87 = scmp.eq.s32.totalorder %s16, 0
    %p88 = por %p86, %p87
    %p89 = scmp.ne.s32.totalorder %s78, %s81
    %p90 = scmp.eq.s32.totalorder %s21, 1
    %p91 = por %p89, %p90
    %p92 = scmp.ne.s32.totalorder %s81, %s82
    %p93 = scmp.eq.s32.totalorder %s21, 0
    %p94 = por %p92, %p93
    %p95 = scmp.ne.s32.totalorder %s81, %s82
    %p96 = scmp.eq.s32.totalorder %s22, 1
    %p97 = por %p95, %p96
    %p99 = scmp.ne.s32.totalorder %s82, %s98
    %p100 = scmp.eq.s32.totalorder %s22, 0
    %p101 = por %p99, %p100
    %s102 = ssub.s32 %s16, %s23
    %p103 = scmp.eq.s32.totalorder %s102, 0
    %s105 = sadd.s32 %s104, 1
    %s106 = scalar_select %p103, %s104, %s105
    %p109 = pneg %p103
    %p110 = scmp.eq.s32.totalorder %s16, 1
    %p111 = por %p109, %p110
    %p112 = scmp.ne.s32.totalorder %s104, %s107
    %p113 = scmp.eq.s32.totalorder %s16, 0
    %p114 = por %p112, %p113
    %p115 = scmp.ne.s32.totalorder %s104, %s107
    %p116 = scmp.eq.s32.totalorder %s21, 1
    %p117 = por %p115, %p116
    %p118 = scmp.ne.s32.totalorder %s107, %s108
    %p119 = scmp.eq.s32.totalorder %s21, 0
    %p120 = por %p118, %p119
    %p121 = scmp.ne.s32.totalorder %s107, %s108
    %p122 = scmp.eq.s32.totalorder %s22, 1
    %p123 = por %p121, %p122
    %p125 = scmp.ne.s32.totalorder %s108, %s124
    %p126 = scmp.eq.s32.totalorder %s22, 0
    %p127 = por %p125, %p126
    %s129 = sadd.s32 %s128, 1
    %p132 = scmp.eq.s32.totalorder %s16, 1
    %p133 = scmp.ne.s32.totalorder %s128, %s130
    %p134 = scmp.eq.s32.totalorder %s16, 0
    %p135 = por %p133, %p134
    %p136 = scmp.ne.s32.totalorder %s128, %s130
    %p137 = scmp.eq.s32.totalorder %s21, 1
    %p138 = por %p136, %p137
    %p139 = scmp.ne.s32.totalorder %s130, %s131
    %p140 = scmp.eq.s32.totalorder %s21, 0
    %p141 = por %p139, %p140
    %p142 = scmp.ne.s32.totalorder %s130, %s131
    %p143 = scmp.eq.s32.totalorder %s22, 1
    %p144 = por %p142, %p143
    %p146 = scmp.ne.s32.totalorder %s131, %s145
    %p147 = scmp.eq.s32.totalorder %s22, 0
    %p148 = por %p146, %p147
    %s150 = sadd.s32 %s149, 1
    %p153 = scmp.eq.s32.totalorder %s16, 1
    %p154 = scmp.ne.s32.totalorder %s149, %s151
    %p155 = scmp.eq.s32.totalorder %s16, 0
    %p156 = por %p154, %p155
    %p157 = scmp.ne.s32.totalorder %s149, %s151
    %p158 = scmp.eq.s32.totalorder %s21, 1
    %p159 = por %p157, %p158
    %p160 = scmp.ne.s32.totalorder %s151, %s152
    %p161 = scmp.eq.s32.totalorder %s21, 0
    %p162 = por %p160, %p161
    %p163 = scmp.ne.s32.totalorder %s151, %s152
    %p164 = scmp.eq.s32.totalorder %s22, 1
    %p165 = por %p163, %p164
    %p167 = scmp.ne.s32.totalorder %s152, %s166
    %p168 = scmp.eq.s32.totalorder %s22, 0
    %p169 = por %p167, %p168
    %s171 = sadd.s32 %s170, 1
    %p174 = scmp.eq.s32.totalorder %s16, 1
    %p175 = scmp.ne.s32.totalorder %s170, %s172
    %p176 = scmp.eq.s32.totalorder %s16, 0
    %p177 = por %p175, %p176
    %p178 = scmp.ne.s32.totalorder %s170, %s172
    %p179 = scmp.eq.s32.totalorder %s21, 1
    %p180 = por %p178, %p179
    %p181 = scmp.ne.s32.totalorder %s172, %s173
    %p182 = scmp.eq.s32.totalorder %s21, 0
    %p183 = por %p181, %p182
    %p184 = scmp.ne.s32.totalorder %s172, %s173
    %p185 = scmp.eq.s32.totalorder %s22, 1
    %p186 = por %p184, %p185
    %p188 = scmp.ne.s32.totalorder %s173, %s187
    %p189 = scmp.eq.s32.totalorder %s22, 0
    %p190 = por %p188, %p189
    %s192 = sadd.s32 %s191, 1
    %p195 = scmp.eq.s32.totalorder %s16, 1
    %p196 = scmp.ne.s32.totalorder %s191, %s193
    %p197 = scmp.eq.s32.totalorder %s16, 0
    %p198 = por %p196, %p197
    %p199 = scmp.ne.s32.totalorder %s191, %s193
    %p200 = scmp.eq.s32.totalorder %s21, 1
    %p201 = por %p199, %p200
    %p202 = scmp.ne.s32.totalorder %s193, %s194
    %p203 = scmp.eq.s32.totalorder %s21, 0
    %p204 = por %p202, %p203
    %p205 = scmp.ne.s32.totalorder %s193, %s194
    %p206 = scmp.eq.s32.totalorder %s22, 1
    %p207 = por %p205, %p206
    %p209 = scmp.ne.s32.totalorder %s194, %s208
    %p210 = scmp.eq.s32.totalorder %s22, 0
    %p211 = por %p209, %p210
    %s213 = sadd.s32 %s212, 1
    %p216 = scmp.eq.s32.totalorder %s16, 1
    %p217 = scmp.ne.s32.totalorder %s212, %s214
    %p218 = scmp.eq.s32.totalorder %s16, 0
    %p219 = por %p217, %p218
    %p220 = scmp.ne.s32.totalorder %s212, %s214
    %p221 = scmp.eq.s32.totalorder %s21, 1
    %p222 = por %p220, %p221
    %p223 = scmp.ne.s32.totalorder %s214, %s215
    %p224 = scmp.eq.s32.totalorder %s21, 0
    %p225 = por %p223, %p224
    %p226 = scmp.ne.s32.totalorder %s214, %s215
    %p227 = scmp.eq.s32.totalorder %s22, 1
    %p228 = por %p226, %p227
    %p230 = scmp.ne.s32.totalorder %s215, %s229
    %p231 = scmp.eq.s32.totalorder %s22, 0
    %p232 = por %p230, %p231
    %s234 = sadd.s32 %s233, 1
    %p237 = scmp.eq.s32.totalorder %s16, 1
    %p238 = scmp.ne.s32.totalorder %s233, %s235
    %p239 = scmp.eq.s32.totalorder %s16, 0
    %p240 = por %p238, %p239
    %p241 = scmp.ne.s32.totalorder %s233, %s235
    %p242 = scmp.eq.s32.totalorder %s21, 1
    %p243 = por %p241, %p242
    %p244 = scmp.ne.s32.totalorder %s235, %s236
    %p245 = scmp.eq.s32.totalorder %s21, 0
    %p246 = por %p244, %p245
    %p247 = scmp.ne.s32.totalorder %s235, %s236
    %p248 = scmp.eq.s32.totalorder %s22, 1
    %p249 = por %p247, %p248
    %p251 = scmp.ne.s32.totalorder %s236, %s250
    %p252 = scmp.eq.s32.totalorder %s22, 0
    %p253 = por %p251, %p252
    %s254 = ssub.s32 %s16, %s23
    %p255 = scmp.eq.s32.totalorder %s254, 0
    %s257 = sadd.s32 %s256, 1
    %s258 = scalar_select %p255, %s256, %s257
    %p261 = pneg %p255
    %p262 = scmp.eq.s32.totalorder %s16, 1
    %p263 = por %p261, %p262
    %p264 = scmp.ne.s32.totalorder %s256, %s259
    %p265 = scmp.eq.s32.totalorder %s16, 0
    %p266 = por %p264, %p265
    %p267 = scmp.ne.s32.totalorder %s256, %s259
    %p268 = scmp.eq.s32.totalorder %s21, 1
    %p269 = por %p267, %p268
    %p270 = scmp.ne.s32.totalorder %s259, %s260
    %p271 = scmp.eq.s32.totalorder %s21, 0
    %p272 = por %p270, %p271
    %p273 = scmp.ne.s32.totalorder %s259, %s260
    %p274 = scmp.eq.s32.totalorder %s22, 1
    %p275 = por %p273, %p274
    %p277 = scmp.ne.s32.totalorder %s260, %s276
    %p278 = scmp.eq.s32.totalorder %s22, 0
    %p279 = por %p277, %p278
    %p280 = scmp.le.s32.totalorder 1, %s16
    %p281 = scmp.lt.s32.totalorder %s16, 3
    %p282 = pnand %p280, %p281
    %p283 = pneg %p282
    // Predicated region
    $region9: #{axial_attention_pallas.1} parent=5 // pred_check
      _
    $region10: #{axial_attention_pallas.1} parent=5 // pred_check_branch
      %285 = sbr.rel (%p282) target = $region12
    $region11: #{axial_attention_pallas.1} parent=5 // pred_region
      %s286 = ssub.s32 %s16, 1
      // Predicated region
      $region13: #{axial_attention_pallas.1} parent=11 // pred_check
        %p287 = pneg %p141
      $region14: #{axial_attention_pallas.1} parent=11 // pred_check_branch
        %289 = sbr.rel (%p287) target = $region16
      $region15: #{axial_attention_pallas.1} parent=11 // pred_region
        _
      $region16: #{axial_attention_pallas.1} parent=11 // pred_fallthru
        _
      // Predicated region
      $region17: #{axial_attention_pallas.1} parent=11 // pred_check
        %p290 = pneg %p162
      $region18: #{axial_attention_pallas.1} parent=11 // pred_check_branch
        %292 = sbr.rel (%p290) target = $region20
      $region19: #{axial_attention_pallas.1} parent=11 // pred_region
        _
      $region20: #{axial_attention_pallas.1} parent=11 // pred_fallthru
        _
      // Predicated region
      $region21: #{axial_attention_pallas.1} parent=11 // pred_check
        %p293 = pneg %p183
      $region22: #{axial_attention_pallas.1} parent=11 // pred_check_branch
        %295 = sbr.rel (%p293) target = $region24
      $region23: #{axial_attention_pallas.1} parent=11 // pred_region
        _
      $region24: #{axial_attention_pallas.1} parent=11 // pred_fallthru
        _
      // Predicated region
      $region25: #{axial_attention_pallas.1} parent=11 // pred_check
        %p296 = pneg %p204
      $region26: #{axial_attention_pallas.1} parent=11 // pred_check_branch
        %298 = sbr.rel (%p296) target = $region28
      $region27: #{axial_attention_pallas.1} parent=11 // pred_region
        _
      $region28: #{axial_attention_pallas.1} parent=11 // pred_fallthru
        _
      // Predicated region
      $region29: #{axial_attention_pallas.1} parent=11 // pred_check
        %p299 = pneg %p225
      $region30: #{axial_attention_pallas.1} parent=11 // pred_check_branch
        %301 = sbr.rel (%p299) target = $region32
      $region31: #{axial_attention_pallas.1} parent=11 // pred_region
        _
      $region32: #{axial_attention_pallas.1} parent=11 // pred_fallthru
        _
      // Predicated region
      $region33: #{axial_attention_pallas.1} parent=11 // pred_check
        %p302 = pneg %p246
      $region34: #{axial_attention_pallas.1} parent=11 // pred_check_branch
        %304 = sbr.rel (%p302) target = $region36
      $region35: #{axial_attention_pallas.1} parent=11 // pred_region
        _
      $region36: #{axial_attention_pallas.1} parent=11 // pred_fallthru
        _
    $region12: #{axial_attention_pallas.1} parent=5 // pred_fallthru
      _
    %p305 = scmp.lt.s32.totalorder %s16, 2
    // Predicated region
    $region37: #{axial_attention_pallas.1} parent=5 // pred_check
      %p306 = pneg %p305
    $region38: #{axial_attention_pallas.1} parent=5 // pred_check_branch
      %308 = sbr.rel (%p306) target = $region40
    $region39: #{axial_attention_pallas.1} parent=5 // pred_region
      // Predicated region
      $region41: #{axial_attention_pallas.1} parent=39 // pred_check
        %p309 = pneg %p36
      $region42: #{axial_attention_pallas.1} parent=39 // pred_check_branch
        %311 = sbr.rel (%p309) target = $region44
      $region43: #{axial_attention_pallas.1} parent=39 // pred_region
        %p312 = scmp.lt.s32.totalorder %s16, 1
        %s313 = scalar_select %p312, %s16, 1
        %s314 = smul.addr %s313, 8
        %s315 = smul.addr %s314, 8
        %s316 = scalar_lea.vmem %s0, %s315
      $region44: #{axial_attention_pallas.1} parent=39 // pred_fallthru
        _
      // Predicated region
      $region45: #{axial_attention_pallas.1} parent=39 // pred_check
        %p317 = pneg %p62
      $region46: #{axial_attention_pallas.1} parent=39 // pred_check_branch
        %319 = sbr.rel (%p317) target = $region48
      $region47: #{axial_attention_pallas.1} parent=39 // pred_region
        %p320 = scmp.lt.s32.totalorder %s16, 1
        %s321 = scalar_select %p320, %s16, 1
        %s322 = smul.addr %s321, 8
        %s323 = smul.addr %s322, 8
        %s324 = scalar_lea.vmem %s1, %s323
      $region48: #{axial_attention_pallas.1} parent=39 // pred_fallthru
        _
      // Predicated region
      $region49: #{axial_attention_pallas.1} parent=39 // pred_check
        %p325 = pneg %p88
      $region50: #{axial_attention_pallas.1} parent=39 // pred_check_branch
        %327 = sbr.rel (%p325) target = $region52
      $region51: #{axial_attention_pallas.1} parent=39 // pred_region
        %p328 = scmp.lt.s32.totalorder %s16, 1
        %s329 = scalar_select %p328, %s16, 1
        %s330 = smul.addr %s329, 8
        %s331 = scalar_lea.vmem %s2, %s330
      $region52: #{axial_attention_pallas.1} parent=39 // pred_fallthru
        _
      // Predicated region
      $region53: #{axial_attention_pallas.1} parent=39 // pred_check
        %p332 = pneg %p114
      $region54: #{axial_attention_pallas.1} parent=39 // pred_check_branch
        %334 = sbr.rel (%p332) target = $region56
      $region55: #{axial_attention_pallas.1} parent=39 // pred_region
        %p335 = scmp.lt.s32.totalorder %s16, 1
        %s336 = scalar_select %p335, %s16, 1
        %s337 = smul.addr %s336, 8
        %s338 = scalar_lea.vmem %s3, %s337
      $region56: #{axial_attention_pallas.1} parent=39 // pred_fallthru
        _
    $region40: #{axial_attention_pallas.1} parent=5 // pred_fallthru
      _
    %p339 = scmp.le.s32.totalorder 1, %s16
    %p340 = scmp.lt.s32.totalorder %s16, 3
    %p341 = pnand %p339, %p340
    %p342 = pneg %p341
    // Predicated region
    $region57: #{axial_attention_pallas.1} parent=5 // pred_check
      _
    $region58: #{axial_attention_pallas.1} parent=5 // pred_check_branch
      %344 = sbr.rel (%p341) target = $region60
    $region59: #{axial_attention_pallas.1} parent=5 // pred_region
      %s345 = ssub.s32 %s16, 1
      %p346 = scmp.lt.s32.totalorder %s21, 1
      %s347 = scalar_select %p346, %s21, 1
      %s348 = smul.addr %s347, 8
      %s349 = smul.addr %s348, 8
      %s350 = scalar_lea.vmem %s0, %s349
      %p351 = pneg %p42
      %p352 = pneg %p39
      %p353 = scmp.lt.s32.totalorder %s21, 1
      %s354 = scalar_select %p353, %s21, 1
      %s355 = smul.addr %s354, 8
      %s356 = smul.addr %s355, 8
      %s357 = scalar_lea.vmem %s1, %s356
      %p358 = pneg %p68
      %p359 = pneg %p65
      %p360 = scmp.lt.s32.totalorder %s21, 1
      %s361 = scalar_select %p360, %s21, 1
      %s362 = smul.addr %s361, 8
      %s363 = scalar_lea.vmem %s2, %s362
      %p364 = pneg %p94
      %p365 = pneg %p91
      %p366 = scmp.lt.s32.totalorder %s21, 1
      %s367 = scalar_select %p366, %s21, 1
      %s368 = smul.addr %s367, 8
      %s369 = scalar_lea.vmem %s3, %s368
      %p370 = pneg %p120
      %p371 = pneg %p117
      %p372 = pneg %p141
      %p373 = pneg %p138
      %p374 = pneg %p162
      %p375 = pneg %p159
      %p376 = pneg %p183
      %p377 = pneg %p180
      %p378 = pneg %p204
      %p379 = pneg %p201
      %p380 = pneg %p225
      %p381 = pneg %p222
      %p382 = pneg %p246
      %p383 = pneg %p243
      %p384 = pneg %p272
      %p385 = pneg %p269
      %p386 = scmp.lt.s32.totalorder %s21, 1
      %s387 = scalar_select %p386, %s21, 1
      %s388 = smul.addr %s387, 8
      %s389 = smul.addr %s388, 8
      %s390 = scalar_lea.vmem %s10, %s389
      %p391 = scmp.lt.s32.totalorder %s21, 1
      %s392 = scalar_select %p391, %s21, 1
      %s393 = smul.addr %s392, 8
      %s394 = smul.addr %s393, 8
      %s395 = scalar_lea.vmem %s0, %s394
      %p396 = scmp.lt.s32.totalorder %s21, 1
      %s397 = scalar_select %p396, %s21, 1
      %s398 = smul.addr %s397, 8
      %s399 = smul.addr %s398, 8
      %s400 = scalar_lea.vmem %s1, %s399
      %p401 = scmp.lt.s32.totalorder %s21, 1
      %s402 = scalar_select %p401, %s21, 1
      %s403 = smul.addr %s402, 8
      %s404 = scalar_lea.vmem %s2, %s403
      %p405 = scmp.lt.s32.totalorder %s21, 1
      %s406 = scalar_select %p405, %s21, 1
      %s407 = smul.addr %s406, 8
      %s408 = scalar_lea.vmem %s3, %s407
      %p409 = scmp.lt.s32.totalorder %s21, 1
      %s410 = scalar_select %p409, %s21, 1
      %s411 = smul.addr %s410, 8
      %s412 = smul.addr %s411, 8
      %s413 = scalar_lea.vmem %s10, %s412
      %v415 = vld [vmem:[%s395] sm:$0xff]
      %v416 = vld [vmem:[%s395 + $0x8] sm:$0xff]
      %v417 = vld [vmem:[%s395 + $0x10] sm:$0xff]
      %v418 = vld [vmem:[%s395 + $0x18] sm:$0xff]
      %v419 = vld [vmem:[%s395 + $0x20] sm:$0xff]
      %v420 = vld [vmem:[%s395 + $0x28] sm:$0xff]
      %v421 = vld [vmem:[%s395 + $0x30] sm:$0xff]
      %v422 = vld [vmem:[%s395 + $0x38] sm:$0xff]
      %v423 = vld [vmem:[%s400] sm:$0xff]
      %v424 = vld [vmem:[%s400 + $0x8] sm:$0xff]
      %v425 = vld [vmem:[%s400 + $0x10] sm:$0xff]
      %v426 = vld [vmem:[%s400 + $0x18] sm:$0xff]
      %v427 = vld [vmem:[%s400 + $0x20] sm:$0xff]
      %v428 = vld [vmem:[%s400 + $0x28] sm:$0xff]
      %v429 = vld [vmem:[%s400 + $0x30] sm:$0xff]
      %v430 = vld [vmem:[%s400 + $0x38] sm:$0xff]
      %v431 = vld [vmem:[%s404] sm:$0xff]
      %v432 = vld [vmem:[%s408] sm:$0xff]
      %v433 = vld [vmem:[%s4] sm:$0x1]
      %v434 = vld [vmem:[%s5] sm:$0x1]
      %vm435 = vcmask 261120
      %v436 = vsel %vm435, %v415, 0.0
      %437 = vadd.xlane.f32.xlu0 %v436
      %v438 = vpop.xlane.xlu0 %437
      %v439 = vsel %vm435, %v416, 0.0
      %440 = vadd.xlane.f32.xlu0 %v439
      %v441 = vpop.xlane.xlu0 %440
      %v442 = vsel %vm435, %v417, 0.0
      %443 = vadd.xlane.f32.xlu0 %v442
      %v444 = vpop.xlane.xlu0 %443
      %v445 = vsel %vm435, %v418, 0.0
      %446 = vadd.xlane.f32.xlu0 %v445
      %v447 = vpop.xlane.xlu0 %446
      %v448 = vsel %vm435, %v419, 0.0
      %449 = vadd.xlane.f32.xlu0 %v448
      %v450 = vpop.xlane.xlu0 %449
      %v451 = vsel %vm435, %v420, 0.0
      %452 = vadd.xlane.f32.xlu0 %v451
      %v453 = vpop.xlane.xlu0 %452
      %v454 = vsel %vm435, %v421, 0.0
      %455 = vadd.xlane.f32.xlu0 %v454
      %v456 = vpop.xlane.xlu0 %455
      %v457 = vsel %vm435, %v422, 0.0
      %458 = vadd.xlane.f32.xlu0 %v457
      %v459 = vpop.xlane.xlu0 %458
      %v460 = vrcp.pop 32.0
      %v461 = vmul.f32 %v438, %v460
      %v462 = vmul.f32 %v441, %v460
      %v463 = vmul.f32 %v444, %v460
      %v464 = vmul.f32 %v447, %v460
      %v465 = vmul.f32 %v450, %v460
      %v466 = vmul.f32 %v453, %v460
      %v467 = vmul.f32 %v456, %v460
      %v468 = vmul.f32 %v459, %v460
      %v469 = vsub.f32 %v415, %v461
      %v470 = vsub.f32 %v416, %v462
      %v471 = vsub.f32 %v417, %v463
      %v472 = vsub.f32 %v418, %v464
      %v473 = vsub.f32 %v419, %v465
      %v474 = vsub.f32 %v420, %v466
      %v475 = vsub.f32 %v421, %v467
      %v476 = vsub.f32 %v422, %v468
      %v477 = vmul.f32 %v469, %v469
      %v478 = vmul.f32 %v470, %v470
      %v479 = vmul.f32 %v471, %v471
      %v480 = vmul.f32 %v472, %v472
      %v481 = vmul.f32 %v473, %v473
      %v482 = vmul.f32 %v474, %v474
      %v483 = vmul.f32 %v475, %v475
      %v484 = vmul.f32 %v476, %v476
      %v485 = vsel %vm435, %v477, 0.0
      %486 = vadd.xlane.f32.xlu0 %v485
      %v487 = vpop.xlane.xlu0 %486
      %v488 = vsel %vm435, %v478, 0.0
      %489 = vadd.xlane.f32.xlu0 %v488
      %v490 = vpop.xlane.xlu0 %489
      %v491 = vsel %vm435, %v479, 0.0
      %492 = vadd.xlane.f32.xlu0 %v491
      %v493 = vpop.xlane.xlu0 %492
      %v494 = vsel %vm435, %v480, 0.0
      %495 = vadd.xlane.f32.xlu0 %v494
      %v496 = vpop.xlane.xlu0 %495
      %v497 = vsel %vm435, %v481, 0.0
      %498 = vadd.xlane.f32.xlu0 %v497
      %v499 = vpop.xlane.xlu0 %498
      %v500 = vsel %vm435, %v482, 0.0
      %501 = vadd.xlane.f32.xlu0 %v500
      %v502 = vpop.xlane.xlu0 %501
      %v503 = vsel %vm435, %v483, 0.0
      %504 = vadd.xlane.f32.xlu0 %v503
      %v505 = vpop.xlane.xlu0 %504
      %v506 = vsel %vm435, %v484, 0.0
      %507 = vadd.xlane.f32.xlu0 %v506
      %v508 = vpop.xlane.xlu0 %507
      %v509 = vmul.f32 %v487, %v460
      %v510 = vmul.f32 %v490, %v460
      %v511 = vmul.f32 %v493, %v460
      %v512 = vmul.f32 %v496, %v460
      %v513 = vmul.f32 %v499, %v460
      %v514 = vmul.f32 %v502, %v460
      %v515 = vmul.f32 %v505, %v460
      %v516 = vmul.f32 %v508, %v460
      %v517 = vadd.f32 %v509, 1e-05
      %v518 = vadd.f32 %v510, 1e-05
      %v519 = vadd.f32 %v511, 1e-05
      %v520 = vadd.f32 %v512, 1e-05
      %v521 = vadd.f32 %v513, 1e-05
      %v522 = vadd.f32 %v514, 1e-05
      %v523 = vadd.f32 %v515, 1e-05
      %v524 = vadd.f32 %v516, 1e-05
      %v525 = vrsqrt.pop %v517
      %v526 = vrsqrt.pop %v518
      %v527 = vrsqrt.pop %v519
      %v528 = vrsqrt.pop %v520
      %v529 = vrsqrt.pop %v521
      %v530 = vrsqrt.pop %v522
      %v531 = vrsqrt.pop %v523
      %v532 = vrsqrt.pop %v524
      %v533 = vmul.f32 %v469, %v525
      %v534 = vmul.f32 %v470, %v526
      %v535 = vmul.f32 %v471, %v527
      %v536 = vmul.f32 %v472, %v528
      %v537 = vmul.f32 %v473, %v529
      %v538 = vmul.f32 %v474, %v530
      %v539 = vmul.f32 %v475, %v531
      %v540 = vmul.f32 %v476, %v532
      %v542 = vlaneseq
      %v543 = vshrl.u32 %v542, 7
      %v544 = vsub.s32 0, %v543
      %v545 = vrot.slane %v433, %v544
      %v547 = vmul.f32 %v533, %v545
      %v548 = vmul.f32 %v534, %v545
      %v549 = vmul.f32 %v535, %v545
      %v550 = vmul.f32 %v536, %v545
      %v551 = vmul.f32 %v537, %v545
      %v552 = vmul.f32 %v538, %v545
      %v553 = vmul.f32 %v539, %v545
      %v554 = vmul.f32 %v540, %v545
      %v556 = vlaneseq
      %v557 = vshrl.u32 %v556, 7
      %v558 = vsub.s32 0, %v557
      %v559 = vrot.slane %v434, %v558
      %v561 = vadd.f32 %v547, %v559
      %v562 = vadd.f32 %v548, %v559
      %v563 = vadd.f32 %v549, %v559
      %v564 = vadd.f32 %v550, %v559
      %v565 = vadd.f32 %v551, %v559
      %v566 = vadd.f32 %v552, %v559
      %v567 = vadd.f32 %v553, %v559
      %v568 = vadd.f32 %v554, %v559
      %v569 = vpack.c.bf16 %v562, %v561
      %v570 = vpack.c.bf16 %v564, %v563
      %v571 = vpack.c.bf16 %v566, %v565
      %v572 = vpack.c.bf16 %v568, %v567
      %v573 = vsel %vm435, %v423, 0.0
      %574 = vadd.xlane.f32.xlu0 %v573
      %v575 = vpop.xlane.xlu0 %574
      %v576 = vsel %vm435, %v424, 0.0
      %577 = vadd.xlane.f32.xlu0 %v576
      %v578 = vpop.xlane.xlu0 %577
      %v579 = vsel %vm435, %v425, 0.0
      %580 = vadd.xlane.f32.xlu0 %v579
      %v581 = vpop.xlane.xlu0 %580
      %v582 = vsel %vm435, %v426, 0.0
      %583 = vadd.xlane.f32.xlu0 %v582
      %v584 = vpop.xlane.xlu0 %583
      %v585 = vsel %vm435, %v427, 0.0
      %586 = vadd.xlane.f32.xlu0 %v585
      %v587 = vpop.xlane.xlu0 %586
      %v588 = vsel %vm435, %v428, 0.0
      %589 = vadd.xlane.f32.xlu0 %v588
      %v590 = vpop.xlane.xlu0 %589
      %v591 = vsel %vm435, %v429, 0.0
      %592 = vadd.xlane.f32.xlu0 %v591
      %v593 = vpop.xlane.xlu0 %592
      %v594 = vsel %vm435, %v430, 0.0
      %595 = vadd.xlane.f32.xlu0 %v594
      %v596 = vpop.xlane.xlu0 %595
      %v597 = vmul.f32 %v575, %v460
      %v598 = vmul.f32 %v578, %v460
      %v599 = vmul.f32 %v581, %v460
      %v600 = vmul.f32 %v584, %v460
      %v601 = vmul.f32 %v587, %v460
      %v602 = vmul.f32 %v590, %v460
      %v603 = vmul.f32 %v593, %v460
      %v604 = vmul.f32 %v596, %v460
      %v605 = vsub.f32 %v423, %v597
      %v606 = vsub.f32 %v424, %v598
      %v607 = vsub.f32 %v425, %v599
      %v608 = vsub.f32 %v426, %v600
      %v609 = vsub.f32 %v427, %v601
      %v610 = vsub.f32 %v428, %v602
      %v611 = vsub.f32 %v429, %v603
      %v612 = vsub.f32 %v430, %v604
      %v613 = vmul.f32 %v605, %v605
      %v614 = vmul.f32 %v606, %v606
      %v615 = vmul.f32 %v607, %v607
      %v616 = vmul.f32 %v608, %v608
      %v617 = vmul.f32 %v609, %v609
      %v618 = vmul.f32 %v610, %v610
      %v619 = vmul.f32 %v611, %v611
      %v620 = vmul.f32 %v612, %v612
      %v621 = vsel %vm435, %v613, 0.0
      %622 = vadd.xlane.f32.xlu0 %v621
      %v623 = vpop.xlane.xlu0 %622
      %v624 = vsel %vm435, %v614, 0.0
      %625 = vadd.xlane.f32.xlu0 %v624
      %v626 = vpop.xlane.xlu0 %625
      %v627 = vsel %vm435, %v615, 0.0
      %628 = vadd.xlane.f32.xlu0 %v627
      %v629 = vpop.xlane.xlu0 %628
      %v630 = vsel %vm435, %v616, 0.0
      %631 = vadd.xlane.f32.xlu0 %v630
      %v632 = vpop.xlane.xlu0 %631
      %v633 = vsel %vm435, %v617, 0.0
      %634 = vadd.xlane.f32.xlu0 %v633
      %v635 = vpop.xlane.xlu0 %634
      %v636 = vsel %vm435, %v618, 0.0
      %637 = vadd.xlane.f32.xlu0 %v636
      %v638 = vpop.xlane.xlu0 %637
      %v639 = vsel %vm435, %v619, 0.0
      %640 = vadd.xlane.f32.xlu0 %v639
      %v641 = vpop.xlane.xlu0 %640
      %v642 = vsel %vm435, %v620, 0.0
      %643 = vadd.xlane.f32.xlu0 %v642
      %v644 = vpop.xlane.xlu0 %643
      %v645 = vmul.f32 %v623, %v460
      %v646 = vmul.f32 %v626, %v460
      %v647 = vmul.f32 %v629, %v460
      %v648 = vmul.f32 %v632, %v460
      %v649 = vmul.f32 %v635, %v460
      %v650 = vmul.f32 %v638, %v460
      %v651 = vmul.f32 %v641, %v460
      %v652 = vmul.f32 %v644, %v460
      %v653 = vadd.f32 %v645, 1e-05
      %v654 = vadd.f32 %v646, 1e-05
      %v655 = vadd.f32 %v647, 1e-05
      %v656 = vadd.f32 %v648, 1e-05
      %v657 = vadd.f32 %v649, 1e-05
      %v658 = vadd.f32 %v650, 1e-05
      %v659 = vadd.f32 %v651, 1e-05
      %v660 = vadd.f32 %v652, 1e-05
      %v661 = vrsqrt.pop %v653
      %v662 = vrsqrt.pop %v654
      %v663 = vrsqrt.pop %v655
      %v664 = vrsqrt.pop %v656
      %v665 = vrsqrt.pop %v657
      %v666 = vrsqrt.pop %v658
      %v667 = vrsqrt.pop %v659
      %v668 = vrsqrt.pop %v660
      %v669 = vmul.f32 %v605, %v661
      %v670 = vmul.f32 %v606, %v662
      %v671 = vmul.f32 %v607, %v663
      %v672 = vmul.f32 %v608, %v664
      %v673 = vmul.f32 %v609, %v665
      %v674 = vmul.f32 %v610, %v666
      %v675 = vmul.f32 %v611, %v667
      %v676 = vmul.f32 %v612, %v668
      %v677 = vmul.f32 %v669, %v545
      %v678 = vmul.f32 %v670, %v545
      %v679 = vmul.f32 %v671, %v545
      %v680 = vmul.f32 %v672, %v545
      %v681 = vmul.f32 %v673, %v545
      %v682 = vmul.f32 %v674, %v545
      %v683 = vmul.f32 %v675, %v545
      %v684 = vmul.f32 %v676, %v545
      %v685 = vadd.f32 %v677, %v559
      %v686 = vadd.f32 %v678, %v559
      %v687 = vadd.f32 %v679, %v559
      %v688 = vadd.f32 %v680, %v559
      %v689 = vadd.f32 %v681, %v559
      %v690 = vadd.f32 %v682, %v559
      %v691 = vadd.f32 %v683, %v559
      %v692 = vadd.f32 %v684, %v559
      %v693 = vpack.c.bf16 %v686, %v685
      %v694 = vpack.c.bf16 %v688, %v687
      %v695 = vpack.c.bf16 %v690, %v689
      %v696 = vpack.c.bf16 %v692, %v691
      %v697 = vld [vmem:[%s9] sm:$0x1]
      %v699 = vlaneseq
      %v700 = vshrl.u32 %v699, 7
      %v701 = vsub.s32 0, %v700
      %v702 = vrot.slane %v697, %v701
      %v704 = vadd.f32 %v702, 0.0
      %v705 = vld [vmem:[%s6] sm:$0xf]
      %v706 = vld [vmem:[%s6 + $0x4] sm:$0xf]
      %v707 = vld [vmem:[%s6 + $0x8] sm:$0xf]
      %v708 = vld [vmem:[%s6 + $0xc] sm:$0xf]
      %v709 = vld [vmem:[%s7] sm:$0x1]
      %v711 = vlaneseq
      %v712 = vshrl.u32 %v711, 7
      %v713 = vsub.s32 0, %v712
      %v714 = vrot.slane %v709, %v713
      %v720 = vunpack.c.l.b16 %v705
      %v721 = vunpack.c.l.b16 %v706
      %v722 = vunpack.c.l.b16 %v707
      %v723 = vunpack.c.l.b16 %v708
      %v724 = vpack.c.b16 %v721, %v720
      %v725 = vpack.c.b16 %v723, %v722
      %v729 = vsel %vm435, %v693, 0
      %v732 = vsel %vm435, %v694, 0
      %v735 = vsel %vm435, %v695, 0
      %v738 = vsel %vm435, %v696, 0
      %740 = vmatprep.subr.bf16.mxu0 0
      %741 = vmatpush1.bf16.msra.mxu0 0
      %742 = vmatprep.subr.bf16.mxu0 0
      %743 = vmatpush1.bf16.msra.mxu0 0
      %744 = vmatprep.subr.bf16.mxu0 0
      %745 = vmatpush1.bf16.msra.mxu0 0
      %746 = vmatprep.subr.bf16.mxu0 0
      %747 = vmatpush1.bf16.msra.mxu0 0
      %748 = vmatprep.subr.bf16.mxu0 0
      %749 = vmatpush1.bf16.msra.mxu0 0
      %750 = vmatprep.subr.bf16.mxu0 0
      %751 = vmatpush1.bf16.msra.mxu0 0
      %752 = vmatprep.subr.bf16.mxu0 0
      %753 = vmatpush1.bf16.msra.mxu0 %v725
      %754 = vmatprep.subr.bf16.mxu0 0
      %755 = vmatpush1.bf16.msra.mxu0 %v724
      %756 = vmatprep.subr.bf16.mxu0 0
      %757 = vmatpush2.bf16.msra.mxu0 0
      %758 = vmatprep.subr.bf16.mxu0 0
      %759 = vmatpush2.bf16.msra.mxu0 0
      %760 = vmatprep.subr.bf16.mxu0 0
      %761 = vmatpush2.bf16.msra.mxu0 0
      %762 = vmatprep.subr.bf16.mxu0 0
      %763 = vmatpush2.bf16.msra.mxu0 0
      %764 = vmatprep.subr.bf16.mxu0 0
      %765 = vmatpush2.bf16.msra.mxu0 0
      %766 = vmatprep.subr.bf16.mxu0 0
      %767 = vmatpush2.bf16.msra.mxu0 0
      %768 = vmatprep.subr.bf16.mxu0 0
      %769 = vmatpush2.bf16.msra.mxu0 0
      %770 = vmatprep.subr.bf16.mxu0 0
      %771 = vmatpush2.bf16.msra.mxu0 0
      %772 = vmatprep.mubr.bf16.mxu0 0
      %773 = vmatmul.mubr.bf16.gmra.mxu0 %v729
      %v774 = vpop.f32.mrf.mxu0
      %v775 = vadd.f32 %v714, %v774
      %v776 = vpop.f32.mrf.mxu0
      %v777 = vpop.f32.mrf.mxu0
      %v778 = vadd.f32 %v714, %v777
      %v779 = vpop.f32.mrf.mxu0
      %780 = vmatprep.mubr.bf16.mxu0 0
      %781 = vmatmul.mubr.bf16.gmra.mxu0 %v732
      %v782 = vpop.f32.mrf.mxu0
      %v783 = vadd.f32 %v714, %v782
      %v784 = vpop.f32.mrf.mxu0
      %v785 = vpop.f32.mrf.mxu0
      %v786 = vadd.f32 %v714, %v785
      %v787 = vpop.f32.mrf.mxu0
      %788 = vmatprep.mubr.bf16.mxu0 0
      %789 = vmatmul.mubr.bf16.gmra.mxu0 %v735
      %v790 = vpop.f32.mrf.mxu0
      %v791 = vadd.f32 %v714, %v790
      %v792 = vpop.f32.mrf.mxu0
      %v793 = vpop.f32.mrf.mxu0
      %v794 = vadd.f32 %v714, %v793
      %v795 = vpop.f32.mrf.mxu0
      %796 = vmatprep.mubr.bf16.mxu0 0
      %797 = vmatmul.mubr.bf16.gmra.mxu0 %v738
      %v798 = vpop.f32.mrf.mxu0
      %v799 = vadd.f32 %v714, %v798
      %v800 = vpop.f32.mrf.mxu0
      %v801 = vpop.f32.mrf.mxu0
      %v802 = vadd.f32 %v714, %v801
      %v803 = vpop.f32.mrf.mxu0
      %804 = vdwg.mxu0
      %v805 = vpack.c.bf16 %v778, %v775
      %v806 = vpack.c.bf16 %v786, %v783
      %v807 = vpack.c.bf16 %v794, %v791
      %v808 = vpack.c.bf16 %v802, %v799
      %v813 = vunpack.c.l.b16 %v805
      %v814 = vunpack.c.h.b16 %v805
      %v815 = vunpack.c.l.b16 %v806
      %v816 = vunpack.c.h.b16 %v806
      %v817 = vunpack.c.l.b16 %v807
      %v818 = vunpack.c.h.b16 %v807
      %v819 = vunpack.c.l.b16 %v808
      %v820 = vunpack.c.h.b16 %v808
      %v821 = vpack.c.b16 %v813, %v813
      %v822 = vpack.c.b16 %v814, %v814
      %v823 = vpack.c.b16 %v815, %v815
      %v824 = vpack.c.b16 %v816, %v816
      %v825 = vpack.c.b16 %v817, %v817
      %v826 = vpack.c.b16 %v818, %v818
      %v827 = vpack.c.b16 %v819, %v819
      %v828 = vpack.c.b16 %v820, %v820
      %s829 = scalar_lea.vmem %s6, 64
      %v830 = vld [vmem:[%s829] sm:$0xf]
      %v831 = vld [vmem:[%s829 + $0x4] sm:$0xf]
      %v832 = vld [vmem:[%s829 + $0x8] sm:$0xf]
      %v833 = vld [vmem:[%s829 + $0xc] sm:$0xf]
      %s834 = scalar_lea.vmem %s7, 4
      %v835 = vld [vmem:[%s834] sm:$0x1]
      %v837 = vlaneseq
      %v838 = vshrl.u32 %v837, 7
      %v839 = vsub.s32 0, %v838
      %v840 = vrot.slane %v835, %v839
      %v846 = vunpack.c.l.b16 %v830
      %v847 = vunpack.c.l.b16 %v831
      %v848 = vunpack.c.l.b16 %v832
      %v849 = vunpack.c.l.b16 %v833
      %v850 = vpack.c.b16 %v847, %v846
      %v851 = vpack.c.b16 %v849, %v848
      %v855 = vsel %vm435, %v569, 0
      %v858 = vsel %vm435, %v570, 0
      %v861 = vsel %vm435, %v571, 0
      %v864 = vsel %vm435, %v572, 0
      %866 = vmatprep.subr.bf16.mxu0 0
      %867 = vmatpush1.bf16.msra.mxu0 0
      %868 = vmatprep.subr.bf16.mxu0 0
      %869 = vmatpush1.bf16.msra.mxu0 0
      %870 = vmatprep.subr.bf16.mxu0 0
      %871 = vmatpush1.bf16.msra.mxu0 0
      %872 = vmatprep.subr.bf16.mxu0 0
      %873 = vmatpush1.bf16.msra.mxu0 0
      %874 = vmatprep.subr.bf16.mxu0 0
      %875 = vmatpush1.bf16.msra.mxu0 0
      %876 = vmatprep.subr.bf16.mxu0 0
      %877 = vmatpush1.bf16.msra.mxu0 0
      %878 = vmatprep.subr.bf16.mxu0 0
      %879 = vmatpush1.bf16.msra.mxu0 %v851
      %880 = vmatprep.subr.bf16.mxu0 0
      %881 = vmatpush1.bf16.msra.mxu0 %v850
      %882 = vmatprep.subr.bf16.mxu0 0
      %883 = vmatpush2.bf16.msra.mxu0 0
      %884 = vmatprep.subr.bf16.mxu0 0
      %885 = vmatpush2.bf16.msra.mxu0 0
      %886 = vmatprep.subr.bf16.mxu0 0
      %887 = vmatpush2.bf16.msra.mxu0 0
      %888 = vmatprep.subr.bf16.mxu0 0
      %889 = vmatpush2.bf16.msra.mxu0 0
      %890 = vmatprep.subr.bf16.mxu0 0
      %891 = vmatpush2.bf16.msra.mxu0 0
      %892 = vmatprep.subr.bf16.mxu0 0
      %893 = vmatpush2.bf16.msra.mxu0 0
      %894 = vmatprep.subr.bf16.mxu0 0
      %895 = vmatpush2.bf16.msra.mxu0 0
      %896 = vmatprep.subr.bf16.mxu0 0
      %897 = vmatpush2.bf16.msra.mxu0 0
      %898 = vmatprep.mubr.bf16.mxu0 0
      %899 = vmatmul.mubr.bf16.gmra.mxu0 %v855
      %v900 = vpop.f32.mrf.mxu0
      %v901 = vadd.f32 %v840, %v900
      %v902 = vpop.f32.mrf.mxu0
      %v903 = vpop.f32.mrf.mxu0
      %v904 = vadd.f32 %v840, %v903
      %v905 = vpop.f32.mrf.mxu0
      %906 = vmatprep.mubr.bf16.mxu0 0
      %907 = vmatmul.mubr.bf16.gmra.mxu0 %v858
      %v908 = vpop.f32.mrf.mxu0
      %v909 = vadd.f32 %v840, %v908
      %v910 = vpop.f32.mrf.mxu0
      %v911 = vpop.f32.mrf.mxu0
      %v912 = vadd.f32 %v840, %v911
      %v913 = vpop.f32.mrf.mxu0
      %914 = vmatprep.mubr.bf16.mxu0 0
      %915 = vmatmul.mubr.bf16.gmra.mxu0 %v861
      %v916 = vpop.f32.mrf.mxu0
      %v917 = vadd.f32 %v840, %v916
      %v918 = vpop.f32.mrf.mxu0
      %v919 = vpop.f32.mrf.mxu0
      %v920 = vadd.f32 %v840, %v919
      %v921 = vpop.f32.mrf.mxu0
      %922 = vmatprep.mubr.bf16.mxu0 0
      %923 = vmatmul.mubr.bf16.gmra.mxu0 %v864
      %v924 = vpop.f32.mrf.mxu0
      %v925 = vadd.f32 %v840, %v924
      %v926 = vpop.f32.mrf.mxu0
      %v927 = vpop.f32.mrf.mxu0
      %v928 = vadd.f32 %v840, %v927
      %v929 = vpop.f32.mrf.mxu0
      %930 = vdwg.mxu0
      %v931 = vpack.c.bf16 %v904, %v901
      %v932 = vpack.c.bf16 %v912, %v909
      %v933 = vpack.c.bf16 %v920, %v917
      %v934 = vpack.c.bf16 %v928, %v925
      %v939 = vunpack.c.l.b16 %v931
      %v940 = vunpack.c.h.b16 %v931
      %v941 = vunpack.c.l.b16 %v932
      %v942 = vunpack.c.h.b16 %v932
      %v943 = vunpack.c.l.b16 %v933
      %v944 = vunpack.c.h.b16 %v933
      %v945 = vunpack.c.l.b16 %v934
      %v946 = vunpack.c.h.b16 %v934
      %v947 = vpack.c.b16 %v939, %v939
      %v948 = vpack.c.b16 %v940, %v940
      %v949 = vpack.c.b16 %v941, %v941
      %v950 = vpack.c.b16 %v942, %v942
      %v951 = vpack.c.b16 %v943, %v943
      %v952 = vpack.c.b16 %v944, %v944
      %v953 = vpack.c.b16 %v945, %v945
      %v954 = vpack.c.b16 %v946, %v946
      %s955 = scalar_lea.vmem %s6, 128
      %v956 = vld [vmem:[%s955] sm:$0xf]
      %v957 = vld [vmem:[%s955 + $0x4] sm:$0xf]
      %v958 = vld [vmem:[%s955 + $0x8] sm:$0xf]
      %v959 = vld [vmem:[%s955 + $0xc] sm:$0xf]
      %s960 = scalar_lea.vmem %s7, 8
      %v961 = vld [vmem:[%s960] sm:$0x1]
      %v963 = vlaneseq
      %v964 = vshrl.u32 %v963, 7
      %v965 = vsub.s32 0, %v964
      %v966 = vrot.slane %v961, %v965
      %v972 = vunpack.c.l.b16 %v956
      %v973 = vunpack.c.l.b16 %v957
      %v974 = vunpack.c.l.b16 %v958
      %v975 = vunpack.c.l.b16 %v959
      %v976 = vpack.c.b16 %v973, %v972
      %v977 = vpack.c.b16 %v975, %v974
      %980 = vmatprep.subr.bf16.mxu0 0
      %981 = vmatpush1.bf16.msra.mxu0 0
      %982 = vmatprep.subr.bf16.mxu0 0
      %983 = vmatpush1.bf16.msra.mxu0 0
      %984 = vmatprep.subr.bf16.mxu0 0
      %985 = vmatpush1.bf16.msra.mxu0 0
      %986 = vmatprep.subr.bf16.mxu0 0
      %987 = vmatpush1.bf16.msra.mxu0 0
      %988 = vmatprep.subr.bf16.mxu0 0
      %989 = vmatpush1.bf16.msra.mxu0 0
      %990 = vmatprep.subr.bf16.mxu0 0
      %991 = vmatpush1.bf16.msra.mxu0 0
      %992 = vmatprep.subr.bf16.mxu0 0
      %993 = vmatpush1.bf16.msra.mxu0 %v977
      %994 = vmatprep.subr.bf16.mxu0 0
      %995 = vmatpush1.bf16.msra.mxu0 %v976
      %996 = vmatprep.subr.bf16.mxu0 0
      %997 = vmatpush2.bf16.msra.mxu0 0
      %998 = vmatprep.subr.bf16.mxu0 0
      %999 = vmatpush2.bf16.msra.mxu0 0
      %1000 = vmatprep.subr.bf16.mxu0 0
      %1001 = vmatpush2.bf16.msra.mxu0 0
      %1002 = vmatprep.subr.bf16.mxu0 0
      %1003 = vmatpush2.bf16.msra.mxu0 0
      %1004 = vmatprep.subr.bf16.mxu0 0
      %1005 = vmatpush2.bf16.msra.mxu0 0
      %1006 = vmatprep.subr.bf16.mxu0 0
      %1007 = vmatpush2.bf16.msra.mxu0 0
      %1008 = vmatprep.subr.bf16.mxu0 0
      %1009 = vmatpush2.bf16.msra.mxu0 0
      %1010 = vmatprep.subr.bf16.mxu0 0
      %1011 = vmatpush2.bf16.msra.mxu0 0
      %1012 = vmatprep.mubr.bf16.mxu0 0
      %1013 = vmatmul.mubr.bf16.gmra.mxu0 %v855
      %v1014 = vpop.f32.mrf.mxu0
      %v1015 = vadd.f32 %v966, %v1014
      %v1016 = vpop.f32.mrf.mxu0
      %v1017 = vpop.f32.mrf.mxu0
      %v1018 = vadd.f32 %v966, %v1017
      %v1019 = vpop.f32.mrf.mxu0
      %1020 = vmatprep.mubr.bf16.mxu0 0
      %1021 = vmatmul.mubr.bf16.gmra.mxu0 %v858
      %v1022 = vpop.f32.mrf.mxu0
      %v1023 = vadd.f32 %v966, %v1022
      %v1024 = vpop.f32.mrf.mxu0
      %v1025 = vpop.f32.mrf.mxu0
      %v1026 = vadd.f32 %v966, %v1025
      %v1027 = vpop.f32.mrf.mxu0
      %1028 = vmatprep.mubr.bf16.mxu0 0
      %1029 = vmatmul.mubr.bf16.gmra.mxu0 %v861
      %v1030 = vpop.f32.mrf.mxu0
      %v1031 = vadd.f32 %v966, %v1030
      %v1032 = vpop.f32.mrf.mxu0
      %v1033 = vpop.f32.mrf.mxu0
      %v1034 = vadd.f32 %v966, %v1033
      %v1035 = vpop.f32.mrf.mxu0
      %1036 = vmatprep.mubr.bf16.mxu0 0
      %1037 = vmatmul.mubr.bf16.gmra.mxu0 %v864
      %v1038 = vpop.f32.mrf.mxu0
      %v1039 = vadd.f32 %v966, %v1038
      %v1040 = vpop.f32.mrf.mxu0
      %v1041 = vpop.f32.mrf.mxu0
      %v1042 = vadd.f32 %v966, %v1041
      %v1043 = vpop.f32.mrf.mxu0
      %1044 = vdwg.mxu0
      %v1045 = vpack.c.bf16 %v1018, %v1015
      %v1046 = vpack.c.bf16 %v1026, %v1023
      %v1047 = vpack.c.bf16 %v1034, %v1031
      %v1048 = vpack.c.bf16 %v1042, %v1039
      %v1053 = vunpack.c.l.b16 %v1045
      %v1054 = vunpack.c.h.b16 %v1045
      %v1055 = vunpack.c.l.b16 %v1046
      %v1056 = vunpack.c.h.b16 %v1046
      %v1057 = vunpack.c.l.b16 %v1047
      %v1058 = vunpack.c.h.b16 %v1047
      %v1059 = vunpack.c.l.b16 %v1048
      %v1060 = vunpack.c.h.b16 %v1048
      %v1061 = vpack.c.b16 %v1053, %v1053
      %v1062 = vpack.c.b16 %v1054, %v1054
      %v1063 = vpack.c.b16 %v1055, %v1055
      %v1064 = vpack.c.b16 %v1056, %v1056
      %v1065 = vpack.c.b16 %v1057, %v1057
      %v1066 = vpack.c.b16 %v1058, %v1058
      %v1067 = vpack.c.b16 %v1059, %v1059
      %v1068 = vpack.c.b16 %v1060, %v1060
      %vm1069 = vcmask 64512
      %v1071 = vsel %vm1069, %v821, 0
      %v1074 = vsel %vm1069, %v947, 0
      %1076 = vmatprep.subr.bf16.mxu0 0
      %1077 = vmatpush1.bf16.xpose.msra.mxu0 0
      %1078 = vmatprep.subr.bf16.mxu0 0
      %1079 = vmatpush1.bf16.xpose.msra.mxu0 0
      %1080 = vmatprep.subr.bf16.mxu0 0
      %1081 = vmatpush1.bf16.xpose.msra.mxu0 0
      %1082 = vmatprep.subr.bf16.mxu0 0
      %1083 = vmatpush1.bf16.xpose.msra.mxu0 0
      %1084 = vmatprep.subr.bf16.mxu0 0
      %1085 = vmatpush1.bf16.xpose.msra.mxu0 0
      %1086 = vmatprep.subr.bf16.mxu0 0
      %1087 = vmatpush1.bf16.xpose.msra.mxu0 0
      %1088 = vmatprep.subr.bf16.mxu0 0
      %1089 = vmatpush1.bf16.xpose.msra.mxu0 0
      %1090 = vmatprep.subr.bf16.mxu0 0
      %1091 = vmatpush1.bf16.xpose.msra.mxu0 %v1074
      %1092 = vmatprep.subr.bf16.mxu0 0
      %1093 = vmatpush2.bf16.xpose.msra.mxu0 0
      %1094 = vmatprep.subr.bf16.mxu0 0
      %1095 = vmatpush2.bf16.xpose.msra.mxu0 0
      %1096 = vmatprep.subr.bf16.mxu0 0
      %1097 = vmatpush2.bf16.xpose.msra.mxu0 0
      %1098 = vmatprep.subr.bf16.mxu0 0
      %1099 = vmatpush2.bf16.xpose.msra.mxu0 0
      %1100 = vmatprep.subr.bf16.mxu0 0
      %1101 = vmatpush2.bf16.xpose.msra.mxu0 0
      %1102 = vmatprep.subr.bf16.mxu0 0
      %1103 = vmatpush2.bf16.xpose.msra.mxu0 0
      %1104 = vmatprep.subr.bf16.mxu0 0
      %1105 = vmatpush2.bf16.xpose.msra.mxu0 0
      %1106 = vmatprep.subr.bf16.mxu0 0
      %1107 = vmatpush2.bf16.xpose.msra.mxu0 0
      %1108 = vmatprep.mubr.bf16.mxu0 0
      %1109 = vmatmul.mubr.bf16.gmra.mxu0 %v1071
      %v1110 = vpop.f32.mrf.mxu0
      %v1111 = vadd.f32 %v431, %v1110
      %v1112 = vpop.f32.mrf.mxu0
      %v1113 = vpop.f32.mrf.mxu0
      %v1114 = vpop.f32.mrf.mxu0
      %1115 = vdwg.mxu0
      %v1117 = vsel %vm1069, %v822, 0
      %v1120 = vsel %vm1069, %v948, 0
      %1122 = vmatprep.subr.bf16.mxu0 0
      %1123 = vmatpush1.bf16.xpose.msra.mxu0 0
      %1124 = vmatprep.subr.bf16.mxu0 0
      %1125 = vmatpush1.bf16.xpose.msra.mxu0 0
      %1126 = vmatprep.subr.bf16.mxu0 0
      %1127 = vmatpush1.bf16.xpose.msra.mxu0 0
      %1128 = vmatprep.subr.bf16.mxu0 0
      %1129 = vmatpush1.bf16.xpose.msra.mxu0 0
      %1130 = vmatprep.subr.bf16.mxu0 0
      %1131 = vmatpush1.bf16.xpose.msra.mxu0 0
      %1132 = vmatprep.subr.bf16.mxu0 0
      %1133 = vmatpush1.bf16.xpose.msra.mxu0 0
      %1134 = vmatprep.subr.bf16.mxu0 0
      %1135 = vmatpush1.bf16.xpose.msra.mxu0 0
      %1136 = vmatprep.subr.bf16.mxu0 0
      %1137 = vmatpush1.bf16.xpose.msra.mxu0 %v1120
      %1138 = vmatprep.subr.bf16.mxu0 0
      %1139 = vmatpush2.bf16.xpose.msra.mxu0 0
      %1140 = vmatprep.subr.bf16.mxu0 0
      %1141 = vmatpush2.bf16.xpose.msra.mxu0 0
      %1142 = vmatprep.subr.bf16.mxu0 0
      %1143 = vmatpush2.bf16.xpose.msra.mxu0 0
      %1144 = vmatprep.subr.bf16.mxu0 0
      %1145 = vmatpush2.bf16.xpose.msra.mxu0 0
      %1146 = vmatprep.subr.bf16.mxu0 0
      %1147 = vmatpush2.bf16.xpose.msra.mxu0 0
      %1148 = vmatprep.subr.bf16.mxu0 0
      %1149 = vmatpush2.bf16.xpose.msra.mxu0 0
      %1150 = vmatprep.subr.bf16.mxu0 0
      %1151 = vmatpush2.bf16.xpose.msra.mxu0 0
      %1152 = vmatprep.subr.bf16.mxu0 0
      %1153 = vmatpush2.bf16.xpose.msra.mxu0 0
      %1154 = vmatprep.mubr.bf16.mxu0 0
      %1155 = vmatmul.mubr.bf16.gmra.mxu0 %v1117
      %v1156 = vpop.f32.mrf.mxu0
      %v1157 = vadd.f32 %v431, %v1156
      %v1158 = vpop.f32.mrf.mxu0
      %v1159 = vpop.f32.mrf.mxu0
      %v1160 = vpop.f32.mrf.mxu0
      %1161 = vdwg.mxu0
      %v1163 = vsel %vm1069, %v823, 0
      %v1166 = vsel %vm1069, %v949, 0
      %1168 = vmatprep.subr.bf16.mxu0 0
      %1169 = vmatpush1.bf16.xpose.msra.mxu0 0
      %1170 = vmatprep.subr.bf16.mxu0 0
      %1171 = vmatpush1.bf16.xpose.msra.mxu0 0
      %1172 = vmatprep.subr.bf16.mxu0 0
      %1173 = vmatpush1.bf16.xpose.msra.mxu0 0
      %1174 = vmatprep.subr.bf16.mxu0 0
      %1175 = vmatpush1.bf16.xpose.msra.mxu0 0
      %1176 = vmatprep.subr.bf16.mxu0 0
      %1177 = vmatpush1.bf16.xpose.msra.mxu0 0
      %1178 = vmatprep.subr.bf16.mxu0 0
      %1179 = vmatpush1.bf16.xpose.msra.mxu0 0
      %1180 = vmatprep.subr.bf16.mxu0 0
      %1181 = vmatpush1.bf16.xpose.msra.mxu0 0
      %1182 = vmatprep.subr.bf16.mxu0 0
      %1183 = vmatpush1.bf16.xpose.msra.mxu0 %v1166
      %1184 = vmatprep.subr.bf16.mxu0 0
      %1185 = vmatpush2.bf16.xpose.msra.mxu0 0
      %1186 = vmatprep.subr.bf16.mxu0 0
      %1187 = vmatpush2.bf16.xpose.msra.mxu0 0
      %1188 = vmatprep.subr.bf16.mxu0 0
      %1189 = vmatpush2.bf16.xpose.msra.mxu0 0
      %1190 = vmatprep.subr.bf16.mxu0 0
      %1191 = vmatpush2.bf16.xpose.msra.mxu0 0
      %1192 = vmatprep.subr.bf16.mxu0 0
      %1193 = vmatpush2.bf16.xpose.msra.mxu0 0
      %1194 = vmatprep.subr.bf16.mxu0 0
      %1195 = vmatpush2.bf16.xpose.msra.mxu0 0
      %1196 = vmatprep.subr.bf16.mxu0 0
      %1197 = vmatpush2.bf16.xpose.msra.mxu0 0
      %1198 = vmatprep.subr.bf16.mxu0 0
      %1199 = vmatpush2.bf16.xpose.msra.mxu0 0
      %1200 = vmatprep.mubr.bf16.mxu0 0
      %1201 = vmatmul.mubr.bf16.gmra.mxu0 %v1163
      %v1202 = vpop.f32.mrf.mxu0
      %v1203 = vadd.f32 %v431, %v1202
      %v1204 = vpop.f32.mrf.mxu0
      %v1205 = vpop.f32.mrf.mxu0
      %v1206 = vpop.f32.mrf.mxu0
      %1207 = vdwg.mxu0
      %v1209 = vsel %vm1069, %v824, 0
      %v1212 = vsel %vm1069, %v950, 0
      %1214 = vmatprep.subr.bf16.mxu0 0
      %1215 = vmatpush1.bf16.xpose.msra.mxu0 0
      %1216 = vmatprep.subr.bf16.mxu0 0
      %1217 = vmatpush1.bf16.xpose.msra.mxu0 0
      %1218 = vmatprep.subr.bf16.mxu0 0
      %1219 = vmatpush1.bf16.xpose.msra.mxu0 0
      %1220 = vmatprep.subr.bf16.mxu0 0
      %1221 = vmatpush1.bf16.xpose.msra.mxu0 0
      %1222 = vmatprep.subr.bf16.mxu0 0
      %1223 = vmatpush1.bf16.xpose.msra.mxu0 0
      %1224 = vmatprep.subr.bf16.mxu0 0
      %1225 = vmatpush1.bf16.xpose.msra.mxu0 0
      %1226 = vmatprep.subr.bf16.mxu0 0
      %1227 = vmatpush1.bf16.xpose.msra.mxu0 0
      %1228 = vmatprep.subr.bf16.mxu0 0
      %1229 = vmatpush1.bf16.xpose.msra.mxu0 %v1212
      %1230 = vmatprep.subr.bf16.mxu0 0
      %1231 = vmatpush2.bf16.xpose.msra.mxu0 0
      %1232 = vmatprep.subr.bf16.mxu0 0
      %1233 = vmatpush2.bf16.xpose.msra.mxu0 0
      %1234 = vmatprep.subr.bf16.mxu0 0
      %1235 = vmatpush2.bf16.xpose.msra.mxu0 0
      %1236 = vmatprep.subr.bf16.mxu0 0
      %1237 = vmatpush2.bf16.xpose.msra.mxu0 0
      %1238 = vmatprep.subr.bf16.mxu0 0
      %1239 = vmatpush2.bf16.xpose.msra.mxu0 0
      %1240 = vmatprep.subr.bf16.mxu0 0
      %1241 = vmatpush2.bf16.xpose.msra.mxu0 0
      %1242 = vmatprep.subr.bf16.mxu0 0
      %1243 = vmatpush2.bf16.xpose.msra.mxu0 0
      %1244 = vmatprep.subr.bf16.mxu0 0
      %1245 = vmatpush2.bf16.xpose.msra.mxu0 0
      %1246 = vmatprep.mubr.bf16.mxu0 0
      %1247 = vmatmul.mubr.bf16.gmra.mxu0 %v1209
      %v1248 = vpop.f32.mrf.mxu0
      %v1249 = vadd.f32 %v431, %v1248
      %v1250 = vpop.f32.mrf.mxu0
      %v1251 = vpop.f32.mrf.mxu0
      %v1252 = vpop.f32.mrf.mxu0
      %1253 = vdwg.mxu0
      %v1255 = vsel %vm1069, %v825, 0
      %v1258 = vsel %vm1069, %v951, 0
      %1260 = vmatprep.subr.bf16.mxu0 0
      %1261 = vmatpush1.bf16.xpose.msra.mxu0 0
      %1262 = vmatprep.subr.bf16.mxu0 0
      %1263 = vmatpush1.bf16.xpose.msra.mxu0 0
      %1264 = vmatprep.subr.bf16.mxu0 0
      %1265 = vmatpush1.bf16.xpose.msra.mxu0 0
      %1266 = vmatprep.subr.bf16.mxu0 0
      %1267 = vmatpush1.bf16.xpose.msra.mxu0 0
      %1268 = vmatprep.subr.bf16.mxu0 0
      %1269 = vmatpush1.bf16.xpose.msra.mxu0 0
      %1270 = vmatprep.subr.bf16.mxu0 0
      %1271 = vmatpush1.bf16.xpose.msra.mxu0 0
      %1272 = vmatprep.subr.bf16.mxu0 0
      %1273 = vmatpush1.bf16.xpose.msra.mxu0 0
      %1274 = vmatprep.subr.bf16.mxu0 0
      %1275 = vmatpush1.bf16.xpose.msra.mxu0 %v1258
      %1276 = vmatprep.subr.bf16.mxu0 0
      %1277 = vmatpush2.bf16.xpose.msra.mxu0 0
      %1278 = vmatprep.subr.bf16.mxu0 0
      %1279 = vmatpush2.bf16.xpose.msra.mxu0 0
      %1280 = vmatprep.subr.bf16.mxu0 0
      %1281 = vmatpush2.bf16.xpose.msra.mxu0 0
      %1282 = vmatprep.subr.bf16.mxu0 0
      %1283 = vmatpush2.bf16.xpose.msra.mxu0 0
      %1284 = vmatprep.subr.bf16.mxu0 0
      %1285 = vmatpush2.bf16.xpose.msra.mxu0 0
      %1286 = vmatprep.subr.bf16.mxu0 0
      %1287 = vmatpush2.bf16.xpose.msra.mxu0 0
      %1288 = vmatprep.subr.bf16.mxu0 0
      %1289 = vmatpush2.bf16.xpose.msra.mxu0 0
      %1290 = vmatprep.subr.bf16.mxu0 0
      %1291 = vmatpush2.bf16.xpose.msra.mxu0 0
      %1292 = vmatprep.mubr.bf16.mxu0 0
      %1293 = vmatmul.mubr.bf16.gmra.mxu0 %v1255
      %v1294 = vpop.f32.mrf.mxu0
      %v1295 = vadd.f32 %v431, %v1294
      %v1296 = vpop.f32.mrf.mxu0
      %v1297 = vpop.f32.mrf.mxu0
      %v1298 = vpop.f32.mrf.mxu0
      %1299 = vdwg.mxu0
      %v1301 = vsel %vm1069, %v826, 0
      %v1304 = vsel %vm1069, %v952, 0
      %1306 = vmatprep.subr.bf16.mxu0 0
      %1307 = vmatpush1.bf16.xpose.msra.mxu0 0
      %1308 = vmatprep.subr.bf16.mxu0 0
      %1309 = vmatpush1.bf16.xpose.msra.mxu0 0
      %1310 = vmatprep.subr.bf16.mxu0 0
      %1311 = vmatpush1.bf16.xpose.msra.mxu0 0
      %1312 = vmatprep.subr.bf16.mxu0 0
      %1313 = vmatpush1.bf16.xpose.msra.mxu0 0
      %1314 = vmatprep.subr.bf16.mxu0 0
      %1315 = vmatpush1.bf16.xpose.msra.mxu0 0
      %1316 = vmatprep.subr.bf16.mxu0 0
      %1317 = vmatpush1.bf16.xpose.msra.mxu0 0
      %1318 = vmatprep.subr.bf16.mxu0 0
      %1319 = vmatpush1.bf16.xpose.msra.mxu0 0
      %1320 = vmatprep.subr.bf16.mxu0 0
      %1321 = vmatpush1.bf16.xpose.msra.mxu0 %v1304
      %1322 = vmatprep.subr.bf16.mxu0 0
      %1323 = vmatpush2.bf16.xpose.msra.mxu0 0
      %1324 = vmatprep.subr.bf16.mxu0 0
      %1325 = vmatpush2.bf16.xpose.msra.mxu0 0
      %1326 = vmatprep.subr.bf16.mxu0 0
      %1327 = vmatpush2.bf16.xpose.msra.mxu0 0
      %1328 = vmatprep.subr.bf16.mxu0 0
      %1329 = vmatpush2.bf16.xpose.msra.mxu0 0
      %1330 = vmatprep.subr.bf16.mxu0 0
      %1331 = vmatpush2.bf16.xpose.msra.mxu0 0
      %1332 = vmatprep.subr.bf16.mxu0 0
      %1333 = vmatpush2.bf16.xpose.msra.mxu0 0
      %1334 = vmatprep.subr.bf16.mxu0 0
      %1335 = vmatpush2.bf16.xpose.msra.mxu0 0
      %1336 = vmatprep.subr.bf16.mxu0 0
      %1337 = vmatpush2.bf16.xpose.msra.mxu0 0
      %1338 = vmatprep.mubr.bf16.mxu0 0
      %1339 = vmatmul.mubr.bf16.gmra.mxu0 %v1301
      %v1340 = vpop.f32.mrf.mxu0
      %v1341 = vadd.f32 %v431, %v1340
      %v1342 = vpop.f32.mrf.mxu0
      %v1343 = vpop.f32.mrf.mxu0
      %v1344 = vpop.f32.mrf.mxu0
      %1345 = vdwg.mxu0
      %v1347 = vsel %vm1069, %v827, 0
      %v1350 = vsel %vm1069, %v953, 0
      %1352 = vmatprep.subr.bf16.mxu0 0
      %1353 = vmatpush1.bf16.xpose.msra.mxu0 0
      %1354 = vmatprep.subr.bf16.mxu0 0
      %1355 = vmatpush1.bf16.xpose.msra.mxu0 0
      %1356 = vmatprep.subr.bf16.mxu0 0
      %1357 = vmatpush1.bf16.xpose.msra.mxu0 0
      %1358 = vmatprep.subr.bf16.mxu0 0
      %1359 = vmatpush1.bf16.xpose.msra.mxu0 0
      %1360 = vmatprep.subr.bf16.mxu0 0
      %1361 = vmatpush1.bf16.xpose.msra.mxu0 0
      %1362 = vmatprep.subr.bf16.mxu0 0
      %1363 = vmatpush1.bf16.xpose.msra.mxu0 0
      %1364 = vmatprep.subr.bf16.mxu0 0
      %1365 = vmatpush1.bf16.xpose.msra.mxu0 0
      %1366 = vmatprep.subr.bf16.mxu0 0
      %1367 = vmatpush1.bf16.xpose.msra.mxu0 %v1350
      %1368 = vmatprep.subr.bf16.mxu0 0
      %1369 = vmatpush2.bf16.xpose.msra.mxu0 0
      %1370 = vmatprep.subr.bf16.mxu0 0
      %1371 = vmatpush2.bf16.xpose.msra.mxu0 0
      %1372 = vmatprep.subr.bf16.mxu0 0
      %1373 = vmatpush2.bf16.xpose.msra.mxu0 0
      %1374 = vmatprep.subr.bf16.mxu0 0
      %1375 = vmatpush2.bf16.xpose.msra.mxu0 0
      %1376 = vmatprep.subr.bf16.mxu0 0
      %1377 = vmatpush2.bf16.xpose.msra.mxu0 0
      %1378 = vmatprep.subr.bf16.mxu0 0
      %1379 = vmatpush2.bf16.xpose.msra.mxu0 0
      %1380 = vmatprep.subr.bf16.mxu0 0
      %1381 = vmatpush2.bf16.xpose.msra.mxu0 0
      %1382 = vmatprep.subr.bf16.mxu0 0
      %1383 = vmatpush2.bf16.xpose.msra.mxu0 0
      %1384 = vmatprep.mubr.bf16.mxu0 0
      %1385 = vmatmul.mubr.bf16.gmra.mxu0 %v1347
      %v1386 = vpop.f32.mrf.mxu0
      %v1387 = vadd.f32 %v431, %v1386
      %v1388 = vpop.f32.mrf.mxu0
      %v1389 = vpop.f32.mrf.mxu0
      %v1390 = vpop.f32.mrf.mxu0
      %1391 = vdwg.mxu0
      %v1393 = vsel %vm1069, %v828, 0
      %v1396 = vsel %vm1069, %v954, 0
      %1398 = vmatprep.subr.bf16.mxu0 0
      %1399 = vmatpush1.bf16.xpose.msra.mxu0 0
      %1400 = vmatprep.subr.bf16.mxu0 0
      %1401 = vmatpush1.bf16.xpose.msra.mxu0 0
      %1402 = vmatprep.subr.bf16.mxu0 0
      %1403 = vmatpush1.bf16.xpose.msra.mxu0 0
      %1404 = vmatprep.subr.bf16.mxu0 0
      %1405 = vmatpush1.bf16.xpose.msra.mxu0 0
      %1406 = vmatprep.subr.bf16.mxu0 0
      %1407 = vmatpush1.bf16.xpose.msra.mxu0 0
      %1408 = vmatprep.subr.bf16.mxu0 0
      %1409 = vmatpush1.bf16.xpose.msra.mxu0 0
      %1410 = vmatprep.subr.bf16.mxu0 0
      %1411 = vmatpush1.bf16.xpose.msra.mxu0 0
      %1412 = vmatprep.subr.bf16.mxu0 0
      %1413 = vmatpush1.bf16.xpose.msra.mxu0 %v1396
      %1414 = vmatprep.subr.bf16.mxu0 0
      %1415 = vmatpush2.bf16.xpose.msra.mxu0 0
      %1416 = vmatprep.subr.bf16.mxu0 0
      %1417 = vmatpush2.bf16.xpose.msra.mxu0 0
      %1418 = vmatprep.subr.bf16.mxu0 0
      %1419 = vmatpush2.bf16.xpose.msra.mxu0 0
      %1420 = vmatprep.subr.bf16.mxu0 0
      %1421 = vmatpush2.bf16.xpose.msra.mxu0 0
      %1422 = vmatprep.subr.bf16.mxu0 0
      %1423 = vmatpush2.bf16.xpose.msra.mxu0 0
      %1424 = vmatprep.subr.bf16.mxu0 0
      %1425 = vmatpush2.bf16.xpose.msra.mxu0 0
      %1426 = vmatprep.subr.bf16.mxu0 0
      %1427 = vmatpush2.bf16.xpose.msra.mxu0 0
      %1428 = vmatprep.subr.bf16.mxu0 0
      %1429 = vmatpush2.bf16.xpose.msra.mxu0 0
      %1430 = vmatprep.mubr.bf16.mxu0 0
      %1431 = vmatmul.mubr.bf16.gmra.mxu0 %v1393
      %v1432 = vpop.f32.mrf.mxu0
      %v1433 = vadd.f32 %v431, %v1432
      %v1434 = vpop.f32.mrf.mxu0
      %v1435 = vpop.f32.mrf.mxu0
      %v1436 = vpop.f32.mrf.mxu0
      %1437 = vdwg.mxu0
      %v1438 = vsel %vm1069, %v1111, -inf
      %1439 = vmax.xlane.f32.xlu0 %v1438
      %v1440 = vpop.xlane.xlu0 %1439
      %v1441 = vsel %vm1069, %v1157, -inf
      %1442 = vmax.xlane.f32.xlu0 %v1441
      %v1443 = vpop.xlane.xlu0 %1442
      %v1444 = vsel %vm1069, %v1203, -inf
      %1445 = vmax.xlane.f32.xlu0 %v1444
      %v1446 = vpop.xlane.xlu0 %1445
      %v1447 = vsel %vm1069, %v1249, -inf
      %1448 = vmax.xlane.f32.xlu0 %v1447
      %v1449 = vpop.xlane.xlu0 %1448
      %v1450 = vsel %vm1069, %v1295, -inf
      %1451 = vmax.xlane.f32.xlu0 %v1450
      %v1452 = vpop.xlane.xlu0 %1451
      %v1453 = vsel %vm1069, %v1341, -inf
      %1454 = vmax.xlane.f32.xlu0 %v1453
      %v1455 = vpop.xlane.xlu0 %1454
      %v1456 = vsel %vm1069, %v1387, -inf
      %1457 = vmax.xlane.f32.xlu0 %v1456
      %v1458 = vpop.xlane.xlu0 %1457
      %v1459 = vsel %vm1069, %v1433, -inf
      %1460 = vmax.xlane.f32.xlu0 %v1459
      %v1461 = vpop.xlane.xlu0 %1460
      %v1462 = vsub.f32 %v1111, %v1440
      %v1463 = vsub.f32 %v1157, %v1443
      %v1464 = vsub.f32 %v1203, %v1446
      %v1465 = vsub.f32 %v1249, %v1449
      %v1466 = vsub.f32 %v1295, %v1452
      %v1467 = vsub.f32 %v1341, %v1455
      %v1468 = vsub.f32 %v1387, %v1458
      %v1469 = vsub.f32 %v1433, %v1461
      %v1470 = vmul.f32 %v1462, 1.442695
      %v1471 = vpow.pop %v1470
      %v1472 = vmul.f32 %v1463, 1.442695
      %v1473 = vpow.pop %v1472
      %v1474 = vmul.f32 %v1464, 1.442695
      %v1475 = vpow.pop %v1474
      %v1476 = vmul.f32 %v1465, 1.442695
      %v1477 = vpow.pop %v1476
      %v1478 = vmul.f32 %v1466, 1.442695
      %v1479 = vpow.pop %v1478
      %v1480 = vmul.f32 %v1467, 1.442695
      %v1481 = vpow.pop %v1480
      %v1482 = vmul.f32 %v1468, 1.442695
      %v1483 = vpow.pop %v1482
      %v1484 = vmul.f32 %v1469, 1.442695
      %v1485 = vpow.pop %v1484
      %v1486 = vsel %vm1069, %v1471, 0.0
      %1487 = vadd.xlane.f32.xlu0 %v1486
      %v1488 = vpop.xlane.xlu0 %1487
      %v1489 = vsel %vm1069, %v1473, 0.0
      %1490 = vadd.xlane.f32.xlu0 %v1489
      %v1491 = vpop.xlane.xlu0 %1490
      %v1492 = vsel %vm1069, %v1475, 0.0
      %1493 = vadd.xlane.f32.xlu0 %v1492
      %v1494 = vpop.xlane.xlu0 %1493
      %v1495 = vsel %vm1069, %v1477, 0.0
      %1496 = vadd.xlane.f32.xlu0 %v1495
      %v1497 = vpop.xlane.xlu0 %1496
      %v1498 = vsel %vm1069, %v1479, 0.0
      %1499 = vadd.xlane.f32.xlu0 %v1498
      %v1500 = vpop.xlane.xlu0 %1499
      %v1501 = vsel %vm1069, %v1481, 0.0
      %1502 = vadd.xlane.f32.xlu0 %v1501
      %v1503 = vpop.xlane.xlu0 %1502
      %v1504 = vsel %vm1069, %v1483, 0.0
      %1505 = vadd.xlane.f32.xlu0 %v1504
      %v1506 = vpop.xlane.xlu0 %1505
      %v1507 = vsel %vm1069, %v1485, 0.0
      %1508 = vadd.xlane.f32.xlu0 %v1507
      %v1509 = vpop.xlane.xlu0 %1508
      %v1510 = vrcp.pop %v1488
      %v1511 = vrcp.pop %v1491
      %v1512 = vrcp.pop %v1494
      %v1513 = vrcp.pop %v1497
      %v1514 = vrcp.pop %v1500
      %v1515 = vrcp.pop %v1503
      %v1516 = vrcp.pop %v1506
      %v1517 = vrcp.pop %v1509
      %v1518 = vmul.f32 %v1471, %v1510
      %v1519 = vmul.f32 %v1473, %v1511
      %v1520 = vmul.f32 %v1475, %v1512
      %v1521 = vmul.f32 %v1477, %v1513
      %v1522 = vmul.f32 %v1479, %v1514
      %v1523 = vmul.f32 %v1481, %v1515
      %v1524 = vmul.f32 %v1483, %v1516
      %v1525 = vmul.f32 %v1485, %v1517
      %v1526 = vpack.c.bf16 %v1518, %v1518
      %v1527 = vpack.c.bf16 %v1519, %v1519
      %v1528 = vpack.c.bf16 %v1520, %v1520
      %v1529 = vpack.c.bf16 %v1521, %v1521
      %v1530 = vpack.c.bf16 %v1522, %v1522
      %v1531 = vpack.c.bf16 %v1523, %v1523
      %v1532 = vpack.c.bf16 %v1524, %v1524
      %v1533 = vpack.c.bf16 %v1525, %v1525
      %v1535 = vsel %vm1069, %v1526, 0
      %vm1537 = vcmask 1043456
      %v1539 = vsel %vm1537, %v1061, 0
      %1541 = vmatprep.subr.bf16.mxu0 0
      %1542 = vmatpush1.bf16.msra.mxu0 0
      %1543 = vmatprep.subr.bf16.mxu0 0
      %1544 = vmatpush1.bf16.msra.mxu0 0
      %1545 = vmatprep.subr.bf16.mxu0 0
      %1546 = vmatpush1.bf16.msra.mxu0 0
      %1547 = vmatprep.subr.bf16.mxu0 0
      %1548 = vmatpush1.bf16.msra.mxu0 0
      %1549 = vmatprep.subr.bf16.mxu0 0
      %1550 = vmatpush1.bf16.msra.mxu0 0
      %1551 = vmatprep.subr.bf16.mxu0 0
      %1552 = vmatpush1.bf16.msra.mxu0 0
      %1553 = vmatprep.subr.bf16.mxu0 0
      %1554 = vmatpush1.bf16.msra.mxu0 0
      %1555 = vmatprep.subr.bf16.mxu0 0
      %1556 = vmatpush1.bf16.msra.mxu0 %v1539
      %1557 = vmatprep.subr.bf16.mxu0 0
      %1558 = vmatpush2.bf16.msra.mxu0 0
      %1559 = vmatprep.subr.bf16.mxu0 0
      %1560 = vmatpush2.bf16.msra.mxu0 0
      %1561 = vmatprep.subr.bf16.mxu0 0
      %1562 = vmatpush2.bf16.msra.mxu0 0
      %1563 = vmatprep.subr.bf16.mxu0 0
      %1564 = vmatpush2.bf16.msra.mxu0 0
      %1565 = vmatprep.subr.bf16.mxu0 0
      %1566 = vmatpush2.bf16.msra.mxu0 0
      %1567 = vmatprep.subr.bf16.mxu0 0
      %1568 = vmatpush2.bf16.msra.mxu0 0
      %1569 = vmatprep.subr.bf16.mxu0 0
      %1570 = vmatpush2.bf16.msra.mxu0 0
      %1571 = vmatprep.subr.bf16.mxu0 0
      %1572 = vmatpush2.bf16.msra.mxu0 0
      %1573 = vmatprep.mubr.bf16.mxu0 0
      %1574 = vmatmul.mubr.bf16.gmra.mxu0 %v1535
      %v1575 = vpop.f32.mrf.mxu0
      %v1576 = vadd.f32 0.0, %v1575
      %v1577 = vpop.f32.mrf.mxu0
      %v1578 = vpop.f32.mrf.mxu0
      %v1579 = vpop.f32.mrf.mxu0
      %1580 = vdwg.mxu0
      %v1582 = vsel %vm1069, %v1527, 0
      %v1585 = vsel %vm1537, %v1062, 0
      %1587 = vmatprep.subr.bf16.mxu0 0
      %1588 = vmatpush1.bf16.msra.mxu0 0
      %1589 = vmatprep.subr.bf16.mxu0 0
      %1590 = vmatpush1.bf16.msra.mxu0 0
      %1591 = vmatprep.subr.bf16.mxu0 0
      %1592 = vmatpush1.bf16.msra.mxu0 0
      %1593 = vmatprep.subr.bf16.mxu0 0
      %1594 = vmatpush1.bf16.msra.mxu0 0
      %1595 = vmatprep.subr.bf16.mxu0 0
      %1596 = vmatpush1.bf16.msra.mxu0 0
      %1597 = vmatprep.subr.bf16.mxu0 0
      %1598 = vmatpush1.bf16.msra.mxu0 0
      %1599 = vmatprep.subr.bf16.mxu0 0
      %1600 = vmatpush1.bf16.msra.mxu0 0
      %1601 = vmatprep.subr.bf16.mxu0 0
      %1602 = vmatpush1.bf16.msra.mxu0 %v1585
      %1603 = vmatprep.subr.bf16.mxu0 0
      %1604 = vmatpush2.bf16.msra.mxu0 0
      %1605 = vmatprep.subr.bf16.mxu0 0
      %1606 = vmatpush2.bf16.msra.mxu0 0
      %1607 = vmatprep.subr.bf16.mxu0 0
      %1608 = vmatpush2.bf16.msra.mxu0 0
      %1609 = vmatprep.subr.bf16.mxu0 0
      %1610 = vmatpush2.bf16.msra.mxu0 0
      %1611 = vmatprep.subr.bf16.mxu0 0
      %1612 = vmatpush2.bf16.msra.mxu0 0
      %1613 = vmatprep.subr.bf16.mxu0 0
      %1614 = vmatpush2.bf16.msra.mxu0 0
      %1615 = vmatprep.subr.bf16.mxu0 0
      %1616 = vmatpush2.bf16.msra.mxu0 0
      %1617 = vmatprep.subr.bf16.mxu0 0
      %1618 = vmatpush2.bf16.msra.mxu0 0
      %1619 = vmatprep.mubr.bf16.mxu0 0
      %1620 = vmatmul.mubr.bf16.gmra.mxu0 %v1582
      %v1621 = vpop.f32.mrf.mxu0
      %v1622 = vadd.f32 0.0, %v1621
      %v1623 = vpop.f32.mrf.mxu0
      %v1624 = vpop.f32.mrf.mxu0
      %v1625 = vpop.f32.mrf.mxu0
      %1626 = vdwg.mxu0
      %v1628 = vsel %vm1069, %v1528, 0
      %v1631 = vsel %vm1537, %v1063, 0
      %1633 = vmatprep.subr.bf16.mxu0 0
      %1634 = vmatpush1.bf16.msra.mxu0 0
      %1635 = vmatprep.subr.bf16.mxu0 0
      %1636 = vmatpush1.bf16.msra.mxu0 0
      %1637 = vmatprep.subr.bf16.mxu0 0
      %1638 = vmatpush1.bf16.msra.mxu0 0
      %1639 = vmatprep.subr.bf16.mxu0 0
      %1640 = vmatpush1.bf16.msra.mxu0 0
      %1641 = vmatprep.subr.bf16.mxu0 0
      %1642 = vmatpush1.bf16.msra.mxu0 0
      %1643 = vmatprep.subr.bf16.mxu0 0
      %1644 = vmatpush1.bf16.msra.mxu0 0
      %1645 = vmatprep.subr.bf16.mxu0 0
      %1646 = vmatpush1.bf16.msra.mxu0 0
      %1647 = vmatprep.subr.bf16.mxu0 0
      %1648 = vmatpush1.bf16.msra.mxu0 %v1631
      %1649 = vmatprep.subr.bf16.mxu0 0
      %1650 = vmatpush2.bf16.msra.mxu0 0
      %1651 = vmatprep.subr.bf16.mxu0 0
      %1652 = vmatpush2.bf16.msra.mxu0 0
      %1653 = vmatprep.subr.bf16.mxu0 0
      %1654 = vmatpush2.bf16.msra.mxu0 0
      %1655 = vmatprep.subr.bf16.mxu0 0
      %1656 = vmatpush2.bf16.msra.mxu0 0
      %1657 = vmatprep.subr.bf16.mxu0 0
      %1658 = vmatpush2.bf16.msra.mxu0 0
      %1659 = vmatprep.subr.bf16.mxu0 0
      %1660 = vmatpush2.bf16.msra.mxu0 0
      %1661 = vmatprep.subr.bf16.mxu0 0
      %1662 = vmatpush2.bf16.msra.mxu0 0
      %1663 = vmatprep.subr.bf16.mxu0 0
      %1664 = vmatpush2.bf16.msra.mxu0 0
      %1665 = vmatprep.mubr.bf16.mxu0 0
      %1666 = vmatmul.mubr.bf16.gmra.mxu0 %v1628
      %v1667 = vpop.f32.mrf.mxu0
      %v1668 = vadd.f32 0.0, %v1667
      %v1669 = vpop.f32.mrf.mxu0
      %v1670 = vpop.f32.mrf.mxu0
      %v1671 = vpop.f32.mrf.mxu0
      %1672 = vdwg.mxu0
      %v1674 = vsel %vm1069, %v1529, 0
      %v1677 = vsel %vm1537, %v1064, 0
      %1679 = vmatprep.subr.bf16.mxu0 0
      %1680 = vmatpush1.bf16.msra.mxu0 0
      %1681 = vmatprep.subr.bf16.mxu0 0
      %1682 = vmatpush1.bf16.msra.mxu0 0
      %1683 = vmatprep.subr.bf16.mxu0 0
      %1684 = vmatpush1.bf16.msra.mxu0 0
      %1685 = vmatprep.subr.bf16.mxu0 0
      %1686 = vmatpush1.bf16.msra.mxu0 0
      %1687 = vmatprep.subr.bf16.mxu0 0
      %1688 = vmatpush1.bf16.msra.mxu0 0
      %1689 = vmatprep.subr.bf16.mxu0 0
      %1690 = vmatpush1.bf16.msra.mxu0 0
      %1691 = vmatprep.subr.bf16.mxu0 0
      %1692 = vmatpush1.bf16.msra.mxu0 0
      %1693 = vmatprep.subr.bf16.mxu0 0
      %1694 = vmatpush1.bf16.msra.mxu0 %v1677
      %1695 = vmatprep.subr.bf16.mxu0 0
      %1696 = vmatpush2.bf16.msra.mxu0 0
      %1697 = vmatprep.subr.bf16.mxu0 0
      %1698 = vmatpush2.bf16.msra.mxu0 0
      %1699 = vmatprep.subr.bf16.mxu0 0
      %1700 = vmatpush2.bf16.msra.mxu0 0
      %1701 = vmatprep.subr.bf16.mxu0 0
      %1702 = vmatpush2.bf16.msra.mxu0 0
      %1703 = vmatprep.subr.bf16.mxu0 0
      %1704 = vmatpush2.bf16.msra.mxu0 0
      %1705 = vmatprep.subr.bf16.mxu0 0
      %1706 = vmatpush2.bf16.msra.mxu0 0
      %1707 = vmatprep.subr.bf16.mxu0 0
      %1708 = vmatpush2.bf16.msra.mxu0 0
      %1709 = vmatprep.subr.bf16.mxu0 0
      %1710 = vmatpush2.bf16.msra.mxu0 0
      %1711 = vmatprep.mubr.bf16.mxu0 0
      %1712 = vmatmul.mubr.bf16.gmra.mxu0 %v1674
      %v1713 = vpop.f32.mrf.mxu0
      %v1714 = vadd.f32 0.0, %v1713
      %v1715 = vpop.f32.mrf.mxu0
      %v1716 = vpop.f32.mrf.mxu0
      %v1717 = vpop.f32.mrf.mxu0
      %1718 = vdwg.mxu0
      %v1720 = vsel %vm1069, %v1530, 0
      %v1723 = vsel %vm1537, %v1065, 0
      %1725 = vmatprep.subr.bf16.mxu0 0
      %1726 = vmatpush1.bf16.msra.mxu0 0
      %1727 = vmatprep.subr.bf16.mxu0 0
      %1728 = vmatpush1.bf16.msra.mxu0 0
      %1729 = vmatprep.subr.bf16.mxu0 0
      %1730 = vmatpush1.bf16.msra.mxu0 0
      %1731 = vmatprep.subr.bf16.mxu0 0
      %1732 = vmatpush1.bf16.msra.mxu0 0
      %1733 = vmatprep.subr.bf16.mxu0 0
      %1734 = vmatpush1.bf16.msra.mxu0 0
      %1735 = vmatprep.subr.bf16.mxu0 0
      %1736 = vmatpush1.bf16.msra.mxu0 0
      %1737 = vmatprep.subr.bf16.mxu0 0
      %1738 = vmatpush1.bf16.msra.mxu0 0
      %1739 = vmatprep.subr.bf16.mxu0 0
      %1740 = vmatpush1.bf16.msra.mxu0 %v1723
      %1741 = vmatprep.subr.bf16.mxu0 0
      %1742 = vmatpush2.bf16.msra.mxu0 0
      %1743 = vmatprep.subr.bf16.mxu0 0
      %1744 = vmatpush2.bf16.msra.mxu0 0
      %1745 = vmatprep.subr.bf16.mxu0 0
      %1746 = vmatpush2.bf16.msra.mxu0 0
      %1747 = vmatprep.subr.bf16.mxu0 0
      %1748 = vmatpush2.bf16.msra.mxu0 0
      %1749 = vmatprep.subr.bf16.mxu0 0
      %1750 = vmatpush2.bf16.msra.mxu0 0
      %1751 = vmatprep.subr.bf16.mxu0 0
      %1752 = vmatpush2.bf16.msra.mxu0 0
      %1753 = vmatprep.subr.bf16.mxu0 0
      %1754 = vmatpush2.bf16.msra.mxu0 0
      %1755 = vmatprep.subr.bf16.mxu0 0
      %1756 = vmatpush2.bf16.msra.mxu0 0
      %1757 = vmatprep.mubr.bf16.mxu0 0
      %1758 = vmatmul.mubr.bf16.gmra.mxu0 %v1720
      %v1759 = vpop.f32.mrf.mxu0
      %v1760 = vadd.f32 0.0, %v1759
      %v1761 = vpop.f32.mrf.mxu0
      %v1762 = vpop.f32.mrf.mxu0
      %v1763 = vpop.f32.mrf.mxu0
      %1764 = vdwg.mxu0
      %v1766 = vsel %vm1069, %v1531, 0
      %v1769 = vsel %vm1537, %v1066, 0
      %1771 = vmatprep.subr.bf16.mxu0 0
      %1772 = vmatpush1.bf16.msra.mxu0 0
      %1773 = vmatprep.subr.bf16.mxu0 0
      %1774 = vmatpush1.bf16.msra.mxu0 0
      %1775 = vmatprep.subr.bf16.mxu0 0
      %1776 = vmatpush1.bf16.msra.mxu0 0
      %1777 = vmatprep.subr.bf16.mxu0 0
      %1778 = vmatpush1.bf16.msra.mxu0 0
      %1779 = vmatprep.subr.bf16.mxu0 0
      %1780 = vmatpush1.bf16.msra.mxu0 0
      %1781 = vmatprep.subr.bf16.mxu0 0
      %1782 = vmatpush1.bf16.msra.mxu0 0
      %1783 = vmatprep.subr.bf16.mxu0 0
      %1784 = vmatpush1.bf16.msra.mxu0 0
      %1785 = vmatprep.subr.bf16.mxu0 0
      %1786 = vmatpush1.bf16.msra.mxu0 %v1769
      %1787 = vmatprep.subr.bf16.mxu0 0
      %1788 = vmatpush2.bf16.msra.mxu0 0
      %1789 = vmatprep.subr.bf16.mxu0 0
      %1790 = vmatpush2.bf16.msra.mxu0 0
      %1791 = vmatprep.subr.bf16.mxu0 0
      %1792 = vmatpush2.bf16.msra.mxu0 0
      %1793 = vmatprep.subr.bf16.mxu0 0
      %1794 = vmatpush2.bf16.msra.mxu0 0
      %1795 = vmatprep.subr.bf16.mxu0 0
      %1796 = vmatpush2.bf16.msra.mxu0 0
      %1797 = vmatprep.subr.bf16.mxu0 0
      %1798 = vmatpush2.bf16.msra.mxu0 0
      %1799 = vmatprep.subr.bf16.mxu0 0
      %1800 = vmatpush2.bf16.msra.mxu0 0
      %1801 = vmatprep.subr.bf16.mxu0 0
      %1802 = vmatpush2.bf16.msra.mxu0 0
      %1803 = vmatprep.mubr.bf16.mxu0 0
      %1804 = vmatmul.mubr.bf16.gmra.mxu0 %v1766
      %v1805 = vpop.f32.mrf.mxu0
      %v1806 = vadd.f32 0.0, %v1805
      %v1807 = vpop.f32.mrf.mxu0
      %v1808 = vpop.f32.mrf.mxu0
      %v1809 = vpop.f32.mrf.mxu0
      %1810 = vdwg.mxu0
      %v1812 = vsel %vm1069, %v1532, 0
      %v1815 = vsel %vm1537, %v1067, 0
      %1817 = vmatprep.subr.bf16.mxu0 0
      %1818 = vmatpush1.bf16.msra.mxu0 0
      %1819 = vmatprep.subr.bf16.mxu0 0
      %1820 = vmatpush1.bf16.msra.mxu0 0
      %1821 = vmatprep.subr.bf16.mxu0 0
      %1822 = vmatpush1.bf16.msra.mxu0 0
      %1823 = vmatprep.subr.bf16.mxu0 0
      %1824 = vmatpush1.bf16.msra.mxu0 0
      %1825 = vmatprep.subr.bf16.mxu0 0
      %1826 = vmatpush1.bf16.msra.mxu0 0
      %1827 = vmatprep.subr.bf16.mxu0 0
      %1828 = vmatpush1.bf16.msra.mxu0 0
      %1829 = vmatprep.subr.bf16.mxu0 0
      %1830 = vmatpush1.bf16.msra.mxu0 0
      %1831 = vmatprep.subr.bf16.mxu0 0
      %1832 = vmatpush1.bf16.msra.mxu0 %v1815
      %1833 = vmatprep.subr.bf16.mxu0 0
      %1834 = vmatpush2.bf16.msra.mxu0 0
      %1835 = vmatprep.subr.bf16.mxu0 0
      %1836 = vmatpush2.bf16.msra.mxu0 0
      %1837 = vmatprep.subr.bf16.mxu0 0
      %1838 = vmatpush2.bf16.msra.mxu0 0
      %1839 = vmatprep.subr.bf16.mxu0 0
      %1840 = vmatpush2.bf16.msra.mxu0 0
      %1841 = vmatprep.subr.bf16.mxu0 0
      %1842 = vmatpush2.bf16.msra.mxu0 0
      %1843 = vmatprep.subr.bf16.mxu0 0
      %1844 = vmatpush2.bf16.msra.mxu0 0
      %1845 = vmatprep.subr.bf16.mxu0 0
      %1846 = vmatpush2.bf16.msra.mxu0 0
      %1847 = vmatprep.subr.bf16.mxu0 0
      %1848 = vmatpush2.bf16.msra.mxu0 0
      %1849 = vmatprep.mubr.bf16.mxu0 0
      %1850 = vmatmul.mubr.bf16.gmra.mxu0 %v1812
      %v1851 = vpop.f32.mrf.mxu0
      %v1852 = vadd.f32 0.0, %v1851
      %v1853 = vpop.f32.mrf.mxu0
      %v1854 = vpop.f32.mrf.mxu0
      %v1855 = vpop.f32.mrf.mxu0
      %1856 = vdwg.mxu0
      %v1858 = vsel %vm1069, %v1533, 0
      %v1861 = vsel %vm1537, %v1068, 0
      %1863 = vmatprep.subr.bf16.mxu0 0
      %1864 = vmatpush1.bf16.msra.mxu0 0
      %1865 = vmatprep.subr.bf16.mxu0 0
      %1866 = vmatpush1.bf16.msra.mxu0 0
      %1867 = vmatprep.subr.bf16.mxu0 0
      %1868 = vmatpush1.bf16.msra.mxu0 0
      %1869 = vmatprep.subr.bf16.mxu0 0
      %1870 = vmatpush1.bf16.msra.mxu0 0
      %1871 = vmatprep.subr.bf16.mxu0 0
      %1872 = vmatpush1.bf16.msra.mxu0 0
      %1873 = vmatprep.subr.bf16.mxu0 0
      %1874 = vmatpush1.bf16.msra.mxu0 0
      %1875 = vmatprep.subr.bf16.mxu0 0
      %1876 = vmatpush1.bf16.msra.mxu0 0
      %1877 = vmatprep.subr.bf16.mxu0 0
      %1878 = vmatpush1.bf16.msra.mxu0 %v1861
      %1879 = vmatprep.subr.bf16.mxu0 0
      %1880 = vmatpush2.bf16.msra.mxu0 0
      %1881 = vmatprep.subr.bf16.mxu0 0
      %1882 = vmatpush2.bf16.msra.mxu0 0
      %1883 = vmatprep.subr.bf16.mxu0 0
      %1884 = vmatpush2.bf16.msra.mxu0 0
      %1885 = vmatprep.subr.bf16.mxu0 0
      %1886 = vmatpush2.bf16.msra.mxu0 0
      %1887 = vmatprep.subr.bf16.mxu0 0
      %1888 = vmatpush2.bf16.msra.mxu0 0
      %1889 = vmatprep.subr.bf16.mxu0 0
      %1890 = vmatpush2.bf16.msra.mxu0 0
      %1891 = vmatprep.subr.bf16.mxu0 0
      %1892 = vmatpush2.bf16.msra.mxu0 0
      %1893 = vmatprep.subr.bf16.mxu0 0
      %1894 = vmatpush2.bf16.msra.mxu0 0
      %1895 = vmatprep.mubr.bf16.mxu0 0
      %1896 = vmatmul.mubr.bf16.gmra.mxu0 %v1858
      %v1897 = vpop.f32.mrf.mxu0
      %v1898 = vadd.f32 0.0, %v1897
      %v1899 = vpop.f32.mrf.mxu0
      %v1900 = vpop.f32.mrf.mxu0
      %v1901 = vpop.f32.mrf.mxu0
      %1902 = vdwg.mxu0
      %v1903 = vpack.c.bf16 %v1622, %v1576
      %v1904 = vpack.c.bf16 %v1714, %v1668
      %v1905 = vpack.c.bf16 %v1806, %v1760
      %v1906 = vpack.c.bf16 %v1898, %v1852
      %v1907 = vld [vmem:[%s8] sm:$0xf]
      %v1909 = vsel %vm1069, %v1903, 0
      %v1912 = vsel %vm1069, %v1904, 0
      %v1915 = vsel %vm1069, %v1905, 0
      %v1918 = vsel %vm1069, %v1906, 0
      %v1921 = vsel %vm1537, %v1907, 0
      %1923 = vmatprep.subr.bf16.mxu0 0
      %1924 = vmatpush1.bf16.msra.mxu0 0
      %1925 = vmatprep.subr.bf16.mxu0 0
      %1926 = vmatpush1.bf16.msra.mxu0 0
      %1927 = vmatprep.subr.bf16.mxu0 0
      %1928 = vmatpush1.bf16.msra.mxu0 0
      %1929 = vmatprep.subr.bf16.mxu0 0
      %1930 = vmatpush1.bf16.msra.mxu0 0
      %1931 = vmatprep.subr.bf16.mxu0 0
      %1932 = vmatpush1.bf16.msra.mxu0 0
      %1933 = vmatprep.subr.bf16.mxu0 0
      %1934 = vmatpush1.bf16.msra.mxu0 0
      %1935 = vmatprep.subr.bf16.mxu0 0
      %1936 = vmatpush1.bf16.msra.mxu0 0
      %1937 = vmatprep.subr.bf16.mxu0 0
      %1938 = vmatpush1.bf16.msra.mxu0 %v1921
      %1939 = vmatprep.subr.bf16.mxu0 0
      %1940 = vmatpush2.bf16.msra.mxu0 0
      %1941 = vmatprep.subr.bf16.mxu0 0
      %1942 = vmatpush2.bf16.msra.mxu0 0
      %1943 = vmatprep.subr.bf16.mxu0 0
      %1944 = vmatpush2.bf16.msra.mxu0 0
      %1945 = vmatprep.subr.bf16.mxu0 0
      %1946 = vmatpush2.bf16.msra.mxu0 0
      %1947 = vmatprep.subr.bf16.mxu0 0
      %1948 = vmatpush2.bf16.msra.mxu0 0
      %1949 = vmatprep.subr.bf16.mxu0 0
      %1950 = vmatpush2.bf16.msra.mxu0 0
      %1951 = vmatprep.subr.bf16.mxu0 0
      %1952 = vmatpush2.bf16.msra.mxu0 0
      %1953 = vmatprep.subr.bf16.mxu0 0
      %1954 = vmatpush2.bf16.msra.mxu0 0
      %1955 = vmatprep.mubr.bf16.mxu0 0
      %1956 = vmatmul.mubr.bf16.gmra.mxu0 %v1909
      %v1957 = vpop.f32.mrf.mxu0
      %v1958 = vadd.f32 0.0, %v1957
      %v1959 = vpop.f32.mrf.mxu0
      %v1960 = vpop.f32.mrf.mxu0
      %v1961 = vadd.f32 0.0, %v1960
      %v1962 = vpop.f32.mrf.mxu0
      %1963 = vmatprep.mubr.bf16.mxu0 0
      %1964 = vmatmul.mubr.bf16.gmra.mxu0 %v1912
      %v1965 = vpop.f32.mrf.mxu0
      %v1966 = vadd.f32 0.0, %v1965
      %v1967 = vpop.f32.mrf.mxu0
      %v1968 = vpop.f32.mrf.mxu0
      %v1969 = vadd.f32 0.0, %v1968
      %v1970 = vpop.f32.mrf.mxu0
      %1971 = vmatprep.mubr.bf16.mxu0 0
      %1972 = vmatmul.mubr.bf16.gmra.mxu0 %v1915
      %v1973 = vpop.f32.mrf.mxu0
      %v1974 = vadd.f32 0.0, %v1973
      %v1975 = vpop.f32.mrf.mxu0
      %v1976 = vpop.f32.mrf.mxu0
      %v1977 = vadd.f32 0.0, %v1976
      %v1978 = vpop.f32.mrf.mxu0
      %1979 = vmatprep.mubr.bf16.mxu0 0
      %1980 = vmatmul.mubr.bf16.gmra.mxu0 %v1918
      %v1981 = vpop.f32.mrf.mxu0
      %v1982 = vadd.f32 0.0, %v1981
      %v1983 = vpop.f32.mrf.mxu0
      %v1984 = vpop.f32.mrf.mxu0
      %v1985 = vadd.f32 0.0, %v1984
      %v1986 = vpop.f32.mrf.mxu0
      %1987 = vdwg.mxu0
      %v1988 = vadd.f32 %v704, %v1958
      %v1989 = vadd.f32 %v704, %v1961
      %v1990 = vadd.f32 %v704, %v1966
      %v1991 = vadd.f32 %v704, %v1969
      %v1992 = vadd.f32 %v704, %v1974
      %v1993 = vadd.f32 %v704, %v1977
      %v1994 = vadd.f32 %v704, %v1982
      %v1995 = vadd.f32 %v704, %v1985
      %s1996 = scalar_lea.vmem %s6, 192
      %v1997 = vld [vmem:[%s1996] sm:$0xf]
      %v1998 = vld [vmem:[%s1996 + $0x4] sm:$0xf]
      %v1999 = vld [vmem:[%s1996 + $0x8] sm:$0xf]
      %v2000 = vld [vmem:[%s1996 + $0xc] sm:$0xf]
      %s2001 = scalar_lea.vmem %s7, 12
      %v2002 = vld [vmem:[%s2001] sm:$0x1]
      %v2004 = vlaneseq
      %v2005 = vshrl.u32 %v2004, 7
      %v2006 = vsub.s32 0, %v2005
      %v2007 = vrot.slane %v2002, %v2006
      %v2013 = vunpack.c.l.b16 %v1997
      %v2014 = vunpack.c.l.b16 %v1998
      %v2015 = vunpack.c.l.b16 %v1999
      %v2016 = vunpack.c.l.b16 %v2000
      %v2017 = vpack.c.b16 %v2014, %v2013
      %v2018 = vpack.c.b16 %v2016, %v2015
      %2021 = vmatprep.subr.bf16.mxu0 0
      %2022 = vmatpush1.bf16.msra.mxu0 0
      %2023 = vmatprep.subr.bf16.mxu0 0
      %2024 = vmatpush1.bf16.msra.mxu0 0
      %2025 = vmatprep.subr.bf16.mxu0 0
      %2026 = vmatpush1.bf16.msra.mxu0 0
      %2027 = vmatprep.subr.bf16.mxu0 0
      %2028 = vmatpush1.bf16.msra.mxu0 0
      %2029 = vmatprep.subr.bf16.mxu0 0
      %2030 = vmatpush1.bf16.msra.mxu0 0
      %2031 = vmatprep.subr.bf16.mxu0 0
      %2032 = vmatpush1.bf16.msra.mxu0 0
      %2033 = vmatprep.subr.bf16.mxu0 0
      %2034 = vmatpush1.bf16.msra.mxu0 %v2018
      %2035 = vmatprep.subr.bf16.mxu0 0
      %2036 = vmatpush1.bf16.msra.mxu0 %v2017
      %2037 = vmatprep.subr.bf16.mxu0 0
      %2038 = vmatpush2.bf16.msra.mxu0 0
      %2039 = vmatprep.subr.bf16.mxu0 0
      %2040 = vmatpush2.bf16.msra.mxu0 0
      %2041 = vmatprep.subr.bf16.mxu0 0
      %2042 = vmatpush2.bf16.msra.mxu0 0
      %2043 = vmatprep.subr.bf16.mxu0 0
      %2044 = vmatpush2.bf16.msra.mxu0 0
      %2045 = vmatprep.subr.bf16.mxu0 0
      %2046 = vmatpush2.bf16.msra.mxu0 0
      %2047 = vmatprep.subr.bf16.mxu0 0
      %2048 = vmatpush2.bf16.msra.mxu0 0
      %2049 = vmatprep.subr.bf16.mxu0 0
      %2050 = vmatpush2.bf16.msra.mxu0 0
      %2051 = vmatprep.subr.bf16.mxu0 0
      %2052 = vmatpush2.bf16.msra.mxu0 0
      %2053 = vmatprep.mubr.bf16.mxu0 0
      %2054 = vmatmul.mubr.bf16.gmra.mxu0 %v729
      %v2055 = vpop.f32.mrf.mxu0
      %v2056 = vadd.f32 %v2007, %v2055
      %v2057 = vpop.f32.mrf.mxu0
      %v2058 = vpop.f32.mrf.mxu0
      %v2059 = vadd.f32 %v2007, %v2058
      %v2060 = vpop.f32.mrf.mxu0
      %2061 = vmatprep.mubr.bf16.mxu0 0
      %2062 = vmatmul.mubr.bf16.gmra.mxu0 %v732
      %v2063 = vpop.f32.mrf.mxu0
      %v2064 = vadd.f32 %v2007, %v2063
      %v2065 = vpop.f32.mrf.mxu0
      %v2066 = vpop.f32.mrf.mxu0
      %v2067 = vadd.f32 %v2007, %v2066
      %v2068 = vpop.f32.mrf.mxu0
      %2069 = vmatprep.mubr.bf16.mxu0 0
      %2070 = vmatmul.mubr.bf16.gmra.mxu0 %v735
      %v2071 = vpop.f32.mrf.mxu0
      %v2072 = vadd.f32 %v2007, %v2071
      %v2073 = vpop.f32.mrf.mxu0
      %v2074 = vpop.f32.mrf.mxu0
      %v2075 = vadd.f32 %v2007, %v2074
      %v2076 = vpop.f32.mrf.mxu0
      %2077 = vmatprep.mubr.bf16.mxu0 0
      %2078 = vmatmul.mubr.bf16.gmra.mxu0 %v738
      %v2079 = vpop.f32.mrf.mxu0
      %v2080 = vadd.f32 %v2007, %v2079
      %v2081 = vpop.f32.mrf.mxu0
      %v2082 = vpop.f32.mrf.mxu0
      %v2083 = vadd.f32 %v2007, %v2082
      %v2084 = vpop.f32.mrf.mxu0
      %2085 = vdwg.mxu0
      %v2086 = vpack.c.bf16 %v2059, %v2056
      %v2087 = vpack.c.bf16 %v2067, %v2064
      %v2088 = vpack.c.bf16 %v2075, %v2072
      %v2089 = vpack.c.bf16 %v2083, %v2080
      %v2094 = vunpack.c.l.b16 %v2086
      %v2095 = vunpack.c.h.b16 %v2086
      %v2096 = vunpack.c.l.b16 %v2087
      %v2097 = vunpack.c.h.b16 %v2087
      %v2098 = vunpack.c.l.b16 %v2088
      %v2099 = vunpack.c.h.b16 %v2088
      %v2100 = vunpack.c.l.b16 %v2089
      %v2101 = vunpack.c.h.b16 %v2089
      %v2102 = vpack.c.b16 %v2094, %v2094
      %v2103 = vpack.c.b16 %v2095, %v2095
      %v2104 = vpack.c.b16 %v2096, %v2096
      %v2105 = vpack.c.b16 %v2097, %v2097
      %v2106 = vpack.c.b16 %v2098, %v2098
      %v2107 = vpack.c.b16 %v2099, %v2099
      %v2108 = vpack.c.b16 %v2100, %v2100
      %v2109 = vpack.c.b16 %v2101, %v2101
      %s2110 = scalar_lea.vmem %s6, 256
      %v2111 = vld [vmem:[%s2110] sm:$0xf]
      %v2112 = vld [vmem:[%s2110 + $0x4] sm:$0xf]
      %v2113 = vld [vmem:[%s2110 + $0x8] sm:$0xf]
      %v2114 = vld [vmem:[%s2110 + $0xc] sm:$0xf]
      %s2115 = scalar_lea.vmem %s7, 16
      %v2116 = vld [vmem:[%s2115] sm:$0x1]
      %v2118 = vlaneseq
      %v2119 = vshrl.u32 %v2118, 7
      %v2120 = vsub.s32 0, %v2119
      %v2121 = vrot.slane %v2116, %v2120
      %v2127 = vunpack.c.l.b16 %v2111
      %v2128 = vunpack.c.l.b16 %v2112
      %v2129 = vunpack.c.l.b16 %v2113
      %v2130 = vunpack.c.l.b16 %v2114
      %v2131 = vpack.c.b16 %v2128, %v2127
      %v2132 = vpack.c.b16 %v2130, %v2129
      %2135 = vmatprep.subr.bf16.mxu0 0
      %2136 = vmatpush1.bf16.msra.mxu0 0
      %2137 = vmatprep.subr.bf16.mxu0 0
      %2138 = vmatpush1.bf16.msra.mxu0 0
      %2139 = vmatprep.subr.bf16.mxu0 0
      %2140 = vmatpush1.bf16.msra.mxu0 0
      %2141 = vmatprep.subr.bf16.mxu0 0
      %2142 = vmatpush1.bf16.msra.mxu0 0
      %2143 = vmatprep.subr.bf16.mxu0 0
      %2144 = vmatpush1.bf16.msra.mxu0 0
      %2145 = vmatprep.subr.bf16.mxu0 0
      %2146 = vmatpush1.bf16.msra.mxu0 0
      %2147 = vmatprep.subr.bf16.mxu0 0
      %2148 = vmatpush1.bf16.msra.mxu0 %v2132
      %2149 = vmatprep.subr.bf16.mxu0 0
      %2150 = vmatpush1.bf16.msra.mxu0 %v2131
      %2151 = vmatprep.subr.bf16.mxu0 0
      %2152 = vmatpush2.bf16.msra.mxu0 0
      %2153 = vmatprep.subr.bf16.mxu0 0
      %2154 = vmatpush2.bf16.msra.mxu0 0
      %2155 = vmatprep.subr.bf16.mxu0 0
      %2156 = vmatpush2.bf16.msra.mxu0 0
      %2157 = vmatprep.subr.bf16.mxu0 0
      %2158 = vmatpush2.bf16.msra.mxu0 0
      %2159 = vmatprep.subr.bf16.mxu0 0
      %2160 = vmatpush2.bf16.msra.mxu0 0
      %2161 = vmatprep.subr.bf16.mxu0 0
      %2162 = vmatpush2.bf16.msra.mxu0 0
      %2163 = vmatprep.subr.bf16.mxu0 0
      %2164 = vmatpush2.bf16.msra.mxu0 0
      %2165 = vmatprep.subr.bf16.mxu0 0
      %2166 = vmatpush2.bf16.msra.mxu0 0
      %2167 = vmatprep.mubr.bf16.mxu0 0
      %2168 = vmatmul.mubr.bf16.gmra.mxu0 %v729
      %v2169 = vpop.f32.mrf.mxu0
      %v2170 = vadd.f32 %v2121, %v2169
      %v2171 = vpop.f32.mrf.mxu0
      %v2172 = vpop.f32.mrf.mxu0
      %v2173 = vadd.f32 %v2121, %v2172
      %v2174 = vpop.f32.mrf.mxu0
      %2175 = vmatprep.mubr.bf16.mxu0 0
      %2176 = vmatmul.mubr.bf16.gmra.mxu0 %v732
      %v2177 = vpop.f32.mrf.mxu0
      %v2178 = vadd.f32 %v2121, %v2177
      %v2179 = vpop.f32.mrf.mxu0
      %v2180 = vpop.f32.mrf.mxu0
      %v2181 = vadd.f32 %v2121, %v2180
      %v2182 = vpop.f32.mrf.mxu0
      %2183 = vmatprep.mubr.bf16.mxu0 0
      %2184 = vmatmul.mubr.bf16.gmra.mxu0 %v735
      %v2185 = vpop.f32.mrf.mxu0
      %v2186 = vadd.f32 %v2121, %v2185
      %v2187 = vpop.f32.mrf.mxu0
      %v2188 = vpop.f32.mrf.mxu0
      %v2189 = vadd.f32 %v2121, %v2188
      %v2190 = vpop.f32.mrf.mxu0
      %2191 = vmatprep.mubr.bf16.mxu0 0
      %2192 = vmatmul.mubr.bf16.gmra.mxu0 %v738
      %v2193 = vpop.f32.mrf.mxu0
      %v2194 = vadd.f32 %v2121, %v2193
      %v2195 = vpop.f32.mrf.mxu0
      %v2196 = vpop.f32.mrf.mxu0
      %v2197 = vadd.f32 %v2121, %v2196
      %v2198 = vpop.f32.mrf.mxu0
      %2199 = vdwg.mxu0
      %v2200 = vpack.c.bf16 %v2173, %v2170
      %v2201 = vpack.c.bf16 %v2181, %v2178
      %v2202 = vpack.c.bf16 %v2189, %v2186
      %v2203 = vpack.c.bf16 %v2197, %v2194
      %v2208 = vunpack.c.l.b16 %v2200
      %v2209 = vunpack.c.h.b16 %v2200
      %v2210 = vunpack.c.l.b16 %v2201
      %v2211 = vunpack.c.h.b16 %v2201
      %v2212 = vunpack.c.l.b16 %v2202
      %v2213 = vunpack.c.h.b16 %v2202
      %v2214 = vunpack.c.l.b16 %v2203
      %v2215 = vunpack.c.h.b16 %v2203
      %v2216 = vpack.c.b16 %v2208, %v2208
      %v2217 = vpack.c.b16 %v2209, %v2209
      %v2218 = vpack.c.b16 %v2210, %v2210
      %v2219 = vpack.c.b16 %v2211, %v2211
      %v2220 = vpack.c.b16 %v2212, %v2212
      %v2221 = vpack.c.b16 %v2213, %v2213
      %v2222 = vpack.c.b16 %v2214, %v2214
      %v2223 = vpack.c.b16 %v2215, %v2215
      %s2224 = scalar_lea.vmem %s6, 320
      %v2225 = vld [vmem:[%s2224] sm:$0xf]
      %v2226 = vld [vmem:[%s2224 + $0x4] sm:$0xf]
      %v2227 = vld [vmem:[%s2224 + $0x8] sm:$0xf]
      %v2228 = vld [vmem:[%s2224 + $0xc] sm:$0xf]
      %s2229 = scalar_lea.vmem %s7, 20
      %v2230 = vld [vmem:[%s2229] sm:$0x1]
      %v2232 = vlaneseq
      %v2233 = vshrl.u32 %v2232, 7
      %v2234 = vsub.s32 0, %v2233
      %v2235 = vrot.slane %v2230, %v2234
      %v2241 = vunpack.c.l.b16 %v2225
      %v2242 = vunpack.c.l.b16 %v2226
      %v2243 = vunpack.c.l.b16 %v2227
      %v2244 = vunpack.c.l.b16 %v2228
      %v2245 = vpack.c.b16 %v2242, %v2241
      %v2246 = vpack.c.b16 %v2244, %v2243
      %2249 = vmatprep.subr.bf16.mxu0 0
      %2250 = vmatpush1.bf16.msra.mxu0 0
      %2251 = vmatprep.subr.bf16.mxu0 0
      %2252 = vmatpush1.bf16.msra.mxu0 0
      %2253 = vmatprep.subr.bf16.mxu0 0
      %2254 = vmatpush1.bf16.msra.mxu0 0
      %2255 = vmatprep.subr.bf16.mxu0 0
      %2256 = vmatpush1.bf16.msra.mxu0 0
      %2257 = vmatprep.subr.bf16.mxu0 0
      %2258 = vmatpush1.bf16.msra.mxu0 0
      %2259 = vmatprep.subr.bf16.mxu0 0
      %2260 = vmatpush1.bf16.msra.mxu0 0
      %2261 = vmatprep.subr.bf16.mxu0 0
      %2262 = vmatpush1.bf16.msra.mxu0 %v2246
      %2263 = vmatprep.subr.bf16.mxu0 0
      %2264 = vmatpush1.bf16.msra.mxu0 %v2245
      %2265 = vmatprep.subr.bf16.mxu0 0
      %2266 = vmatpush2.bf16.msra.mxu0 0
      %2267 = vmatprep.subr.bf16.mxu0 0
      %2268 = vmatpush2.bf16.msra.mxu0 0
      %2269 = vmatprep.subr.bf16.mxu0 0
      %2270 = vmatpush2.bf16.msra.mxu0 0
      %2271 = vmatprep.subr.bf16.mxu0 0
      %2272 = vmatpush2.bf16.msra.mxu0 0
      %2273 = vmatprep.subr.bf16.mxu0 0
      %2274 = vmatpush2.bf16.msra.mxu0 0
      %2275 = vmatprep.subr.bf16.mxu0 0
      %2276 = vmatpush2.bf16.msra.mxu0 0
      %2277 = vmatprep.subr.bf16.mxu0 0
      %2278 = vmatpush2.bf16.msra.mxu0 0
      %2279 = vmatprep.subr.bf16.mxu0 0
      %2280 = vmatpush2.bf16.msra.mxu0 0
      %2281 = vmatprep.mubr.bf16.mxu0 0
      %2282 = vmatmul.mubr.bf16.gmra.mxu0 %v729
      %v2283 = vpop.f32.mrf.mxu0
      %v2284 = vadd.f32 %v2235, %v2283
      %v2285 = vpop.f32.mrf.mxu0
      %v2286 = vpop.f32.mrf.mxu0
      %v2287 = vadd.f32 %v2235, %v2286
      %v2288 = vpop.f32.mrf.mxu0
      %2289 = vmatprep.mubr.bf16.mxu0 0
      %2290 = vmatmul.mubr.bf16.gmra.mxu0 %v732
      %v2291 = vpop.f32.mrf.mxu0
      %v2292 = vadd.f32 %v2235, %v2291
      %v2293 = vpop.f32.mrf.mxu0
      %v2294 = vpop.f32.mrf.mxu0
      %v2295 = vadd.f32 %v2235, %v2294
      %v2296 = vpop.f32.mrf.mxu0
      %2297 = vmatprep.mubr.bf16.mxu0 0
      %2298 = vmatmul.mubr.bf16.gmra.mxu0 %v735
      %v2299 = vpop.f32.mrf.mxu0
      %v2300 = vadd.f32 %v2235, %v2299
      %v2301 = vpop.f32.mrf.mxu0
      %v2302 = vpop.f32.mrf.mxu0
      %v2303 = vadd.f32 %v2235, %v2302
      %v2304 = vpop.f32.mrf.mxu0
      %2305 = vmatprep.mubr.bf16.mxu0 0
      %2306 = vmatmul.mubr.bf16.gmra.mxu0 %v738
      %v2307 = vpop.f32.mrf.mxu0
      %v2308 = vadd.f32 %v2235, %v2307
      %v2309 = vpop.f32.mrf.mxu0
      %v2310 = vpop.f32.mrf.mxu0
      %v2311 = vadd.f32 %v2235, %v2310
      %v2312 = vpop.f32.mrf.mxu0
      %2313 = vdwg.mxu0
      %v2314 = vpack.c.bf16 %v2287, %v2284
      %v2315 = vpack.c.bf16 %v2295, %v2292
      %v2316 = vpack.c.bf16 %v2303, %v2300
      %v2317 = vpack.c.bf16 %v2311, %v2308
      %v2322 = vunpack.c.l.b16 %v2314
      %v2323 = vunpack.c.h.b16 %v2314
      %v2324 = vunpack.c.l.b16 %v2315
      %v2325 = vunpack.c.h.b16 %v2315
      %v2326 = vunpack.c.l.b16 %v2316
      %v2327 = vunpack.c.h.b16 %v2316
      %v2328 = vunpack.c.l.b16 %v2317
      %v2329 = vunpack.c.h.b16 %v2317
      %v2330 = vpack.c.b16 %v2322, %v2322
      %v2331 = vpack.c.b16 %v2323, %v2323
      %v2332 = vpack.c.b16 %v2324, %v2324
      %v2333 = vpack.c.b16 %v2325, %v2325
      %v2334 = vpack.c.b16 %v2326, %v2326
      %v2335 = vpack.c.b16 %v2327, %v2327
      %v2336 = vpack.c.b16 %v2328, %v2328
      %v2337 = vpack.c.b16 %v2329, %v2329
      %v2339 = vsel %vm1069, %v2102, 0
      %v2342 = vsel %vm1069, %v2216, 0
      %2344 = vmatprep.subr.bf16.mxu0 0
      %2345 = vmatpush1.bf16.xpose.msra.mxu0 0
      %2346 = vmatprep.subr.bf16.mxu0 0
      %2347 = vmatpush1.bf16.xpose.msra.mxu0 0
      %2348 = vmatprep.subr.bf16.mxu0 0
      %2349 = vmatpush1.bf16.xpose.msra.mxu0 0
      %2350 = vmatprep.subr.bf16.mxu0 0
      %2351 = vmatpush1.bf16.xpose.msra.mxu0 0
      %2352 = vmatprep.subr.bf16.mxu0 0
      %2353 = vmatpush1.bf16.xpose.msra.mxu0 0
      %2354 = vmatprep.subr.bf16.mxu0 0
      %2355 = vmatpush1.bf16.xpose.msra.mxu0 0
      %2356 = vmatprep.subr.bf16.mxu0 0
      %2357 = vmatpush1.bf16.xpose.msra.mxu0 0
      %2358 = vmatprep.subr.bf16.mxu0 0
      %2359 = vmatpush1.bf16.xpose.msra.mxu0 %v2342
      %2360 = vmatprep.subr.bf16.mxu0 0
      %2361 = vmatpush2.bf16.xpose.msra.mxu0 0
      %2362 = vmatprep.subr.bf16.mxu0 0
      %2363 = vmatpush2.bf16.xpose.msra.mxu0 0
      %2364 = vmatprep.subr.bf16.mxu0 0
      %2365 = vmatpush2.bf16.xpose.msra.mxu0 0
      %2366 = vmatprep.subr.bf16.mxu0 0
      %2367 = vmatpush2.bf16.xpose.msra.mxu0 0
      %2368 = vmatprep.subr.bf16.mxu0 0
      %2369 = vmatpush2.bf16.xpose.msra.mxu0 0
      %2370 = vmatprep.subr.bf16.mxu0 0
      %2371 = vmatpush2.bf16.xpose.msra.mxu0 0
      %2372 = vmatprep.subr.bf16.mxu0 0
      %2373 = vmatpush2.bf16.xpose.msra.mxu0 0
      %2374 = vmatprep.subr.bf16.mxu0 0
      %2375 = vmatpush2.bf16.xpose.msra.mxu0 0
      %2376 = vmatprep.mubr.bf16.mxu0 0
      %2377 = vmatmul.mubr.bf16.gmra.mxu0 %v2339
      %v2378 = vpop.f32.mrf.mxu0
      %v2379 = vadd.f32 %v432, %v2378
      %v2380 = vpop.f32.mrf.mxu0
      %v2381 = vpop.f32.mrf.mxu0
      %v2382 = vpop.f32.mrf.mxu0
      %2383 = vdwg.mxu0
      %v2385 = vsel %vm1069, %v2103, 0
      %v2388 = vsel %vm1069, %v2217, 0
      %2390 = vmatprep.subr.bf16.mxu0 0
      %2391 = vmatpush1.bf16.xpose.msra.mxu0 0
      %2392 = vmatprep.subr.bf16.mxu0 0
      %2393 = vmatpush1.bf16.xpose.msra.mxu0 0
      %2394 = vmatprep.subr.bf16.mxu0 0
      %2395 = vmatpush1.bf16.xpose.msra.mxu0 0
      %2396 = vmatprep.subr.bf16.mxu0 0
      %2397 = vmatpush1.bf16.xpose.msra.mxu0 0
      %2398 = vmatprep.subr.bf16.mxu0 0
      %2399 = vmatpush1.bf16.xpose.msra.mxu0 0
      %2400 = vmatprep.subr.bf16.mxu0 0
      %2401 = vmatpush1.bf16.xpose.msra.mxu0 0
      %2402 = vmatprep.subr.bf16.mxu0 0
      %2403 = vmatpush1.bf16.xpose.msra.mxu0 0
      %2404 = vmatprep.subr.bf16.mxu0 0
      %2405 = vmatpush1.bf16.xpose.msra.mxu0 %v2388
      %2406 = vmatprep.subr.bf16.mxu0 0
      %2407 = vmatpush2.bf16.xpose.msra.mxu0 0
      %2408 = vmatprep.subr.bf16.mxu0 0
      %2409 = vmatpush2.bf16.xpose.msra.mxu0 0
      %2410 = vmatprep.subr.bf16.mxu0 0
      %2411 = vmatpush2.bf16.xpose.msra.mxu0 0
      %2412 = vmatprep.subr.bf16.mxu0 0
      %2413 = vmatpush2.bf16.xpose.msra.mxu0 0
      %2414 = vmatprep.subr.bf16.mxu0 0
      %2415 = vmatpush2.bf16.xpose.msra.mxu0 0
      %2416 = vmatprep.subr.bf16.mxu0 0
      %2417 = vmatpush2.bf16.xpose.msra.mxu0 0
      %2418 = vmatprep.subr.bf16.mxu0 0
      %2419 = vmatpush2.bf16.xpose.msra.mxu0 0
      %2420 = vmatprep.subr.bf16.mxu0 0
      %2421 = vmatpush2.bf16.xpose.msra.mxu0 0
      %2422 = vmatprep.mubr.bf16.mxu0 0
      %2423 = vmatmul.mubr.bf16.gmra.mxu0 %v2385
      %v2424 = vpop.f32.mrf.mxu0
      %v2425 = vadd.f32 %v432, %v2424
      %v2426 = vpop.f32.mrf.mxu0
      %v2427 = vpop.f32.mrf.mxu0
      %v2428 = vpop.f32.mrf.mxu0
      %2429 = vdwg.mxu0
      %v2431 = vsel %vm1069, %v2104, 0
      %v2434 = vsel %vm1069, %v2218, 0
      %2436 = vmatprep.subr.bf16.mxu0 0
      %2437 = vmatpush1.bf16.xpose.msra.mxu0 0
      %2438 = vmatprep.subr.bf16.mxu0 0
      %2439 = vmatpush1.bf16.xpose.msra.mxu0 0
      %2440 = vmatprep.subr.bf16.mxu0 0
      %2441 = vmatpush1.bf16.xpose.msra.mxu0 0
      %2442 = vmatprep.subr.bf16.mxu0 0
      %2443 = vmatpush1.bf16.xpose.msra.mxu0 0
      %2444 = vmatprep.subr.bf16.mxu0 0
      %2445 = vmatpush1.bf16.xpose.msra.mxu0 0
      %2446 = vmatprep.subr.bf16.mxu0 0
      %2447 = vmatpush1.bf16.xpose.msra.mxu0 0
      %2448 = vmatprep.subr.bf16.mxu0 0
      %2449 = vmatpush1.bf16.xpose.msra.mxu0 0
      %2450 = vmatprep.subr.bf16.mxu0 0
      %2451 = vmatpush1.bf16.xpose.msra.mxu0 %v2434
      %2452 = vmatprep.subr.bf16.mxu0 0
      %2453 = vmatpush2.bf16.xpose.msra.mxu0 0
      %2454 = vmatprep.subr.bf16.mxu0 0
      %2455 = vmatpush2.bf16.xpose.msra.mxu0 0
      %2456 = vmatprep.subr.bf16.mxu0 0
      %2457 = vmatpush2.bf16.xpose.msra.mxu0 0
      %2458 = vmatprep.subr.bf16.mxu0 0
      %2459 = vmatpush2.bf16.xpose.msra.mxu0 0
      %2460 = vmatprep.subr.bf16.mxu0 0
      %2461 = vmatpush2.bf16.xpose.msra.mxu0 0
      %2462 = vmatprep.subr.bf16.mxu0 0
      %2463 = vmatpush2.bf16.xpose.msra.mxu0 0
      %2464 = vmatprep.subr.bf16.mxu0 0
      %2465 = vmatpush2.bf16.xpose.msra.mxu0 0
      %2466 = vmatprep.subr.bf16.mxu0 0
      %2467 = vmatpush2.bf16.xpose.msra.mxu0 0
      %2468 = vmatprep.mubr.bf16.mxu0 0
      %2469 = vmatmul.mubr.bf16.gmra.mxu0 %v2431
      %v2470 = vpop.f32.mrf.mxu0
      %v2471 = vadd.f32 %v432, %v2470
      %v2472 = vpop.f32.mrf.mxu0
      %v2473 = vpop.f32.mrf.mxu0
      %v2474 = vpop.f32.mrf.mxu0
      %2475 = vdwg.mxu0
      %v2477 = vsel %vm1069, %v2105, 0
      %v2480 = vsel %vm1069, %v2219, 0
      %2482 = vmatprep.subr.bf16.mxu0 0
      %2483 = vmatpush1.bf16.xpose.msra.mxu0 0
      %2484 = vmatprep.subr.bf16.mxu0 0
      %2485 = vmatpush1.bf16.xpose.msra.mxu0 0
      %2486 = vmatprep.subr.bf16.mxu0 0
      %2487 = vmatpush1.bf16.xpose.msra.mxu0 0
      %2488 = vmatprep.subr.bf16.mxu0 0
      %2489 = vmatpush1.bf16.xpose.msra.mxu0 0
      %2490 = vmatprep.subr.bf16.mxu0 0
      %2491 = vmatpush1.bf16.xpose.msra.mxu0 0
      %2492 = vmatprep.subr.bf16.mxu0 0
      %2493 = vmatpush1.bf16.xpose.msra.mxu0 0
      %2494 = vmatprep.subr.bf16.mxu0 0
      %2495 = vmatpush1.bf16.xpose.msra.mxu0 0
      %2496 = vmatprep.subr.bf16.mxu0 0
      %2497 = vmatpush1.bf16.xpose.msra.mxu0 %v2480
      %2498 = vmatprep.subr.bf16.mxu0 0
      %2499 = vmatpush2.bf16.xpose.msra.mxu0 0
      %2500 = vmatprep.subr.bf16.mxu0 0
      %2501 = vmatpush2.bf16.xpose.msra.mxu0 0
      %2502 = vmatprep.subr.bf16.mxu0 0
      %2503 = vmatpush2.bf16.xpose.msra.mxu0 0
      %2504 = vmatprep.subr.bf16.mxu0 0
      %2505 = vmatpush2.bf16.xpose.msra.mxu0 0
      %2506 = vmatprep.subr.bf16.mxu0 0
      %2507 = vmatpush2.bf16.xpose.msra.mxu0 0
      %2508 = vmatprep.subr.bf16.mxu0 0
      %2509 = vmatpush2.bf16.xpose.msra.mxu0 0
      %2510 = vmatprep.subr.bf16.mxu0 0
      %2511 = vmatpush2.bf16.xpose.msra.mxu0 0
      %2512 = vmatprep.subr.bf16.mxu0 0
      %2513 = vmatpush2.bf16.xpose.msra.mxu0 0
      %2514 = vmatprep.mubr.bf16.mxu0 0
      %2515 = vmatmul.mubr.bf16.gmra.mxu0 %v2477
      %v2516 = vpop.f32.mrf.mxu0
      %v2517 = vadd.f32 %v432, %v2516
      %v2518 = vpop.f32.mrf.mxu0
      %v2519 = vpop.f32.mrf.mxu0
      %v2520 = vpop.f32.mrf.mxu0
      %2521 = vdwg.mxu0
      %v2523 = vsel %vm1069, %v2106, 0
      %v2526 = vsel %vm1069, %v2220, 0
      %2528 = vmatprep.subr.bf16.mxu0 0
      %2529 = vmatpush1.bf16.xpose.msra.mxu0 0
      %2530 = vmatprep.subr.bf16.mxu0 0
      %2531 = vmatpush1.bf16.xpose.msra.mxu0 0
      %2532 = vmatprep.subr.bf16.mxu0 0
      %2533 = vmatpush1.bf16.xpose.msra.mxu0 0
      %2534 = vmatprep.subr.bf16.mxu0 0
      %2535 = vmatpush1.bf16.xpose.msra.mxu0 0
      %2536 = vmatprep.subr.bf16.mxu0 0
      %2537 = vmatpush1.bf16.xpose.msra.mxu0 0
      %2538 = vmatprep.subr.bf16.mxu0 0
      %2539 = vmatpush1.bf16.xpose.msra.mxu0 0
      %2540 = vmatprep.subr.bf16.mxu0 0
      %2541 = vmatpush1.bf16.xpose.msra.mxu0 0
      %2542 = vmatprep.subr.bf16.mxu0 0
      %2543 = vmatpush1.bf16.xpose.msra.mxu0 %v2526
      %2544 = vmatprep.subr.bf16.mxu0 0
      %2545 = vmatpush2.bf16.xpose.msra.mxu0 0
      %2546 = vmatprep.subr.bf16.mxu0 0
      %2547 = vmatpush2.bf16.xpose.msra.mxu0 0
      %2548 = vmatprep.subr.bf16.mxu0 0
      %2549 = vmatpush2.bf16.xpose.msra.mxu0 0
      %2550 = vmatprep.subr.bf16.mxu0 0
      %2551 = vmatpush2.bf16.xpose.msra.mxu0 0
      %2552 = vmatprep.subr.bf16.mxu0 0
      %2553 = vmatpush2.bf16.xpose.msra.mxu0 0
      %2554 = vmatprep.subr.bf16.mxu0 0
      %2555 = vmatpush2.bf16.xpose.msra.mxu0 0
      %2556 = vmatprep.subr.bf16.mxu0 0
      %2557 = vmatpush2.bf16.xpose.msra.mxu0 0
      %2558 = vmatprep.subr.bf16.mxu0 0
      %2559 = vmatpush2.bf16.xpose.msra.mxu0 0
      %2560 = vmatprep.mubr.bf16.mxu0 0
      %2561 = vmatmul.mubr.bf16.gmra.mxu0 %v2523
      %v2562 = vpop.f32.mrf.mxu0
      %v2563 = vadd.f32 %v432, %v2562
      %v2564 = vpop.f32.mrf.mxu0
      %v2565 = vpop.f32.mrf.mxu0
      %v2566 = vpop.f32.mrf.mxu0
      %2567 = vdwg.mxu0
      %v2569 = vsel %vm1069, %v2107, 0
      %v2572 = vsel %vm1069, %v2221, 0
      %2574 = vmatprep.subr.bf16.mxu0 0
      %2575 = vmatpush1.bf16.xpose.msra.mxu0 0
      %2576 = vmatprep.subr.bf16.mxu0 0
      %2577 = vmatpush1.bf16.xpose.msra.mxu0 0
      %2578 = vmatprep.subr.bf16.mxu0 0
      %2579 = vmatpush1.bf16.xpose.msra.mxu0 0
      %2580 = vmatprep.subr.bf16.mxu0 0
      %2581 = vmatpush1.bf16.xpose.msra.mxu0 0
      %2582 = vmatprep.subr.bf16.mxu0 0
      %2583 = vmatpush1.bf16.xpose.msra.mxu0 0
      %2584 = vmatprep.subr.bf16.mxu0 0
      %2585 = vmatpush1.bf16.xpose.msra.mxu0 0
      %2586 = vmatprep.subr.bf16.mxu0 0
      %2587 = vmatpush1.bf16.xpose.msra.mxu0 0
      %2588 = vmatprep.subr.bf16.mxu0 0
      %2589 = vmatpush1.bf16.xpose.msra.mxu0 %v2572
      %2590 = vmatprep.subr.bf16.mxu0 0
      %2591 = vmatpush2.bf16.xpose.msra.mxu0 0
      %2592 = vmatprep.subr.bf16.mxu0 0
      %2593 = vmatpush2.bf16.xpose.msra.mxu0 0
      %2594 = vmatprep.subr.bf16.mxu0 0
      %2595 = vmatpush2.bf16.xpose.msra.mxu0 0
      %2596 = vmatprep.subr.bf16.mxu0 0
      %2597 = vmatpush2.bf16.xpose.msra.mxu0 0
      %2598 = vmatprep.subr.bf16.mxu0 0
      %2599 = vmatpush2.bf16.xpose.msra.mxu0 0
      %2600 = vmatprep.subr.bf16.mxu0 0
      %2601 = vmatpush2.bf16.xpose.msra.mxu0 0
      %2602 = vmatprep.subr.bf16.mxu0 0
      %2603 = vmatpush2.bf16.xpose.msra.mxu0 0
      %2604 = vmatprep.subr.bf16.mxu0 0
      %2605 = vmatpush2.bf16.xpose.msra.mxu0 0
      %2606 = vmatprep.mubr.bf16.mxu0 0
      %2607 = vmatmul.mubr.bf16.gmra.mxu0 %v2569
      %v2608 = vpop.f32.mrf.mxu0
      %v2609 = vadd.f32 %v432, %v2608
      %v2610 = vpop.f32.mrf.mxu0
      %v2611 = vpop.f32.mrf.mxu0
      %v2612 = vpop.f32.mrf.mxu0
      %2613 = vdwg.mxu0
      %v2615 = vsel %vm1069, %v2108, 0
      %v2618 = vsel %vm1069, %v2222, 0
      %2620 = vmatprep.subr.bf16.mxu0 0
      %2621 = vmatpush1.bf16.xpose.msra.mxu0 0
      %2622 = vmatprep.subr.bf16.mxu0 0
      %2623 = vmatpush1.bf16.xpose.msra.mxu0 0
      %2624 = vmatprep.subr.bf16.mxu0 0
      %2625 = vmatpush1.bf16.xpose.msra.mxu0 0
      %2626 = vmatprep.subr.bf16.mxu0 0
      %2627 = vmatpush1.bf16.xpose.msra.mxu0 0
      %2628 = vmatprep.subr.bf16.mxu0 0
      %2629 = vmatpush1.bf16.xpose.msra.mxu0 0
      %2630 = vmatprep.subr.bf16.mxu0 0
      %2631 = vmatpush1.bf16.xpose.msra.mxu0 0
      %2632 = vmatprep.subr.bf16.mxu0 0
      %2633 = vmatpush1.bf16.xpose.msra.mxu0 0
      %2634 = vmatprep.subr.bf16.mxu0 0
      %2635 = vmatpush1.bf16.xpose.msra.mxu0 %v2618
      %2636 = vmatprep.subr.bf16.mxu0 0
      %2637 = vmatpush2.bf16.xpose.msra.mxu0 0
      %2638 = vmatprep.subr.bf16.mxu0 0
      %2639 = vmatpush2.bf16.xpose.msra.mxu0 0
      %2640 = vmatprep.subr.bf16.mxu0 0
      %2641 = vmatpush2.bf16.xpose.msra.mxu0 0
      %2642 = vmatprep.subr.bf16.mxu0 0
      %2643 = vmatpush2.bf16.xpose.msra.mxu0 0
      %2644 = vmatprep.subr.bf16.mxu0 0
      %2645 = vmatpush2.bf16.xpose.msra.mxu0 0
      %2646 = vmatprep.subr.bf16.mxu0 0
      %2647 = vmatpush2.bf16.xpose.msra.mxu0 0
      %2648 = vmatprep.subr.bf16.mxu0 0
      %2649 = vmatpush2.bf16.xpose.msra.mxu0 0
      %2650 = vmatprep.subr.bf16.mxu0 0
      %2651 = vmatpush2.bf16.xpose.msra.mxu0 0
      %2652 = vmatprep.mubr.bf16.mxu0 0
      %2653 = vmatmul.mubr.bf16.gmra.mxu0 %v2615
      %v2654 = vpop.f32.mrf.mxu0
      %v2655 = vadd.f32 %v432, %v2654
      %v2656 = vpop.f32.mrf.mxu0
      %v2657 = vpop.f32.mrf.mxu0
      %v2658 = vpop.f32.mrf.mxu0
      %2659 = vdwg.mxu0
      %v2661 = vsel %vm1069, %v2109, 0
      %v2664 = vsel %vm1069, %v2223, 0
      %2666 = vmatprep.subr.bf16.mxu0 0
      %2667 = vmatpush1.bf16.xpose.msra.mxu0 0
      %2668 = vmatprep.subr.bf16.mxu0 0
      %2669 = vmatpush1.bf16.xpose.msra.mxu0 0
      %2670 = vmatprep.subr.bf16.mxu0 0
      %2671 = vmatpush1.bf16.xpose.msra.mxu0 0
      %2672 = vmatprep.subr.bf16.mxu0 0
      %2673 = vmatpush1.bf16.xpose.msra.mxu0 0
      %2674 = vmatprep.subr.bf16.mxu0 0
      %2675 = vmatpush1.bf16.xpose.msra.mxu0 0
      %2676 = vmatprep.subr.bf16.mxu0 0
      %2677 = vmatpush1.bf16.xpose.msra.mxu0 0
      %2678 = vmatprep.subr.bf16.mxu0 0
      %2679 = vmatpush1.bf16.xpose.msra.mxu0 0
      %2680 = vmatprep.subr.bf16.mxu0 0
      %2681 = vmatpush1.bf16.xpose.msra.mxu0 %v2664
      %2682 = vmatprep.subr.bf16.mxu0 0
      %2683 = vmatpush2.bf16.xpose.msra.mxu0 0
      %2684 = vmatprep.subr.bf16.mxu0 0
      %2685 = vmatpush2.bf16.xpose.msra.mxu0 0
      %2686 = vmatprep.subr.bf16.mxu0 0
      %2687 = vmatpush2.bf16.xpose.msra.mxu0 0
      %2688 = vmatprep.subr.bf16.mxu0 0
      %2689 = vmatpush2.bf16.xpose.msra.mxu0 0
      %2690 = vmatprep.subr.bf16.mxu0 0
      %2691 = vmatpush2.bf16.xpose.msra.mxu0 0
      %2692 = vmatprep.subr.bf16.mxu0 0
      %2693 = vmatpush2.bf16.xpose.msra.mxu0 0
      %2694 = vmatprep.subr.bf16.mxu0 0
      %2695 = vmatpush2.bf16.xpose.msra.mxu0 0
      %2696 = vmatprep.subr.bf16.mxu0 0
      %2697 = vmatpush2.bf16.xpose.msra.mxu0 0
      %2698 = vmatprep.mubr.bf16.mxu0 0
      %2699 = vmatmul.mubr.bf16.gmra.mxu0 %v2661
      %v2700 = vpop.f32.mrf.mxu0
      %v2701 = vadd.f32 %v432, %v2700
      %v2702 = vpop.f32.mrf.mxu0
      %v2703 = vpop.f32.mrf.mxu0
      %v2704 = vpop.f32.mrf.mxu0
      %2705 = vdwg.mxu0
      %v2706 = vsel %vm1069, %v2379, -inf
      %2707 = vmax.xlane.f32.xlu0 %v2706
      %v2708 = vpop.xlane.xlu0 %2707
      %v2709 = vsel %vm1069, %v2425, -inf
      %2710 = vmax.xlane.f32.xlu0 %v2709
      %v2711 = vpop.xlane.xlu0 %2710
      %v2712 = vsel %vm1069, %v2471, -inf
      %2713 = vmax.xlane.f32.xlu0 %v2712
      %v2714 = vpop.xlane.xlu0 %2713
      %v2715 = vsel %vm1069, %v2517, -inf
      %2716 = vmax.xlane.f32.xlu0 %v2715
      %v2717 = vpop.xlane.xlu0 %2716
      %v2718 = vsel %vm1069, %v2563, -inf
      %2719 = vmax.xlane.f32.xlu0 %v2718
      %v2720 = vpop.xlane.xlu0 %2719
      %v2721 = vsel %vm1069, %v2609, -inf
      %2722 = vmax.xlane.f32.xlu0 %v2721
      %v2723 = vpop.xlane.xlu0 %2722
      %v2724 = vsel %vm1069, %v2655, -inf
      %2725 = vmax.xlane.f32.xlu0 %v2724
      %v2726 = vpop.xlane.xlu0 %2725
      %v2727 = vsel %vm1069, %v2701, -inf
      %2728 = vmax.xlane.f32.xlu0 %v2727
      %v2729 = vpop.xlane.xlu0 %2728
      %v2730 = vsub.f32 %v2379, %v2708
      %v2731 = vsub.f32 %v2425, %v2711
      %v2732 = vsub.f32 %v2471, %v2714
      %v2733 = vsub.f32 %v2517, %v2717
      %v2734 = vsub.f32 %v2563, %v2720
      %v2735 = vsub.f32 %v2609, %v2723
      %v2736 = vsub.f32 %v2655, %v2726
      %v2737 = vsub.f32 %v2701, %v2729
      %v2738 = vmul.f32 %v2730, 1.442695
      %v2739 = vpow.pop %v2738
      %v2740 = vmul.f32 %v2731, 1.442695
      %v2741 = vpow.pop %v2740
      %v2742 = vmul.f32 %v2732, 1.442695
      %v2743 = vpow.pop %v2742
      %v2744 = vmul.f32 %v2733, 1.442695
      %v2745 = vpow.pop %v2744
      %v2746 = vmul.f32 %v2734, 1.442695
      %v2747 = vpow.pop %v2746
      %v2748 = vmul.f32 %v2735, 1.442695
      %v2749 = vpow.pop %v2748
      %v2750 = vmul.f32 %v2736, 1.442695
      %v2751 = vpow.pop %v2750
      %v2752 = vmul.f32 %v2737, 1.442695
      %v2753 = vpow.pop %v2752
      %v2754 = vsel %vm1069, %v2739, 0.0
      %2755 = vadd.xlane.f32.xlu0 %v2754
      %v2756 = vpop.xlane.xlu0 %2755
      %v2757 = vsel %vm1069, %v2741, 0.0
      %2758 = vadd.xlane.f32.xlu0 %v2757
      %v2759 = vpop.xlane.xlu0 %2758
      %v2760 = vsel %vm1069, %v2743, 0.0
      %2761 = vadd.xlane.f32.xlu0 %v2760
      %v2762 = vpop.xlane.xlu0 %2761
      %v2763 = vsel %vm1069, %v2745, 0.0
      %2764 = vadd.xlane.f32.xlu0 %v2763
      %v2765 = vpop.xlane.xlu0 %2764
      %v2766 = vsel %vm1069, %v2747, 0.0
      %2767 = vadd.xlane.f32.xlu0 %v2766
      %v2768 = vpop.xlane.xlu0 %2767
      %v2769 = vsel %vm1069, %v2749, 0.0
      %2770 = vadd.xlane.f32.xlu0 %v2769
      %v2771 = vpop.xlane.xlu0 %2770
      %v2772 = vsel %vm1069, %v2751, 0.0
      %2773 = vadd.xlane.f32.xlu0 %v2772
      %v2774 = vpop.xlane.xlu0 %2773
      %v2775 = vsel %vm1069, %v2753, 0.0
      %2776 = vadd.xlane.f32.xlu0 %v2775
      %v2777 = vpop.xlane.xlu0 %2776
      %v2778 = vrcp.pop %v2756
      %v2779 = vrcp.pop %v2759
      %v2780 = vrcp.pop %v2762
      %v2781 = vrcp.pop %v2765
      %v2782 = vrcp.pop %v2768
      %v2783 = vrcp.pop %v2771
      %v2784 = vrcp.pop %v2774
      %v2785 = vrcp.pop %v2777
      %v2786 = vmul.f32 %v2739, %v2778
      %v2787 = vmul.f32 %v2741, %v2779
      %v2788 = vmul.f32 %v2743, %v2780
      %v2789 = vmul.f32 %v2745, %v2781
      %v2790 = vmul.f32 %v2747, %v2782
      %v2791 = vmul.f32 %v2749, %v2783
      %v2792 = vmul.f32 %v2751, %v2784
      %v2793 = vmul.f32 %v2753, %v2785
      %v2794 = vpack.c.bf16 %v2786, %v2786
      %v2795 = vpack.c.bf16 %v2787, %v2787
      %v2796 = vpack.c.bf16 %v2788, %v2788
      %v2797 = vpack.c.bf16 %v2789, %v2789
      %v2798 = vpack.c.bf16 %v2790, %v2790
      %v2799 = vpack.c.bf16 %v2791, %v2791
      %v2800 = vpack.c.bf16 %v2792, %v2792
      %v2801 = vpack.c.bf16 %v2793, %v2793
      %v2803 = vsel %vm1069, %v2794, 0
      %v2806 = vsel %vm1537, %v2330, 0
      %2808 = vmatprep.subr.bf16.mxu0 0
      %2809 = vmatpush1.bf16.msra.mxu0 0
      %2810 = vmatprep.subr.bf16.mxu0 0
      %2811 = vmatpush1.bf16.msra.mxu0 0
      %2812 = vmatprep.subr.bf16.mxu0 0
      %2813 = vmatpush1.bf16.msra.mxu0 0
      %2814 = vmatprep.subr.bf16.mxu0 0
      %2815 = vmatpush1.bf16.msra.mxu0 0
      %2816 = vmatprep.subr.bf16.mxu0 0
      %2817 = vmatpush1.bf16.msra.mxu0 0
      %2818 = vmatprep.subr.bf16.mxu0 0
      %2819 = vmatpush1.bf16.msra.mxu0 0
      %2820 = vmatprep.subr.bf16.mxu0 0
      %2821 = vmatpush1.bf16.msra.mxu0 0
      %2822 = vmatprep.subr.bf16.mxu0 0
      %2823 = vmatpush1.bf16.msra.mxu0 %v2806
      %2824 = vmatprep.subr.bf16.mxu0 0
      %2825 = vmatpush2.bf16.msra.mxu0 0
      %2826 = vmatprep.subr.bf16.mxu0 0
      %2827 = vmatpush2.bf16.msra.mxu0 0
      %2828 = vmatprep.subr.bf16.mxu0 0
      %2829 = vmatpush2.bf16.msra.mxu0 0
      %2830 = vmatprep.subr.bf16.mxu0 0
      %2831 = vmatpush2.bf16.msra.mxu0 0
      %2832 = vmatprep.subr.bf16.mxu0 0
      %2833 = vmatpush2.bf16.msra.mxu0 0
      %2834 = vmatprep.subr.bf16.mxu0 0
      %2835 = vmatpush2.bf16.msra.mxu0 0
      %2836 = vmatprep.subr.bf16.mxu0 0
      %2837 = vmatpush2.bf16.msra.mxu0 0
      %2838 = vmatprep.subr.bf16.mxu0 0
      %2839 = vmatpush2.bf16.msra.mxu0 0
      %2840 = vmatprep.mubr.bf16.mxu0 0
      %2841 = vmatmul.mubr.bf16.gmra.mxu0 %v2803
      %v2842 = vpop.f32.mrf.mxu0
      %v2843 = vadd.f32 0.0, %v2842
      %v2844 = vpop.f32.mrf.mxu0
      %v2845 = vpop.f32.mrf.mxu0
      %v2846 = vpop.f32.mrf.mxu0
      %2847 = vdwg.mxu0
      %v2849 = vsel %vm1069, %v2795, 0
      %v2852 = vsel %vm1537, %v2331, 0
      %2854 = vmatprep.subr.bf16.mxu0 0
      %2855 = vmatpush1.bf16.msra.mxu0 0
      %2856 = vmatprep.subr.bf16.mxu0 0
      %2857 = vmatpush1.bf16.msra.mxu0 0
      %2858 = vmatprep.subr.bf16.mxu0 0
      %2859 = vmatpush1.bf16.msra.mxu0 0
      %2860 = vmatprep.subr.bf16.mxu0 0
      %2861 = vmatpush1.bf16.msra.mxu0 0
      %2862 = vmatprep.subr.bf16.mxu0 0
      %2863 = vmatpush1.bf16.msra.mxu0 0
      %2864 = vmatprep.subr.bf16.mxu0 0
      %2865 = vmatpush1.bf16.msra.mxu0 0
      %2866 = vmatprep.subr.bf16.mxu0 0
      %2867 = vmatpush1.bf16.msra.mxu0 0
      %2868 = vmatprep.subr.bf16.mxu0 0
      %2869 = vmatpush1.bf16.msra.mxu0 %v2852
      %2870 = vmatprep.subr.bf16.mxu0 0
      %2871 = vmatpush2.bf16.msra.mxu0 0
      %2872 = vmatprep.subr.bf16.mxu0 0
      %2873 = vmatpush2.bf16.msra.mxu0 0
      %2874 = vmatprep.subr.bf16.mxu0 0
      %2875 = vmatpush2.bf16.msra.mxu0 0
      %2876 = vmatprep.subr.bf16.mxu0 0
      %2877 = vmatpush2.bf16.msra.mxu0 0
      %2878 = vmatprep.subr.bf16.mxu0 0
      %2879 = vmatpush2.bf16.msra.mxu0 0
      %2880 = vmatprep.subr.bf16.mxu0 0
      %2881 = vmatpush2.bf16.msra.mxu0 0
      %2882 = vmatprep.subr.bf16.mxu0 0
      %2883 = vmatpush2.bf16.msra.mxu0 0
      %2884 = vmatprep.subr.bf16.mxu0 0
      %2885 = vmatpush2.bf16.msra.mxu0 0
      %2886 = vmatprep.mubr.bf16.mxu0 0
      %2887 = vmatmul.mubr.bf16.gmra.mxu0 %v2849
      %v2888 = vpop.f32.mrf.mxu0
      %v2889 = vadd.f32 0.0, %v2888
      %v2890 = vpop.f32.mrf.mxu0
      %v2891 = vpop.f32.mrf.mxu0
      %v2892 = vpop.f32.mrf.mxu0
      %2893 = vdwg.mxu0
      %v2895 = vsel %vm1069, %v2796, 0
      %v2898 = vsel %vm1537, %v2332, 0
      %2900 = vmatprep.subr.bf16.mxu0 0
      %2901 = vmatpush1.bf16.msra.mxu0 0
      %2902 = vmatprep.subr.bf16.mxu0 0
      %2903 = vmatpush1.bf16.msra.mxu0 0
      %2904 = vmatprep.subr.bf16.mxu0 0
      %2905 = vmatpush1.bf16.msra.mxu0 0
      %2906 = vmatprep.subr.bf16.mxu0 0
      %2907 = vmatpush1.bf16.msra.mxu0 0
      %2908 = vmatprep.subr.bf16.mxu0 0
      %2909 = vmatpush1.bf16.msra.mxu0 0
      %2910 = vmatprep.subr.bf16.mxu0 0
      %2911 = vmatpush1.bf16.msra.mxu0 0
      %2912 = vmatprep.subr.bf16.mxu0 0
      %2913 = vmatpush1.bf16.msra.mxu0 0
      %2914 = vmatprep.subr.bf16.mxu0 0
      %2915 = vmatpush1.bf16.msra.mxu0 %v2898
      %2916 = vmatprep.subr.bf16.mxu0 0
      %2917 = vmatpush2.bf16.msra.mxu0 0
      %2918 = vmatprep.subr.bf16.mxu0 0
      %2919 = vmatpush2.bf16.msra.mxu0 0
      %2920 = vmatprep.subr.bf16.mxu0 0
      %2921 = vmatpush2.bf16.msra.mxu0 0
      %2922 = vmatprep.subr.bf16.mxu0 0
      %2923 = vmatpush2.bf16.msra.mxu0 0
      %2924 = vmatprep.subr.bf16.mxu0 0
      %2925 = vmatpush2.bf16.msra.mxu0 0
      %2926 = vmatprep.subr.bf16.mxu0 0
      %2927 = vmatpush2.bf16.msra.mxu0 0
      %2928 = vmatprep.subr.bf16.mxu0 0
      %2929 = vmatpush2.bf16.msra.mxu0 0
      %2930 = vmatprep.subr.bf16.mxu0 0
      %2931 = vmatpush2.bf16.msra.mxu0 0
      %2932 = vmatprep.mubr.bf16.mxu0 0
      %2933 = vmatmul.mubr.bf16.gmra.mxu0 %v2895
      %v2934 = vpop.f32.mrf.mxu0
      %v2935 = vadd.f32 0.0, %v2934
      %v2936 = vpop.f32.mrf.mxu0
      %v2937 = vpop.f32.mrf.mxu0
      %v2938 = vpop.f32.mrf.mxu0
      %2939 = vdwg.mxu0
      %v2941 = vsel %vm1069, %v2797, 0
      %v2944 = vsel %vm1537, %v2333, 0
      %2946 = vmatprep.subr.bf16.mxu0 0
      %2947 = vmatpush1.bf16.msra.mxu0 0
      %2948 = vmatprep.subr.bf16.mxu0 0
      %2949 = vmatpush1.bf16.msra.mxu0 0
      %2950 = vmatprep.subr.bf16.mxu0 0
      %2951 = vmatpush1.bf16.msra.mxu0 0
      %2952 = vmatprep.subr.bf16.mxu0 0
      %2953 = vmatpush1.bf16.msra.mxu0 0
      %2954 = vmatprep.subr.bf16.mxu0 0
      %2955 = vmatpush1.bf16.msra.mxu0 0
      %2956 = vmatprep.subr.bf16.mxu0 0
      %2957 = vmatpush1.bf16.msra.mxu0 0
      %2958 = vmatprep.subr.bf16.mxu0 0
      %2959 = vmatpush1.bf16.msra.mxu0 0
      %2960 = vmatprep.subr.bf16.mxu0 0
      %2961 = vmatpush1.bf16.msra.mxu0 %v2944
      %2962 = vmatprep.subr.bf16.mxu0 0
      %2963 = vmatpush2.bf16.msra.mxu0 0
      %2964 = vmatprep.subr.bf16.mxu0 0
      %2965 = vmatpush2.bf16.msra.mxu0 0
      %2966 = vmatprep.subr.bf16.mxu0 0
      %2967 = vmatpush2.bf16.msra.mxu0 0
      %2968 = vmatprep.subr.bf16.mxu0 0
      %2969 = vmatpush2.bf16.msra.mxu0 0
      %2970 = vmatprep.subr.bf16.mxu0 0
      %2971 = vmatpush2.bf16.msra.mxu0 0
      %2972 = vmatprep.subr.bf16.mxu0 0
      %2973 = vmatpush2.bf16.msra.mxu0 0
      %2974 = vmatprep.subr.bf16.mxu0 0
      %2975 = vmatpush2.bf16.msra.mxu0 0
      %2976 = vmatprep.subr.bf16.mxu0 0
      %2977 = vmatpush2.bf16.msra.mxu0 0
      %2978 = vmatprep.mubr.bf16.mxu0 0
      %2979 = vmatmul.mubr.bf16.gmra.mxu0 %v2941
      %v2980 = vpop.f32.mrf.mxu0
      %v2981 = vadd.f32 0.0, %v2980
      %v2982 = vpop.f32.mrf.mxu0
      %v2983 = vpop.f32.mrf.mxu0
      %v2984 = vpop.f32.mrf.mxu0
      %2985 = vdwg.mxu0
      %v2987 = vsel %vm1069, %v2798, 0
      %v2990 = vsel %vm1537, %v2334, 0
      %2992 = vmatprep.subr.bf16.mxu0 0
      %2993 = vmatpush1.bf16.msra.mxu0 0
      %2994 = vmatprep.subr.bf16.mxu0 0
      %2995 = vmatpush1.bf16.msra.mxu0 0
      %2996 = vmatprep.subr.bf16.mxu0 0
      %2997 = vmatpush1.bf16.msra.mxu0 0
      %2998 = vmatprep.subr.bf16.mxu0 0
      %2999 = vmatpush1.bf16.msra.mxu0 0
      %3000 = vmatprep.subr.bf16.mxu0 0
      %3001 = vmatpush1.bf16.msra.mxu0 0
      %3002 = vmatprep.subr.bf16.mxu0 0
      %3003 = vmatpush1.bf16.msra.mxu0 0
      %3004 = vmatprep.subr.bf16.mxu0 0
      %3005 = vmatpush1.bf16.msra.mxu0 0
      %3006 = vmatprep.subr.bf16.mxu0 0
      %3007 = vmatpush1.bf16.msra.mxu0 %v2990
      %3008 = vmatprep.subr.bf16.mxu0 0
      %3009 = vmatpush2.bf16.msra.mxu0 0
      %3010 = vmatprep.subr.bf16.mxu0 0
      %3011 = vmatpush2.bf16.msra.mxu0 0
      %3012 = vmatprep.subr.bf16.mxu0 0
      %3013 = vmatpush2.bf16.msra.mxu0 0
      %3014 = vmatprep.subr.bf16.mxu0 0
      %3015 = vmatpush2.bf16.msra.mxu0 0
      %3016 = vmatprep.subr.bf16.mxu0 0
      %3017 = vmatpush2.bf16.msra.mxu0 0
      %3018 = vmatprep.subr.bf16.mxu0 0
      %3019 = vmatpush2.bf16.msra.mxu0 0
      %3020 = vmatprep.subr.bf16.mxu0 0
      %3021 = vmatpush2.bf16.msra.mxu0 0
      %3022 = vmatprep.subr.bf16.mxu0 0
      %3023 = vmatpush2.bf16.msra.mxu0 0
      %3024 = vmatprep.mubr.bf16.mxu0 0
      %3025 = vmatmul.mubr.bf16.gmra.mxu0 %v2987
      %v3026 = vpop.f32.mrf.mxu0
      %v3027 = vadd.f32 0.0, %v3026
      %v3028 = vpop.f32.mrf.mxu0
      %v3029 = vpop.f32.mrf.mxu0
      %v3030 = vpop.f32.mrf.mxu0
      %3031 = vdwg.mxu0
      %v3033 = vsel %vm1069, %v2799, 0
      %v3036 = vsel %vm1537, %v2335, 0
      %3038 = vmatprep.subr.bf16.mxu0 0
      %3039 = vmatpush1.bf16.msra.mxu0 0
      %3040 = vmatprep.subr.bf16.mxu0 0
      %3041 = vmatpush1.bf16.msra.mxu0 0
      %3042 = vmatprep.subr.bf16.mxu0 0
      %3043 = vmatpush1.bf16.msra.mxu0 0
      %3044 = vmatprep.subr.bf16.mxu0 0
      %3045 = vmatpush1.bf16.msra.mxu0 0
      %3046 = vmatprep.subr.bf16.mxu0 0
      %3047 = vmatpush1.bf16.msra.mxu0 0
      %3048 = vmatprep.subr.bf16.mxu0 0
      %3049 = vmatpush1.bf16.msra.mxu0 0
      %3050 = vmatprep.subr.bf16.mxu0 0
      %3051 = vmatpush1.bf16.msra.mxu0 0
      %3052 = vmatprep.subr.bf16.mxu0 0
      %3053 = vmatpush1.bf16.msra.mxu0 %v3036
      %3054 = vmatprep.subr.bf16.mxu0 0
      %3055 = vmatpush2.bf16.msra.mxu0 0
      %3056 = vmatprep.subr.bf16.mxu0 0
      %3057 = vmatpush2.bf16.msra.mxu0 0
      %3058 = vmatprep.subr.bf16.mxu0 0
      %3059 = vmatpush2.bf16.msra.mxu0 0
      %3060 = vmatprep.subr.bf16.mxu0 0
      %3061 = vmatpush2.bf16.msra.mxu0 0
      %3062 = vmatprep.subr.bf16.mxu0 0
      %3063 = vmatpush2.bf16.msra.mxu0 0
      %3064 = vmatprep.subr.bf16.mxu0 0
      %3065 = vmatpush2.bf16.msra.mxu0 0
      %3066 = vmatprep.subr.bf16.mxu0 0
      %3067 = vmatpush2.bf16.msra.mxu0 0
      %3068 = vmatprep.subr.bf16.mxu0 0
      %3069 = vmatpush2.bf16.msra.mxu0 0
      %3070 = vmatprep.mubr.bf16.mxu0 0
      %3071 = vmatmul.mubr.bf16.gmra.mxu0 %v3033
      %v3072 = vpop.f32.mrf.mxu0
      %v3073 = vadd.f32 0.0, %v3072
      %v3074 = vpop.f32.mrf.mxu0
      %v3075 = vpop.f32.mrf.mxu0
      %v3076 = vpop.f32.mrf.mxu0
      %3077 = vdwg.mxu0
      %v3079 = vsel %vm1069, %v2800, 0
      %v3082 = vsel %vm1537, %v2336, 0
      %3084 = vmatprep.subr.bf16.mxu0 0
      %3085 = vmatpush1.bf16.msra.mxu0 0
      %3086 = vmatprep.subr.bf16.mxu0 0
      %3087 = vmatpush1.bf16.msra.mxu0 0
      %3088 = vmatprep.subr.bf16.mxu0 0
      %3089 = vmatpush1.bf16.msra.mxu0 0
      %3090 = vmatprep.subr.bf16.mxu0 0
      %3091 = vmatpush1.bf16.msra.mxu0 0
      %3092 = vmatprep.subr.bf16.mxu0 0
      %3093 = vmatpush1.bf16.msra.mxu0 0
      %3094 = vmatprep.subr.bf16.mxu0 0
      %3095 = vmatpush1.bf16.msra.mxu0 0
      %3096 = vmatprep.subr.bf16.mxu0 0
      %3097 = vmatpush1.bf16.msra.mxu0 0
      %3098 = vmatprep.subr.bf16.mxu0 0
      %3099 = vmatpush1.bf16.msra.mxu0 %v3082
      %3100 = vmatprep.subr.bf16.mxu0 0
      %3101 = vmatpush2.bf16.msra.mxu0 0
      %3102 = vmatprep.subr.bf16.mxu0 0
      %3103 = vmatpush2.bf16.msra.mxu0 0
      %3104 = vmatprep.subr.bf16.mxu0 0
      %3105 = vmatpush2.bf16.msra.mxu0 0
      %3106 = vmatprep.subr.bf16.mxu0 0
      %3107 = vmatpush2.bf16.msra.mxu0 0
      %3108 = vmatprep.subr.bf16.mxu0 0
      %3109 = vmatpush2.bf16.msra.mxu0 0
      %3110 = vmatprep.subr.bf16.mxu0 0
      %3111 = vmatpush2.bf16.msra.mxu0 0
      %3112 = vmatprep.subr.bf16.mxu0 0
      %3113 = vmatpush2.bf16.msra.mxu0 0
      %3114 = vmatprep.subr.bf16.mxu0 0
      %3115 = vmatpush2.bf16.msra.mxu0 0
      %3116 = vmatprep.mubr.bf16.mxu0 0
      %3117 = vmatmul.mubr.bf16.gmra.mxu0 %v3079
      %v3118 = vpop.f32.mrf.mxu0
      %v3119 = vadd.f32 0.0, %v3118
      %v3120 = vpop.f32.mrf.mxu0
      %v3121 = vpop.f32.mrf.mxu0
      %v3122 = vpop.f32.mrf.mxu0
      %3123 = vdwg.mxu0
      %v3125 = vsel %vm1069, %v2801, 0
      %v3128 = vsel %vm1537, %v2337, 0
      %3130 = vmatprep.subr.bf16.mxu0 0
      %3131 = vmatpush1.bf16.msra.mxu0 0
      %3132 = vmatprep.subr.bf16.mxu0 0
      %3133 = vmatpush1.bf16.msra.mxu0 0
      %3134 = vmatprep.subr.bf16.mxu0 0
      %3135 = vmatpush1.bf16.msra.mxu0 0
      %3136 = vmatprep.subr.bf16.mxu0 0
      %3137 = vmatpush1.bf16.msra.mxu0 0
      %3138 = vmatprep.subr.bf16.mxu0 0
      %3139 = vmatpush1.bf16.msra.mxu0 0
      %3140 = vmatprep.subr.bf16.mxu0 0
      %3141 = vmatpush1.bf16.msra.mxu0 0
      %3142 = vmatprep.subr.bf16.mxu0 0
      %3143 = vmatpush1.bf16.msra.mxu0 0
      %3144 = vmatprep.subr.bf16.mxu0 0
      %3145 = vmatpush1.bf16.msra.mxu0 %v3128
      %3146 = vmatprep.subr.bf16.mxu0 0
      %3147 = vmatpush2.bf16.msra.mxu0 0
      %3148 = vmatprep.subr.bf16.mxu0 0
      %3149 = vmatpush2.bf16.msra.mxu0 0
      %3150 = vmatprep.subr.bf16.mxu0 0
      %3151 = vmatpush2.bf16.msra.mxu0 0
      %3152 = vmatprep.subr.bf16.mxu0 0
      %3153 = vmatpush2.bf16.msra.mxu0 0
      %3154 = vmatprep.subr.bf16.mxu0 0
      %3155 = vmatpush2.bf16.msra.mxu0 0
      %3156 = vmatprep.subr.bf16.mxu0 0
      %3157 = vmatpush2.bf16.msra.mxu0 0
      %3158 = vmatprep.subr.bf16.mxu0 0
      %3159 = vmatpush2.bf16.msra.mxu0 0
      %3160 = vmatprep.subr.bf16.mxu0 0
      %3161 = vmatpush2.bf16.msra.mxu0 0
      %3162 = vmatprep.mubr.bf16.mxu0 0
      %3163 = vmatmul.mubr.bf16.gmra.mxu0 %v3125
      %v3164 = vpop.f32.mrf.mxu0
      %v3165 = vadd.f32 0.0, %v3164
      %v3166 = vpop.f32.mrf.mxu0
      %v3167 = vpop.f32.mrf.mxu0
      %v3168 = vpop.f32.mrf.mxu0
      %3169 = vdwg.mxu0
      %v3170 = vpack.c.bf16 %v2889, %v2843
      %v3171 = vpack.c.bf16 %v2981, %v2935
      %v3172 = vpack.c.bf16 %v3073, %v3027
      %v3173 = vpack.c.bf16 %v3165, %v3119
      %s3174 = scalar_lea.vmem %s8, 16
      %v3175 = vld [vmem:[%s3174] sm:$0xf]
      %v3177 = vsel %vm1069, %v3170, 0
      %v3180 = vsel %vm1069, %v3171, 0
      %v3183 = vsel %vm1069, %v3172, 0
      %v3186 = vsel %vm1069, %v3173, 0
      %v3189 = vsel %vm1537, %v3175, 0
      %3191 = vmatprep.subr.bf16.mxu0 0
      %3192 = vmatpush1.bf16.msra.mxu0 0
      %3193 = vmatprep.subr.bf16.mxu0 0
      %3194 = vmatpush1.bf16.msra.mxu0 0
      %3195 = vmatprep.subr.bf16.mxu0 0
      %3196 = vmatpush1.bf16.msra.mxu0 0
      %3197 = vmatprep.subr.bf16.mxu0 0
      %3198 = vmatpush1.bf16.msra.mxu0 0
      %3199 = vmatprep.subr.bf16.mxu0 0
      %3200 = vmatpush1.bf16.msra.mxu0 0
      %3201 = vmatprep.subr.bf16.mxu0 0
      %3202 = vmatpush1.bf16.msra.mxu0 0
      %3203 = vmatprep.subr.bf16.mxu0 0
      %3204 = vmatpush1.bf16.msra.mxu0 0
      %3205 = vmatprep.subr.bf16.mxu0 0
      %3206 = vmatpush1.bf16.msra.mxu0 %v3189
      %3207 = vmatprep.subr.bf16.mxu0 0
      %3208 = vmatpush2.bf16.msra.mxu0 0
      %3209 = vmatprep.subr.bf16.mxu0 0
      %3210 = vmatpush2.bf16.msra.mxu0 0
      %3211 = vmatprep.subr.bf16.mxu0 0
      %3212 = vmatpush2.bf16.msra.mxu0 0
      %3213 = vmatprep.subr.bf16.mxu0 0
      %3214 = vmatpush2.bf16.msra.mxu0 0
      %3215 = vmatprep.subr.bf16.mxu0 0
      %3216 = vmatpush2.bf16.msra.mxu0 0
      %3217 = vmatprep.subr.bf16.mxu0 0
      %3218 = vmatpush2.bf16.msra.mxu0 0
      %3219 = vmatprep.subr.bf16.mxu0 0
      %3220 = vmatpush2.bf16.msra.mxu0 0
      %3221 = vmatprep.subr.bf16.mxu0 0
      %3222 = vmatpush2.bf16.msra.mxu0 0
      %3223 = vmatprep.mubr.bf16.mxu0 0
      %3224 = vmatmul.mubr.bf16.gmra.mxu0 %v3177
      %v3225 = vpop.f32.mrf.mxu0
      %v3226 = vadd.f32 0.0, %v3225
      %v3227 = vpop.f32.mrf.mxu0
      %v3228 = vpop.f32.mrf.mxu0
      %v3229 = vadd.f32 0.0, %v3228
      %v3230 = vpop.f32.mrf.mxu0
      %3231 = vmatprep.mubr.bf16.mxu0 0
      %3232 = vmatmul.mubr.bf16.gmra.mxu0 %v3180
      %v3233 = vpop.f32.mrf.mxu0
      %v3234 = vadd.f32 0.0, %v3233
      %v3235 = vpop.f32.mrf.mxu0
      %v3236 = vpop.f32.mrf.mxu0
      %v3237 = vadd.f32 0.0, %v3236
      %v3238 = vpop.f32.mrf.mxu0
      %3239 = vmatprep.mubr.bf16.mxu0 0
      %3240 = vmatmul.mubr.bf16.gmra.mxu0 %v3183
      %v3241 = vpop.f32.mrf.mxu0
      %v3242 = vadd.f32 0.0, %v3241
      %v3243 = vpop.f32.mrf.mxu0
      %v3244 = vpop.f32.mrf.mxu0
      %v3245 = vadd.f32 0.0, %v3244
      %v3246 = vpop.f32.mrf.mxu0
      %3247 = vmatprep.mubr.bf16.mxu0 0
      %3248 = vmatmul.mubr.bf16.gmra.mxu0 %v3186
      %v3249 = vpop.f32.mrf.mxu0
      %v3250 = vadd.f32 0.0, %v3249
      %v3251 = vpop.f32.mrf.mxu0
      %v3252 = vpop.f32.mrf.mxu0
      %v3253 = vadd.f32 0.0, %v3252
      %v3254 = vpop.f32.mrf.mxu0
      %3255 = vdwg.mxu0
      %v3256 = vadd.f32 %v1988, %v3226
      %v3257 = vadd.f32 %v1989, %v3229
      %v3258 = vadd.f32 %v1990, %v3234
      %v3259 = vadd.f32 %v1991, %v3237
      %v3260 = vadd.f32 %v1992, %v3242
      %v3261 = vadd.f32 %v1993, %v3245
      %v3262 = vadd.f32 %v1994, %v3250
      %v3263 = vadd.f32 %v1995, %v3253
      %s3264 = scalar_lea.vmem %s6, 16
      %v3265 = vld [vmem:[%s3264] sm:$0xf]
      %v3266 = vld [vmem:[%s3264 + $0x4] sm:$0xf]
      %v3267 = vld [vmem:[%s3264 + $0x8] sm:$0xf]
      %v3268 = vld [vmem:[%s3264 + $0xc] sm:$0xf]
      %s3269 = scalar_lea.vmem %s7, 1
      %v3270 = vld [vmem:[%s3269] sm:$0x1]
      %v3272 = vlaneseq
      %v3273 = vshrl.u32 %v3272, 7
      %v3274 = vsub.s32 0, %v3273
      %v3275 = vrot.slane %v3270, %v3274
      %v3281 = vunpack.c.l.b16 %v3265
      %v3282 = vunpack.c.l.b16 %v3266
      %v3283 = vunpack.c.l.b16 %v3267
      %v3284 = vunpack.c.l.b16 %v3268
      %v3285 = vpack.c.b16 %v3282, %v3281
      %v3286 = vpack.c.b16 %v3284, %v3283
      %3289 = vmatprep.subr.bf16.mxu0 0
      %3290 = vmatpush1.bf16.msra.mxu0 0
      %3291 = vmatprep.subr.bf16.mxu0 0
      %3292 = vmatpush1.bf16.msra.mxu0 0
      %3293 = vmatprep.subr.bf16.mxu0 0
      %3294 = vmatpush1.bf16.msra.mxu0 0
      %3295 = vmatprep.subr.bf16.mxu0 0
      %3296 = vmatpush1.bf16.msra.mxu0 0
      %3297 = vmatprep.subr.bf16.mxu0 0
      %3298 = vmatpush1.bf16.msra.mxu0 0
      %3299 = vmatprep.subr.bf16.mxu0 0
      %3300 = vmatpush1.bf16.msra.mxu0 0
      %3301 = vmatprep.subr.bf16.mxu0 0
      %3302 = vmatpush1.bf16.msra.mxu0 %v3286
      %3303 = vmatprep.subr.bf16.mxu0 0
      %3304 = vmatpush1.bf16.msra.mxu0 %v3285
      %3305 = vmatprep.subr.bf16.mxu0 0
      %3306 = vmatpush2.bf16.msra.mxu0 0
      %3307 = vmatprep.subr.bf16.mxu0 0
      %3308 = vmatpush2.bf16.msra.mxu0 0
      %3309 = vmatprep.subr.bf16.mxu0 0
      %3310 = vmatpush2.bf16.msra.mxu0 0
      %3311 = vmatprep.subr.bf16.mxu0 0
      %3312 = vmatpush2.bf16.msra.mxu0 0
      %3313 = vmatprep.subr.bf16.mxu0 0
      %3314 = vmatpush2.bf16.msra.mxu0 0
      %3315 = vmatprep.subr.bf16.mxu0 0
      %3316 = vmatpush2.bf16.msra.mxu0 0
      %3317 = vmatprep.subr.bf16.mxu0 0
      %3318 = vmatpush2.bf16.msra.mxu0 0
      %3319 = vmatprep.subr.bf16.mxu0 0
      %3320 = vmatpush2.bf16.msra.mxu0 0
      %3321 = vmatprep.mubr.bf16.mxu0 0
      %3322 = vmatmul.mubr.bf16.gmra.mxu0 %v729
      %v3323 = vpop.f32.mrf.mxu0
      %v3324 = vadd.f32 %v3275, %v3323
      %v3325 = vpop.f32.mrf.mxu0
      %v3326 = vpop.f32.mrf.mxu0
      %v3327 = vadd.f32 %v3275, %v3326
      %v3328 = vpop.f32.mrf.mxu0
      %3329 = vmatprep.mubr.bf16.mxu0 0
      %3330 = vmatmul.mubr.bf16.gmra.mxu0 %v732
      %v3331 = vpop.f32.mrf.mxu0
      %v3332 = vadd.f32 %v3275, %v3331
      %v3333 = vpop.f32.mrf.mxu0
      %v3334 = vpop.f32.mrf.mxu0
      %v3335 = vadd.f32 %v3275, %v3334
      %v3336 = vpop.f32.mrf.mxu0
      %3337 = vmatprep.mubr.bf16.mxu0 0
      %3338 = vmatmul.mubr.bf16.gmra.mxu0 %v735
      %v3339 = vpop.f32.mrf.mxu0
      %v3340 = vadd.f32 %v3275, %v3339
      %v3341 = vpop.f32.mrf.mxu0
      %v3342 = vpop.f32.mrf.mxu0
      %v3343 = vadd.f32 %v3275, %v3342
      %v3344 = vpop.f32.mrf.mxu0
      %3345 = vmatprep.mubr.bf16.mxu0 0
      %3346 = vmatmul.mubr.bf16.gmra.mxu0 %v738
      %v3347 = vpop.f32.mrf.mxu0
      %v3348 = vadd.f32 %v3275, %v3347
      %v3349 = vpop.f32.mrf.mxu0
      %v3350 = vpop.f32.mrf.mxu0
      %v3351 = vadd.f32 %v3275, %v3350
      %v3352 = vpop.f32.mrf.mxu0
      %3353 = vdwg.mxu0
      %v3354 = vpack.c.bf16 %v3327, %v3324
      %v3355 = vpack.c.bf16 %v3335, %v3332
      %v3356 = vpack.c.bf16 %v3343, %v3340
      %v3357 = vpack.c.bf16 %v3351, %v3348
      %v3362 = vunpack.c.l.b16 %v3354
      %v3363 = vunpack.c.h.b16 %v3354
      %v3364 = vunpack.c.l.b16 %v3355
      %v3365 = vunpack.c.h.b16 %v3355
      %v3366 = vunpack.c.l.b16 %v3356
      %v3367 = vunpack.c.h.b16 %v3356
      %v3368 = vunpack.c.l.b16 %v3357
      %v3369 = vunpack.c.h.b16 %v3357
      %v3370 = vpack.c.b16 %v3362, %v3362
      %v3371 = vpack.c.b16 %v3363, %v3363
      %v3372 = vpack.c.b16 %v3364, %v3364
      %v3373 = vpack.c.b16 %v3365, %v3365
      %v3374 = vpack.c.b16 %v3366, %v3366
      %v3375 = vpack.c.b16 %v3367, %v3367
      %v3376 = vpack.c.b16 %v3368, %v3368
      %v3377 = vpack.c.b16 %v3369, %v3369
      %s3378 = scalar_lea.vmem %s6, 80
      %v3379 = vld [vmem:[%s3378] sm:$0xf]
      %v3380 = vld [vmem:[%s3378 + $0x4] sm:$0xf]
      %v3381 = vld [vmem:[%s3378 + $0x8] sm:$0xf]
      %v3382 = vld [vmem:[%s3378 + $0xc] sm:$0xf]
      %s3383 = scalar_lea.vmem %s7, 5
      %v3384 = vld [vmem:[%s3383] sm:$0x1]
      %v3386 = vlaneseq
      %v3387 = vshrl.u32 %v3386, 7
      %v3388 = vsub.s32 0, %v3387
      %v3389 = vrot.slane %v3384, %v3388
      %v3395 = vunpack.c.l.b16 %v3379
      %v3396 = vunpack.c.l.b16 %v3380
      %v3397 = vunpack.c.l.b16 %v3381
      %v3398 = vunpack.c.l.b16 %v3382
      %v3399 = vpack.c.b16 %v3396, %v3395
      %v3400 = vpack.c.b16 %v3398, %v3397
      %3403 = vmatprep.subr.bf16.mxu0 0
      %3404 = vmatpush1.bf16.msra.mxu0 0
      %3405 = vmatprep.subr.bf16.mxu0 0
      %3406 = vmatpush1.bf16.msra.mxu0 0
      %3407 = vmatprep.subr.bf16.mxu0 0
      %3408 = vmatpush1.bf16.msra.mxu0 0
      %3409 = vmatprep.subr.bf16.mxu0 0
      %3410 = vmatpush1.bf16.msra.mxu0 0
      %3411 = vmatprep.subr.bf16.mxu0 0
      %3412 = vmatpush1.bf16.msra.mxu0 0
      %3413 = vmatprep.subr.bf16.mxu0 0
      %3414 = vmatpush1.bf16.msra.mxu0 0
      %3415 = vmatprep.subr.bf16.mxu0 0
      %3416 = vmatpush1.bf16.msra.mxu0 %v3400
      %3417 = vmatprep.subr.bf16.mxu0 0
      %3418 = vmatpush1.bf16.msra.mxu0 %v3399
      %3419 = vmatprep.subr.bf16.mxu0 0
      %3420 = vmatpush2.bf16.msra.mxu0 0
      %3421 = vmatprep.subr.bf16.mxu0 0
      %3422 = vmatpush2.bf16.msra.mxu0 0
      %3423 = vmatprep.subr.bf16.mxu0 0
      %3424 = vmatpush2.bf16.msra.mxu0 0
      %3425 = vmatprep.subr.bf16.mxu0 0
      %3426 = vmatpush2.bf16.msra.mxu0 0
      %3427 = vmatprep.subr.bf16.mxu0 0
      %3428 = vmatpush2.bf16.msra.mxu0 0
      %3429 = vmatprep.subr.bf16.mxu0 0
      %3430 = vmatpush2.bf16.msra.mxu0 0
      %3431 = vmatprep.subr.bf16.mxu0 0
      %3432 = vmatpush2.bf16.msra.mxu0 0
      %3433 = vmatprep.subr.bf16.mxu0 0
      %3434 = vmatpush2.bf16.msra.mxu0 0
      %3435 = vmatprep.mubr.bf16.mxu0 0
      %3436 = vmatmul.mubr.bf16.gmra.mxu0 %v855
      %v3437 = vpop.f32.mrf.mxu0
      %v3438 = vadd.f32 %v3389, %v3437
      %v3439 = vpop.f32.mrf.mxu0
      %v3440 = vpop.f32.mrf.mxu0
      %v3441 = vadd.f32 %v3389, %v3440
      %v3442 = vpop.f32.mrf.mxu0
      %3443 = vmatprep.mubr.bf16.mxu0 0
      %3444 = vmatmul.mubr.bf16.gmra.mxu0 %v858
      %v3445 = vpop.f32.mrf.mxu0
      %v3446 = vadd.f32 %v3389, %v3445
      %v3447 = vpop.f32.mrf.mxu0
      %v3448 = vpop.f32.mrf.mxu0
      %v3449 = vadd.f32 %v3389, %v3448
      %v3450 = vpop.f32.mrf.mxu0
      %3451 = vmatprep.mubr.bf16.mxu0 0
      %3452 = vmatmul.mubr.bf16.gmra.mxu0 %v861
      %v3453 = vpop.f32.mrf.mxu0
      %v3454 = vadd.f32 %v3389, %v3453
      %v3455 = vpop.f32.mrf.mxu0
      %v3456 = vpop.f32.mrf.mxu0
      %v3457 = vadd.f32 %v3389, %v3456
      %v3458 = vpop.f32.mrf.mxu0
      %3459 = vmatprep.mubr.bf16.mxu0 0
      %3460 = vmatmul.mubr.bf16.gmra.mxu0 %v864
      %v3461 = vpop.f32.mrf.mxu0
      %v3462 = vadd.f32 %v3389, %v3461
      %v3463 = vpop.f32.mrf.mxu0
      %v3464 = vpop.f32.mrf.mxu0
      %v3465 = vadd.f32 %v3389, %v3464
      %v3466 = vpop.f32.mrf.mxu0
      %3467 = vdwg.mxu0
      %v3468 = vpack.c.bf16 %v3441, %v3438
      %v3469 = vpack.c.bf16 %v3449, %v3446
      %v3470 = vpack.c.bf16 %v3457, %v3454
      %v3471 = vpack.c.bf16 %v3465, %v3462
      %v3476 = vunpack.c.l.b16 %v3468
      %v3477 = vunpack.c.h.b16 %v3468
      %v3478 = vunpack.c.l.b16 %v3469
      %v3479 = vunpack.c.h.b16 %v3469
      %v3480 = vunpack.c.l.b16 %v3470
      %v3481 = vunpack.c.h.b16 %v3470
      %v3482 = vunpack.c.l.b16 %v3471
      %v3483 = vunpack.c.h.b16 %v3471
      %v3484 = vpack.c.b16 %v3476, %v3476
      %v3485 = vpack.c.b16 %v3477, %v3477
      %v3486 = vpack.c.b16 %v3478, %v3478
      %v3487 = vpack.c.b16 %v3479, %v3479
      %v3488 = vpack.c.b16 %v3480, %v3480
      %v3489 = vpack.c.b16 %v3481, %v3481
      %v3490 = vpack.c.b16 %v3482, %v3482
      %v3491 = vpack.c.b16 %v3483, %v3483
      %s3492 = scalar_lea.vmem %s6, 144
      %v3493 = vld [vmem:[%s3492] sm:$0xf]
      %v3494 = vld [vmem:[%s3492 + $0x4] sm:$0xf]
      %v3495 = vld [vmem:[%s3492 + $0x8] sm:$0xf]
      %v3496 = vld [vmem:[%s3492 + $0xc] sm:$0xf]
      %s3497 = scalar_lea.vmem %s7, 9
      %v3498 = vld [vmem:[%s3497] sm:$0x1]
      %v3500 = vlaneseq
      %v3501 = vshrl.u32 %v3500, 7
      %v3502 = vsub.s32 0, %v3501
      %v3503 = vrot.slane %v3498, %v3502
      %v3509 = vunpack.c.l.b16 %v3493
      %v3510 = vunpack.c.l.b16 %v3494
      %v3511 = vunpack.c.l.b16 %v3495
      %v3512 = vunpack.c.l.b16 %v3496
      %v3513 = vpack.c.b16 %v3510, %v3509
      %v3514 = vpack.c.b16 %v3512, %v3511
      %3517 = vmatprep.subr.bf16.mxu0 0
      %3518 = vmatpush1.bf16.msra.mxu0 0
      %3519 = vmatprep.subr.bf16.mxu0 0
      %3520 = vmatpush1.bf16.msra.mxu0 0
      %3521 = vmatprep.subr.bf16.mxu0 0
      %3522 = vmatpush1.bf16.msra.mxu0 0
      %3523 = vmatprep.subr.bf16.mxu0 0
      %3524 = vmatpush1.bf16.msra.mxu0 0
      %3525 = vmatprep.subr.bf16.mxu0 0
      %3526 = vmatpush1.bf16.msra.mxu0 0
      %3527 = vmatprep.subr.bf16.mxu0 0
      %3528 = vmatpush1.bf16.msra.mxu0 0
      %3529 = vmatprep.subr.bf16.mxu0 0
      %3530 = vmatpush1.bf16.msra.mxu0 %v3514
      %3531 = vmatprep.subr.bf16.mxu0 0
      %3532 = vmatpush1.bf16.msra.mxu0 %v3513
      %3533 = vmatprep.subr.bf16.mxu0 0
      %3534 = vmatpush2.bf16.msra.mxu0 0
      %3535 = vmatprep.subr.bf16.mxu0 0
      %3536 = vmatpush2.bf16.msra.mxu0 0
      %3537 = vmatprep.subr.bf16.mxu0 0
      %3538 = vmatpush2.bf16.msra.mxu0 0
      %3539 = vmatprep.subr.bf16.mxu0 0
      %3540 = vmatpush2.bf16.msra.mxu0 0
      %3541 = vmatprep.subr.bf16.mxu0 0
      %3542 = vmatpush2.bf16.msra.mxu0 0
      %3543 = vmatprep.subr.bf16.mxu0 0
      %3544 = vmatpush2.bf16.msra.mxu0 0
      %3545 = vmatprep.subr.bf16.mxu0 0
      %3546 = vmatpush2.bf16.msra.mxu0 0
      %3547 = vmatprep.subr.bf16.mxu0 0
      %3548 = vmatpush2.bf16.msra.mxu0 0
      %3549 = vmatprep.mubr.bf16.mxu0 0
      %3550 = vmatmul.mubr.bf16.gmra.mxu0 %v855
      %v3551 = vpop.f32.mrf.mxu0
      %v3552 = vadd.f32 %v3503, %v3551
      %v3553 = vpop.f32.mrf.mxu0
      %v3554 = vpop.f32.mrf.mxu0
      %v3555 = vadd.f32 %v3503, %v3554
      %v3556 = vpop.f32.mrf.mxu0
      %3557 = vmatprep.mubr.bf16.mxu0 0
      %3558 = vmatmul.mubr.bf16.gmra.mxu0 %v858
      %v3559 = vpop.f32.mrf.mxu0
      %v3560 = vadd.f32 %v3503, %v3559
      %v3561 = vpop.f32.mrf.mxu0
      %v3562 = vpop.f32.mrf.mxu0
      %v3563 = vadd.f32 %v3503, %v3562
      %v3564 = vpop.f32.mrf.mxu0
      %3565 = vmatprep.mubr.bf16.mxu0 0
      %3566 = vmatmul.mubr.bf16.gmra.mxu0 %v861
      %v3567 = vpop.f32.mrf.mxu0
      %v3568 = vadd.f32 %v3503, %v3567
      %v3569 = vpop.f32.mrf.mxu0
      %v3570 = vpop.f32.mrf.mxu0
      %v3571 = vadd.f32 %v3503, %v3570
      %v3572 = vpop.f32.mrf.mxu0
      %3573 = vmatprep.mubr.bf16.mxu0 0
      %3574 = vmatmul.mubr.bf16.gmra.mxu0 %v864
      %v3575 = vpop.f32.mrf.mxu0
      %v3576 = vadd.f32 %v3503, %v3575
      %v3577 = vpop.f32.mrf.mxu0
      %v3578 = vpop.f32.mrf.mxu0
      %v3579 = vadd.f32 %v3503, %v3578
      %v3580 = vpop.f32.mrf.mxu0
      %3581 = vdwg.mxu0
      %v3582 = vpack.c.bf16 %v3555, %v3552
      %v3583 = vpack.c.bf16 %v3563, %v3560
      %v3584 = vpack.c.bf16 %v3571, %v3568
      %v3585 = vpack.c.bf16 %v3579, %v3576
      %v3590 = vunpack.c.l.b16 %v3582
      %v3591 = vunpack.c.h.b16 %v3582
      %v3592 = vunpack.c.l.b16 %v3583
      %v3593 = vunpack.c.h.b16 %v3583
      %v3594 = vunpack.c.l.b16 %v3584
      %v3595 = vunpack.c.h.b16 %v3584
      %v3596 = vunpack.c.l.b16 %v3585
      %v3597 = vunpack.c.h.b16 %v3585
      %v3598 = vpack.c.b16 %v3590, %v3590
      %v3599 = vpack.c.b16 %v3591, %v3591
      %v3600 = vpack.c.b16 %v3592, %v3592
      %v3601 = vpack.c.b16 %v3593, %v3593
      %v3602 = vpack.c.b16 %v3594, %v3594
      %v3603 = vpack.c.b16 %v3595, %v3595
      %v3604 = vpack.c.b16 %v3596, %v3596
      %v3605 = vpack.c.b16 %v3597, %v3597
      %v3607 = vsel %vm1069, %v3370, 0
      %v3610 = vsel %vm1069, %v3484, 0
      %3612 = vmatprep.subr.bf16.mxu0 0
      %3613 = vmatpush1.bf16.xpose.msra.mxu0 0
      %3614 = vmatprep.subr.bf16.mxu0 0
      %3615 = vmatpush1.bf16.xpose.msra.mxu0 0
      %3616 = vmatprep.subr.bf16.mxu0 0
      %3617 = vmatpush1.bf16.xpose.msra.mxu0 0
      %3618 = vmatprep.subr.bf16.mxu0 0
      %3619 = vmatpush1.bf16.xpose.msra.mxu0 0
      %3620 = vmatprep.subr.bf16.mxu0 0
      %3621 = vmatpush1.bf16.xpose.msra.mxu0 0
      %3622 = vmatprep.subr.bf16.mxu0 0
      %3623 = vmatpush1.bf16.xpose.msra.mxu0 0
      %3624 = vmatprep.subr.bf16.mxu0 0
      %3625 = vmatpush1.bf16.xpose.msra.mxu0 0
      %3626 = vmatprep.subr.bf16.mxu0 0
      %3627 = vmatpush1.bf16.xpose.msra.mxu0 %v3610
      %3628 = vmatprep.subr.bf16.mxu0 0
      %3629 = vmatpush2.bf16.xpose.msra.mxu0 0
      %3630 = vmatprep.subr.bf16.mxu0 0
      %3631 = vmatpush2.bf16.xpose.msra.mxu0 0
      %3632 = vmatprep.subr.bf16.mxu0 0
      %3633 = vmatpush2.bf16.xpose.msra.mxu0 0
      %3634 = vmatprep.subr.bf16.mxu0 0
      %3635 = vmatpush2.bf16.xpose.msra.mxu0 0
      %3636 = vmatprep.subr.bf16.mxu0 0
      %3637 = vmatpush2.bf16.xpose.msra.mxu0 0
      %3638 = vmatprep.subr.bf16.mxu0 0
      %3639 = vmatpush2.bf16.xpose.msra.mxu0 0
      %3640 = vmatprep.subr.bf16.mxu0 0
      %3641 = vmatpush2.bf16.xpose.msra.mxu0 0
      %3642 = vmatprep.subr.bf16.mxu0 0
      %3643 = vmatpush2.bf16.xpose.msra.mxu0 0
      %3644 = vmatprep.mubr.bf16.mxu0 0
      %3645 = vmatmul.mubr.bf16.gmra.mxu0 %v3607
      %v3646 = vpop.f32.mrf.mxu0
      %v3647 = vadd.f32 %v431, %v3646
      %v3648 = vpop.f32.mrf.mxu0
      %v3649 = vpop.f32.mrf.mxu0
      %v3650 = vpop.f32.mrf.mxu0
      %3651 = vdwg.mxu0
      %v3653 = vsel %vm1069, %v3371, 0
      %v3656 = vsel %vm1069, %v3485, 0
      %3658 = vmatprep.subr.bf16.mxu0 0
      %3659 = vmatpush1.bf16.xpose.msra.mxu0 0
      %3660 = vmatprep.subr.bf16.mxu0 0
      %3661 = vmatpush1.bf16.xpose.msra.mxu0 0
      %3662 = vmatprep.subr.bf16.mxu0 0
      %3663 = vmatpush1.bf16.xpose.msra.mxu0 0
      %3664 = vmatprep.subr.bf16.mxu0 0
      %3665 = vmatpush1.bf16.xpose.msra.mxu0 0
      %3666 = vmatprep.subr.bf16.mxu0 0
      %3667 = vmatpush1.bf16.xpose.msra.mxu0 0
      %3668 = vmatprep.subr.bf16.mxu0 0
      %3669 = vmatpush1.bf16.xpose.msra.mxu0 0
      %3670 = vmatprep.subr.bf16.mxu0 0
      %3671 = vmatpush1.bf16.xpose.msra.mxu0 0
      %3672 = vmatprep.subr.bf16.mxu0 0
      %3673 = vmatpush1.bf16.xpose.msra.mxu0 %v3656
      %3674 = vmatprep.subr.bf16.mxu0 0
      %3675 = vmatpush2.bf16.xpose.msra.mxu0 0
      %3676 = vmatprep.subr.bf16.mxu0 0
      %3677 = vmatpush2.bf16.xpose.msra.mxu0 0
      %3678 = vmatprep.subr.bf16.mxu0 0
      %3679 = vmatpush2.bf16.xpose.msra.mxu0 0
      %3680 = vmatprep.subr.bf16.mxu0 0
      %3681 = vmatpush2.bf16.xpose.msra.mxu0 0
      %3682 = vmatprep.subr.bf16.mxu0 0
      %3683 = vmatpush2.bf16.xpose.msra.mxu0 0
      %3684 = vmatprep.subr.bf16.mxu0 0
      %3685 = vmatpush2.bf16.xpose.msra.mxu0 0
      %3686 = vmatprep.subr.bf16.mxu0 0
      %3687 = vmatpush2.bf16.xpose.msra.mxu0 0
      %3688 = vmatprep.subr.bf16.mxu0 0
      %3689 = vmatpush2.bf16.xpose.msra.mxu0 0
      %3690 = vmatprep.mubr.bf16.mxu0 0
      %3691 = vmatmul.mubr.bf16.gmra.mxu0 %v3653
      %v3692 = vpop.f32.mrf.mxu0
      %v3693 = vadd.f32 %v431, %v3692
      %v3694 = vpop.f32.mrf.mxu0
      %v3695 = vpop.f32.mrf.mxu0
      %v3696 = vpop.f32.mrf.mxu0
      %3697 = vdwg.mxu0
      %v3699 = vsel %vm1069, %v3372, 0
      %v3702 = vsel %vm1069, %v3486, 0
      %3704 = vmatprep.subr.bf16.mxu0 0
      %3705 = vmatpush1.bf16.xpose.msra.mxu0 0
      %3706 = vmatprep.subr.bf16.mxu0 0
      %3707 = vmatpush1.bf16.xpose.msra.mxu0 0
      %3708 = vmatprep.subr.bf16.mxu0 0
      %3709 = vmatpush1.bf16.xpose.msra.mxu0 0
      %3710 = vmatprep.subr.bf16.mxu0 0
      %3711 = vmatpush1.bf16.xpose.msra.mxu0 0
      %3712 = vmatprep.subr.bf16.mxu0 0
      %3713 = vmatpush1.bf16.xpose.msra.mxu0 0
      %3714 = vmatprep.subr.bf16.mxu0 0
      %3715 = vmatpush1.bf16.xpose.msra.mxu0 0
      %3716 = vmatprep.subr.bf16.mxu0 0
      %3717 = vmatpush1.bf16.xpose.msra.mxu0 0
      %3718 = vmatprep.subr.bf16.mxu0 0
      %3719 = vmatpush1.bf16.xpose.msra.mxu0 %v3702
      %3720 = vmatprep.subr.bf16.mxu0 0
      %3721 = vmatpush2.bf16.xpose.msra.mxu0 0
      %3722 = vmatprep.subr.bf16.mxu0 0
      %3723 = vmatpush2.bf16.xpose.msra.mxu0 0
      %3724 = vmatprep.subr.bf16.mxu0 0
      %3725 = vmatpush2.bf16.xpose.msra.mxu0 0
      %3726 = vmatprep.subr.bf16.mxu0 0
      %3727 = vmatpush2.bf16.xpose.msra.mxu0 0
      %3728 = vmatprep.subr.bf16.mxu0 0
      %3729 = vmatpush2.bf16.xpose.msra.mxu0 0
      %3730 = vmatprep.subr.bf16.mxu0 0
      %3731 = vmatpush2.bf16.xpose.msra.mxu0 0
      %3732 = vmatprep.subr.bf16.mxu0 0
      %3733 = vmatpush2.bf16.xpose.msra.mxu0 0
      %3734 = vmatprep.subr.bf16.mxu0 0
      %3735 = vmatpush2.bf16.xpose.msra.mxu0 0
      %3736 = vmatprep.mubr.bf16.mxu0 0
      %3737 = vmatmul.mubr.bf16.gmra.mxu0 %v3699
      %v3738 = vpop.f32.mrf.mxu0
      %v3739 = vadd.f32 %v431, %v3738
      %v3740 = vpop.f32.mrf.mxu0
      %v3741 = vpop.f32.mrf.mxu0
      %v3742 = vpop.f32.mrf.mxu0
      %3743 = vdwg.mxu0
      %v3745 = vsel %vm1069, %v3373, 0
      %v3748 = vsel %vm1069, %v3487, 0
      %3750 = vmatprep.subr.bf16.mxu0 0
      %3751 = vmatpush1.bf16.xpose.msra.mxu0 0
      %3752 = vmatprep.subr.bf16.mxu0 0
      %3753 = vmatpush1.bf16.xpose.msra.mxu0 0
      %3754 = vmatprep.subr.bf16.mxu0 0
      %3755 = vmatpush1.bf16.xpose.msra.mxu0 0
      %3756 = vmatprep.subr.bf16.mxu0 0
      %3757 = vmatpush1.bf16.xpose.msra.mxu0 0
      %3758 = vmatprep.subr.bf16.mxu0 0
      %3759 = vmatpush1.bf16.xpose.msra.mxu0 0
      %3760 = vmatprep.subr.bf16.mxu0 0
      %3761 = vmatpush1.bf16.xpose.msra.mxu0 0
      %3762 = vmatprep.subr.bf16.mxu0 0
      %3763 = vmatpush1.bf16.xpose.msra.mxu0 0
      %3764 = vmatprep.subr.bf16.mxu0 0
      %3765 = vmatpush1.bf16.xpose.msra.mxu0 %v3748
      %3766 = vmatprep.subr.bf16.mxu0 0
      %3767 = vmatpush2.bf16.xpose.msra.mxu0 0
      %3768 = vmatprep.subr.bf16.mxu0 0
      %3769 = vmatpush2.bf16.xpose.msra.mxu0 0
      %3770 = vmatprep.subr.bf16.mxu0 0
      %3771 = vmatpush2.bf16.xpose.msra.mxu0 0
      %3772 = vmatprep.subr.bf16.mxu0 0
      %3773 = vmatpush2.bf16.xpose.msra.mxu0 0
      %3774 = vmatprep.subr.bf16.mxu0 0
      %3775 = vmatpush2.bf16.xpose.msra.mxu0 0
      %3776 = vmatprep.subr.bf16.mxu0 0
      %3777 = vmatpush2.bf16.xpose.msra.mxu0 0
      %3778 = vmatprep.subr.bf16.mxu0 0
      %3779 = vmatpush2.bf16.xpose.msra.mxu0 0
      %3780 = vmatprep.subr.bf16.mxu0 0
      %3781 = vmatpush2.bf16.xpose.msra.mxu0 0
      %3782 = vmatprep.mubr.bf16.mxu0 0
      %3783 = vmatmul.mubr.bf16.gmra.mxu0 %v3745
      %v3784 = vpop.f32.mrf.mxu0
      %v3785 = vadd.f32 %v431, %v3784
      %v3786 = vpop.f32.mrf.mxu0
      %v3787 = vpop.f32.mrf.mxu0
      %v3788 = vpop.f32.mrf.mxu0
      %3789 = vdwg.mxu0
      %v3791 = vsel %vm1069, %v3374, 0
      %v3794 = vsel %vm1069, %v3488, 0
      %3796 = vmatprep.subr.bf16.mxu0 0
      %3797 = vmatpush1.bf16.xpose.msra.mxu0 0
      %3798 = vmatprep.subr.bf16.mxu0 0
      %3799 = vmatpush1.bf16.xpose.msra.mxu0 0
      %3800 = vmatprep.subr.bf16.mxu0 0
      %3801 = vmatpush1.bf16.xpose.msra.mxu0 0
      %3802 = vmatprep.subr.bf16.mxu0 0
      %3803 = vmatpush1.bf16.xpose.msra.mxu0 0
      %3804 = vmatprep.subr.bf16.mxu0 0
      %3805 = vmatpush1.bf16.xpose.msra.mxu0 0
      %3806 = vmatprep.subr.bf16.mxu0 0
      %3807 = vmatpush1.bf16.xpose.msra.mxu0 0
      %3808 = vmatprep.subr.bf16.mxu0 0
      %3809 = vmatpush1.bf16.xpose.msra.mxu0 0
      %3810 = vmatprep.subr.bf16.mxu0 0
      %3811 = vmatpush1.bf16.xpose.msra.mxu0 %v3794
      %3812 = vmatprep.subr.bf16.mxu0 0
      %3813 = vmatpush2.bf16.xpose.msra.mxu0 0
      %3814 = vmatprep.subr.bf16.mxu0 0
      %3815 = vmatpush2.bf16.xpose.msra.mxu0 0
      %3816 = vmatprep.subr.bf16.mxu0 0
      %3817 = vmatpush2.bf16.xpose.msra.mxu0 0
      %3818 = vmatprep.subr.bf16.mxu0 0
      %3819 = vmatpush2.bf16.xpose.msra.mxu0 0
      %3820 = vmatprep.subr.bf16.mxu0 0
      %3821 = vmatpush2.bf16.xpose.msra.mxu0 0
      %3822 = vmatprep.subr.bf16.mxu0 0
      %3823 = vmatpush2.bf16.xpose.msra.mxu0 0
      %3824 = vmatprep.subr.bf16.mxu0 0
      %3825 = vmatpush2.bf16.xpose.msra.mxu0 0
      %3826 = vmatprep.subr.bf16.mxu0 0
      %3827 = vmatpush2.bf16.xpose.msra.mxu0 0
      %3828 = vmatprep.mubr.bf16.mxu0 0
      %3829 = vmatmul.mubr.bf16.gmra.mxu0 %v3791
      %v3830 = vpop.f32.mrf.mxu0
      %v3831 = vadd.f32 %v431, %v3830
      %v3832 = vpop.f32.mrf.mxu0
      %v3833 = vpop.f32.mrf.mxu0
      %v3834 = vpop.f32.mrf.mxu0
      %3835 = vdwg.mxu0
      %v3837 = vsel %vm1069, %v3375, 0
      %v3840 = vsel %vm1069, %v3489, 0
      %3842 = vmatprep.subr.bf16.mxu0 0
      %3843 = vmatpush1.bf16.xpose.msra.mxu0 0
      %3844 = vmatprep.subr.bf16.mxu0 0
      %3845 = vmatpush1.bf16.xpose.msra.mxu0 0
      %3846 = vmatprep.subr.bf16.mxu0 0
      %3847 = vmatpush1.bf16.xpose.msra.mxu0 0
      %3848 = vmatprep.subr.bf16.mxu0 0
      %3849 = vmatpush1.bf16.xpose.msra.mxu0 0
      %3850 = vmatprep.subr.bf16.mxu0 0
      %3851 = vmatpush1.bf16.xpose.msra.mxu0 0
      %3852 = vmatprep.subr.bf16.mxu0 0
      %3853 = vmatpush1.bf16.xpose.msra.mxu0 0
      %3854 = vmatprep.subr.bf16.mxu0 0
      %3855 = vmatpush1.bf16.xpose.msra.mxu0 0
      %3856 = vmatprep.subr.bf16.mxu0 0
      %3857 = vmatpush1.bf16.xpose.msra.mxu0 %v3840
      %3858 = vmatprep.subr.bf16.mxu0 0
      %3859 = vmatpush2.bf16.xpose.msra.mxu0 0
      %3860 = vmatprep.subr.bf16.mxu0 0
      %3861 = vmatpush2.bf16.xpose.msra.mxu0 0
      %3862 = vmatprep.subr.bf16.mxu0 0
      %3863 = vmatpush2.bf16.xpose.msra.mxu0 0
      %3864 = vmatprep.subr.bf16.mxu0 0
      %3865 = vmatpush2.bf16.xpose.msra.mxu0 0
      %3866 = vmatprep.subr.bf16.mxu0 0
      %3867 = vmatpush2.bf16.xpose.msra.mxu0 0
      %3868 = vmatprep.subr.bf16.mxu0 0
      %3869 = vmatpush2.bf16.xpose.msra.mxu0 0
      %3870 = vmatprep.subr.bf16.mxu0 0
      %3871 = vmatpush2.bf16.xpose.msra.mxu0 0
      %3872 = vmatprep.subr.bf16.mxu0 0
      %3873 = vmatpush2.bf16.xpose.msra.mxu0 0
      %3874 = vmatprep.mubr.bf16.mxu0 0
      %3875 = vmatmul.mubr.bf16.gmra.mxu0 %v3837
      %v3876 = vpop.f32.mrf.mxu0
      %v3877 = vadd.f32 %v431, %v3876
      %v3878 = vpop.f32.mrf.mxu0
      %v3879 = vpop.f32.mrf.mxu0
      %v3880 = vpop.f32.mrf.mxu0
      %3881 = vdwg.mxu0
      %v3883 = vsel %vm1069, %v3376, 0
      %v3886 = vsel %vm1069, %v3490, 0
      %3888 = vmatprep.subr.bf16.mxu0 0
      %3889 = vmatpush1.bf16.xpose.msra.mxu0 0
      %3890 = vmatprep.subr.bf16.mxu0 0
      %3891 = vmatpush1.bf16.xpose.msra.mxu0 0
      %3892 = vmatprep.subr.bf16.mxu0 0
      %3893 = vmatpush1.bf16.xpose.msra.mxu0 0
      %3894 = vmatprep.subr.bf16.mxu0 0
      %3895 = vmatpush1.bf16.xpose.msra.mxu0 0
      %3896 = vmatprep.subr.bf16.mxu0 0
      %3897 = vmatpush1.bf16.xpose.msra.mxu0 0
      %3898 = vmatprep.subr.bf16.mxu0 0
      %3899 = vmatpush1.bf16.xpose.msra.mxu0 0
      %3900 = vmatprep.subr.bf16.mxu0 0
      %3901 = vmatpush1.bf16.xpose.msra.mxu0 0
      %3902 = vmatprep.subr.bf16.mxu0 0
      %3903 = vmatpush1.bf16.xpose.msra.mxu0 %v3886
      %3904 = vmatprep.subr.bf16.mxu0 0
      %3905 = vmatpush2.bf16.xpose.msra.mxu0 0
      %3906 = vmatprep.subr.bf16.mxu0 0
      %3907 = vmatpush2.bf16.xpose.msra.mxu0 0
      %3908 = vmatprep.subr.bf16.mxu0 0
      %3909 = vmatpush2.bf16.xpose.msra.mxu0 0
      %3910 = vmatprep.subr.bf16.mxu0 0
      %3911 = vmatpush2.bf16.xpose.msra.mxu0 0
      %3912 = vmatprep.subr.bf16.mxu0 0
      %3913 = vmatpush2.bf16.xpose.msra.mxu0 0
      %3914 = vmatprep.subr.bf16.mxu0 0
      %3915 = vmatpush2.bf16.xpose.msra.mxu0 0
      %3916 = vmatprep.subr.bf16.mxu0 0
      %3917 = vmatpush2.bf16.xpose.msra.mxu0 0
      %3918 = vmatprep.subr.bf16.mxu0 0
      %3919 = vmatpush2.bf16.xpose.msra.mxu0 0
      %3920 = vmatprep.mubr.bf16.mxu0 0
      %3921 = vmatmul.mubr.bf16.gmra.mxu0 %v3883
      %v3922 = vpop.f32.mrf.mxu0
      %v3923 = vadd.f32 %v431, %v3922
      %v3924 = vpop.f32.mrf.mxu0
      %v3925 = vpop.f32.mrf.mxu0
      %v3926 = vpop.f32.mrf.mxu0
      %3927 = vdwg.mxu0
      %v3929 = vsel %vm1069, %v3377, 0
      %v3932 = vsel %vm1069, %v3491, 0
      %3934 = vmatprep.subr.bf16.mxu0 0
      %3935 = vmatpush1.bf16.xpose.msra.mxu0 0
      %3936 = vmatprep.subr.bf16.mxu0 0
      %3937 = vmatpush1.bf16.xpose.msra.mxu0 0
      %3938 = vmatprep.subr.bf16.mxu0 0
      %3939 = vmatpush1.bf16.xpose.msra.mxu0 0
      %3940 = vmatprep.subr.bf16.mxu0 0
      %3941 = vmatpush1.bf16.xpose.msra.mxu0 0
      %3942 = vmatprep.subr.bf16.mxu0 0
      %3943 = vmatpush1.bf16.xpose.msra.mxu0 0
      %3944 = vmatprep.subr.bf16.mxu0 0
      %3945 = vmatpush1.bf16.xpose.msra.mxu0 0
      %3946 = vmatprep.subr.bf16.mxu0 0
      %3947 = vmatpush1.bf16.xpose.msra.mxu0 0
      %3948 = vmatprep.subr.bf16.mxu0 0
      %3949 = vmatpush1.bf16.xpose.msra.mxu0 %v3932
      %3950 = vmatprep.subr.bf16.mxu0 0
      %3951 = vmatpush2.bf16.xpose.msra.mxu0 0
      %3952 = vmatprep.subr.bf16.mxu0 0
      %3953 = vmatpush2.bf16.xpose.msra.mxu0 0
      %3954 = vmatprep.subr.bf16.mxu0 0
      %3955 = vmatpush2.bf16.xpose.msra.mxu0 0
      %3956 = vmatprep.subr.bf16.mxu0 0
      %3957 = vmatpush2.bf16.xpose.msra.mxu0 0
      %3958 = vmatprep.subr.bf16.mxu0 0
      %3959 = vmatpush2.bf16.xpose.msra.mxu0 0
      %3960 = vmatprep.subr.bf16.mxu0 0
      %3961 = vmatpush2.bf16.xpose.msra.mxu0 0
      %3962 = vmatprep.subr.bf16.mxu0 0
      %3963 = vmatpush2.bf16.xpose.msra.mxu0 0
      %3964 = vmatprep.subr.bf16.mxu0 0
      %3965 = vmatpush2.bf16.xpose.msra.mxu0 0
      %3966 = vmatprep.mubr.bf16.mxu0 0
      %3967 = vmatmul.mubr.bf16.gmra.mxu0 %v3929
      %v3968 = vpop.f32.mrf.mxu0
      %v3969 = vadd.f32 %v431, %v3968
      %v3970 = vpop.f32.mrf.mxu0
      %v3971 = vpop.f32.mrf.mxu0
      %v3972 = vpop.f32.mrf.mxu0
      %3973 = vdwg.mxu0
      %v3974 = vsel %vm1069, %v3647, -inf
      %3975 = vmax.xlane.f32.xlu0 %v3974
      %v3976 = vpop.xlane.xlu0 %3975
      %v3977 = vsel %vm1069, %v3693, -inf
      %3978 = vmax.xlane.f32.xlu0 %v3977
      %v3979 = vpop.xlane.xlu0 %3978
      %v3980 = vsel %vm1069, %v3739, -inf
      %3981 = vmax.xlane.f32.xlu0 %v3980
      %v3982 = vpop.xlane.xlu0 %3981
      %v3983 = vsel %vm1069, %v3785, -inf
      %3984 = vmax.xlane.f32.xlu0 %v3983
      %v3985 = vpop.xlane.xlu0 %3984
      %v3986 = vsel %vm1069, %v3831, -inf
      %3987 = vmax.xlane.f32.xlu0 %v3986
      %v3988 = vpop.xlane.xlu0 %3987
      %v3989 = vsel %vm1069, %v3877, -inf
      %3990 = vmax.xlane.f32.xlu0 %v3989
      %v3991 = vpop.xlane.xlu0 %3990
      %v3992 = vsel %vm1069, %v3923, -inf
      %3993 = vmax.xlane.f32.xlu0 %v3992
      %v3994 = vpop.xlane.xlu0 %3993
      %v3995 = vsel %vm1069, %v3969, -inf
      %3996 = vmax.xlane.f32.xlu0 %v3995
      %v3997 = vpop.xlane.xlu0 %3996
      %v3998 = vsub.f32 %v3647, %v3976
      %v3999 = vsub.f32 %v3693, %v3979
      %v4000 = vsub.f32 %v3739, %v3982
      %v4001 = vsub.f32 %v3785, %v3985
      %v4002 = vsub.f32 %v3831, %v3988
      %v4003 = vsub.f32 %v3877, %v3991
      %v4004 = vsub.f32 %v3923, %v3994
      %v4005 = vsub.f32 %v3969, %v3997
      %v4006 = vmul.f32 %v3998, 1.442695
      %v4007 = vpow.pop %v4006
      %v4008 = vmul.f32 %v3999, 1.442695
      %v4009 = vpow.pop %v4008
      %v4010 = vmul.f32 %v4000, 1.442695
      %v4011 = vpow.pop %v4010
      %v4012 = vmul.f32 %v4001, 1.442695
      %v4013 = vpow.pop %v4012
      %v4014 = vmul.f32 %v4002, 1.442695
      %v4015 = vpow.pop %v4014
      %v4016 = vmul.f32 %v4003, 1.442695
      %v4017 = vpow.pop %v4016
      %v4018 = vmul.f32 %v4004, 1.442695
      %v4019 = vpow.pop %v4018
      %v4020 = vmul.f32 %v4005, 1.442695
      %v4021 = vpow.pop %v4020
      %v4022 = vsel %vm1069, %v4007, 0.0
      %4023 = vadd.xlane.f32.xlu0 %v4022
      %v4024 = vpop.xlane.xlu0 %4023
      %v4025 = vsel %vm1069, %v4009, 0.0
      %4026 = vadd.xlane.f32.xlu0 %v4025
      %v4027 = vpop.xlane.xlu0 %4026
      %v4028 = vsel %vm1069, %v4011, 0.0
      %4029 = vadd.xlane.f32.xlu0 %v4028
      %v4030 = vpop.xlane.xlu0 %4029
      %v4031 = vsel %vm1069, %v4013, 0.0
      %4032 = vadd.xlane.f32.xlu0 %v4031
      %v4033 = vpop.xlane.xlu0 %4032
      %v4034 = vsel %vm1069, %v4015, 0.0
      %4035 = vadd.xlane.f32.xlu0 %v4034
      %v4036 = vpop.xlane.xlu0 %4035
      %v4037 = vsel %vm1069, %v4017, 0.0
      %4038 = vadd.xlane.f32.xlu0 %v4037
      %v4039 = vpop.xlane.xlu0 %4038
      %v4040 = vsel %vm1069, %v4019, 0.0
      %4041 = vadd.xlane.f32.xlu0 %v4040
      %v4042 = vpop.xlane.xlu0 %4041
      %v4043 = vsel %vm1069, %v4021, 0.0
      %4044 = vadd.xlane.f32.xlu0 %v4043
      %v4045 = vpop.xlane.xlu0 %4044
      %v4046 = vrcp.pop %v4024
      %v4047 = vrcp.pop %v4027
      %v4048 = vrcp.pop %v4030
      %v4049 = vrcp.pop %v4033
      %v4050 = vrcp.pop %v4036
      %v4051 = vrcp.pop %v4039
      %v4052 = vrcp.pop %v4042
      %v4053 = vrcp.pop %v4045
      %v4054 = vmul.f32 %v4007, %v4046
      %v4055 = vmul.f32 %v4009, %v4047
      %v4056 = vmul.f32 %v4011, %v4048
      %v4057 = vmul.f32 %v4013, %v4049
      %v4058 = vmul.f32 %v4015, %v4050
      %v4059 = vmul.f32 %v4017, %v4051
      %v4060 = vmul.f32 %v4019, %v4052
      %v4061 = vmul.f32 %v4021, %v4053
      %v4062 = vpack.c.bf16 %v4054, %v4054
      %v4063 = vpack.c.bf16 %v4055, %v4055
      %v4064 = vpack.c.bf16 %v4056, %v4056
      %v4065 = vpack.c.bf16 %v4057, %v4057
      %v4066 = vpack.c.bf16 %v4058, %v4058
      %v4067 = vpack.c.bf16 %v4059, %v4059
      %v4068 = vpack.c.bf16 %v4060, %v4060
      %v4069 = vpack.c.bf16 %v4061, %v4061
      %v4071 = vsel %vm1069, %v4062, 0
      %v4074 = vsel %vm1537, %v3598, 0
      %4076 = vmatprep.subr.bf16.mxu0 0
      %4077 = vmatpush1.bf16.msra.mxu0 0
      %4078 = vmatprep.subr.bf16.mxu0 0
      %4079 = vmatpush1.bf16.msra.mxu0 0
      %4080 = vmatprep.subr.bf16.mxu0 0
      %4081 = vmatpush1.bf16.msra.mxu0 0
      %4082 = vmatprep.subr.bf16.mxu0 0
      %4083 = vmatpush1.bf16.msra.mxu0 0
      %4084 = vmatprep.subr.bf16.mxu0 0
      %4085 = vmatpush1.bf16.msra.mxu0 0
      %4086 = vmatprep.subr.bf16.mxu0 0
      %4087 = vmatpush1.bf16.msra.mxu0 0
      %4088 = vmatprep.subr.bf16.mxu0 0
      %4089 = vmatpush1.bf16.msra.mxu0 0
      %4090 = vmatprep.subr.bf16.mxu0 0
      %4091 = vmatpush1.bf16.msra.mxu0 %v4074
      %4092 = vmatprep.subr.bf16.mxu0 0
      %4093 = vmatpush2.bf16.msra.mxu0 0
      %4094 = vmatprep.subr.bf16.mxu0 0
      %4095 = vmatpush2.bf16.msra.mxu0 0
      %4096 = vmatprep.subr.bf16.mxu0 0
      %4097 = vmatpush2.bf16.msra.mxu0 0
      %4098 = vmatprep.subr.bf16.mxu0 0
      %4099 = vmatpush2.bf16.msra.mxu0 0
      %4100 = vmatprep.subr.bf16.mxu0 0
      %4101 = vmatpush2.bf16.msra.mxu0 0
      %4102 = vmatprep.subr.bf16.mxu0 0
      %4103 = vmatpush2.bf16.msra.mxu0 0
      %4104 = vmatprep.subr.bf16.mxu0 0
      %4105 = vmatpush2.bf16.msra.mxu0 0
      %4106 = vmatprep.subr.bf16.mxu0 0
      %4107 = vmatpush2.bf16.msra.mxu0 0
      %4108 = vmatprep.mubr.bf16.mxu0 0
      %4109 = vmatmul.mubr.bf16.gmra.mxu0 %v4071
      %v4110 = vpop.f32.mrf.mxu0
      %v4111 = vadd.f32 0.0, %v4110
      %v4112 = vpop.f32.mrf.mxu0
      %v4113 = vpop.f32.mrf.mxu0
      %v4114 = vpop.f32.mrf.mxu0
      %4115 = vdwg.mxu0
      %v4117 = vsel %vm1069, %v4063, 0
      %v4120 = vsel %vm1537, %v3599, 0
      %4122 = vmatprep.subr.bf16.mxu0 0
      %4123 = vmatpush1.bf16.msra.mxu0 0
      %4124 = vmatprep.subr.bf16.mxu0 0
      %4125 = vmatpush1.bf16.msra.mxu0 0
      %4126 = vmatprep.subr.bf16.mxu0 0
      %4127 = vmatpush1.bf16.msra.mxu0 0
      %4128 = vmatprep.subr.bf16.mxu0 0
      %4129 = vmatpush1.bf16.msra.mxu0 0
      %4130 = vmatprep.subr.bf16.mxu0 0
      %4131 = vmatpush1.bf16.msra.mxu0 0
      %4132 = vmatprep.subr.bf16.mxu0 0
      %4133 = vmatpush1.bf16.msra.mxu0 0
      %4134 = vmatprep.subr.bf16.mxu0 0
      %4135 = vmatpush1.bf16.msra.mxu0 0
      %4136 = vmatprep.subr.bf16.mxu0 0
      %4137 = vmatpush1.bf16.msra.mxu0 %v4120
      %4138 = vmatprep.subr.bf16.mxu0 0
      %4139 = vmatpush2.bf16.msra.mxu0 0
      %4140 = vmatprep.subr.bf16.mxu0 0
      %4141 = vmatpush2.bf16.msra.mxu0 0
      %4142 = vmatprep.subr.bf16.mxu0 0
      %4143 = vmatpush2.bf16.msra.mxu0 0
      %4144 = vmatprep.subr.bf16.mxu0 0
      %4145 = vmatpush2.bf16.msra.mxu0 0
      %4146 = vmatprep.subr.bf16.mxu0 0
      %4147 = vmatpush2.bf16.msra.mxu0 0
      %4148 = vmatprep.subr.bf16.mxu0 0
      %4149 = vmatpush2.bf16.msra.mxu0 0
      %4150 = vmatprep.subr.bf16.mxu0 0
      %4151 = vmatpush2.bf16.msra.mxu0 0
      %4152 = vmatprep.subr.bf16.mxu0 0
      %4153 = vmatpush2.bf16.msra.mxu0 0
      %4154 = vmatprep.mubr.bf16.mxu0 0
      %4155 = vmatmul.mubr.bf16.gmra.mxu0 %v4117
      %v4156 = vpop.f32.mrf.mxu0
      %v4157 = vadd.f32 0.0, %v4156
      %v4158 = vpop.f32.mrf.mxu0
      %v4159 = vpop.f32.mrf.mxu0
      %v4160 = vpop.f32.mrf.mxu0
      %4161 = vdwg.mxu0
      %v4163 = vsel %vm1069, %v4064, 0
      %v4166 = vsel %vm1537, %v3600, 0
      %4168 = vmatprep.subr.bf16.mxu0 0
      %4169 = vmatpush1.bf16.msra.mxu0 0
      %4170 = vmatprep.subr.bf16.mxu0 0
      %4171 = vmatpush1.bf16.msra.mxu0 0
      %4172 = vmatprep.subr.bf16.mxu0 0
      %4173 = vmatpush1.bf16.msra.mxu0 0
      %4174 = vmatprep.subr.bf16.mxu0 0
      %4175 = vmatpush1.bf16.msra.mxu0 0
      %4176 = vmatprep.subr.bf16.mxu0 0
      %4177 = vmatpush1.bf16.msra.mxu0 0
      %4178 = vmatprep.subr.bf16.mxu0 0
      %4179 = vmatpush1.bf16.msra.mxu0 0
      %4180 = vmatprep.subr.bf16.mxu0 0
      %4181 = vmatpush1.bf16.msra.mxu0 0
      %4182 = vmatprep.subr.bf16.mxu0 0
      %4183 = vmatpush1.bf16.msra.mxu0 %v4166
      %4184 = vmatprep.subr.bf16.mxu0 0
      %4185 = vmatpush2.bf16.msra.mxu0 0
      %4186 = vmatprep.subr.bf16.mxu0 0
      %4187 = vmatpush2.bf16.msra.mxu0 0
      %4188 = vmatprep.subr.bf16.mxu0 0
      %4189 = vmatpush2.bf16.msra.mxu0 0
      %4190 = vmatprep.subr.bf16.mxu0 0
      %4191 = vmatpush2.bf16.msra.mxu0 0
      %4192 = vmatprep.subr.bf16.mxu0 0
      %4193 = vmatpush2.bf16.msra.mxu0 0
      %4194 = vmatprep.subr.bf16.mxu0 0
      %4195 = vmatpush2.bf16.msra.mxu0 0
      %4196 = vmatprep.subr.bf16.mxu0 0
      %4197 = vmatpush2.bf16.msra.mxu0 0
      %4198 = vmatprep.subr.bf16.mxu0 0
      %4199 = vmatpush2.bf16.msra.mxu0 0
      %4200 = vmatprep.mubr.bf16.mxu0 0
      %4201 = vmatmul.mubr.bf16.gmra.mxu0 %v4163
      %v4202 = vpop.f32.mrf.mxu0
      %v4203 = vadd.f32 0.0, %v4202
      %v4204 = vpop.f32.mrf.mxu0
      %v4205 = vpop.f32.mrf.mxu0
      %v4206 = vpop.f32.mrf.mxu0
      %4207 = vdwg.mxu0
      %v4209 = vsel %vm1069, %v4065, 0
      %v4212 = vsel %vm1537, %v3601, 0
      %4214 = vmatprep.subr.bf16.mxu0 0
      %4215 = vmatpush1.bf16.msra.mxu0 0
      %4216 = vmatprep.subr.bf16.mxu0 0
      %4217 = vmatpush1.bf16.msra.mxu0 0
      %4218 = vmatprep.subr.bf16.mxu0 0
      %4219 = vmatpush1.bf16.msra.mxu0 0
      %4220 = vmatprep.subr.bf16.mxu0 0
      %4221 = vmatpush1.bf16.msra.mxu0 0
      %4222 = vmatprep.subr.bf16.mxu0 0
      %4223 = vmatpush1.bf16.msra.mxu0 0
      %4224 = vmatprep.subr.bf16.mxu0 0
      %4225 = vmatpush1.bf16.msra.mxu0 0
      %4226 = vmatprep.subr.bf16.mxu0 0
      %4227 = vmatpush1.bf16.msra.mxu0 0
      %4228 = vmatprep.subr.bf16.mxu0 0
      %4229 = vmatpush1.bf16.msra.mxu0 %v4212
      %4230 = vmatprep.subr.bf16.mxu0 0
      %4231 = vmatpush2.bf16.msra.mxu0 0
      %4232 = vmatprep.subr.bf16.mxu0 0
      %4233 = vmatpush2.bf16.msra.mxu0 0
      %4234 = vmatprep.subr.bf16.mxu0 0
      %4235 = vmatpush2.bf16.msra.mxu0 0
      %4236 = vmatprep.subr.bf16.mxu0 0
      %4237 = vmatpush2.bf16.msra.mxu0 0
      %4238 = vmatprep.subr.bf16.mxu0 0
      %4239 = vmatpush2.bf16.msra.mxu0 0
      %4240 = vmatprep.subr.bf16.mxu0 0
      %4241 = vmatpush2.bf16.msra.mxu0 0
      %4242 = vmatprep.subr.bf16.mxu0 0
      %4243 = vmatpush2.bf16.msra.mxu0 0
      %4244 = vmatprep.subr.bf16.mxu0 0
      %4245 = vmatpush2.bf16.msra.mxu0 0
      %4246 = vmatprep.mubr.bf16.mxu0 0
      %4247 = vmatmul.mubr.bf16.gmra.mxu0 %v4209
      %v4248 = vpop.f32.mrf.mxu0
      %v4249 = vadd.f32 0.0, %v4248
      %v4250 = vpop.f32.mrf.mxu0
      %v4251 = vpop.f32.mrf.mxu0
      %v4252 = vpop.f32.mrf.mxu0
      %4253 = vdwg.mxu0
      %v4255 = vsel %vm1069, %v4066, 0
      %v4258 = vsel %vm1537, %v3602, 0
      %4260 = vmatprep.subr.bf16.mxu0 0
      %4261 = vmatpush1.bf16.msra.mxu0 0
      %4262 = vmatprep.subr.bf16.mxu0 0
      %4263 = vmatpush1.bf16.msra.mxu0 0
      %4264 = vmatprep.subr.bf16.mxu0 0
      %4265 = vmatpush1.bf16.msra.mxu0 0
      %4266 = vmatprep.subr.bf16.mxu0 0
      %4267 = vmatpush1.bf16.msra.mxu0 0
      %4268 = vmatprep.subr.bf16.mxu0 0
      %4269 = vmatpush1.bf16.msra.mxu0 0
      %4270 = vmatprep.subr.bf16.mxu0 0
      %4271 = vmatpush1.bf16.msra.mxu0 0
      %4272 = vmatprep.subr.bf16.mxu0 0
      %4273 = vmatpush1.bf16.msra.mxu0 0
      %4274 = vmatprep.subr.bf16.mxu0 0
      %4275 = vmatpush1.bf16.msra.mxu0 %v4258
      %4276 = vmatprep.subr.bf16.mxu0 0
      %4277 = vmatpush2.bf16.msra.mxu0 0
      %4278 = vmatprep.subr.bf16.mxu0 0
      %4279 = vmatpush2.bf16.msra.mxu0 0
      %4280 = vmatprep.subr.bf16.mxu0 0
      %4281 = vmatpush2.bf16.msra.mxu0 0
      %4282 = vmatprep.subr.bf16.mxu0 0
      %4283 = vmatpush2.bf16.msra.mxu0 0
      %4284 = vmatprep.subr.bf16.mxu0 0
      %4285 = vmatpush2.bf16.msra.mxu0 0
      %4286 = vmatprep.subr.bf16.mxu0 0
      %4287 = vmatpush2.bf16.msra.mxu0 0
      %4288 = vmatprep.subr.bf16.mxu0 0
      %4289 = vmatpush2.bf16.msra.mxu0 0
      %4290 = vmatprep.subr.bf16.mxu0 0
      %4291 = vmatpush2.bf16.msra.mxu0 0
      %4292 = vmatprep.mubr.bf16.mxu0 0
      %4293 = vmatmul.mubr.bf16.gmra.mxu0 %v4255
      %v4294 = vpop.f32.mrf.mxu0
      %v4295 = vadd.f32 0.0, %v4294
      %v4296 = vpop.f32.mrf.mxu0
      %v4297 = vpop.f32.mrf.mxu0
      %v4298 = vpop.f32.mrf.mxu0
      %4299 = vdwg.mxu0
      %v4301 = vsel %vm1069, %v4067, 0
      %v4304 = vsel %vm1537, %v3603, 0
      %4306 = vmatprep.subr.bf16.mxu0 0
      %4307 = vmatpush1.bf16.msra.mxu0 0
      %4308 = vmatprep.subr.bf16.mxu0 0
      %4309 = vmatpush1.bf16.msra.mxu0 0
      %4310 = vmatprep.subr.bf16.mxu0 0
      %4311 = vmatpush1.bf16.msra.mxu0 0
      %4312 = vmatprep.subr.bf16.mxu0 0
      %4313 = vmatpush1.bf16.msra.mxu0 0
      %4314 = vmatprep.subr.bf16.mxu0 0
      %4315 = vmatpush1.bf16.msra.mxu0 0
      %4316 = vmatprep.subr.bf16.mxu0 0
      %4317 = vmatpush1.bf16.msra.mxu0 0
      %4318 = vmatprep.subr.bf16.mxu0 0
      %4319 = vmatpush1.bf16.msra.mxu0 0
      %4320 = vmatprep.subr.bf16.mxu0 0
      %4321 = vmatpush1.bf16.msra.mxu0 %v4304
      %4322 = vmatprep.subr.bf16.mxu0 0
      %4323 = vmatpush2.bf16.msra.mxu0 0
      %4324 = vmatprep.subr.bf16.mxu0 0
      %4325 = vmatpush2.bf16.msra.mxu0 0
      %4326 = vmatprep.subr.bf16.mxu0 0
      %4327 = vmatpush2.bf16.msra.mxu0 0
      %4328 = vmatprep.subr.bf16.mxu0 0
      %4329 = vmatpush2.bf16.msra.mxu0 0
      %4330 = vmatprep.subr.bf16.mxu0 0
      %4331 = vmatpush2.bf16.msra.mxu0 0
      %4332 = vmatprep.subr.bf16.mxu0 0
      %4333 = vmatpush2.bf16.msra.mxu0 0
      %4334 = vmatprep.subr.bf16.mxu0 0
      %4335 = vmatpush2.bf16.msra.mxu0 0
      %4336 = vmatprep.subr.bf16.mxu0 0
      %4337 = vmatpush2.bf16.msra.mxu0 0
      %4338 = vmatprep.mubr.bf16.mxu0 0
      %4339 = vmatmul.mubr.bf16.gmra.mxu0 %v4301
      %v4340 = vpop.f32.mrf.mxu0
      %v4341 = vadd.f32 0.0, %v4340
      %v4342 = vpop.f32.mrf.mxu0
      %v4343 = vpop.f32.mrf.mxu0
      %v4344 = vpop.f32.mrf.mxu0
      %4345 = vdwg.mxu0
      %v4347 = vsel %vm1069, %v4068, 0
      %v4350 = vsel %vm1537, %v3604, 0
      %4352 = vmatprep.subr.bf16.mxu0 0
      %4353 = vmatpush1.bf16.msra.mxu0 0
      %4354 = vmatprep.subr.bf16.mxu0 0
      %4355 = vmatpush1.bf16.msra.mxu0 0
      %4356 = vmatprep.subr.bf16.mxu0 0
      %4357 = vmatpush1.bf16.msra.mxu0 0
      %4358 = vmatprep.subr.bf16.mxu0 0
      %4359 = vmatpush1.bf16.msra.mxu0 0
      %4360 = vmatprep.subr.bf16.mxu0 0
      %4361 = vmatpush1.bf16.msra.mxu0 0
      %4362 = vmatprep.subr.bf16.mxu0 0
      %4363 = vmatpush1.bf16.msra.mxu0 0
      %4364 = vmatprep.subr.bf16.mxu0 0
      %4365 = vmatpush1.bf16.msra.mxu0 0
      %4366 = vmatprep.subr.bf16.mxu0 0
      %4367 = vmatpush1.bf16.msra.mxu0 %v4350
      %4368 = vmatprep.subr.bf16.mxu0 0
      %4369 = vmatpush2.bf16.msra.mxu0 0
      %4370 = vmatprep.subr.bf16.mxu0 0
      %4371 = vmatpush2.bf16.msra.mxu0 0
      %4372 = vmatprep.subr.bf16.mxu0 0
      %4373 = vmatpush2.bf16.msra.mxu0 0
      %4374 = vmatprep.subr.bf16.mxu0 0
      %4375 = vmatpush2.bf16.msra.mxu0 0
      %4376 = vmatprep.subr.bf16.mxu0 0
      %4377 = vmatpush2.bf16.msra.mxu0 0
      %4378 = vmatprep.subr.bf16.mxu0 0
      %4379 = vmatpush2.bf16.msra.mxu0 0
      %4380 = vmatprep.subr.bf16.mxu0 0
      %4381 = vmatpush2.bf16.msra.mxu0 0
      %4382 = vmatprep.subr.bf16.mxu0 0
      %4383 = vmatpush2.bf16.msra.mxu0 0
      %4384 = vmatprep.mubr.bf16.mxu0 0
      %4385 = vmatmul.mubr.bf16.gmra.mxu0 %v4347
      %v4386 = vpop.f32.mrf.mxu0
      %v4387 = vadd.f32 0.0, %v4386
      %v4388 = vpop.f32.mrf.mxu0
      %v4389 = vpop.f32.mrf.mxu0
      %v4390 = vpop.f32.mrf.mxu0
      %4391 = vdwg.mxu0
      %v4393 = vsel %vm1069, %v4069, 0
      %v4396 = vsel %vm1537, %v3605, 0
      %4398 = vmatprep.subr.bf16.mxu0 0
      %4399 = vmatpush1.bf16.msra.mxu0 0
      %4400 = vmatprep.subr.bf16.mxu0 0
      %4401 = vmatpush1.bf16.msra.mxu0 0
      %4402 = vmatprep.subr.bf16.mxu0 0
      %4403 = vmatpush1.bf16.msra.mxu0 0
      %4404 = vmatprep.subr.bf16.mxu0 0
      %4405 = vmatpush1.bf16.msra.mxu0 0
      %4406 = vmatprep.subr.bf16.mxu0 0
      %4407 = vmatpush1.bf16.msra.mxu0 0
      %4408 = vmatprep.subr.bf16.mxu0 0
      %4409 = vmatpush1.bf16.msra.mxu0 0
      %4410 = vmatprep.subr.bf16.mxu0 0
      %4411 = vmatpush1.bf16.msra.mxu0 0
      %4412 = vmatprep.subr.bf16.mxu0 0
      %4413 = vmatpush1.bf16.msra.mxu0 %v4396
      %4414 = vmatprep.subr.bf16.mxu0 0
      %4415 = vmatpush2.bf16.msra.mxu0 0
      %4416 = vmatprep.subr.bf16.mxu0 0
      %4417 = vmatpush2.bf16.msra.mxu0 0
      %4418 = vmatprep.subr.bf16.mxu0 0
      %4419 = vmatpush2.bf16.msra.mxu0 0
      %4420 = vmatprep.subr.bf16.mxu0 0
      %4421 = vmatpush2.bf16.msra.mxu0 0
      %4422 = vmatprep.subr.bf16.mxu0 0
      %4423 = vmatpush2.bf16.msra.mxu0 0
      %4424 = vmatprep.subr.bf16.mxu0 0
      %4425 = vmatpush2.bf16.msra.mxu0 0
      %4426 = vmatprep.subr.bf16.mxu0 0
      %4427 = vmatpush2.bf16.msra.mxu0 0
      %4428 = vmatprep.subr.bf16.mxu0 0
      %4429 = vmatpush2.bf16.msra.mxu0 0
      %4430 = vmatprep.mubr.bf16.mxu0 0
      %4431 = vmatmul.mubr.bf16.gmra.mxu0 %v4393
      %v4432 = vpop.f32.mrf.mxu0
      %v4433 = vadd.f32 0.0, %v4432
      %v4434 = vpop.f32.mrf.mxu0
      %v4435 = vpop.f32.mrf.mxu0
      %v4436 = vpop.f32.mrf.mxu0
      %4437 = vdwg.mxu0
      %v4438 = vpack.c.bf16 %v4157, %v4111
      %v4439 = vpack.c.bf16 %v4249, %v4203
      %v4440 = vpack.c.bf16 %v4341, %v4295
      %v4441 = vpack.c.bf16 %v4433, %v4387
      %s4442 = scalar_lea.vmem %s8, 4
      %v4443 = vld [vmem:[%s4442] sm:$0xf]
      %v4445 = vsel %vm1069, %v4438, 0
      %v4448 = vsel %vm1069, %v4439, 0
      %v4451 = vsel %vm1069, %v4440, 0
      %v4454 = vsel %vm1069, %v4441, 0
      %v4457 = vsel %vm1537, %v4443, 0
      %4459 = vmatprep.subr.bf16.mxu0 0
      %4460 = vmatpush1.bf16.msra.mxu0 0
      %4461 = vmatprep.subr.bf16.mxu0 0
      %4462 = vmatpush1.bf16.msra.mxu0 0
      %4463 = vmatprep.subr.bf16.mxu0 0
      %4464 = vmatpush1.bf16.msra.mxu0 0
      %4465 = vmatprep.subr.bf16.mxu0 0
      %4466 = vmatpush1.bf16.msra.mxu0 0
      %4467 = vmatprep.subr.bf16.mxu0 0
      %4468 = vmatpush1.bf16.msra.mxu0 0
      %4469 = vmatprep.subr.bf16.mxu0 0
      %4470 = vmatpush1.bf16.msra.mxu0 0
      %4471 = vmatprep.subr.bf16.mxu0 0
      %4472 = vmatpush1.bf16.msra.mxu0 0
      %4473 = vmatprep.subr.bf16.mxu0 0
      %4474 = vmatpush1.bf16.msra.mxu0 %v4457
      %4475 = vmatprep.subr.bf16.mxu0 0
      %4476 = vmatpush2.bf16.msra.mxu0 0
      %4477 = vmatprep.subr.bf16.mxu0 0
      %4478 = vmatpush2.bf16.msra.mxu0 0
      %4479 = vmatprep.subr.bf16.mxu0 0
      %4480 = vmatpush2.bf16.msra.mxu0 0
      %4481 = vmatprep.subr.bf16.mxu0 0
      %4482 = vmatpush2.bf16.msra.mxu0 0
      %4483 = vmatprep.subr.bf16.mxu0 0
      %4484 = vmatpush2.bf16.msra.mxu0 0
      %4485 = vmatprep.subr.bf16.mxu0 0
      %4486 = vmatpush2.bf16.msra.mxu0 0
      %4487 = vmatprep.subr.bf16.mxu0 0
      %4488 = vmatpush2.bf16.msra.mxu0 0
      %4489 = vmatprep.subr.bf16.mxu0 0
      %4490 = vmatpush2.bf16.msra.mxu0 0
      %4491 = vmatprep.mubr.bf16.mxu0 0
      %4492 = vmatmul.mubr.bf16.gmra.mxu0 %v4445
      %v4493 = vpop.f32.mrf.mxu0
      %v4494 = vadd.f32 0.0, %v4493
      %v4495 = vpop.f32.mrf.mxu0
      %v4496 = vpop.f32.mrf.mxu0
      %v4497 = vadd.f32 0.0, %v4496
      %v4498 = vpop.f32.mrf.mxu0
      %4499 = vmatprep.mubr.bf16.mxu0 0
      %4500 = vmatmul.mubr.bf16.gmra.mxu0 %v4448
      %v4501 = vpop.f32.mrf.mxu0
      %v4502 = vadd.f32 0.0, %v4501
      %v4503 = vpop.f32.mrf.mxu0
      %v4504 = vpop.f32.mrf.mxu0
      %v4505 = vadd.f32 0.0, %v4504
      %v4506 = vpop.f32.mrf.mxu0
      %4507 = vmatprep.mubr.bf16.mxu0 0
      %4508 = vmatmul.mubr.bf16.gmra.mxu0 %v4451
      %v4509 = vpop.f32.mrf.mxu0
      %v4510 = vadd.f32 0.0, %v4509
      %v4511 = vpop.f32.mrf.mxu0
      %v4512 = vpop.f32.mrf.mxu0
      %v4513 = vadd.f32 0.0, %v4512
      %v4514 = vpop.f32.mrf.mxu0
      %4515 = vmatprep.mubr.bf16.mxu0 0
      %4516 = vmatmul.mubr.bf16.gmra.mxu0 %v4454
      %v4517 = vpop.f32.mrf.mxu0
      %v4518 = vadd.f32 0.0, %v4517
      %v4519 = vpop.f32.mrf.mxu0
      %v4520 = vpop.f32.mrf.mxu0
      %v4521 = vadd.f32 0.0, %v4520
      %v4522 = vpop.f32.mrf.mxu0
      %4523 = vdwg.mxu0
      %v4524 = vadd.f32 %v3256, %v4494
      %v4525 = vadd.f32 %v3257, %v4497
      %v4526 = vadd.f32 %v3258, %v4502
      %v4527 = vadd.f32 %v3259, %v4505
      %v4528 = vadd.f32 %v3260, %v4510
      %v4529 = vadd.f32 %v3261, %v4513
      %v4530 = vadd.f32 %v3262, %v4518
      %v4531 = vadd.f32 %v3263, %v4521
      %s4532 = scalar_lea.vmem %s6, 208
      %v4533 = vld [vmem:[%s4532] sm:$0xf]
      %v4534 = vld [vmem:[%s4532 + $0x4] sm:$0xf]
      %v4535 = vld [vmem:[%s4532 + $0x8] sm:$0xf]
      %v4536 = vld [vmem:[%s4532 + $0xc] sm:$0xf]
      %s4537 = scalar_lea.vmem %s7, 13
      %v4538 = vld [vmem:[%s4537] sm:$0x1]
      %v4540 = vlaneseq
      %v4541 = vshrl.u32 %v4540, 7
      %v4542 = vsub.s32 0, %v4541
      %v4543 = vrot.slane %v4538, %v4542
      %v4549 = vunpack.c.l.b16 %v4533
      %v4550 = vunpack.c.l.b16 %v4534
      %v4551 = vunpack.c.l.b16 %v4535
      %v4552 = vunpack.c.l.b16 %v4536
      %v4553 = vpack.c.b16 %v4550, %v4549
      %v4554 = vpack.c.b16 %v4552, %v4551
      %4557 = vmatprep.subr.bf16.mxu0 0
      %4558 = vmatpush1.bf16.msra.mxu0 0
      %4559 = vmatprep.subr.bf16.mxu0 0
      %4560 = vmatpush1.bf16.msra.mxu0 0
      %4561 = vmatprep.subr.bf16.mxu0 0
      %4562 = vmatpush1.bf16.msra.mxu0 0
      %4563 = vmatprep.subr.bf16.mxu0 0
      %4564 = vmatpush1.bf16.msra.mxu0 0
      %4565 = vmatprep.subr.bf16.mxu0 0
      %4566 = vmatpush1.bf16.msra.mxu0 0
      %4567 = vmatprep.subr.bf16.mxu0 0
      %4568 = vmatpush1.bf16.msra.mxu0 0
      %4569 = vmatprep.subr.bf16.mxu0 0
      %4570 = vmatpush1.bf16.msra.mxu0 %v4554
      %4571 = vmatprep.subr.bf16.mxu0 0
      %4572 = vmatpush1.bf16.msra.mxu0 %v4553
      %4573 = vmatprep.subr.bf16.mxu0 0
      %4574 = vmatpush2.bf16.msra.mxu0 0
      %4575 = vmatprep.subr.bf16.mxu0 0
      %4576 = vmatpush2.bf16.msra.mxu0 0
      %4577 = vmatprep.subr.bf16.mxu0 0
      %4578 = vmatpush2.bf16.msra.mxu0 0
      %4579 = vmatprep.subr.bf16.mxu0 0
      %4580 = vmatpush2.bf16.msra.mxu0 0
      %4581 = vmatprep.subr.bf16.mxu0 0
      %4582 = vmatpush2.bf16.msra.mxu0 0
      %4583 = vmatprep.subr.bf16.mxu0 0
      %4584 = vmatpush2.bf16.msra.mxu0 0
      %4585 = vmatprep.subr.bf16.mxu0 0
      %4586 = vmatpush2.bf16.msra.mxu0 0
      %4587 = vmatprep.subr.bf16.mxu0 0
      %4588 = vmatpush2.bf16.msra.mxu0 0
      %4589 = vmatprep.mubr.bf16.mxu0 0
      %4590 = vmatmul.mubr.bf16.gmra.mxu0 %v729
      %v4591 = vpop.f32.mrf.mxu0
      %v4592 = vadd.f32 %v4543, %v4591
      %v4593 = vpop.f32.mrf.mxu0
      %v4594 = vpop.f32.mrf.mxu0
      %v4595 = vadd.f32 %v4543, %v4594
      %v4596 = vpop.f32.mrf.mxu0
      %4597 = vmatprep.mubr.bf16.mxu0 0
      %4598 = vmatmul.mubr.bf16.gmra.mxu0 %v732
      %v4599 = vpop.f32.mrf.mxu0
      %v4600 = vadd.f32 %v4543, %v4599
      %v4601 = vpop.f32.mrf.mxu0
      %v4602 = vpop.f32.mrf.mxu0
      %v4603 = vadd.f32 %v4543, %v4602
      %v4604 = vpop.f32.mrf.mxu0
      %4605 = vmatprep.mubr.bf16.mxu0 0
      %4606 = vmatmul.mubr.bf16.gmra.mxu0 %v735
      %v4607 = vpop.f32.mrf.mxu0
      %v4608 = vadd.f32 %v4543, %v4607
      %v4609 = vpop.f32.mrf.mxu0
      %v4610 = vpop.f32.mrf.mxu0
      %v4611 = vadd.f32 %v4543, %v4610
      %v4612 = vpop.f32.mrf.mxu0
      %4613 = vmatprep.mubr.bf16.mxu0 0
      %4614 = vmatmul.mubr.bf16.gmra.mxu0 %v738
      %v4615 = vpop.f32.mrf.mxu0
      %v4616 = vadd.f32 %v4543, %v4615
      %v4617 = vpop.f32.mrf.mxu0
      %v4618 = vpop.f32.mrf.mxu0
      %v4619 = vadd.f32 %v4543, %v4618
      %v4620 = vpop.f32.mrf.mxu0
      %4621 = vdwg.mxu0
      %v4622 = vpack.c.bf16 %v4595, %v4592
      %v4623 = vpack.c.bf16 %v4603, %v4600
      %v4624 = vpack.c.bf16 %v4611, %v4608
      %v4625 = vpack.c.bf16 %v4619, %v4616
      %v4630 = vunpack.c.l.b16 %v4622
      %v4631 = vunpack.c.h.b16 %v4622
      %v4632 = vunpack.c.l.b16 %v4623
      %v4633 = vunpack.c.h.b16 %v4623
      %v4634 = vunpack.c.l.b16 %v4624
      %v4635 = vunpack.c.h.b16 %v4624
      %v4636 = vunpack.c.l.b16 %v4625
      %v4637 = vunpack.c.h.b16 %v4625
      %v4638 = vpack.c.b16 %v4630, %v4630
      %v4639 = vpack.c.b16 %v4631, %v4631
      %v4640 = vpack.c.b16 %v4632, %v4632
      %v4641 = vpack.c.b16 %v4633, %v4633
      %v4642 = vpack.c.b16 %v4634, %v4634
      %v4643 = vpack.c.b16 %v4635, %v4635
      %v4644 = vpack.c.b16 %v4636, %v4636
      %v4645 = vpack.c.b16 %v4637, %v4637
      %s4646 = scalar_lea.vmem %s6, 272
      %v4647 = vld [vmem:[%s4646] sm:$0xf]
      %v4648 = vld [vmem:[%s4646 + $0x4] sm:$0xf]
      %v4649 = vld [vmem:[%s4646 + $0x8] sm:$0xf]
      %v4650 = vld [vmem:[%s4646 + $0xc] sm:$0xf]
      %s4651 = scalar_lea.vmem %s7, 17
      %v4652 = vld [vmem:[%s4651] sm:$0x1]
      %v4654 = vlaneseq
      %v4655 = vshrl.u32 %v4654, 7
      %v4656 = vsub.s32 0, %v4655
      %v4657 = vrot.slane %v4652, %v4656
      %v4663 = vunpack.c.l.b16 %v4647
      %v4664 = vunpack.c.l.b16 %v4648
      %v4665 = vunpack.c.l.b16 %v4649
      %v4666 = vunpack.c.l.b16 %v4650
      %v4667 = vpack.c.b16 %v4664, %v4663
      %v4668 = vpack.c.b16 %v4666, %v4665
      %4671 = vmatprep.subr.bf16.mxu0 0
      %4672 = vmatpush1.bf16.msra.mxu0 0
      %4673 = vmatprep.subr.bf16.mxu0 0
      %4674 = vmatpush1.bf16.msra.mxu0 0
      %4675 = vmatprep.subr.bf16.mxu0 0
      %4676 = vmatpush1.bf16.msra.mxu0 0
      %4677 = vmatprep.subr.bf16.mxu0 0
      %4678 = vmatpush1.bf16.msra.mxu0 0
      %4679 = vmatprep.subr.bf16.mxu0 0
      %4680 = vmatpush1.bf16.msra.mxu0 0
      %4681 = vmatprep.subr.bf16.mxu0 0
      %4682 = vmatpush1.bf16.msra.mxu0 0
      %4683 = vmatprep.subr.bf16.mxu0 0
      %4684 = vmatpush1.bf16.msra.mxu0 %v4668
      %4685 = vmatprep.subr.bf16.mxu0 0
      %4686 = vmatpush1.bf16.msra.mxu0 %v4667
      %4687 = vmatprep.subr.bf16.mxu0 0
      %4688 = vmatpush2.bf16.msra.mxu0 0
      %4689 = vmatprep.subr.bf16.mxu0 0
      %4690 = vmatpush2.bf16.msra.mxu0 0
      %4691 = vmatprep.subr.bf16.mxu0 0
      %4692 = vmatpush2.bf16.msra.mxu0 0
      %4693 = vmatprep.subr.bf16.mxu0 0
      %4694 = vmatpush2.bf16.msra.mxu0 0
      %4695 = vmatprep.subr.bf16.mxu0 0
      %4696 = vmatpush2.bf16.msra.mxu0 0
      %4697 = vmatprep.subr.bf16.mxu0 0
      %4698 = vmatpush2.bf16.msra.mxu0 0
      %4699 = vmatprep.subr.bf16.mxu0 0
      %4700 = vmatpush2.bf16.msra.mxu0 0
      %4701 = vmatprep.subr.bf16.mxu0 0
      %4702 = vmatpush2.bf16.msra.mxu0 0
      %4703 = vmatprep.mubr.bf16.mxu0 0
      %4704 = vmatmul.mubr.bf16.gmra.mxu0 %v729
      %v4705 = vpop.f32.mrf.mxu0
      %v4706 = vadd.f32 %v4657, %v4705
      %v4707 = vpop.f32.mrf.mxu0
      %v4708 = vpop.f32.mrf.mxu0
      %v4709 = vadd.f32 %v4657, %v4708
      %v4710 = vpop.f32.mrf.mxu0
      %4711 = vmatprep.mubr.bf16.mxu0 0
      %4712 = vmatmul.mubr.bf16.gmra.mxu0 %v732
      %v4713 = vpop.f32.mrf.mxu0
      %v4714 = vadd.f32 %v4657, %v4713
      %v4715 = vpop.f32.mrf.mxu0
      %v4716 = vpop.f32.mrf.mxu0
      %v4717 = vadd.f32 %v4657, %v4716
      %v4718 = vpop.f32.mrf.mxu0
      %4719 = vmatprep.mubr.bf16.mxu0 0
      %4720 = vmatmul.mubr.bf16.gmra.mxu0 %v735
      %v4721 = vpop.f32.mrf.mxu0
      %v4722 = vadd.f32 %v4657, %v4721
      %v4723 = vpop.f32.mrf.mxu0
      %v4724 = vpop.f32.mrf.mxu0
      %v4725 = vadd.f32 %v4657, %v4724
      %v4726 = vpop.f32.mrf.mxu0
      %4727 = vmatprep.mubr.bf16.mxu0 0
      %4728 = vmatmul.mubr.bf16.gmra.mxu0 %v738
      %v4729 = vpop.f32.mrf.mxu0
      %v4730 = vadd.f32 %v4657, %v4729
      %v4731 = vpop.f32.mrf.mxu0
      %v4732 = vpop.f32.mrf.mxu0
      %v4733 = vadd.f32 %v4657, %v4732
      %v4734 = vpop.f32.mrf.mxu0
      %4735 = vdwg.mxu0
      %v4736 = vpack.c.bf16 %v4709, %v4706
      %v4737 = vpack.c.bf16 %v4717, %v4714
      %v4738 = vpack.c.bf16 %v4725, %v4722
      %v4739 = vpack.c.bf16 %v4733, %v4730
      %v4744 = vunpack.c.l.b16 %v4736
      %v4745 = vunpack.c.h.b16 %v4736
      %v4746 = vunpack.c.l.b16 %v4737
      %v4747 = vunpack.c.h.b16 %v4737
      %v4748 = vunpack.c.l.b16 %v4738
      %v4749 = vunpack.c.h.b16 %v4738
      %v4750 = vunpack.c.l.b16 %v4739
      %v4751 = vunpack.c.h.b16 %v4739
      %v4752 = vpack.c.b16 %v4744, %v4744
      %v4753 = vpack.c.b16 %v4745, %v4745
      %v4754 = vpack.c.b16 %v4746, %v4746
      %v4755 = vpack.c.b16 %v4747, %v4747
      %v4756 = vpack.c.b16 %v4748, %v4748
      %v4757 = vpack.c.b16 %v4749, %v4749
      %v4758 = vpack.c.b16 %v4750, %v4750
      %v4759 = vpack.c.b16 %v4751, %v4751
      %s4760 = scalar_lea.vmem %s6, 336
      %v4761 = vld [vmem:[%s4760] sm:$0xf]
      %v4762 = vld [vmem:[%s4760 + $0x4] sm:$0xf]
      %v4763 = vld [vmem:[%s4760 + $0x8] sm:$0xf]
      %v4764 = vld [vmem:[%s4760 + $0xc] sm:$0xf]
      %s4765 = scalar_lea.vmem %s7, 21
      %v4766 = vld [vmem:[%s4765] sm:$0x1]
      %v4768 = vlaneseq
      %v4769 = vshrl.u32 %v4768, 7
      %v4770 = vsub.s32 0, %v4769
      %v4771 = vrot.slane %v4766, %v4770
      %v4777 = vunpack.c.l.b16 %v4761
      %v4778 = vunpack.c.l.b16 %v4762
      %v4779 = vunpack.c.l.b16 %v4763
      %v4780 = vunpack.c.l.b16 %v4764
      %v4781 = vpack.c.b16 %v4778, %v4777
      %v4782 = vpack.c.b16 %v4780, %v4779
      %4785 = vmatprep.subr.bf16.mxu0 0
      %4786 = vmatpush1.bf16.msra.mxu0 0
      %4787 = vmatprep.subr.bf16.mxu0 0
      %4788 = vmatpush1.bf16.msra.mxu0 0
      %4789 = vmatprep.subr.bf16.mxu0 0
      %4790 = vmatpush1.bf16.msra.mxu0 0
      %4791 = vmatprep.subr.bf16.mxu0 0
      %4792 = vmatpush1.bf16.msra.mxu0 0
      %4793 = vmatprep.subr.bf16.mxu0 0
      %4794 = vmatpush1.bf16.msra.mxu0 0
      %4795 = vmatprep.subr.bf16.mxu0 0
      %4796 = vmatpush1.bf16.msra.mxu0 0
      %4797 = vmatprep.subr.bf16.mxu0 0
      %4798 = vmatpush1.bf16.msra.mxu0 %v4782
      %4799 = vmatprep.subr.bf16.mxu0 0
      %4800 = vmatpush1.bf16.msra.mxu0 %v4781
      %4801 = vmatprep.subr.bf16.mxu0 0
      %4802 = vmatpush2.bf16.msra.mxu0 0
      %4803 = vmatprep.subr.bf16.mxu0 0
      %4804 = vmatpush2.bf16.msra.mxu0 0
      %4805 = vmatprep.subr.bf16.mxu0 0
      %4806 = vmatpush2.bf16.msra.mxu0 0
      %4807 = vmatprep.subr.bf16.mxu0 0
      %4808 = vmatpush2.bf16.msra.mxu0 0
      %4809 = vmatprep.subr.bf16.mxu0 0
      %4810 = vmatpush2.bf16.msra.mxu0 0
      %4811 = vmatprep.subr.bf16.mxu0 0
      %4812 = vmatpush2.bf16.msra.mxu0 0
      %4813 = vmatprep.subr.bf16.mxu0 0
      %4814 = vmatpush2.bf16.msra.mxu0 0
      %4815 = vmatprep.subr.bf16.mxu0 0
      %4816 = vmatpush2.bf16.msra.mxu0 0
      %4817 = vmatprep.mubr.bf16.mxu0 0
      %4818 = vmatmul.mubr.bf16.gmra.mxu0 %v729
      %v4819 = vpop.f32.mrf.mxu0
      %v4820 = vadd.f32 %v4771, %v4819
      %v4821 = vpop.f32.mrf.mxu0
      %v4822 = vpop.f32.mrf.mxu0
      %v4823 = vadd.f32 %v4771, %v4822
      %v4824 = vpop.f32.mrf.mxu0
      %4825 = vmatprep.mubr.bf16.mxu0 0
      %4826 = vmatmul.mubr.bf16.gmra.mxu0 %v732
      %v4827 = vpop.f32.mrf.mxu0
      %v4828 = vadd.f32 %v4771, %v4827
      %v4829 = vpop.f32.mrf.mxu0
      %v4830 = vpop.f32.mrf.mxu0
      %v4831 = vadd.f32 %v4771, %v4830
      %v4832 = vpop.f32.mrf.mxu0
      %4833 = vmatprep.mubr.bf16.mxu0 0
      %4834 = vmatmul.mubr.bf16.gmra.mxu0 %v735
      %v4835 = vpop.f32.mrf.mxu0
      %v4836 = vadd.f32 %v4771, %v4835
      %v4837 = vpop.f32.mrf.mxu0
      %v4838 = vpop.f32.mrf.mxu0
      %v4839 = vadd.f32 %v4771, %v4838
      %v4840 = vpop.f32.mrf.mxu0
      %4841 = vmatprep.mubr.bf16.mxu0 0
      %4842 = vmatmul.mubr.bf16.gmra.mxu0 %v738
      %v4843 = vpop.f32.mrf.mxu0
      %v4844 = vadd.f32 %v4771, %v4843
      %v4845 = vpop.f32.mrf.mxu0
      %v4846 = vpop.f32.mrf.mxu0
      %v4847 = vadd.f32 %v4771, %v4846
      %v4848 = vpop.f32.mrf.mxu0
      %4849 = vdwg.mxu0
      %v4850 = vpack.c.bf16 %v4823, %v4820
      %v4851 = vpack.c.bf16 %v4831, %v4828
      %v4852 = vpack.c.bf16 %v4839, %v4836
      %v4853 = vpack.c.bf16 %v4847, %v4844
      %v4858 = vunpack.c.l.b16 %v4850
      %v4859 = vunpack.c.h.b16 %v4850
      %v4860 = vunpack.c.l.b16 %v4851
      %v4861 = vunpack.c.h.b16 %v4851
      %v4862 = vunpack.c.l.b16 %v4852
      %v4863 = vunpack.c.h.b16 %v4852
      %v4864 = vunpack.c.l.b16 %v4853
      %v4865 = vunpack.c.h.b16 %v4853
      %v4866 = vpack.c.b16 %v4858, %v4858
      %v4867 = vpack.c.b16 %v4859, %v4859
      %v4868 = vpack.c.b16 %v4860, %v4860
      %v4869 = vpack.c.b16 %v4861, %v4861
      %v4870 = vpack.c.b16 %v4862, %v4862
      %v4871 = vpack.c.b16 %v4863, %v4863
      %v4872 = vpack.c.b16 %v4864, %v4864
      %v4873 = vpack.c.b16 %v4865, %v4865
      %v4875 = vsel %vm1069, %v4638, 0
      %v4878 = vsel %vm1069, %v4752, 0
      %4880 = vmatprep.subr.bf16.mxu0 0
      %4881 = vmatpush1.bf16.xpose.msra.mxu0 0
      %4882 = vmatprep.subr.bf16.mxu0 0
      %4883 = vmatpush1.bf16.xpose.msra.mxu0 0
      %4884 = vmatprep.subr.bf16.mxu0 0
      %4885 = vmatpush1.bf16.xpose.msra.mxu0 0
      %4886 = vmatprep.subr.bf16.mxu0 0
      %4887 = vmatpush1.bf16.xpose.msra.mxu0 0
      %4888 = vmatprep.subr.bf16.mxu0 0
      %4889 = vmatpush1.bf16.xpose.msra.mxu0 0
      %4890 = vmatprep.subr.bf16.mxu0 0
      %4891 = vmatpush1.bf16.xpose.msra.mxu0 0
      %4892 = vmatprep.subr.bf16.mxu0 0
      %4893 = vmatpush1.bf16.xpose.msra.mxu0 0
      %4894 = vmatprep.subr.bf16.mxu0 0
      %4895 = vmatpush1.bf16.xpose.msra.mxu0 %v4878
      %4896 = vmatprep.subr.bf16.mxu0 0
      %4897 = vmatpush2.bf16.xpose.msra.mxu0 0
      %4898 = vmatprep.subr.bf16.mxu0 0
      %4899 = vmatpush2.bf16.xpose.msra.mxu0 0
      %4900 = vmatprep.subr.bf16.mxu0 0
      %4901 = vmatpush2.bf16.xpose.msra.mxu0 0
      %4902 = vmatprep.subr.bf16.mxu0 0
      %4903 = vmatpush2.bf16.xpose.msra.mxu0 0
      %4904 = vmatprep.subr.bf16.mxu0 0
      %4905 = vmatpush2.bf16.xpose.msra.mxu0 0
      %4906 = vmatprep.subr.bf16.mxu0 0
      %4907 = vmatpush2.bf16.xpose.msra.mxu0 0
      %4908 = vmatprep.subr.bf16.mxu0 0
      %4909 = vmatpush2.bf16.xpose.msra.mxu0 0
      %4910 = vmatprep.subr.bf16.mxu0 0
      %4911 = vmatpush2.bf16.xpose.msra.mxu0 0
      %4912 = vmatprep.mubr.bf16.mxu0 0
      %4913 = vmatmul.mubr.bf16.gmra.mxu0 %v4875
      %v4914 = vpop.f32.mrf.mxu0
      %v4915 = vadd.f32 %v432, %v4914
      %v4916 = vpop.f32.mrf.mxu0
      %v4917 = vpop.f32.mrf.mxu0
      %v4918 = vpop.f32.mrf.mxu0
      %4919 = vdwg.mxu0
      %v4921 = vsel %vm1069, %v4639, 0
      %v4924 = vsel %vm1069, %v4753, 0
      %4926 = vmatprep.subr.bf16.mxu0 0
      %4927 = vmatpush1.bf16.xpose.msra.mxu0 0
      %4928 = vmatprep.subr.bf16.mxu0 0
      %4929 = vmatpush1.bf16.xpose.msra.mxu0 0
      %4930 = vmatprep.subr.bf16.mxu0 0
      %4931 = vmatpush1.bf16.xpose.msra.mxu0 0
      %4932 = vmatprep.subr.bf16.mxu0 0
      %4933 = vmatpush1.bf16.xpose.msra.mxu0 0
      %4934 = vmatprep.subr.bf16.mxu0 0
      %4935 = vmatpush1.bf16.xpose.msra.mxu0 0
      %4936 = vmatprep.subr.bf16.mxu0 0
      %4937 = vmatpush1.bf16.xpose.msra.mxu0 0
      %4938 = vmatprep.subr.bf16.mxu0 0
      %4939 = vmatpush1.bf16.xpose.msra.mxu0 0
      %4940 = vmatprep.subr.bf16.mxu0 0
      %4941 = vmatpush1.bf16.xpose.msra.mxu0 %v4924
      %4942 = vmatprep.subr.bf16.mxu0 0
      %4943 = vmatpush2.bf16.xpose.msra.mxu0 0
      %4944 = vmatprep.subr.bf16.mxu0 0
      %4945 = vmatpush2.bf16.xpose.msra.mxu0 0
      %4946 = vmatprep.subr.bf16.mxu0 0
      %4947 = vmatpush2.bf16.xpose.msra.mxu0 0
      %4948 = vmatprep.subr.bf16.mxu0 0
      %4949 = vmatpush2.bf16.xpose.msra.mxu0 0
      %4950 = vmatprep.subr.bf16.mxu0 0
      %4951 = vmatpush2.bf16.xpose.msra.mxu0 0
      %4952 = vmatprep.subr.bf16.mxu0 0
      %4953 = vmatpush2.bf16.xpose.msra.mxu0 0
      %4954 = vmatprep.subr.bf16.mxu0 0
      %4955 = vmatpush2.bf16.xpose.msra.mxu0 0
      %4956 = vmatprep.subr.bf16.mxu0 0
      %4957 = vmatpush2.bf16.xpose.msra.mxu0 0
      %4958 = vmatprep.mubr.bf16.mxu0 0
      %4959 = vmatmul.mubr.bf16.gmra.mxu0 %v4921
      %v4960 = vpop.f32.mrf.mxu0
      %v4961 = vadd.f32 %v432, %v4960
      %v4962 = vpop.f32.mrf.mxu0
      %v4963 = vpop.f32.mrf.mxu0
      %v4964 = vpop.f32.mrf.mxu0
      %4965 = vdwg.mxu0
      %v4967 = vsel %vm1069, %v4640, 0
      %v4970 = vsel %vm1069, %v4754, 0
      %4972 = vmatprep.subr.bf16.mxu0 0
      %4973 = vmatpush1.bf16.xpose.msra.mxu0 0
      %4974 = vmatprep.subr.bf16.mxu0 0
      %4975 = vmatpush1.bf16.xpose.msra.mxu0 0
      %4976 = vmatprep.subr.bf16.mxu0 0
      %4977 = vmatpush1.bf16.xpose.msra.mxu0 0
      %4978 = vmatprep.subr.bf16.mxu0 0
      %4979 = vmatpush1.bf16.xpose.msra.mxu0 0
      %4980 = vmatprep.subr.bf16.mxu0 0
      %4981 = vmatpush1.bf16.xpose.msra.mxu0 0
      %4982 = vmatprep.subr.bf16.mxu0 0
      %4983 = vmatpush1.bf16.xpose.msra.mxu0 0
      %4984 = vmatprep.subr.bf16.mxu0 0
      %4985 = vmatpush1.bf16.xpose.msra.mxu0 0
      %4986 = vmatprep.subr.bf16.mxu0 0
      %4987 = vmatpush1.bf16.xpose.msra.mxu0 %v4970
      %4988 = vmatprep.subr.bf16.mxu0 0
      %4989 = vmatpush2.bf16.xpose.msra.mxu0 0
      %4990 = vmatprep.subr.bf16.mxu0 0
      %4991 = vmatpush2.bf16.xpose.msra.mxu0 0
      %4992 = vmatprep.subr.bf16.mxu0 0
      %4993 = vmatpush2.bf16.xpose.msra.mxu0 0
      %4994 = vmatprep.subr.bf16.mxu0 0
      %4995 = vmatpush2.bf16.xpose.msra.mxu0 0
      %4996 = vmatprep.subr.bf16.mxu0 0
      %4997 = vmatpush2.bf16.xpose.msra.mxu0 0
      %4998 = vmatprep.subr.bf16.mxu0 0
      %4999 = vmatpush2.bf16.xpose.msra.mxu0 0
      %5000 = vmatprep.subr.bf16.mxu0 0
      %5001 = vmatpush2.bf16.xpose.msra.mxu0 0
      %5002 = vmatprep.subr.bf16.mxu0 0
      %5003 = vmatpush2.bf16.xpose.msra.mxu0 0
      %5004 = vmatprep.mubr.bf16.mxu0 0
      %5005 = vmatmul.mubr.bf16.gmra.mxu0 %v4967
      %v5006 = vpop.f32.mrf.mxu0
      %v5007 = vadd.f32 %v432, %v5006
      %v5008 = vpop.f32.mrf.mxu0
      %v5009 = vpop.f32.mrf.mxu0
      %v5010 = vpop.f32.mrf.mxu0
      %5011 = vdwg.mxu0
      %v5013 = vsel %vm1069, %v4641, 0
      %v5016 = vsel %vm1069, %v4755, 0
      %5018 = vmatprep.subr.bf16.mxu0 0
      %5019 = vmatpush1.bf16.xpose.msra.mxu0 0
      %5020 = vmatprep.subr.bf16.mxu0 0
      %5021 = vmatpush1.bf16.xpose.msra.mxu0 0
      %5022 = vmatprep.subr.bf16.mxu0 0
      %5023 = vmatpush1.bf16.xpose.msra.mxu0 0
      %5024 = vmatprep.subr.bf16.mxu0 0
      %5025 = vmatpush1.bf16.xpose.msra.mxu0 0
      %5026 = vmatprep.subr.bf16.mxu0 0
      %5027 = vmatpush1.bf16.xpose.msra.mxu0 0
      %5028 = vmatprep.subr.bf16.mxu0 0
      %5029 = vmatpush1.bf16.xpose.msra.mxu0 0
      %5030 = vmatprep.subr.bf16.mxu0 0
      %5031 = vmatpush1.bf16.xpose.msra.mxu0 0
      %5032 = vmatprep.subr.bf16.mxu0 0
      %5033 = vmatpush1.bf16.xpose.msra.mxu0 %v5016
      %5034 = vmatprep.subr.bf16.mxu0 0
      %5035 = vmatpush2.bf16.xpose.msra.mxu0 0
      %5036 = vmatprep.subr.bf16.mxu0 0
      %5037 = vmatpush2.bf16.xpose.msra.mxu0 0
      %5038 = vmatprep.subr.bf16.mxu0 0
      %5039 = vmatpush2.bf16.xpose.msra.mxu0 0
      %5040 = vmatprep.subr.bf16.mxu0 0
      %5041 = vmatpush2.bf16.xpose.msra.mxu0 0
      %5042 = vmatprep.subr.bf16.mxu0 0
      %5043 = vmatpush2.bf16.xpose.msra.mxu0 0
      %5044 = vmatprep.subr.bf16.mxu0 0
      %5045 = vmatpush2.bf16.xpose.msra.mxu0 0
      %5046 = vmatprep.subr.bf16.mxu0 0
      %5047 = vmatpush2.bf16.xpose.msra.mxu0 0
      %5048 = vmatprep.subr.bf16.mxu0 0
      %5049 = vmatpush2.bf16.xpose.msra.mxu0 0
      %5050 = vmatprep.mubr.bf16.mxu0 0
      %5051 = vmatmul.mubr.bf16.gmra.mxu0 %v5013
      %v5052 = vpop.f32.mrf.mxu0
      %v5053 = vadd.f32 %v432, %v5052
      %v5054 = vpop.f32.mrf.mxu0
      %v5055 = vpop.f32.mrf.mxu0
      %v5056 = vpop.f32.mrf.mxu0
      %5057 = vdwg.mxu0
      %v5059 = vsel %vm1069, %v4642, 0
      %v5062 = vsel %vm1069, %v4756, 0
      %5064 = vmatprep.subr.bf16.mxu0 0
      %5065 = vmatpush1.bf16.xpose.msra.mxu0 0
      %5066 = vmatprep.subr.bf16.mxu0 0
      %5067 = vmatpush1.bf16.xpose.msra.mxu0 0
      %5068 = vmatprep.subr.bf16.mxu0 0
      %5069 = vmatpush1.bf16.xpose.msra.mxu0 0
      %5070 = vmatprep.subr.bf16.mxu0 0
      %5071 = vmatpush1.bf16.xpose.msra.mxu0 0
      %5072 = vmatprep.subr.bf16.mxu0 0
      %5073 = vmatpush1.bf16.xpose.msra.mxu0 0
      %5074 = vmatprep.subr.bf16.mxu0 0
      %5075 = vmatpush1.bf16.xpose.msra.mxu0 0
      %5076 = vmatprep.subr.bf16.mxu0 0
      %5077 = vmatpush1.bf16.xpose.msra.mxu0 0
      %5078 = vmatprep.subr.bf16.mxu0 0
      %5079 = vmatpush1.bf16.xpose.msra.mxu0 %v5062
      %5080 = vmatprep.subr.bf16.mxu0 0
      %5081 = vmatpush2.bf16.xpose.msra.mxu0 0
      %5082 = vmatprep.subr.bf16.mxu0 0
      %5083 = vmatpush2.bf16.xpose.msra.mxu0 0
      %5084 = vmatprep.subr.bf16.mxu0 0
      %5085 = vmatpush2.bf16.xpose.msra.mxu0 0
      %5086 = vmatprep.subr.bf16.mxu0 0
      %5087 = vmatpush2.bf16.xpose.msra.mxu0 0
      %5088 = vmatprep.subr.bf16.mxu0 0
      %5089 = vmatpush2.bf16.xpose.msra.mxu0 0
      %5090 = vmatprep.subr.bf16.mxu0 0
      %5091 = vmatpush2.bf16.xpose.msra.mxu0 0
      %5092 = vmatprep.subr.bf16.mxu0 0
      %5093 = vmatpush2.bf16.xpose.msra.mxu0 0
      %5094 = vmatprep.subr.bf16.mxu0 0
      %5095 = vmatpush2.bf16.xpose.msra.mxu0 0
      %5096 = vmatprep.mubr.bf16.mxu0 0
      %5097 = vmatmul.mubr.bf16.gmra.mxu0 %v5059
      %v5098 = vpop.f32.mrf.mxu0
      %v5099 = vadd.f32 %v432, %v5098
      %v5100 = vpop.f32.mrf.mxu0
      %v5101 = vpop.f32.mrf.mxu0
      %v5102 = vpop.f32.mrf.mxu0
      %5103 = vdwg.mxu0
      %v5105 = vsel %vm1069, %v4643, 0
      %v5108 = vsel %vm1069, %v4757, 0
      %5110 = vmatprep.subr.bf16.mxu0 0
      %5111 = vmatpush1.bf16.xpose.msra.mxu0 0
      %5112 = vmatprep.subr.bf16.mxu0 0
      %5113 = vmatpush1.bf16.xpose.msra.mxu0 0
      %5114 = vmatprep.subr.bf16.mxu0 0
      %5115 = vmatpush1.bf16.xpose.msra.mxu0 0
      %5116 = vmatprep.subr.bf16.mxu0 0
      %5117 = vmatpush1.bf16.xpose.msra.mxu0 0
      %5118 = vmatprep.subr.bf16.mxu0 0
      %5119 = vmatpush1.bf16.xpose.msra.mxu0 0
      %5120 = vmatprep.subr.bf16.mxu0 0
      %5121 = vmatpush1.bf16.xpose.msra.mxu0 0
      %5122 = vmatprep.subr.bf16.mxu0 0
      %5123 = vmatpush1.bf16.xpose.msra.mxu0 0
      %5124 = vmatprep.subr.bf16.mxu0 0
      %5125 = vmatpush1.bf16.xpose.msra.mxu0 %v5108
      %5126 = vmatprep.subr.bf16.mxu0 0
      %5127 = vmatpush2.bf16.xpose.msra.mxu0 0
      %5128 = vmatprep.subr.bf16.mxu0 0
      %5129 = vmatpush2.bf16.xpose.msra.mxu0 0
      %5130 = vmatprep.subr.bf16.mxu0 0
      %5131 = vmatpush2.bf16.xpose.msra.mxu0 0
      %5132 = vmatprep.subr.bf16.mxu0 0
      %5133 = vmatpush2.bf16.xpose.msra.mxu0 0
      %5134 = vmatprep.subr.bf16.mxu0 0
      %5135 = vmatpush2.bf16.xpose.msra.mxu0 0
      %5136 = vmatprep.subr.bf16.mxu0 0
      %5137 = vmatpush2.bf16.xpose.msra.mxu0 0
      %5138 = vmatprep.subr.bf16.mxu0 0
      %5139 = vmatpush2.bf16.xpose.msra.mxu0 0
      %5140 = vmatprep.subr.bf16.mxu0 0
      %5141 = vmatpush2.bf16.xpose.msra.mxu0 0
      %5142 = vmatprep.mubr.bf16.mxu0 0
      %5143 = vmatmul.mubr.bf16.gmra.mxu0 %v5105
      %v5144 = vpop.f32.mrf.mxu0
      %v5145 = vadd.f32 %v432, %v5144
      %v5146 = vpop.f32.mrf.mxu0
      %v5147 = vpop.f32.mrf.mxu0
      %v5148 = vpop.f32.mrf.mxu0
      %5149 = vdwg.mxu0
      %v5151 = vsel %vm1069, %v4644, 0
      %v5154 = vsel %vm1069, %v4758, 0
      %5156 = vmatprep.subr.bf16.mxu0 0
      %5157 = vmatpush1.bf16.xpose.msra.mxu0 0
      %5158 = vmatprep.subr.bf16.mxu0 0
      %5159 = vmatpush1.bf16.xpose.msra.mxu0 0
      %5160 = vmatprep.subr.bf16.mxu0 0
      %5161 = vmatpush1.bf16.xpose.msra.mxu0 0
      %5162 = vmatprep.subr.bf16.mxu0 0
      %5163 = vmatpush1.bf16.xpose.msra.mxu0 0
      %5164 = vmatprep.subr.bf16.mxu0 0
      %5165 = vmatpush1.bf16.xpose.msra.mxu0 0
      %5166 = vmatprep.subr.bf16.mxu0 0
      %5167 = vmatpush1.bf16.xpose.msra.mxu0 0
      %5168 = vmatprep.subr.bf16.mxu0 0
      %5169 = vmatpush1.bf16.xpose.msra.mxu0 0
      %5170 = vmatprep.subr.bf16.mxu0 0
      %5171 = vmatpush1.bf16.xpose.msra.mxu0 %v5154
      %5172 = vmatprep.subr.bf16.mxu0 0
      %5173 = vmatpush2.bf16.xpose.msra.mxu0 0
      %5174 = vmatprep.subr.bf16.mxu0 0
      %5175 = vmatpush2.bf16.xpose.msra.mxu0 0
      %5176 = vmatprep.subr.bf16.mxu0 0
      %5177 = vmatpush2.bf16.xpose.msra.mxu0 0
      %5178 = vmatprep.subr.bf16.mxu0 0
      %5179 = vmatpush2.bf16.xpose.msra.mxu0 0
      %5180 = vmatprep.subr.bf16.mxu0 0
      %5181 = vmatpush2.bf16.xpose.msra.mxu0 0
      %5182 = vmatprep.subr.bf16.mxu0 0
      %5183 = vmatpush2.bf16.xpose.msra.mxu0 0
      %5184 = vmatprep.subr.bf16.mxu0 0
      %5185 = vmatpush2.bf16.xpose.msra.mxu0 0
      %5186 = vmatprep.subr.bf16.mxu0 0
      %5187 = vmatpush2.bf16.xpose.msra.mxu0 0
      %5188 = vmatprep.mubr.bf16.mxu0 0
      %5189 = vmatmul.mubr.bf16.gmra.mxu0 %v5151
      %v5190 = vpop.f32.mrf.mxu0
      %v5191 = vadd.f32 %v432, %v5190
      %v5192 = vpop.f32.mrf.mxu0
      %v5193 = vpop.f32.mrf.mxu0
      %v5194 = vpop.f32.mrf.mxu0
      %5195 = vdwg.mxu0
      %v5197 = vsel %vm1069, %v4645, 0
      %v5200 = vsel %vm1069, %v4759, 0
      %5202 = vmatprep.subr.bf16.mxu0 0
      %5203 = vmatpush1.bf16.xpose.msra.mxu0 0
      %5204 = vmatprep.subr.bf16.mxu0 0
      %5205 = vmatpush1.bf16.xpose.msra.mxu0 0
      %5206 = vmatprep.subr.bf16.mxu0 0
      %5207 = vmatpush1.bf16.xpose.msra.mxu0 0
      %5208 = vmatprep.subr.bf16.mxu0 0
      %5209 = vmatpush1.bf16.xpose.msra.mxu0 0
      %5210 = vmatprep.subr.bf16.mxu0 0
      %5211 = vmatpush1.bf16.xpose.msra.mxu0 0
      %5212 = vmatprep.subr.bf16.mxu0 0
      %5213 = vmatpush1.bf16.xpose.msra.mxu0 0
      %5214 = vmatprep.subr.bf16.mxu0 0
      %5215 = vmatpush1.bf16.xpose.msra.mxu0 0
      %5216 = vmatprep.subr.bf16.mxu0 0
      %5217 = vmatpush1.bf16.xpose.msra.mxu0 %v5200
      %5218 = vmatprep.subr.bf16.mxu0 0
      %5219 = vmatpush2.bf16.xpose.msra.mxu0 0
      %5220 = vmatprep.subr.bf16.mxu0 0
      %5221 = vmatpush2.bf16.xpose.msra.mxu0 0
      %5222 = vmatprep.subr.bf16.mxu0 0
      %5223 = vmatpush2.bf16.xpose.msra.mxu0 0
      %5224 = vmatprep.subr.bf16.mxu0 0
      %5225 = vmatpush2.bf16.xpose.msra.mxu0 0
      %5226 = vmatprep.subr.bf16.mxu0 0
      %5227 = vmatpush2.bf16.xpose.msra.mxu0 0
      %5228 = vmatprep.subr.bf16.mxu0 0
      %5229 = vmatpush2.bf16.xpose.msra.mxu0 0
      %5230 = vmatprep.subr.bf16.mxu0 0
      %5231 = vmatpush2.bf16.xpose.msra.mxu0 0
      %5232 = vmatprep.subr.bf16.mxu0 0
      %5233 = vmatpush2.bf16.xpose.msra.mxu0 0
      %5234 = vmatprep.mubr.bf16.mxu0 0
      %5235 = vmatmul.mubr.bf16.gmra.mxu0 %v5197
      %v5236 = vpop.f32.mrf.mxu0
      %v5237 = vadd.f32 %v432, %v5236
      %v5238 = vpop.f32.mrf.mxu0
      %v5239 = vpop.f32.mrf.mxu0
      %v5240 = vpop.f32.mrf.mxu0
      %5241 = vdwg.mxu0
      %v5242 = vsel %vm1069, %v4915, -inf
      %5243 = vmax.xlane.f32.xlu0 %v5242
      %v5244 = vpop.xlane.xlu0 %5243
      %v5245 = vsel %vm1069, %v4961, -inf
      %5246 = vmax.xlane.f32.xlu0 %v5245
      %v5247 = vpop.xlane.xlu0 %5246
      %v5248 = vsel %vm1069, %v5007, -inf
      %5249 = vmax.xlane.f32.xlu0 %v5248
      %v5250 = vpop.xlane.xlu0 %5249
      %v5251 = vsel %vm1069, %v5053, -inf
      %5252 = vmax.xlane.f32.xlu0 %v5251
      %v5253 = vpop.xlane.xlu0 %5252
      %v5254 = vsel %vm1069, %v5099, -inf
      %5255 = vmax.xlane.f32.xlu0 %v5254
      %v5256 = vpop.xlane.xlu0 %5255
      %v5257 = vsel %vm1069, %v5145, -inf
      %5258 = vmax.xlane.f32.xlu0 %v5257
      %v5259 = vpop.xlane.xlu0 %5258
      %v5260 = vsel %vm1069, %v5191, -inf
      %5261 = vmax.xlane.f32.xlu0 %v5260
      %v5262 = vpop.xlane.xlu0 %5261
      %v5263 = vsel %vm1069, %v5237, -inf
      %5264 = vmax.xlane.f32.xlu0 %v5263
      %v5265 = vpop.xlane.xlu0 %5264
      %v5266 = vsub.f32 %v4915, %v5244
      %v5267 = vsub.f32 %v4961, %v5247
      %v5268 = vsub.f32 %v5007, %v5250
      %v5269 = vsub.f32 %v5053, %v5253
      %v5270 = vsub.f32 %v5099, %v5256
      %v5271 = vsub.f32 %v5145, %v5259
      %v5272 = vsub.f32 %v5191, %v5262
      %v5273 = vsub.f32 %v5237, %v5265
      %v5274 = vmul.f32 %v5266, 1.442695
      %v5275 = vpow.pop %v5274
      %v5276 = vmul.f32 %v5267, 1.442695
      %v5277 = vpow.pop %v5276
      %v5278 = vmul.f32 %v5268, 1.442695
      %v5279 = vpow.pop %v5278
      %v5280 = vmul.f32 %v5269, 1.442695
      %v5281 = vpow.pop %v5280
      %v5282 = vmul.f32 %v5270, 1.442695
      %v5283 = vpow.pop %v5282
      %v5284 = vmul.f32 %v5271, 1.442695
      %v5285 = vpow.pop %v5284
      %v5286 = vmul.f32 %v5272, 1.442695
      %v5287 = vpow.pop %v5286
      %v5288 = vmul.f32 %v5273, 1.442695
      %v5289 = vpow.pop %v5288
      %v5290 = vsel %vm1069, %v5275, 0.0
      %5291 = vadd.xlane.f32.xlu0 %v5290
      %v5292 = vpop.xlane.xlu0 %5291
      %v5293 = vsel %vm1069, %v5277, 0.0
      %5294 = vadd.xlane.f32.xlu0 %v5293
      %v5295 = vpop.xlane.xlu0 %5294
      %v5296 = vsel %vm1069, %v5279, 0.0
      %5297 = vadd.xlane.f32.xlu0 %v5296
      %v5298 = vpop.xlane.xlu0 %5297
      %v5299 = vsel %vm1069, %v5281, 0.0
      %5300 = vadd.xlane.f32.xlu0 %v5299
      %v5301 = vpop.xlane.xlu0 %5300
      %v5302 = vsel %vm1069, %v5283, 0.0
      %5303 = vadd.xlane.f32.xlu0 %v5302
      %v5304 = vpop.xlane.xlu0 %5303
      %v5305 = vsel %vm1069, %v5285, 0.0
      %5306 = vadd.xlane.f32.xlu0 %v5305
      %v5307 = vpop.xlane.xlu0 %5306
      %v5308 = vsel %vm1069, %v5287, 0.0
      %5309 = vadd.xlane.f32.xlu0 %v5308
      %v5310 = vpop.xlane.xlu0 %5309
      %v5311 = vsel %vm1069, %v5289, 0.0
      %5312 = vadd.xlane.f32.xlu0 %v5311
      %v5313 = vpop.xlane.xlu0 %5312
      %v5314 = vrcp.pop %v5292
      %v5315 = vrcp.pop %v5295
      %v5316 = vrcp.pop %v5298
      %v5317 = vrcp.pop %v5301
      %v5318 = vrcp.pop %v5304
      %v5319 = vrcp.pop %v5307
      %v5320 = vrcp.pop %v5310
      %v5321 = vrcp.pop %v5313
      %v5322 = vmul.f32 %v5275, %v5314
      %v5323 = vmul.f32 %v5277, %v5315
      %v5324 = vmul.f32 %v5279, %v5316
      %v5325 = vmul.f32 %v5281, %v5317
      %v5326 = vmul.f32 %v5283, %v5318
      %v5327 = vmul.f32 %v5285, %v5319
      %v5328 = vmul.f32 %v5287, %v5320
      %v5329 = vmul.f32 %v5289, %v5321
      %v5330 = vpack.c.bf16 %v5322, %v5322
      %v5331 = vpack.c.bf16 %v5323, %v5323
      %v5332 = vpack.c.bf16 %v5324, %v5324
      %v5333 = vpack.c.bf16 %v5325, %v5325
      %v5334 = vpack.c.bf16 %v5326, %v5326
      %v5335 = vpack.c.bf16 %v5327, %v5327
      %v5336 = vpack.c.bf16 %v5328, %v5328
      %v5337 = vpack.c.bf16 %v5329, %v5329
      %v5339 = vsel %vm1069, %v5330, 0
      %v5342 = vsel %vm1537, %v4866, 0
      %5344 = vmatprep.subr.bf16.mxu0 0
      %5345 = vmatpush1.bf16.msra.mxu0 0
      %5346 = vmatprep.subr.bf16.mxu0 0
      %5347 = vmatpush1.bf16.msra.mxu0 0
      %5348 = vmatprep.subr.bf16.mxu0 0
      %5349 = vmatpush1.bf16.msra.mxu0 0
      %5350 = vmatprep.subr.bf16.mxu0 0
      %5351 = vmatpush1.bf16.msra.mxu0 0
      %5352 = vmatprep.subr.bf16.mxu0 0
      %5353 = vmatpush1.bf16.msra.mxu0 0
      %5354 = vmatprep.subr.bf16.mxu0 0
      %5355 = vmatpush1.bf16.msra.mxu0 0
      %5356 = vmatprep.subr.bf16.mxu0 0
      %5357 = vmatpush1.bf16.msra.mxu0 0
      %5358 = vmatprep.subr.bf16.mxu0 0
      %5359 = vmatpush1.bf16.msra.mxu0 %v5342
      %5360 = vmatprep.subr.bf16.mxu0 0
      %5361 = vmatpush2.bf16.msra.mxu0 0
      %5362 = vmatprep.subr.bf16.mxu0 0
      %5363 = vmatpush2.bf16.msra.mxu0 0
      %5364 = vmatprep.subr.bf16.mxu0 0
      %5365 = vmatpush2.bf16.msra.mxu0 0
      %5366 = vmatprep.subr.bf16.mxu0 0
      %5367 = vmatpush2.bf16.msra.mxu0 0
      %5368 = vmatprep.subr.bf16.mxu0 0
      %5369 = vmatpush2.bf16.msra.mxu0 0
      %5370 = vmatprep.subr.bf16.mxu0 0
      %5371 = vmatpush2.bf16.msra.mxu0 0
      %5372 = vmatprep.subr.bf16.mxu0 0
      %5373 = vmatpush2.bf16.msra.mxu0 0
      %5374 = vmatprep.subr.bf16.mxu0 0
      %5375 = vmatpush2.bf16.msra.mxu0 0
      %5376 = vmatprep.mubr.bf16.mxu0 0
      %5377 = vmatmul.mubr.bf16.gmra.mxu0 %v5339
      %v5378 = vpop.f32.mrf.mxu0
      %v5379 = vadd.f32 0.0, %v5378
      %v5380 = vpop.f32.mrf.mxu0
      %v5381 = vpop.f32.mrf.mxu0
      %v5382 = vpop.f32.mrf.mxu0
      %5383 = vdwg.mxu0
      %v5385 = vsel %vm1069, %v5331, 0
      %v5388 = vsel %vm1537, %v4867, 0
      %5390 = vmatprep.subr.bf16.mxu0 0
      %5391 = vmatpush1.bf16.msra.mxu0 0
      %5392 = vmatprep.subr.bf16.mxu0 0
      %5393 = vmatpush1.bf16.msra.mxu0 0
      %5394 = vmatprep.subr.bf16.mxu0 0
      %5395 = vmatpush1.bf16.msra.mxu0 0
      %5396 = vmatprep.subr.bf16.mxu0 0
      %5397 = vmatpush1.bf16.msra.mxu0 0
      %5398 = vmatprep.subr.bf16.mxu0 0
      %5399 = vmatpush1.bf16.msra.mxu0 0
      %5400 = vmatprep.subr.bf16.mxu0 0
      %5401 = vmatpush1.bf16.msra.mxu0 0
      %5402 = vmatprep.subr.bf16.mxu0 0
      %5403 = vmatpush1.bf16.msra.mxu0 0
      %5404 = vmatprep.subr.bf16.mxu0 0
      %5405 = vmatpush1.bf16.msra.mxu0 %v5388
      %5406 = vmatprep.subr.bf16.mxu0 0
      %5407 = vmatpush2.bf16.msra.mxu0 0
      %5408 = vmatprep.subr.bf16.mxu0 0
      %5409 = vmatpush2.bf16.msra.mxu0 0
      %5410 = vmatprep.subr.bf16.mxu0 0
      %5411 = vmatpush2.bf16.msra.mxu0 0
      %5412 = vmatprep.subr.bf16.mxu0 0
      %5413 = vmatpush2.bf16.msra.mxu0 0
      %5414 = vmatprep.subr.bf16.mxu0 0
      %5415 = vmatpush2.bf16.msra.mxu0 0
      %5416 = vmatprep.subr.bf16.mxu0 0
      %5417 = vmatpush2.bf16.msra.mxu0 0
      %5418 = vmatprep.subr.bf16.mxu0 0
      %5419 = vmatpush2.bf16.msra.mxu0 0
      %5420 = vmatprep.subr.bf16.mxu0 0
      %5421 = vmatpush2.bf16.msra.mxu0 0
      %5422 = vmatprep.mubr.bf16.mxu0 0
      %5423 = vmatmul.mubr.bf16.gmra.mxu0 %v5385
      %v5424 = vpop.f32.mrf.mxu0
      %v5425 = vadd.f32 0.0, %v5424
      %v5426 = vpop.f32.mrf.mxu0
      %v5427 = vpop.f32.mrf.mxu0
      %v5428 = vpop.f32.mrf.mxu0
      %5429 = vdwg.mxu0
      %v5431 = vsel %vm1069, %v5332, 0
      %v5434 = vsel %vm1537, %v4868, 0
      %5436 = vmatprep.subr.bf16.mxu0 0
      %5437 = vmatpush1.bf16.msra.mxu0 0
      %5438 = vmatprep.subr.bf16.mxu0 0
      %5439 = vmatpush1.bf16.msra.mxu0 0
      %5440 = vmatprep.subr.bf16.mxu0 0
      %5441 = vmatpush1.bf16.msra.mxu0 0
      %5442 = vmatprep.subr.bf16.mxu0 0
      %5443 = vmatpush1.bf16.msra.mxu0 0
      %5444 = vmatprep.subr.bf16.mxu0 0
      %5445 = vmatpush1.bf16.msra.mxu0 0
      %5446 = vmatprep.subr.bf16.mxu0 0
      %5447 = vmatpush1.bf16.msra.mxu0 0
      %5448 = vmatprep.subr.bf16.mxu0 0
      %5449 = vmatpush1.bf16.msra.mxu0 0
      %5450 = vmatprep.subr.bf16.mxu0 0
      %5451 = vmatpush1.bf16.msra.mxu0 %v5434
      %5452 = vmatprep.subr.bf16.mxu0 0
      %5453 = vmatpush2.bf16.msra.mxu0 0
      %5454 = vmatprep.subr.bf16.mxu0 0
      %5455 = vmatpush2.bf16.msra.mxu0 0
      %5456 = vmatprep.subr.bf16.mxu0 0
      %5457 = vmatpush2.bf16.msra.mxu0 0
      %5458 = vmatprep.subr.bf16.mxu0 0
      %5459 = vmatpush2.bf16.msra.mxu0 0
      %5460 = vmatprep.subr.bf16.mxu0 0
      %5461 = vmatpush2.bf16.msra.mxu0 0
      %5462 = vmatprep.subr.bf16.mxu0 0
      %5463 = vmatpush2.bf16.msra.mxu0 0
      %5464 = vmatprep.subr.bf16.mxu0 0
      %5465 = vmatpush2.bf16.msra.mxu0 0
      %5466 = vmatprep.subr.bf16.mxu0 0
      %5467 = vmatpush2.bf16.msra.mxu0 0
      %5468 = vmatprep.mubr.bf16.mxu0 0
      %5469 = vmatmul.mubr.bf16.gmra.mxu0 %v5431
      %v5470 = vpop.f32.mrf.mxu0
      %v5471 = vadd.f32 0.0, %v5470
      %v5472 = vpop.f32.mrf.mxu0
      %v5473 = vpop.f32.mrf.mxu0
      %v5474 = vpop.f32.mrf.mxu0
      %5475 = vdwg.mxu0
      %v5477 = vsel %vm1069, %v5333, 0
      %v5480 = vsel %vm1537, %v4869, 0
      %5482 = vmatprep.subr.bf16.mxu0 0
      %5483 = vmatpush1.bf16.msra.mxu0 0
      %5484 = vmatprep.subr.bf16.mxu0 0
      %5485 = vmatpush1.bf16.msra.mxu0 0
      %5486 = vmatprep.subr.bf16.mxu0 0
      %5487 = vmatpush1.bf16.msra.mxu0 0
      %5488 = vmatprep.subr.bf16.mxu0 0
      %5489 = vmatpush1.bf16.msra.mxu0 0
      %5490 = vmatprep.subr.bf16.mxu0 0
      %5491 = vmatpush1.bf16.msra.mxu0 0
      %5492 = vmatprep.subr.bf16.mxu0 0
      %5493 = vmatpush1.bf16.msra.mxu0 0
      %5494 = vmatprep.subr.bf16.mxu0 0
      %5495 = vmatpush1.bf16.msra.mxu0 0
      %5496 = vmatprep.subr.bf16.mxu0 0
      %5497 = vmatpush1.bf16.msra.mxu0 %v5480
      %5498 = vmatprep.subr.bf16.mxu0 0
      %5499 = vmatpush2.bf16.msra.mxu0 0
      %5500 = vmatprep.subr.bf16.mxu0 0
      %5501 = vmatpush2.bf16.msra.mxu0 0
      %5502 = vmatprep.subr.bf16.mxu0 0
      %5503 = vmatpush2.bf16.msra.mxu0 0
      %5504 = vmatprep.subr.bf16.mxu0 0
      %5505 = vmatpush2.bf16.msra.mxu0 0
      %5506 = vmatprep.subr.bf16.mxu0 0
      %5507 = vmatpush2.bf16.msra.mxu0 0
      %5508 = vmatprep.subr.bf16.mxu0 0
      %5509 = vmatpush2.bf16.msra.mxu0 0
      %5510 = vmatprep.subr.bf16.mxu0 0
      %5511 = vmatpush2.bf16.msra.mxu0 0
      %5512 = vmatprep.subr.bf16.mxu0 0
      %5513 = vmatpush2.bf16.msra.mxu0 0
      %5514 = vmatprep.mubr.bf16.mxu0 0
      %5515 = vmatmul.mubr.bf16.gmra.mxu0 %v5477
      %v5516 = vpop.f32.mrf.mxu0
      %v5517 = vadd.f32 0.0, %v5516
      %v5518 = vpop.f32.mrf.mxu0
      %v5519 = vpop.f32.mrf.mxu0
      %v5520 = vpop.f32.mrf.mxu0
      %5521 = vdwg.mxu0
      %v5523 = vsel %vm1069, %v5334, 0
      %v5526 = vsel %vm1537, %v4870, 0
      %5528 = vmatprep.subr.bf16.mxu0 0
      %5529 = vmatpush1.bf16.msra.mxu0 0
      %5530 = vmatprep.subr.bf16.mxu0 0
      %5531 = vmatpush1.bf16.msra.mxu0 0
      %5532 = vmatprep.subr.bf16.mxu0 0
      %5533 = vmatpush1.bf16.msra.mxu0 0
      %5534 = vmatprep.subr.bf16.mxu0 0
      %5535 = vmatpush1.bf16.msra.mxu0 0
      %5536 = vmatprep.subr.bf16.mxu0 0
      %5537 = vmatpush1.bf16.msra.mxu0 0
      %5538 = vmatprep.subr.bf16.mxu0 0
      %5539 = vmatpush1.bf16.msra.mxu0 0
      %5540 = vmatprep.subr.bf16.mxu0 0
      %5541 = vmatpush1.bf16.msra.mxu0 0
      %5542 = vmatprep.subr.bf16.mxu0 0
      %5543 = vmatpush1.bf16.msra.mxu0 %v5526
      %5544 = vmatprep.subr.bf16.mxu0 0
      %5545 = vmatpush2.bf16.msra.mxu0 0
      %5546 = vmatprep.subr.bf16.mxu0 0
      %5547 = vmatpush2.bf16.msra.mxu0 0
      %5548 = vmatprep.subr.bf16.mxu0 0
      %5549 = vmatpush2.bf16.msra.mxu0 0
      %5550 = vmatprep.subr.bf16.mxu0 0
      %5551 = vmatpush2.bf16.msra.mxu0 0
      %5552 = vmatprep.subr.bf16.mxu0 0
      %5553 = vmatpush2.bf16.msra.mxu0 0
      %5554 = vmatprep.subr.bf16.mxu0 0
      %5555 = vmatpush2.bf16.msra.mxu0 0
      %5556 = vmatprep.subr.bf16.mxu0 0
      %5557 = vmatpush2.bf16.msra.mxu0 0
      %5558 = vmatprep.subr.bf16.mxu0 0
      %5559 = vmatpush2.bf16.msra.mxu0 0
      %5560 = vmatprep.mubr.bf16.mxu0 0
      %5561 = vmatmul.mubr.bf16.gmra.mxu0 %v5523
      %v5562 = vpop.f32.mrf.mxu0
      %v5563 = vadd.f32 0.0, %v5562
      %v5564 = vpop.f32.mrf.mxu0
      %v5565 = vpop.f32.mrf.mxu0
      %v5566 = vpop.f32.mrf.mxu0
      %5567 = vdwg.mxu0
      %v5569 = vsel %vm1069, %v5335, 0
      %v5572 = vsel %vm1537, %v4871, 0
      %5574 = vmatprep.subr.bf16.mxu0 0
      %5575 = vmatpush1.bf16.msra.mxu0 0
      %5576 = vmatprep.subr.bf16.mxu0 0
      %5577 = vmatpush1.bf16.msra.mxu0 0
      %5578 = vmatprep.subr.bf16.mxu0 0
      %5579 = vmatpush1.bf16.msra.mxu0 0
      %5580 = vmatprep.subr.bf16.mxu0 0
      %5581 = vmatpush1.bf16.msra.mxu0 0
      %5582 = vmatprep.subr.bf16.mxu0 0
      %5583 = vmatpush1.bf16.msra.mxu0 0
      %5584 = vmatprep.subr.bf16.mxu0 0
      %5585 = vmatpush1.bf16.msra.mxu0 0
      %5586 = vmatprep.subr.bf16.mxu0 0
      %5587 = vmatpush1.bf16.msra.mxu0 0
      %5588 = vmatprep.subr.bf16.mxu0 0
      %5589 = vmatpush1.bf16.msra.mxu0 %v5572
      %5590 = vmatprep.subr.bf16.mxu0 0
      %5591 = vmatpush2.bf16.msra.mxu0 0
      %5592 = vmatprep.subr.bf16.mxu0 0
      %5593 = vmatpush2.bf16.msra.mxu0 0
      %5594 = vmatprep.subr.bf16.mxu0 0
      %5595 = vmatpush2.bf16.msra.mxu0 0
      %5596 = vmatprep.subr.bf16.mxu0 0
      %5597 = vmatpush2.bf16.msra.mxu0 0
      %5598 = vmatprep.subr.bf16.mxu0 0
      %5599 = vmatpush2.bf16.msra.mxu0 0
      %5600 = vmatprep.subr.bf16.mxu0 0
      %5601 = vmatpush2.bf16.msra.mxu0 0
      %5602 = vmatprep.subr.bf16.mxu0 0
      %5603 = vmatpush2.bf16.msra.mxu0 0
      %5604 = vmatprep.subr.bf16.mxu0 0
      %5605 = vmatpush2.bf16.msra.mxu0 0
      %5606 = vmatprep.mubr.bf16.mxu0 0
      %5607 = vmatmul.mubr.bf16.gmra.mxu0 %v5569
      %v5608 = vpop.f32.mrf.mxu0
      %v5609 = vadd.f32 0.0, %v5608
      %v5610 = vpop.f32.mrf.mxu0
      %v5611 = vpop.f32.mrf.mxu0
      %v5612 = vpop.f32.mrf.mxu0
      %5613 = vdwg.mxu0
      %v5615 = vsel %vm1069, %v5336, 0
      %v5618 = vsel %vm1537, %v4872, 0
      %5620 = vmatprep.subr.bf16.mxu0 0
      %5621 = vmatpush1.bf16.msra.mxu0 0
      %5622 = vmatprep.subr.bf16.mxu0 0
      %5623 = vmatpush1.bf16.msra.mxu0 0
      %5624 = vmatprep.subr.bf16.mxu0 0
      %5625 = vmatpush1.bf16.msra.mxu0 0
      %5626 = vmatprep.subr.bf16.mxu0 0
      %5627 = vmatpush1.bf16.msra.mxu0 0
      %5628 = vmatprep.subr.bf16.mxu0 0
      %5629 = vmatpush1.bf16.msra.mxu0 0
      %5630 = vmatprep.subr.bf16.mxu0 0
      %5631 = vmatpush1.bf16.msra.mxu0 0
      %5632 = vmatprep.subr.bf16.mxu0 0
      %5633 = vmatpush1.bf16.msra.mxu0 0
      %5634 = vmatprep.subr.bf16.mxu0 0
      %5635 = vmatpush1.bf16.msra.mxu0 %v5618
      %5636 = vmatprep.subr.bf16.mxu0 0
      %5637 = vmatpush2.bf16.msra.mxu0 0
      %5638 = vmatprep.subr.bf16.mxu0 0
      %5639 = vmatpush2.bf16.msra.mxu0 0
      %5640 = vmatprep.subr.bf16.mxu0 0
      %5641 = vmatpush2.bf16.msra.mxu0 0
      %5642 = vmatprep.subr.bf16.mxu0 0
      %5643 = vmatpush2.bf16.msra.mxu0 0
      %5644 = vmatprep.subr.bf16.mxu0 0
      %5645 = vmatpush2.bf16.msra.mxu0 0
      %5646 = vmatprep.subr.bf16.mxu0 0
      %5647 = vmatpush2.bf16.msra.mxu0 0
      %5648 = vmatprep.subr.bf16.mxu0 0
      %5649 = vmatpush2.bf16.msra.mxu0 0
      %5650 = vmatprep.subr.bf16.mxu0 0
      %5651 = vmatpush2.bf16.msra.mxu0 0
      %5652 = vmatprep.mubr.bf16.mxu0 0
      %5653 = vmatmul.mubr.bf16.gmra.mxu0 %v5615
      %v5654 = vpop.f32.mrf.mxu0
      %v5655 = vadd.f32 0.0, %v5654
      %v5656 = vpop.f32.mrf.mxu0
      %v5657 = vpop.f32.mrf.mxu0
      %v5658 = vpop.f32.mrf.mxu0
      %5659 = vdwg.mxu0
      %v5661 = vsel %vm1069, %v5337, 0
      %v5664 = vsel %vm1537, %v4873, 0
      %5666 = vmatprep.subr.bf16.mxu0 0
      %5667 = vmatpush1.bf16.msra.mxu0 0
      %5668 = vmatprep.subr.bf16.mxu0 0
      %5669 = vmatpush1.bf16.msra.mxu0 0
      %5670 = vmatprep.subr.bf16.mxu0 0
      %5671 = vmatpush1.bf16.msra.mxu0 0
      %5672 = vmatprep.subr.bf16.mxu0 0
      %5673 = vmatpush1.bf16.msra.mxu0 0
      %5674 = vmatprep.subr.bf16.mxu0 0
      %5675 = vmatpush1.bf16.msra.mxu0 0
      %5676 = vmatprep.subr.bf16.mxu0 0
      %5677 = vmatpush1.bf16.msra.mxu0 0
      %5678 = vmatprep.subr.bf16.mxu0 0
      %5679 = vmatpush1.bf16.msra.mxu0 0
      %5680 = vmatprep.subr.bf16.mxu0 0
      %5681 = vmatpush1.bf16.msra.mxu0 %v5664
      %5682 = vmatprep.subr.bf16.mxu0 0
      %5683 = vmatpush2.bf16.msra.mxu0 0
      %5684 = vmatprep.subr.bf16.mxu0 0
      %5685 = vmatpush2.bf16.msra.mxu0 0
      %5686 = vmatprep.subr.bf16.mxu0 0
      %5687 = vmatpush2.bf16.msra.mxu0 0
      %5688 = vmatprep.subr.bf16.mxu0 0
      %5689 = vmatpush2.bf16.msra.mxu0 0
      %5690 = vmatprep.subr.bf16.mxu0 0
      %5691 = vmatpush2.bf16.msra.mxu0 0
      %5692 = vmatprep.subr.bf16.mxu0 0
      %5693 = vmatpush2.bf16.msra.mxu0 0
      %5694 = vmatprep.subr.bf16.mxu0 0
      %5695 = vmatpush2.bf16.msra.mxu0 0
      %5696 = vmatprep.subr.bf16.mxu0 0
      %5697 = vmatpush2.bf16.msra.mxu0 0
      %5698 = vmatprep.mubr.bf16.mxu0 0
      %5699 = vmatmul.mubr.bf16.gmra.mxu0 %v5661
      %v5700 = vpop.f32.mrf.mxu0
      %v5701 = vadd.f32 0.0, %v5700
      %v5702 = vpop.f32.mrf.mxu0
      %v5703 = vpop.f32.mrf.mxu0
      %v5704 = vpop.f32.mrf.mxu0
      %5705 = vdwg.mxu0
      %v5706 = vpack.c.bf16 %v5425, %v5379
      %v5707 = vpack.c.bf16 %v5517, %v5471
      %v5708 = vpack.c.bf16 %v5609, %v5563
      %v5709 = vpack.c.bf16 %v5701, %v5655
      %s5710 = scalar_lea.vmem %s8, 20
      %v5711 = vld [vmem:[%s5710] sm:$0xf]
      %v5713 = vsel %vm1069, %v5706, 0
      %v5716 = vsel %vm1069, %v5707, 0
      %v5719 = vsel %vm1069, %v5708, 0
      %v5722 = vsel %vm1069, %v5709, 0
      %v5725 = vsel %vm1537, %v5711, 0
      %5727 = vmatprep.subr.bf16.mxu0 0
      %5728 = vmatpush1.bf16.msra.mxu0 0
      %5729 = vmatprep.subr.bf16.mxu0 0
      %5730 = vmatpush1.bf16.msra.mxu0 0
      %5731 = vmatprep.subr.bf16.mxu0 0
      %5732 = vmatpush1.bf16.msra.mxu0 0
      %5733 = vmatprep.subr.bf16.mxu0 0
      %5734 = vmatpush1.bf16.msra.mxu0 0
      %5735 = vmatprep.subr.bf16.mxu0 0
      %5736 = vmatpush1.bf16.msra.mxu0 0
      %5737 = vmatprep.subr.bf16.mxu0 0
      %5738 = vmatpush1.bf16.msra.mxu0 0
      %5739 = vmatprep.subr.bf16.mxu0 0
      %5740 = vmatpush1.bf16.msra.mxu0 0
      %5741 = vmatprep.subr.bf16.mxu0 0
      %5742 = vmatpush1.bf16.msra.mxu0 %v5725
      %5743 = vmatprep.subr.bf16.mxu0 0
      %5744 = vmatpush2.bf16.msra.mxu0 0
      %5745 = vmatprep.subr.bf16.mxu0 0
      %5746 = vmatpush2.bf16.msra.mxu0 0
      %5747 = vmatprep.subr.bf16.mxu0 0
      %5748 = vmatpush2.bf16.msra.mxu0 0
      %5749 = vmatprep.subr.bf16.mxu0 0
      %5750 = vmatpush2.bf16.msra.mxu0 0
      %5751 = vmatprep.subr.bf16.mxu0 0
      %5752 = vmatpush2.bf16.msra.mxu0 0
      %5753 = vmatprep.subr.bf16.mxu0 0
      %5754 = vmatpush2.bf16.msra.mxu0 0
      %5755 = vmatprep.subr.bf16.mxu0 0
      %5756 = vmatpush2.bf16.msra.mxu0 0
      %5757 = vmatprep.subr.bf16.mxu0 0
      %5758 = vmatpush2.bf16.msra.mxu0 0
      %5759 = vmatprep.mubr.bf16.mxu0 0
      %5760 = vmatmul.mubr.bf16.gmra.mxu0 %v5713
      %v5761 = vpop.f32.mrf.mxu0
      %v5762 = vadd.f32 0.0, %v5761
      %v5763 = vpop.f32.mrf.mxu0
      %v5764 = vpop.f32.mrf.mxu0
      %v5765 = vadd.f32 0.0, %v5764
      %v5766 = vpop.f32.mrf.mxu0
      %5767 = vmatprep.mubr.bf16.mxu0 0
      %5768 = vmatmul.mubr.bf16.gmra.mxu0 %v5716
      %v5769 = vpop.f32.mrf.mxu0
      %v5770 = vadd.f32 0.0, %v5769
      %v5771 = vpop.f32.mrf.mxu0
      %v5772 = vpop.f32.mrf.mxu0
      %v5773 = vadd.f32 0.0, %v5772
      %v5774 = vpop.f32.mrf.mxu0
      %5775 = vmatprep.mubr.bf16.mxu0 0
      %5776 = vmatmul.mubr.bf16.gmra.mxu0 %v5719
      %v5777 = vpop.f32.mrf.mxu0
      %v5778 = vadd.f32 0.0, %v5777
      %v5779 = vpop.f32.mrf.mxu0
      %v5780 = vpop.f32.mrf.mxu0
      %v5781 = vadd.f32 0.0, %v5780
      %v5782 = vpop.f32.mrf.mxu0
      %5783 = vmatprep.mubr.bf16.mxu0 0
      %5784 = vmatmul.mubr.bf16.gmra.mxu0 %v5722
      %v5785 = vpop.f32.mrf.mxu0
      %v5786 = vadd.f32 0.0, %v5785
      %v5787 = vpop.f32.mrf.mxu0
      %v5788 = vpop.f32.mrf.mxu0
      %v5789 = vadd.f32 0.0, %v5788
      %v5790 = vpop.f32.mrf.mxu0
      %5791 = vdwg.mxu0
      %v5792 = vadd.f32 %v4524, %v5762
      %v5793 = vadd.f32 %v4525, %v5765
      %v5794 = vadd.f32 %v4526, %v5770
      %v5795 = vadd.f32 %v4527, %v5773
      %v5796 = vadd.f32 %v4528, %v5778
      %v5797 = vadd.f32 %v4529, %v5781
      %v5798 = vadd.f32 %v4530, %v5786
      %v5799 = vadd.f32 %v4531, %v5789
      %s5800 = scalar_lea.vmem %s6, 32
      %v5801 = vld [vmem:[%s5800] sm:$0xf]
      %v5802 = vld [vmem:[%s5800 + $0x4] sm:$0xf]
      %v5803 = vld [vmem:[%s5800 + $0x8] sm:$0xf]
      %v5804 = vld [vmem:[%s5800 + $0xc] sm:$0xf]
      %s5805 = scalar_lea.vmem %s7, 2
      %v5806 = vld [vmem:[%s5805] sm:$0x1]
      %v5808 = vlaneseq
      %v5809 = vshrl.u32 %v5808, 7
      %v5810 = vsub.s32 0, %v5809
      %v5811 = vrot.slane %v5806, %v5810
      %v5817 = vunpack.c.l.b16 %v5801
      %v5818 = vunpack.c.l.b16 %v5802
      %v5819 = vunpack.c.l.b16 %v5803
      %v5820 = vunpack.c.l.b16 %v5804
      %v5821 = vpack.c.b16 %v5818, %v5817
      %v5822 = vpack.c.b16 %v5820, %v5819
      %5825 = vmatprep.subr.bf16.mxu0 0
      %5826 = vmatpush1.bf16.msra.mxu0 0
      %5827 = vmatprep.subr.bf16.mxu0 0
      %5828 = vmatpush1.bf16.msra.mxu0 0
      %5829 = vmatprep.subr.bf16.mxu0 0
      %5830 = vmatpush1.bf16.msra.mxu0 0
      %5831 = vmatprep.subr.bf16.mxu0 0
      %5832 = vmatpush1.bf16.msra.mxu0 0
      %5833 = vmatprep.subr.bf16.mxu0 0
      %5834 = vmatpush1.bf16.msra.mxu0 0
      %5835 = vmatprep.subr.bf16.mxu0 0
      %5836 = vmatpush1.bf16.msra.mxu0 0
      %5837 = vmatprep.subr.bf16.mxu0 0
      %5838 = vmatpush1.bf16.msra.mxu0 %v5822
      %5839 = vmatprep.subr.bf16.mxu0 0
      %5840 = vmatpush1.bf16.msra.mxu0 %v5821
      %5841 = vmatprep.subr.bf16.mxu0 0
      %5842 = vmatpush2.bf16.msra.mxu0 0
      %5843 = vmatprep.subr.bf16.mxu0 0
      %5844 = vmatpush2.bf16.msra.mxu0 0
      %5845 = vmatprep.subr.bf16.mxu0 0
      %5846 = vmatpush2.bf16.msra.mxu0 0
      %5847 = vmatprep.subr.bf16.mxu0 0
      %5848 = vmatpush2.bf16.msra.mxu0 0
      %5849 = vmatprep.subr.bf16.mxu0 0
      %5850 = vmatpush2.bf16.msra.mxu0 0
      %5851 = vmatprep.subr.bf16.mxu0 0
      %5852 = vmatpush2.bf16.msra.mxu0 0
      %5853 = vmatprep.subr.bf16.mxu0 0
      %5854 = vmatpush2.bf16.msra.mxu0 0
      %5855 = vmatprep.subr.bf16.mxu0 0
      %5856 = vmatpush2.bf16.msra.mxu0 0
      %5857 = vmatprep.mubr.bf16.mxu0 0
      %5858 = vmatmul.mubr.bf16.gmra.mxu0 %v729
      %v5859 = vpop.f32.mrf.mxu0
      %v5860 = vadd.f32 %v5811, %v5859
      %v5861 = vpop.f32.mrf.mxu0
      %v5862 = vpop.f32.mrf.mxu0
      %v5863 = vadd.f32 %v5811, %v5862
      %v5864 = vpop.f32.mrf.mxu0
      %5865 = vmatprep.mubr.bf16.mxu0 0
      %5866 = vmatmul.mubr.bf16.gmra.mxu0 %v732
      %v5867 = vpop.f32.mrf.mxu0
      %v5868 = vadd.f32 %v5811, %v5867
      %v5869 = vpop.f32.mrf.mxu0
      %v5870 = vpop.f32.mrf.mxu0
      %v5871 = vadd.f32 %v5811, %v5870
      %v5872 = vpop.f32.mrf.mxu0
      %5873 = vmatprep.mubr.bf16.mxu0 0
      %5874 = vmatmul.mubr.bf16.gmra.mxu0 %v735
      %v5875 = vpop.f32.mrf.mxu0
      %v5876 = vadd.f32 %v5811, %v5875
      %v5877 = vpop.f32.mrf.mxu0
      %v5878 = vpop.f32.mrf.mxu0
      %v5879 = vadd.f32 %v5811, %v5878
      %v5880 = vpop.f32.mrf.mxu0
      %5881 = vmatprep.mubr.bf16.mxu0 0
      %5882 = vmatmul.mubr.bf16.gmra.mxu0 %v738
      %v5883 = vpop.f32.mrf.mxu0
      %v5884 = vadd.f32 %v5811, %v5883
      %v5885 = vpop.f32.mrf.mxu0
      %v5886 = vpop.f32.mrf.mxu0
      %v5887 = vadd.f32 %v5811, %v5886
      %v5888 = vpop.f32.mrf.mxu0
      %5889 = vdwg.mxu0
      %v5890 = vpack.c.bf16 %v5863, %v5860
      %v5891 = vpack.c.bf16 %v5871, %v5868
      %v5892 = vpack.c.bf16 %v5879, %v5876
      %v5893 = vpack.c.bf16 %v5887, %v5884
      %v5898 = vunpack.c.l.b16 %v5890
      %v5899 = vunpack.c.h.b16 %v5890
      %v5900 = vunpack.c.l.b16 %v5891
      %v5901 = vunpack.c.h.b16 %v5891
      %v5902 = vunpack.c.l.b16 %v5892
      %v5903 = vunpack.c.h.b16 %v5892
      %v5904 = vunpack.c.l.b16 %v5893
      %v5905 = vunpack.c.h.b16 %v5893
      %v5906 = vpack.c.b16 %v5898, %v5898
      %v5907 = vpack.c.b16 %v5899, %v5899
      %v5908 = vpack.c.b16 %v5900, %v5900
      %v5909 = vpack.c.b16 %v5901, %v5901
      %v5910 = vpack.c.b16 %v5902, %v5902
      %v5911 = vpack.c.b16 %v5903, %v5903
      %v5912 = vpack.c.b16 %v5904, %v5904
      %v5913 = vpack.c.b16 %v5905, %v5905
      %s5914 = scalar_lea.vmem %s6, 96
      %v5915 = vld [vmem:[%s5914] sm:$0xf]
      %v5916 = vld [vmem:[%s5914 + $0x4] sm:$0xf]
      %v5917 = vld [vmem:[%s5914 + $0x8] sm:$0xf]
      %v5918 = vld [vmem:[%s5914 + $0xc] sm:$0xf]
      %s5919 = scalar_lea.vmem %s7, 6
      %v5920 = vld [vmem:[%s5919] sm:$0x1]
      %v5922 = vlaneseq
      %v5923 = vshrl.u32 %v5922, 7
      %v5924 = vsub.s32 0, %v5923
      %v5925 = vrot.slane %v5920, %v5924
      %v5931 = vunpack.c.l.b16 %v5915
      %v5932 = vunpack.c.l.b16 %v5916
      %v5933 = vunpack.c.l.b16 %v5917
      %v5934 = vunpack.c.l.b16 %v5918
      %v5935 = vpack.c.b16 %v5932, %v5931
      %v5936 = vpack.c.b16 %v5934, %v5933
      %5939 = vmatprep.subr.bf16.mxu0 0
      %5940 = vmatpush1.bf16.msra.mxu0 0
      %5941 = vmatprep.subr.bf16.mxu0 0
      %5942 = vmatpush1.bf16.msra.mxu0 0
      %5943 = vmatprep.subr.bf16.mxu0 0
      %5944 = vmatpush1.bf16.msra.mxu0 0
      %5945 = vmatprep.subr.bf16.mxu0 0
      %5946 = vmatpush1.bf16.msra.mxu0 0
      %5947 = vmatprep.subr.bf16.mxu0 0
      %5948 = vmatpush1.bf16.msra.mxu0 0
      %5949 = vmatprep.subr.bf16.mxu0 0
      %5950 = vmatpush1.bf16.msra.mxu0 0
      %5951 = vmatprep.subr.bf16.mxu0 0
      %5952 = vmatpush1.bf16.msra.mxu0 %v5936
      %5953 = vmatprep.subr.bf16.mxu0 0
      %5954 = vmatpush1.bf16.msra.mxu0 %v5935
      %5955 = vmatprep.subr.bf16.mxu0 0
      %5956 = vmatpush2.bf16.msra.mxu0 0
      %5957 = vmatprep.subr.bf16.mxu0 0
      %5958 = vmatpush2.bf16.msra.mxu0 0
      %5959 = vmatprep.subr.bf16.mxu0 0
      %5960 = vmatpush2.bf16.msra.mxu0 0
      %5961 = vmatprep.subr.bf16.mxu0 0
      %5962 = vmatpush2.bf16.msra.mxu0 0
      %5963 = vmatprep.subr.bf16.mxu0 0
      %5964 = vmatpush2.bf16.msra.mxu0 0
      %5965 = vmatprep.subr.bf16.mxu0 0
      %5966 = vmatpush2.bf16.msra.mxu0 0
      %5967 = vmatprep.subr.bf16.mxu0 0
      %5968 = vmatpush2.bf16.msra.mxu0 0
      %5969 = vmatprep.subr.bf16.mxu0 0
      %5970 = vmatpush2.bf16.msra.mxu0 0
      %5971 = vmatprep.mubr.bf16.mxu0 0
      %5972 = vmatmul.mubr.bf16.gmra.mxu0 %v855
      %v5973 = vpop.f32.mrf.mxu0
      %v5974 = vadd.f32 %v5925, %v5973
      %v5975 = vpop.f32.mrf.mxu0
      %v5976 = vpop.f32.mrf.mxu0
      %v5977 = vadd.f32 %v5925, %v5976
      %v5978 = vpop.f32.mrf.mxu0
      %5979 = vmatprep.mubr.bf16.mxu0 0
      %5980 = vmatmul.mubr.bf16.gmra.mxu0 %v858
      %v5981 = vpop.f32.mrf.mxu0
      %v5982 = vadd.f32 %v5925, %v5981
      %v5983 = vpop.f32.mrf.mxu0
      %v5984 = vpop.f32.mrf.mxu0
      %v5985 = vadd.f32 %v5925, %v5984
      %v5986 = vpop.f32.mrf.mxu0
      %5987 = vmatprep.mubr.bf16.mxu0 0
      %5988 = vmatmul.mubr.bf16.gmra.mxu0 %v861
      %v5989 = vpop.f32.mrf.mxu0
      %v5990 = vadd.f32 %v5925, %v5989
      %v5991 = vpop.f32.mrf.mxu0
      %v5992 = vpop.f32.mrf.mxu0
      %v5993 = vadd.f32 %v5925, %v5992
      %v5994 = vpop.f32.mrf.mxu0
      %5995 = vmatprep.mubr.bf16.mxu0 0
      %5996 = vmatmul.mubr.bf16.gmra.mxu0 %v864
      %v5997 = vpop.f32.mrf.mxu0
      %v5998 = vadd.f32 %v5925, %v5997
      %v5999 = vpop.f32.mrf.mxu0
      %v6000 = vpop.f32.mrf.mxu0
      %v6001 = vadd.f32 %v5925, %v6000
      %v6002 = vpop.f32.mrf.mxu0
      %6003 = vdwg.mxu0
      %v6004 = vpack.c.bf16 %v5977, %v5974
      %v6005 = vpack.c.bf16 %v5985, %v5982
      %v6006 = vpack.c.bf16 %v5993, %v5990
      %v6007 = vpack.c.bf16 %v6001, %v5998
      %v6012 = vunpack.c.l.b16 %v6004
      %v6013 = vunpack.c.h.b16 %v6004
      %v6014 = vunpack.c.l.b16 %v6005
      %v6015 = vunpack.c.h.b16 %v6005
      %v6016 = vunpack.c.l.b16 %v6006
      %v6017 = vunpack.c.h.b16 %v6006
      %v6018 = vunpack.c.l.b16 %v6007
      %v6019 = vunpack.c.h.b16 %v6007
      %v6020 = vpack.c.b16 %v6012, %v6012
      %v6021 = vpack.c.b16 %v6013, %v6013
      %v6022 = vpack.c.b16 %v6014, %v6014
      %v6023 = vpack.c.b16 %v6015, %v6015
      %v6024 = vpack.c.b16 %v6016, %v6016
      %v6025 = vpack.c.b16 %v6017, %v6017
      %v6026 = vpack.c.b16 %v6018, %v6018
      %v6027 = vpack.c.b16 %v6019, %v6019
      %s6028 = scalar_lea.vmem %s6, 160
      %v6029 = vld [vmem:[%s6028] sm:$0xf]
      %v6030 = vld [vmem:[%s6028 + $0x4] sm:$0xf]
      %v6031 = vld [vmem:[%s6028 + $0x8] sm:$0xf]
      %v6032 = vld [vmem:[%s6028 + $0xc] sm:$0xf]
      %s6033 = scalar_lea.vmem %s7, 10
      %v6034 = vld [vmem:[%s6033] sm:$0x1]
      %v6036 = vlaneseq
      %v6037 = vshrl.u32 %v6036, 7
      %v6038 = vsub.s32 0, %v6037
      %v6039 = vrot.slane %v6034, %v6038
      %v6045 = vunpack.c.l.b16 %v6029
      %v6046 = vunpack.c.l.b16 %v6030
      %v6047 = vunpack.c.l.b16 %v6031
      %v6048 = vunpack.c.l.b16 %v6032
      %v6049 = vpack.c.b16 %v6046, %v6045
      %v6050 = vpack.c.b16 %v6048, %v6047
      %6053 = vmatprep.subr.bf16.mxu0 0
      %6054 = vmatpush1.bf16.msra.mxu0 0
      %6055 = vmatprep.subr.bf16.mxu0 0
      %6056 = vmatpush1.bf16.msra.mxu0 0
      %6057 = vmatprep.subr.bf16.mxu0 0
      %6058 = vmatpush1.bf16.msra.mxu0 0
      %6059 = vmatprep.subr.bf16.mxu0 0
      %6060 = vmatpush1.bf16.msra.mxu0 0
      %6061 = vmatprep.subr.bf16.mxu0 0
      %6062 = vmatpush1.bf16.msra.mxu0 0
      %6063 = vmatprep.subr.bf16.mxu0 0
      %6064 = vmatpush1.bf16.msra.mxu0 0
      %6065 = vmatprep.subr.bf16.mxu0 0
      %6066 = vmatpush1.bf16.msra.mxu0 %v6050
      %6067 = vmatprep.subr.bf16.mxu0 0
      %6068 = vmatpush1.bf16.msra.mxu0 %v6049
      %6069 = vmatprep.subr.bf16.mxu0 0
      %6070 = vmatpush2.bf16.msra.mxu0 0
      %6071 = vmatprep.subr.bf16.mxu0 0
      %6072 = vmatpush2.bf16.msra.mxu0 0
      %6073 = vmatprep.subr.bf16.mxu0 0
      %6074 = vmatpush2.bf16.msra.mxu0 0
      %6075 = vmatprep.subr.bf16.mxu0 0
      %6076 = vmatpush2.bf16.msra.mxu0 0
      %6077 = vmatprep.subr.bf16.mxu0 0
      %6078 = vmatpush2.bf16.msra.mxu0 0
      %6079 = vmatprep.subr.bf16.mxu0 0
      %6080 = vmatpush2.bf16.msra.mxu0 0
      %6081 = vmatprep.subr.bf16.mxu0 0
      %6082 = vmatpush2.bf16.msra.mxu0 0
      %6083 = vmatprep.subr.bf16.mxu0 0
      %6084 = vmatpush2.bf16.msra.mxu0 0
      %6085 = vmatprep.mubr.bf16.mxu0 0
      %6086 = vmatmul.mubr.bf16.gmra.mxu0 %v855
      %v6087 = vpop.f32.mrf.mxu0
      %v6088 = vadd.f32 %v6039, %v6087
      %v6089 = vpop.f32.mrf.mxu0
      %v6090 = vpop.f32.mrf.mxu0
      %v6091 = vadd.f32 %v6039, %v6090
      %v6092 = vpop.f32.mrf.mxu0
      %6093 = vmatprep.mubr.bf16.mxu0 0
      %6094 = vmatmul.mubr.bf16.gmra.mxu0 %v858
      %v6095 = vpop.f32.mrf.mxu0
      %v6096 = vadd.f32 %v6039, %v6095
      %v6097 = vpop.f32.mrf.mxu0
      %v6098 = vpop.f32.mrf.mxu0
      %v6099 = vadd.f32 %v6039, %v6098
      %v6100 = vpop.f32.mrf.mxu0
      %6101 = vmatprep.mubr.bf16.mxu0 0
      %6102 = vmatmul.mubr.bf16.gmra.mxu0 %v861
      %v6103 = vpop.f32.mrf.mxu0
      %v6104 = vadd.f32 %v6039, %v6103
      %v6105 = vpop.f32.mrf.mxu0
      %v6106 = vpop.f32.mrf.mxu0
      %v6107 = vadd.f32 %v6039, %v6106
      %v6108 = vpop.f32.mrf.mxu0
      %6109 = vmatprep.mubr.bf16.mxu0 0
      %6110 = vmatmul.mubr.bf16.gmra.mxu0 %v864
      %v6111 = vpop.f32.mrf.mxu0
      %v6112 = vadd.f32 %v6039, %v6111
      %v6113 = vpop.f32.mrf.mxu0
      %v6114 = vpop.f32.mrf.mxu0
      %v6115 = vadd.f32 %v6039, %v6114
      %v6116 = vpop.f32.mrf.mxu0
      %6117 = vdwg.mxu0
      %v6118 = vpack.c.bf16 %v6091, %v6088
      %v6119 = vpack.c.bf16 %v6099, %v6096
      %v6120 = vpack.c.bf16 %v6107, %v6104
      %v6121 = vpack.c.bf16 %v6115, %v6112
      %v6126 = vunpack.c.l.b16 %v6118
      %v6127 = vunpack.c.h.b16 %v6118
      %v6128 = vunpack.c.l.b16 %v6119
      %v6129 = vunpack.c.h.b16 %v6119
      %v6130 = vunpack.c.l.b16 %v6120
      %v6131 = vunpack.c.h.b16 %v6120
      %v6132 = vunpack.c.l.b16 %v6121
      %v6133 = vunpack.c.h.b16 %v6121
      %v6134 = vpack.c.b16 %v6126, %v6126
      %v6135 = vpack.c.b16 %v6127, %v6127
      %v6136 = vpack.c.b16 %v6128, %v6128
      %v6137 = vpack.c.b16 %v6129, %v6129
      %v6138 = vpack.c.b16 %v6130, %v6130
      %v6139 = vpack.c.b16 %v6131, %v6131
      %v6140 = vpack.c.b16 %v6132, %v6132
      %v6141 = vpack.c.b16 %v6133, %v6133
      %v6143 = vsel %vm1069, %v5906, 0
      %v6146 = vsel %vm1069, %v6020, 0
      %6148 = vmatprep.subr.bf16.mxu0 0
      %6149 = vmatpush1.bf16.xpose.msra.mxu0 0
      %6150 = vmatprep.subr.bf16.mxu0 0
      %6151 = vmatpush1.bf16.xpose.msra.mxu0 0
      %6152 = vmatprep.subr.bf16.mxu0 0
      %6153 = vmatpush1.bf16.xpose.msra.mxu0 0
      %6154 = vmatprep.subr.bf16.mxu0 0
      %6155 = vmatpush1.bf16.xpose.msra.mxu0 0
      %6156 = vmatprep.subr.bf16.mxu0 0
      %6157 = vmatpush1.bf16.xpose.msra.mxu0 0
      %6158 = vmatprep.subr.bf16.mxu0 0
      %6159 = vmatpush1.bf16.xpose.msra.mxu0 0
      %6160 = vmatprep.subr.bf16.mxu0 0
      %6161 = vmatpush1.bf16.xpose.msra.mxu0 0
      %6162 = vmatprep.subr.bf16.mxu0 0
      %6163 = vmatpush1.bf16.xpose.msra.mxu0 %v6146
      %6164 = vmatprep.subr.bf16.mxu0 0
      %6165 = vmatpush2.bf16.xpose.msra.mxu0 0
      %6166 = vmatprep.subr.bf16.mxu0 0
      %6167 = vmatpush2.bf16.xpose.msra.mxu0 0
      %6168 = vmatprep.subr.bf16.mxu0 0
      %6169 = vmatpush2.bf16.xpose.msra.mxu0 0
      %6170 = vmatprep.subr.bf16.mxu0 0
      %6171 = vmatpush2.bf16.xpose.msra.mxu0 0
      %6172 = vmatprep.subr.bf16.mxu0 0
      %6173 = vmatpush2.bf16.xpose.msra.mxu0 0
      %6174 = vmatprep.subr.bf16.mxu0 0
      %6175 = vmatpush2.bf16.xpose.msra.mxu0 0
      %6176 = vmatprep.subr.bf16.mxu0 0
      %6177 = vmatpush2.bf16.xpose.msra.mxu0 0
      %6178 = vmatprep.subr.bf16.mxu0 0
      %6179 = vmatpush2.bf16.xpose.msra.mxu0 0
      %6180 = vmatprep.mubr.bf16.mxu0 0
      %6181 = vmatmul.mubr.bf16.gmra.mxu0 %v6143
      %v6182 = vpop.f32.mrf.mxu0
      %v6183 = vadd.f32 %v431, %v6182
      %v6184 = vpop.f32.mrf.mxu0
      %v6185 = vpop.f32.mrf.mxu0
      %v6186 = vpop.f32.mrf.mxu0
      %6187 = vdwg.mxu0
      %v6189 = vsel %vm1069, %v5907, 0
      %v6192 = vsel %vm1069, %v6021, 0
      %6194 = vmatprep.subr.bf16.mxu0 0
      %6195 = vmatpush1.bf16.xpose.msra.mxu0 0
      %6196 = vmatprep.subr.bf16.mxu0 0
      %6197 = vmatpush1.bf16.xpose.msra.mxu0 0
      %6198 = vmatprep.subr.bf16.mxu0 0
      %6199 = vmatpush1.bf16.xpose.msra.mxu0 0
      %6200 = vmatprep.subr.bf16.mxu0 0
      %6201 = vmatpush1.bf16.xpose.msra.mxu0 0
      %6202 = vmatprep.subr.bf16.mxu0 0
      %6203 = vmatpush1.bf16.xpose.msra.mxu0 0
      %6204 = vmatprep.subr.bf16.mxu0 0
      %6205 = vmatpush1.bf16.xpose.msra.mxu0 0
      %6206 = vmatprep.subr.bf16.mxu0 0
      %6207 = vmatpush1.bf16.xpose.msra.mxu0 0
      %6208 = vmatprep.subr.bf16.mxu0 0
      %6209 = vmatpush1.bf16.xpose.msra.mxu0 %v6192
      %6210 = vmatprep.subr.bf16.mxu0 0
      %6211 = vmatpush2.bf16.xpose.msra.mxu0 0
      %6212 = vmatprep.subr.bf16.mxu0 0
      %6213 = vmatpush2.bf16.xpose.msra.mxu0 0
      %6214 = vmatprep.subr.bf16.mxu0 0
      %6215 = vmatpush2.bf16.xpose.msra.mxu0 0
      %6216 = vmatprep.subr.bf16.mxu0 0
      %6217 = vmatpush2.bf16.xpose.msra.mxu0 0
      %6218 = vmatprep.subr.bf16.mxu0 0
      %6219 = vmatpush2.bf16.xpose.msra.mxu0 0
      %6220 = vmatprep.subr.bf16.mxu0 0
      %6221 = vmatpush2.bf16.xpose.msra.mxu0 0
      %6222 = vmatprep.subr.bf16.mxu0 0
      %6223 = vmatpush2.bf16.xpose.msra.mxu0 0
      %6224 = vmatprep.subr.bf16.mxu0 0
      %6225 = vmatpush2.bf16.xpose.msra.mxu0 0
      %6226 = vmatprep.mubr.bf16.mxu0 0
      %6227 = vmatmul.mubr.bf16.gmra.mxu0 %v6189
      %v6228 = vpop.f32.mrf.mxu0
      %v6229 = vadd.f32 %v431, %v6228
      %v6230 = vpop.f32.mrf.mxu0
      %v6231 = vpop.f32.mrf.mxu0
      %v6232 = vpop.f32.mrf.mxu0
      %6233 = vdwg.mxu0
      %v6235 = vsel %vm1069, %v5908, 0
      %v6238 = vsel %vm1069, %v6022, 0
      %6240 = vmatprep.subr.bf16.mxu0 0
      %6241 = vmatpush1.bf16.xpose.msra.mxu0 0
      %6242 = vmatprep.subr.bf16.mxu0 0
      %6243 = vmatpush1.bf16.xpose.msra.mxu0 0
      %6244 = vmatprep.subr.bf16.mxu0 0
      %6245 = vmatpush1.bf16.xpose.msra.mxu0 0
      %6246 = vmatprep.subr.bf16.mxu0 0
      %6247 = vmatpush1.bf16.xpose.msra.mxu0 0
      %6248 = vmatprep.subr.bf16.mxu0 0
      %6249 = vmatpush1.bf16.xpose.msra.mxu0 0
      %6250 = vmatprep.subr.bf16.mxu0 0
      %6251 = vmatpush1.bf16.xpose.msra.mxu0 0
      %6252 = vmatprep.subr.bf16.mxu0 0
      %6253 = vmatpush1.bf16.xpose.msra.mxu0 0
      %6254 = vmatprep.subr.bf16.mxu0 0
      %6255 = vmatpush1.bf16.xpose.msra.mxu0 %v6238
      %6256 = vmatprep.subr.bf16.mxu0 0
      %6257 = vmatpush2.bf16.xpose.msra.mxu0 0
      %6258 = vmatprep.subr.bf16.mxu0 0
      %6259 = vmatpush2.bf16.xpose.msra.mxu0 0
      %6260 = vmatprep.subr.bf16.mxu0 0
      %6261 = vmatpush2.bf16.xpose.msra.mxu0 0
      %6262 = vmatprep.subr.bf16.mxu0 0
      %6263 = vmatpush2.bf16.xpose.msra.mxu0 0
      %6264 = vmatprep.subr.bf16.mxu0 0
      %6265 = vmatpush2.bf16.xpose.msra.mxu0 0
      %6266 = vmatprep.subr.bf16.mxu0 0
      %6267 = vmatpush2.bf16.xpose.msra.mxu0 0
      %6268 = vmatprep.subr.bf16.mxu0 0
      %6269 = vmatpush2.bf16.xpose.msra.mxu0 0
      %6270 = vmatprep.subr.bf16.mxu0 0
      %6271 = vmatpush2.bf16.xpose.msra.mxu0 0
      %6272 = vmatprep.mubr.bf16.mxu0 0
      %6273 = vmatmul.mubr.bf16.gmra.mxu0 %v6235
      %v6274 = vpop.f32.mrf.mxu0
      %v6275 = vadd.f32 %v431, %v6274
      %v6276 = vpop.f32.mrf.mxu0
      %v6277 = vpop.f32.mrf.mxu0
      %v6278 = vpop.f32.mrf.mxu0
      %6279 = vdwg.mxu0
      %v6281 = vsel %vm1069, %v5909, 0
      %v6284 = vsel %vm1069, %v6023, 0
      %6286 = vmatprep.subr.bf16.mxu0 0
      %6287 = vmatpush1.bf16.xpose.msra.mxu0 0
      %6288 = vmatprep.subr.bf16.mxu0 0
      %6289 = vmatpush1.bf16.xpose.msra.mxu0 0
      %6290 = vmatprep.subr.bf16.mxu0 0
      %6291 = vmatpush1.bf16.xpose.msra.mxu0 0
      %6292 = vmatprep.subr.bf16.mxu0 0
      %6293 = vmatpush1.bf16.xpose.msra.mxu0 0
      %6294 = vmatprep.subr.bf16.mxu0 0
      %6295 = vmatpush1.bf16.xpose.msra.mxu0 0
      %6296 = vmatprep.subr.bf16.mxu0 0
      %6297 = vmatpush1.bf16.xpose.msra.mxu0 0
      %6298 = vmatprep.subr.bf16.mxu0 0
      %6299 = vmatpush1.bf16.xpose.msra.mxu0 0
      %6300 = vmatprep.subr.bf16.mxu0 0
      %6301 = vmatpush1.bf16.xpose.msra.mxu0 %v6284
      %6302 = vmatprep.subr.bf16.mxu0 0
      %6303 = vmatpush2.bf16.xpose.msra.mxu0 0
      %6304 = vmatprep.subr.bf16.mxu0 0
      %6305 = vmatpush2.bf16.xpose.msra.mxu0 0
      %6306 = vmatprep.subr.bf16.mxu0 0
      %6307 = vmatpush2.bf16.xpose.msra.mxu0 0
      %6308 = vmatprep.subr.bf16.mxu0 0
      %6309 = vmatpush2.bf16.xpose.msra.mxu0 0
      %6310 = vmatprep.subr.bf16.mxu0 0
      %6311 = vmatpush2.bf16.xpose.msra.mxu0 0
      %6312 = vmatprep.subr.bf16.mxu0 0
      %6313 = vmatpush2.bf16.xpose.msra.mxu0 0
      %6314 = vmatprep.subr.bf16.mxu0 0
      %6315 = vmatpush2.bf16.xpose.msra.mxu0 0
      %6316 = vmatprep.subr.bf16.mxu0 0
      %6317 = vmatpush2.bf16.xpose.msra.mxu0 0
      %6318 = vmatprep.mubr.bf16.mxu0 0
      %6319 = vmatmul.mubr.bf16.gmra.mxu0 %v6281
      %v6320 = vpop.f32.mrf.mxu0
      %v6321 = vadd.f32 %v431, %v6320
      %v6322 = vpop.f32.mrf.mxu0
      %v6323 = vpop.f32.mrf.mxu0
      %v6324 = vpop.f32.mrf.mxu0
      %6325 = vdwg.mxu0
      %v6327 = vsel %vm1069, %v5910, 0
      %v6330 = vsel %vm1069, %v6024, 0
      %6332 = vmatprep.subr.bf16.mxu0 0
      %6333 = vmatpush1.bf16.xpose.msra.mxu0 0
      %6334 = vmatprep.subr.bf16.mxu0 0
      %6335 = vmatpush1.bf16.xpose.msra.mxu0 0
      %6336 = vmatprep.subr.bf16.mxu0 0
      %6337 = vmatpush1.bf16.xpose.msra.mxu0 0
      %6338 = vmatprep.subr.bf16.mxu0 0
      %6339 = vmatpush1.bf16.xpose.msra.mxu0 0
      %6340 = vmatprep.subr.bf16.mxu0 0
      %6341 = vmatpush1.bf16.xpose.msra.mxu0 0
      %6342 = vmatprep.subr.bf16.mxu0 0
      %6343 = vmatpush1.bf16.xpose.msra.mxu0 0
      %6344 = vmatprep.subr.bf16.mxu0 0
      %6345 = vmatpush1.bf16.xpose.msra.mxu0 0
      %6346 = vmatprep.subr.bf16.mxu0 0
      %6347 = vmatpush1.bf16.xpose.msra.mxu0 %v6330
      %6348 = vmatprep.subr.bf16.mxu0 0
      %6349 = vmatpush2.bf16.xpose.msra.mxu0 0
      %6350 = vmatprep.subr.bf16.mxu0 0
      %6351 = vmatpush2.bf16.xpose.msra.mxu0 0
      %6352 = vmatprep.subr.bf16.mxu0 0
      %6353 = vmatpush2.bf16.xpose.msra.mxu0 0
      %6354 = vmatprep.subr.bf16.mxu0 0
      %6355 = vmatpush2.bf16.xpose.msra.mxu0 0
      %6356 = vmatprep.subr.bf16.mxu0 0
      %6357 = vmatpush2.bf16.xpose.msra.mxu0 0
      %6358 = vmatprep.subr.bf16.mxu0 0
      %6359 = vmatpush2.bf16.xpose.msra.mxu0 0
      %6360 = vmatprep.subr.bf16.mxu0 0
      %6361 = vmatpush2.bf16.xpose.msra.mxu0 0
      %6362 = vmatprep.subr.bf16.mxu0 0
      %6363 = vmatpush2.bf16.xpose.msra.mxu0 0
      %6364 = vmatprep.mubr.bf16.mxu0 0
      %6365 = vmatmul.mubr.bf16.gmra.mxu0 %v6327
      %v6366 = vpop.f32.mrf.mxu0
      %v6367 = vadd.f32 %v431, %v6366
      %v6368 = vpop.f32.mrf.mxu0
      %v6369 = vpop.f32.mrf.mxu0
      %v6370 = vpop.f32.mrf.mxu0
      %6371 = vdwg.mxu0
      %v6373 = vsel %vm1069, %v5911, 0
      %v6376 = vsel %vm1069, %v6025, 0
      %6378 = vmatprep.subr.bf16.mxu0 0
      %6379 = vmatpush1.bf16.xpose.msra.mxu0 0
      %6380 = vmatprep.subr.bf16.mxu0 0
      %6381 = vmatpush1.bf16.xpose.msra.mxu0 0
      %6382 = vmatprep.subr.bf16.mxu0 0
      %6383 = vmatpush1.bf16.xpose.msra.mxu0 0
      %6384 = vmatprep.subr.bf16.mxu0 0
      %6385 = vmatpush1.bf16.xpose.msra.mxu0 0
      %6386 = vmatprep.subr.bf16.mxu0 0
      %6387 = vmatpush1.bf16.xpose.msra.mxu0 0
      %6388 = vmatprep.subr.bf16.mxu0 0
      %6389 = vmatpush1.bf16.xpose.msra.mxu0 0
      %6390 = vmatprep.subr.bf16.mxu0 0
      %6391 = vmatpush1.bf16.xpose.msra.mxu0 0
      %6392 = vmatprep.subr.bf16.mxu0 0
      %6393 = vmatpush1.bf16.xpose.msra.mxu0 %v6376
      %6394 = vmatprep.subr.bf16.mxu0 0
      %6395 = vmatpush2.bf16.xpose.msra.mxu0 0
      %6396 = vmatprep.subr.bf16.mxu0 0
      %6397 = vmatpush2.bf16.xpose.msra.mxu0 0
      %6398 = vmatprep.subr.bf16.mxu0 0
      %6399 = vmatpush2.bf16.xpose.msra.mxu0 0
      %6400 = vmatprep.subr.bf16.mxu0 0
      %6401 = vmatpush2.bf16.xpose.msra.mxu0 0
      %6402 = vmatprep.subr.bf16.mxu0 0
      %6403 = vmatpush2.bf16.xpose.msra.mxu0 0
      %6404 = vmatprep.subr.bf16.mxu0 0
      %6405 = vmatpush2.bf16.xpose.msra.mxu0 0
      %6406 = vmatprep.subr.bf16.mxu0 0
      %6407 = vmatpush2.bf16.xpose.msra.mxu0 0
      %6408 = vmatprep.subr.bf16.mxu0 0
      %6409 = vmatpush2.bf16.xpose.msra.mxu0 0
      %6410 = vmatprep.mubr.bf16.mxu0 0
      %6411 = vmatmul.mubr.bf16.gmra.mxu0 %v6373
      %v6412 = vpop.f32.mrf.mxu0
      %v6413 = vadd.f32 %v431, %v6412
      %v6414 = vpop.f32.mrf.mxu0
      %v6415 = vpop.f32.mrf.mxu0
      %v6416 = vpop.f32.mrf.mxu0
      %6417 = vdwg.mxu0
      %v6419 = vsel %vm1069, %v5912, 0
      %v6422 = vsel %vm1069, %v6026, 0
      %6424 = vmatprep.subr.bf16.mxu0 0
      %6425 = vmatpush1.bf16.xpose.msra.mxu0 0
      %6426 = vmatprep.subr.bf16.mxu0 0
      %6427 = vmatpush1.bf16.xpose.msra.mxu0 0
      %6428 = vmatprep.subr.bf16.mxu0 0
      %6429 = vmatpush1.bf16.xpose.msra.mxu0 0
      %6430 = vmatprep.subr.bf16.mxu0 0
      %6431 = vmatpush1.bf16.xpose.msra.mxu0 0
      %6432 = vmatprep.subr.bf16.mxu0 0
      %6433 = vmatpush1.bf16.xpose.msra.mxu0 0
      %6434 = vmatprep.subr.bf16.mxu0 0
      %6435 = vmatpush1.bf16.xpose.msra.mxu0 0
      %6436 = vmatprep.subr.bf16.mxu0 0
      %6437 = vmatpush1.bf16.xpose.msra.mxu0 0
      %6438 = vmatprep.subr.bf16.mxu0 0
      %6439 = vmatpush1.bf16.xpose.msra.mxu0 %v6422
      %6440 = vmatprep.subr.bf16.mxu0 0
      %6441 = vmatpush2.bf16.xpose.msra.mxu0 0
      %6442 = vmatprep.subr.bf16.mxu0 0
      %6443 = vmatpush2.bf16.xpose.msra.mxu0 0
      %6444 = vmatprep.subr.bf16.mxu0 0
      %6445 = vmatpush2.bf16.xpose.msra.mxu0 0
      %6446 = vmatprep.subr.bf16.mxu0 0
      %6447 = vmatpush2.bf16.xpose.msra.mxu0 0
      %6448 = vmatprep.subr.bf16.mxu0 0
      %6449 = vmatpush2.bf16.xpose.msra.mxu0 0
      %6450 = vmatprep.subr.bf16.mxu0 0
      %6451 = vmatpush2.bf16.xpose.msra.mxu0 0
      %6452 = vmatprep.subr.bf16.mxu0 0
      %6453 = vmatpush2.bf16.xpose.msra.mxu0 0
      %6454 = vmatprep.subr.bf16.mxu0 0
      %6455 = vmatpush2.bf16.xpose.msra.mxu0 0
      %6456 = vmatprep.mubr.bf16.mxu0 0
      %6457 = vmatmul.mubr.bf16.gmra.mxu0 %v6419
      %v6458 = vpop.f32.mrf.mxu0
      %v6459 = vadd.f32 %v431, %v6458
      %v6460 = vpop.f32.mrf.mxu0
      %v6461 = vpop.f32.mrf.mxu0
      %v6462 = vpop.f32.mrf.mxu0
      %6463 = vdwg.mxu0
      %v6465 = vsel %vm1069, %v5913, 0
      %v6468 = vsel %vm1069, %v6027, 0
      %6470 = vmatprep.subr.bf16.mxu0 0
      %6471 = vmatpush1.bf16.xpose.msra.mxu0 0
      %6472 = vmatprep.subr.bf16.mxu0 0
      %6473 = vmatpush1.bf16.xpose.msra.mxu0 0
      %6474 = vmatprep.subr.bf16.mxu0 0
      %6475 = vmatpush1.bf16.xpose.msra.mxu0 0
      %6476 = vmatprep.subr.bf16.mxu0 0
      %6477 = vmatpush1.bf16.xpose.msra.mxu0 0
      %6478 = vmatprep.subr.bf16.mxu0 0
      %6479 = vmatpush1.bf16.xpose.msra.mxu0 0
      %6480 = vmatprep.subr.bf16.mxu0 0
      %6481 = vmatpush1.bf16.xpose.msra.mxu0 0
      %6482 = vmatprep.subr.bf16.mxu0 0
      %6483 = vmatpush1.bf16.xpose.msra.mxu0 0
      %6484 = vmatprep.subr.bf16.mxu0 0
      %6485 = vmatpush1.bf16.xpose.msra.mxu0 %v6468
      %6486 = vmatprep.subr.bf16.mxu0 0
      %6487 = vmatpush2.bf16.xpose.msra.mxu0 0
      %6488 = vmatprep.subr.bf16.mxu0 0
      %6489 = vmatpush2.bf16.xpose.msra.mxu0 0
      %6490 = vmatprep.subr.bf16.mxu0 0
      %6491 = vmatpush2.bf16.xpose.msra.mxu0 0
      %6492 = vmatprep.subr.bf16.mxu0 0
      %6493 = vmatpush2.bf16.xpose.msra.mxu0 0
      %6494 = vmatprep.subr.bf16.mxu0 0
      %6495 = vmatpush2.bf16.xpose.msra.mxu0 0
      %6496 = vmatprep.subr.bf16.mxu0 0
      %6497 = vmatpush2.bf16.xpose.msra.mxu0 0
      %6498 = vmatprep.subr.bf16.mxu0 0
      %6499 = vmatpush2.bf16.xpose.msra.mxu0 0
      %6500 = vmatprep.subr.bf16.mxu0 0
      %6501 = vmatpush2.bf16.xpose.msra.mxu0 0
      %6502 = vmatprep.mubr.bf16.mxu0 0
      %6503 = vmatmul.mubr.bf16.gmra.mxu0 %v6465
      %v6504 = vpop.f32.mrf.mxu0
      %v6505 = vadd.f32 %v431, %v6504
      %v6506 = vpop.f32.mrf.mxu0
      %v6507 = vpop.f32.mrf.mxu0
      %v6508 = vpop.f32.mrf.mxu0
      %6509 = vdwg.mxu0
      %v6510 = vsel %vm1069, %v6183, -inf
      %6511 = vmax.xlane.f32.xlu0 %v6510
      %v6512 = vpop.xlane.xlu0 %6511
      %v6513 = vsel %vm1069, %v6229, -inf
      %6514 = vmax.xlane.f32.xlu0 %v6513
      %v6515 = vpop.xlane.xlu0 %6514
      %v6516 = vsel %vm1069, %v6275, -inf
      %6517 = vmax.xlane.f32.xlu0 %v6516
      %v6518 = vpop.xlane.xlu0 %6517
      %v6519 = vsel %vm1069, %v6321, -inf
      %6520 = vmax.xlane.f32.xlu0 %v6519
      %v6521 = vpop.xlane.xlu0 %6520
      %v6522 = vsel %vm1069, %v6367, -inf
      %6523 = vmax.xlane.f32.xlu0 %v6522
      %v6524 = vpop.xlane.xlu0 %6523
      %v6525 = vsel %vm1069, %v6413, -inf
      %6526 = vmax.xlane.f32.xlu0 %v6525
      %v6527 = vpop.xlane.xlu0 %6526
      %v6528 = vsel %vm1069, %v6459, -inf
      %6529 = vmax.xlane.f32.xlu0 %v6528
      %v6530 = vpop.xlane.xlu0 %6529
      %v6531 = vsel %vm1069, %v6505, -inf
      %6532 = vmax.xlane.f32.xlu0 %v6531
      %v6533 = vpop.xlane.xlu0 %6532
      %v6534 = vsub.f32 %v6183, %v6512
      %v6535 = vsub.f32 %v6229, %v6515
      %v6536 = vsub.f32 %v6275, %v6518
      %v6537 = vsub.f32 %v6321, %v6521
      %v6538 = vsub.f32 %v6367, %v6524
      %v6539 = vsub.f32 %v6413, %v6527
      %v6540 = vsub.f32 %v6459, %v6530
      %v6541 = vsub.f32 %v6505, %v6533
      %v6542 = vmul.f32 %v6534, 1.442695
      %v6543 = vpow.pop %v6542
      %v6544 = vmul.f32 %v6535, 1.442695
      %v6545 = vpow.pop %v6544
      %v6546 = vmul.f32 %v6536, 1.442695
      %v6547 = vpow.pop %v6546
      %v6548 = vmul.f32 %v6537, 1.442695
      %v6549 = vpow.pop %v6548
      %v6550 = vmul.f32 %v6538, 1.442695
      %v6551 = vpow.pop %v6550
      %v6552 = vmul.f32 %v6539, 1.442695
      %v6553 = vpow.pop %v6552
      %v6554 = vmul.f32 %v6540, 1.442695
      %v6555 = vpow.pop %v6554
      %v6556 = vmul.f32 %v6541, 1.442695
      %v6557 = vpow.pop %v6556
      %v6558 = vsel %vm1069, %v6543, 0.0
      %6559 = vadd.xlane.f32.xlu0 %v6558
      %v6560 = vpop.xlane.xlu0 %6559
      %v6561 = vsel %vm1069, %v6545, 0.0
      %6562 = vadd.xlane.f32.xlu0 %v6561
      %v6563 = vpop.xlane.xlu0 %6562
      %v6564 = vsel %vm1069, %v6547, 0.0
      %6565 = vadd.xlane.f32.xlu0 %v6564
      %v6566 = vpop.xlane.xlu0 %6565
      %v6567 = vsel %vm1069, %v6549, 0.0
      %6568 = vadd.xlane.f32.xlu0 %v6567
      %v6569 = vpop.xlane.xlu0 %6568
      %v6570 = vsel %vm1069, %v6551, 0.0
      %6571 = vadd.xlane.f32.xlu0 %v6570
      %v6572 = vpop.xlane.xlu0 %6571
      %v6573 = vsel %vm1069, %v6553, 0.0
      %6574 = vadd.xlane.f32.xlu0 %v6573
      %v6575 = vpop.xlane.xlu0 %6574
      %v6576 = vsel %vm1069, %v6555, 0.0
      %6577 = vadd.xlane.f32.xlu0 %v6576
      %v6578 = vpop.xlane.xlu0 %6577
      %v6579 = vsel %vm1069, %v6557, 0.0
      %6580 = vadd.xlane.f32.xlu0 %v6579
      %v6581 = vpop.xlane.xlu0 %6580
      %v6582 = vrcp.pop %v6560
      %v6583 = vrcp.pop %v6563
      %v6584 = vrcp.pop %v6566
      %v6585 = vrcp.pop %v6569
      %v6586 = vrcp.pop %v6572
      %v6587 = vrcp.pop %v6575
      %v6588 = vrcp.pop %v6578
      %v6589 = vrcp.pop %v6581
      %v6590 = vmul.f32 %v6543, %v6582
      %v6591 = vmul.f32 %v6545, %v6583
      %v6592 = vmul.f32 %v6547, %v6584
      %v6593 = vmul.f32 %v6549, %v6585
      %v6594 = vmul.f32 %v6551, %v6586
      %v6595 = vmul.f32 %v6553, %v6587
      %v6596 = vmul.f32 %v6555, %v6588
      %v6597 = vmul.f32 %v6557, %v6589
      %v6598 = vpack.c.bf16 %v6590, %v6590
      %v6599 = vpack.c.bf16 %v6591, %v6591
      %v6600 = vpack.c.bf16 %v6592, %v6592
      %v6601 = vpack.c.bf16 %v6593, %v6593
      %v6602 = vpack.c.bf16 %v6594, %v6594
      %v6603 = vpack.c.bf16 %v6595, %v6595
      %v6604 = vpack.c.bf16 %v6596, %v6596
      %v6605 = vpack.c.bf16 %v6597, %v6597
      %v6607 = vsel %vm1069, %v6598, 0
      %v6610 = vsel %vm1537, %v6134, 0
      %6612 = vmatprep.subr.bf16.mxu0 0
      %6613 = vmatpush1.bf16.msra.mxu0 0
      %6614 = vmatprep.subr.bf16.mxu0 0
      %6615 = vmatpush1.bf16.msra.mxu0 0
      %6616 = vmatprep.subr.bf16.mxu0 0
      %6617 = vmatpush1.bf16.msra.mxu0 0
      %6618 = vmatprep.subr.bf16.mxu0 0
      %6619 = vmatpush1.bf16.msra.mxu0 0
      %6620 = vmatprep.subr.bf16.mxu0 0
      %6621 = vmatpush1.bf16.msra.mxu0 0
      %6622 = vmatprep.subr.bf16.mxu0 0
      %6623 = vmatpush1.bf16.msra.mxu0 0
      %6624 = vmatprep.subr.bf16.mxu0 0
      %6625 = vmatpush1.bf16.msra.mxu0 0
      %6626 = vmatprep.subr.bf16.mxu0 0
      %6627 = vmatpush1.bf16.msra.mxu0 %v6610
      %6628 = vmatprep.subr.bf16.mxu0 0
      %6629 = vmatpush2.bf16.msra.mxu0 0
      %6630 = vmatprep.subr.bf16.mxu0 0
      %6631 = vmatpush2.bf16.msra.mxu0 0
      %6632 = vmatprep.subr.bf16.mxu0 0
      %6633 = vmatpush2.bf16.msra.mxu0 0
      %6634 = vmatprep.subr.bf16.mxu0 0
      %6635 = vmatpush2.bf16.msra.mxu0 0
      %6636 = vmatprep.subr.bf16.mxu0 0
      %6637 = vmatpush2.bf16.msra.mxu0 0
      %6638 = vmatprep.subr.bf16.mxu0 0
      %6639 = vmatpush2.bf16.msra.mxu0 0
      %6640 = vmatprep.subr.bf16.mxu0 0
      %6641 = vmatpush2.bf16.msra.mxu0 0
      %6642 = vmatprep.subr.bf16.mxu0 0
      %6643 = vmatpush2.bf16.msra.mxu0 0
      %6644 = vmatprep.mubr.bf16.mxu0 0
      %6645 = vmatmul.mubr.bf16.gmra.mxu0 %v6607
      %v6646 = vpop.f32.mrf.mxu0
      %v6647 = vadd.f32 0.0, %v6646
      %v6648 = vpop.f32.mrf.mxu0
      %v6649 = vpop.f32.mrf.mxu0
      %v6650 = vpop.f32.mrf.mxu0
      %6651 = vdwg.mxu0
      %v6653 = vsel %vm1069, %v6599, 0
      %v6656 = vsel %vm1537, %v6135, 0
      %6658 = vmatprep.subr.bf16.mxu0 0
      %6659 = vmatpush1.bf16.msra.mxu0 0
      %6660 = vmatprep.subr.bf16.mxu0 0
      %6661 = vmatpush1.bf16.msra.mxu0 0
      %6662 = vmatprep.subr.bf16.mxu0 0
      %6663 = vmatpush1.bf16.msra.mxu0 0
      %6664 = vmatprep.subr.bf16.mxu0 0
      %6665 = vmatpush1.bf16.msra.mxu0 0
      %6666 = vmatprep.subr.bf16.mxu0 0
      %6667 = vmatpush1.bf16.msra.mxu0 0
      %6668 = vmatprep.subr.bf16.mxu0 0
      %6669 = vmatpush1.bf16.msra.mxu0 0
      %6670 = vmatprep.subr.bf16.mxu0 0
      %6671 = vmatpush1.bf16.msra.mxu0 0
      %6672 = vmatprep.subr.bf16.mxu0 0
      %6673 = vmatpush1.bf16.msra.mxu0 %v6656
      %6674 = vmatprep.subr.bf16.mxu0 0
      %6675 = vmatpush2.bf16.msra.mxu0 0
      %6676 = vmatprep.subr.bf16.mxu0 0
      %6677 = vmatpush2.bf16.msra.mxu0 0
      %6678 = vmatprep.subr.bf16.mxu0 0
      %6679 = vmatpush2.bf16.msra.mxu0 0
      %6680 = vmatprep.subr.bf16.mxu0 0
      %6681 = vmatpush2.bf16.msra.mxu0 0
      %6682 = vmatprep.subr.bf16.mxu0 0
      %6683 = vmatpush2.bf16.msra.mxu0 0
      %6684 = vmatprep.subr.bf16.mxu0 0
      %6685 = vmatpush2.bf16.msra.mxu0 0
      %6686 = vmatprep.subr.bf16.mxu0 0
      %6687 = vmatpush2.bf16.msra.mxu0 0
      %6688 = vmatprep.subr.bf16.mxu0 0
      %6689 = vmatpush2.bf16.msra.mxu0 0
      %6690 = vmatprep.mubr.bf16.mxu0 0
      %6691 = vmatmul.mubr.bf16.gmra.mxu0 %v6653
      %v6692 = vpop.f32.mrf.mxu0
      %v6693 = vadd.f32 0.0, %v6692
      %v6694 = vpop.f32.mrf.mxu0
      %v6695 = vpop.f32.mrf.mxu0
      %v6696 = vpop.f32.mrf.mxu0
      %6697 = vdwg.mxu0
      %v6699 = vsel %vm1069, %v6600, 0
      %v6702 = vsel %vm1537, %v6136, 0
      %6704 = vmatprep.subr.bf16.mxu0 0
      %6705 = vmatpush1.bf16.msra.mxu0 0
      %6706 = vmatprep.subr.bf16.mxu0 0
      %6707 = vmatpush1.bf16.msra.mxu0 0
      %6708 = vmatprep.subr.bf16.mxu0 0
      %6709 = vmatpush1.bf16.msra.mxu0 0
      %6710 = vmatprep.subr.bf16.mxu0 0
      %6711 = vmatpush1.bf16.msra.mxu0 0
      %6712 = vmatprep.subr.bf16.mxu0 0
      %6713 = vmatpush1.bf16.msra.mxu0 0
      %6714 = vmatprep.subr.bf16.mxu0 0
      %6715 = vmatpush1.bf16.msra.mxu0 0
      %6716 = vmatprep.subr.bf16.mxu0 0
      %6717 = vmatpush1.bf16.msra.mxu0 0
      %6718 = vmatprep.subr.bf16.mxu0 0
      %6719 = vmatpush1.bf16.msra.mxu0 %v6702
      %6720 = vmatprep.subr.bf16.mxu0 0
      %6721 = vmatpush2.bf16.msra.mxu0 0
      %6722 = vmatprep.subr.bf16.mxu0 0
      %6723 = vmatpush2.bf16.msra.mxu0 0
      %6724 = vmatprep.subr.bf16.mxu0 0
      %6725 = vmatpush2.bf16.msra.mxu0 0
      %6726 = vmatprep.subr.bf16.mxu0 0
      %6727 = vmatpush2.bf16.msra.mxu0 0
      %6728 = vmatprep.subr.bf16.mxu0 0
      %6729 = vmatpush2.bf16.msra.mxu0 0
      %6730 = vmatprep.subr.bf16.mxu0 0
      %6731 = vmatpush2.bf16.msra.mxu0 0
      %6732 = vmatprep.subr.bf16.mxu0 0
      %6733 = vmatpush2.bf16.msra.mxu0 0
      %6734 = vmatprep.subr.bf16.mxu0 0
      %6735 = vmatpush2.bf16.msra.mxu0 0
      %6736 = vmatprep.mubr.bf16.mxu0 0
      %6737 = vmatmul.mubr.bf16.gmra.mxu0 %v6699
      %v6738 = vpop.f32.mrf.mxu0
      %v6739 = vadd.f32 0.0, %v6738
      %v6740 = vpop.f32.mrf.mxu0
      %v6741 = vpop.f32.mrf.mxu0
      %v6742 = vpop.f32.mrf.mxu0
      %6743 = vdwg.mxu0
      %v6745 = vsel %vm1069, %v6601, 0
      %v6748 = vsel %vm1537, %v6137, 0
      %6750 = vmatprep.subr.bf16.mxu0 0
      %6751 = vmatpush1.bf16.msra.mxu0 0
      %6752 = vmatprep.subr.bf16.mxu0 0
      %6753 = vmatpush1.bf16.msra.mxu0 0
      %6754 = vmatprep.subr.bf16.mxu0 0
      %6755 = vmatpush1.bf16.msra.mxu0 0
      %6756 = vmatprep.subr.bf16.mxu0 0
      %6757 = vmatpush1.bf16.msra.mxu0 0
      %6758 = vmatprep.subr.bf16.mxu0 0
      %6759 = vmatpush1.bf16.msra.mxu0 0
      %6760 = vmatprep.subr.bf16.mxu0 0
      %6761 = vmatpush1.bf16.msra.mxu0 0
      %6762 = vmatprep.subr.bf16.mxu0 0
      %6763 = vmatpush1.bf16.msra.mxu0 0
      %6764 = vmatprep.subr.bf16.mxu0 0
      %6765 = vmatpush1.bf16.msra.mxu0 %v6748
      %6766 = vmatprep.subr.bf16.mxu0 0
      %6767 = vmatpush2.bf16.msra.mxu0 0
      %6768 = vmatprep.subr.bf16.mxu0 0
      %6769 = vmatpush2.bf16.msra.mxu0 0
      %6770 = vmatprep.subr.bf16.mxu0 0
      %6771 = vmatpush2.bf16.msra.mxu0 0
      %6772 = vmatprep.subr.bf16.mxu0 0
      %6773 = vmatpush2.bf16.msra.mxu0 0
      %6774 = vmatprep.subr.bf16.mxu0 0
      %6775 = vmatpush2.bf16.msra.mxu0 0
      %6776 = vmatprep.subr.bf16.mxu0 0
      %6777 = vmatpush2.bf16.msra.mxu0 0
      %6778 = vmatprep.subr.bf16.mxu0 0
      %6779 = vmatpush2.bf16.msra.mxu0 0
      %6780 = vmatprep.subr.bf16.mxu0 0
      %6781 = vmatpush2.bf16.msra.mxu0 0
      %6782 = vmatprep.mubr.bf16.mxu0 0
      %6783 = vmatmul.mubr.bf16.gmra.mxu0 %v6745
      %v6784 = vpop.f32.mrf.mxu0
      %v6785 = vadd.f32 0.0, %v6784
      %v6786 = vpop.f32.mrf.mxu0
      %v6787 = vpop.f32.mrf.mxu0
      %v6788 = vpop.f32.mrf.mxu0
      %6789 = vdwg.mxu0
      %v6791 = vsel %vm1069, %v6602, 0
      %v6794 = vsel %vm1537, %v6138, 0
      %6796 = vmatprep.subr.bf16.mxu0 0
      %6797 = vmatpush1.bf16.msra.mxu0 0
      %6798 = vmatprep.subr.bf16.mxu0 0
      %6799 = vmatpush1.bf16.msra.mxu0 0
      %6800 = vmatprep.subr.bf16.mxu0 0
      %6801 = vmatpush1.bf16.msra.mxu0 0
      %6802 = vmatprep.subr.bf16.mxu0 0
      %6803 = vmatpush1.bf16.msra.mxu0 0
      %6804 = vmatprep.subr.bf16.mxu0 0
      %6805 = vmatpush1.bf16.msra.mxu0 0
      %6806 = vmatprep.subr.bf16.mxu0 0
      %6807 = vmatpush1.bf16.msra.mxu0 0
      %6808 = vmatprep.subr.bf16.mxu0 0
      %6809 = vmatpush1.bf16.msra.mxu0 0
      %6810 = vmatprep.subr.bf16.mxu0 0
      %6811 = vmatpush1.bf16.msra.mxu0 %v6794
      %6812 = vmatprep.subr.bf16.mxu0 0
      %6813 = vmatpush2.bf16.msra.mxu0 0
      %6814 = vmatprep.subr.bf16.mxu0 0
      %6815 = vmatpush2.bf16.msra.mxu0 0
      %6816 = vmatprep.subr.bf16.mxu0 0
      %6817 = vmatpush2.bf16.msra.mxu0 0
      %6818 = vmatprep.subr.bf16.mxu0 0
      %6819 = vmatpush2.bf16.msra.mxu0 0
      %6820 = vmatprep.subr.bf16.mxu0 0
      %6821 = vmatpush2.bf16.msra.mxu0 0
      %6822 = vmatprep.subr.bf16.mxu0 0
      %6823 = vmatpush2.bf16.msra.mxu0 0
      %6824 = vmatprep.subr.bf16.mxu0 0
      %6825 = vmatpush2.bf16.msra.mxu0 0
      %6826 = vmatprep.subr.bf16.mxu0 0
      %6827 = vmatpush2.bf16.msra.mxu0 0
      %6828 = vmatprep.mubr.bf16.mxu0 0
      %6829 = vmatmul.mubr.bf16.gmra.mxu0 %v6791
      %v6830 = vpop.f32.mrf.mxu0
      %v6831 = vadd.f32 0.0, %v6830
      %v6832 = vpop.f32.mrf.mxu0
      %v6833 = vpop.f32.mrf.mxu0
      %v6834 = vpop.f32.mrf.mxu0
      %6835 = vdwg.mxu0
      %v6837 = vsel %vm1069, %v6603, 0
      %v6840 = vsel %vm1537, %v6139, 0
      %6842 = vmatprep.subr.bf16.mxu0 0
      %6843 = vmatpush1.bf16.msra.mxu0 0
      %6844 = vmatprep.subr.bf16.mxu0 0
      %6845 = vmatpush1.bf16.msra.mxu0 0
      %6846 = vmatprep.subr.bf16.mxu0 0
      %6847 = vmatpush1.bf16.msra.mxu0 0
      %6848 = vmatprep.subr.bf16.mxu0 0
      %6849 = vmatpush1.bf16.msra.mxu0 0
      %6850 = vmatprep.subr.bf16.mxu0 0
      %6851 = vmatpush1.bf16.msra.mxu0 0
      %6852 = vmatprep.subr.bf16.mxu0 0
      %6853 = vmatpush1.bf16.msra.mxu0 0
      %6854 = vmatprep.subr.bf16.mxu0 0
      %6855 = vmatpush1.bf16.msra.mxu0 0
      %6856 = vmatprep.subr.bf16.mxu0 0
      %6857 = vmatpush1.bf16.msra.mxu0 %v6840
      %6858 = vmatprep.subr.bf16.mxu0 0
      %6859 = vmatpush2.bf16.msra.mxu0 0
      %6860 = vmatprep.subr.bf16.mxu0 0
      %6861 = vmatpush2.bf16.msra.mxu0 0
      %6862 = vmatprep.subr.bf16.mxu0 0
      %6863 = vmatpush2.bf16.msra.mxu0 0
      %6864 = vmatprep.subr.bf16.mxu0 0
      %6865 = vmatpush2.bf16.msra.mxu0 0
      %6866 = vmatprep.subr.bf16.mxu0 0
      %6867 = vmatpush2.bf16.msra.mxu0 0
      %6868 = vmatprep.subr.bf16.mxu0 0
      %6869 = vmatpush2.bf16.msra.mxu0 0
      %6870 = vmatprep.subr.bf16.mxu0 0
      %6871 = vmatpush2.bf16.msra.mxu0 0
      %6872 = vmatprep.subr.bf16.mxu0 0
      %6873 = vmatpush2.bf16.msra.mxu0 0
      %6874 = vmatprep.mubr.bf16.mxu0 0
      %6875 = vmatmul.mubr.bf16.gmra.mxu0 %v6837
      %v6876 = vpop.f32.mrf.mxu0
      %v6877 = vadd.f32 0.0, %v6876
      %v6878 = vpop.f32.mrf.mxu0
      %v6879 = vpop.f32.mrf.mxu0
      %v6880 = vpop.f32.mrf.mxu0
      %6881 = vdwg.mxu0
      %v6883 = vsel %vm1069, %v6604, 0
      %v6886 = vsel %vm1537, %v6140, 0
      %6888 = vmatprep.subr.bf16.mxu0 0
      %6889 = vmatpush1.bf16.msra.mxu0 0
      %6890 = vmatprep.subr.bf16.mxu0 0
      %6891 = vmatpush1.bf16.msra.mxu0 0
      %6892 = vmatprep.subr.bf16.mxu0 0
      %6893 = vmatpush1.bf16.msra.mxu0 0
      %6894 = vmatprep.subr.bf16.mxu0 0
      %6895 = vmatpush1.bf16.msra.mxu0 0
      %6896 = vmatprep.subr.bf16.mxu0 0
      %6897 = vmatpush1.bf16.msra.mxu0 0
      %6898 = vmatprep.subr.bf16.mxu0 0
      %6899 = vmatpush1.bf16.msra.mxu0 0
      %6900 = vmatprep.subr.bf16.mxu0 0
      %6901 = vmatpush1.bf16.msra.mxu0 0
      %6902 = vmatprep.subr.bf16.mxu0 0
      %6903 = vmatpush1.bf16.msra.mxu0 %v6886
      %6904 = vmatprep.subr.bf16.mxu0 0
      %6905 = vmatpush2.bf16.msra.mxu0 0
      %6906 = vmatprep.subr.bf16.mxu0 0
      %6907 = vmatpush2.bf16.msra.mxu0 0
      %6908 = vmatprep.subr.bf16.mxu0 0
      %6909 = vmatpush2.bf16.msra.mxu0 0
      %6910 = vmatprep.subr.bf16.mxu0 0
      %6911 = vmatpush2.bf16.msra.mxu0 0
      %6912 = vmatprep.subr.bf16.mxu0 0
      %6913 = vmatpush2.bf16.msra.mxu0 0
      %6914 = vmatprep.subr.bf16.mxu0 0
      %6915 = vmatpush2.bf16.msra.mxu0 0
      %6916 = vmatprep.subr.bf16.mxu0 0
      %6917 = vmatpush2.bf16.msra.mxu0 0
      %6918 = vmatprep.subr.bf16.mxu0 0
      %6919 = vmatpush2.bf16.msra.mxu0 0
      %6920 = vmatprep.mubr.bf16.mxu0 0
      %6921 = vmatmul.mubr.bf16.gmra.mxu0 %v6883
      %v6922 = vpop.f32.mrf.mxu0
      %v6923 = vadd.f32 0.0, %v6922
      %v6924 = vpop.f32.mrf.mxu0
      %v6925 = vpop.f32.mrf.mxu0
      %v6926 = vpop.f32.mrf.mxu0
      %6927 = vdwg.mxu0
      %v6929 = vsel %vm1069, %v6605, 0
      %v6932 = vsel %vm1537, %v6141, 0
      %6934 = vmatprep.subr.bf16.mxu0 0
      %6935 = vmatpush1.bf16.msra.mxu0 0
      %6936 = vmatprep.subr.bf16.mxu0 0
      %6937 = vmatpush1.bf16.msra.mxu0 0
      %6938 = vmatprep.subr.bf16.mxu0 0
      %6939 = vmatpush1.bf16.msra.mxu0 0
      %6940 = vmatprep.subr.bf16.mxu0 0
      %6941 = vmatpush1.bf16.msra.mxu0 0
      %6942 = vmatprep.subr.bf16.mxu0 0
      %6943 = vmatpush1.bf16.msra.mxu0 0
      %6944 = vmatprep.subr.bf16.mxu0 0
      %6945 = vmatpush1.bf16.msra.mxu0 0
      %6946 = vmatprep.subr.bf16.mxu0 0
      %6947 = vmatpush1.bf16.msra.mxu0 0
      %6948 = vmatprep.subr.bf16.mxu0 0
      %6949 = vmatpush1.bf16.msra.mxu0 %v6932
      %6950 = vmatprep.subr.bf16.mxu0 0
      %6951 = vmatpush2.bf16.msra.mxu0 0
      %6952 = vmatprep.subr.bf16.mxu0 0
      %6953 = vmatpush2.bf16.msra.mxu0 0
      %6954 = vmatprep.subr.bf16.mxu0 0
      %6955 = vmatpush2.bf16.msra.mxu0 0
      %6956 = vmatprep.subr.bf16.mxu0 0
      %6957 = vmatpush2.bf16.msra.mxu0 0
      %6958 = vmatprep.subr.bf16.mxu0 0
      %6959 = vmatpush2.bf16.msra.mxu0 0
      %6960 = vmatprep.subr.bf16.mxu0 0
      %6961 = vmatpush2.bf16.msra.mxu0 0
      %6962 = vmatprep.subr.bf16.mxu0 0
      %6963 = vmatpush2.bf16.msra.mxu0 0
      %6964 = vmatprep.subr.bf16.mxu0 0
      %6965 = vmatpush2.bf16.msra.mxu0 0
      %6966 = vmatprep.mubr.bf16.mxu0 0
      %6967 = vmatmul.mubr.bf16.gmra.mxu0 %v6929
      %v6968 = vpop.f32.mrf.mxu0
      %v6969 = vadd.f32 0.0, %v6968
      %v6970 = vpop.f32.mrf.mxu0
      %v6971 = vpop.f32.mrf.mxu0
      %v6972 = vpop.f32.mrf.mxu0
      %6973 = vdwg.mxu0
      %v6974 = vpack.c.bf16 %v6693, %v6647
      %v6975 = vpack.c.bf16 %v6785, %v6739
      %v6976 = vpack.c.bf16 %v6877, %v6831
      %v6977 = vpack.c.bf16 %v6969, %v6923
      %s6978 = scalar_lea.vmem %s8, 8
      %v6979 = vld [vmem:[%s6978] sm:$0xf]
      %v6981 = vsel %vm1069, %v6974, 0
      %v6984 = vsel %vm1069, %v6975, 0
      %v6987 = vsel %vm1069, %v6976, 0
      %v6990 = vsel %vm1069, %v6977, 0
      %v6993 = vsel %vm1537, %v6979, 0
      %6995 = vmatprep.subr.bf16.mxu0 0
      %6996 = vmatpush1.bf16.msra.mxu0 0
      %6997 = vmatprep.subr.bf16.mxu0 0
      %6998 = vmatpush1.bf16.msra.mxu0 0
      %6999 = vmatprep.subr.bf16.mxu0 0
      %7000 = vmatpush1.bf16.msra.mxu0 0
      %7001 = vmatprep.subr.bf16.mxu0 0
      %7002 = vmatpush1.bf16.msra.mxu0 0
      %7003 = vmatprep.subr.bf16.mxu0 0
      %7004 = vmatpush1.bf16.msra.mxu0 0
      %7005 = vmatprep.subr.bf16.mxu0 0
      %7006 = vmatpush1.bf16.msra.mxu0 0
      %7007 = vmatprep.subr.bf16.mxu0 0
      %7008 = vmatpush1.bf16.msra.mxu0 0
      %7009 = vmatprep.subr.bf16.mxu0 0
      %7010 = vmatpush1.bf16.msra.mxu0 %v6993
      %7011 = vmatprep.subr.bf16.mxu0 0
      %7012 = vmatpush2.bf16.msra.mxu0 0
      %7013 = vmatprep.subr.bf16.mxu0 0
      %7014 = vmatpush2.bf16.msra.mxu0 0
      %7015 = vmatprep.subr.bf16.mxu0 0
      %7016 = vmatpush2.bf16.msra.mxu0 0
      %7017 = vmatprep.subr.bf16.mxu0 0
      %7018 = vmatpush2.bf16.msra.mxu0 0
      %7019 = vmatprep.subr.bf16.mxu0 0
      %7020 = vmatpush2.bf16.msra.mxu0 0
      %7021 = vmatprep.subr.bf16.mxu0 0
      %7022 = vmatpush2.bf16.msra.mxu0 0
      %7023 = vmatprep.subr.bf16.mxu0 0
      %7024 = vmatpush2.bf16.msra.mxu0 0
      %7025 = vmatprep.subr.bf16.mxu0 0
      %7026 = vmatpush2.bf16.msra.mxu0 0
      %7027 = vmatprep.mubr.bf16.mxu0 0
      %7028 = vmatmul.mubr.bf16.gmra.mxu0 %v6981
      %v7029 = vpop.f32.mrf.mxu0
      %v7030 = vadd.f32 0.0, %v7029
      %v7031 = vpop.f32.mrf.mxu0
      %v7032 = vpop.f32.mrf.mxu0
      %v7033 = vadd.f32 0.0, %v7032
      %v7034 = vpop.f32.mrf.mxu0
      %7035 = vmatprep.mubr.bf16.mxu0 0
      %7036 = vmatmul.mubr.bf16.gmra.mxu0 %v6984
      %v7037 = vpop.f32.mrf.mxu0
      %v7038 = vadd.f32 0.0, %v7037
      %v7039 = vpop.f32.mrf.mxu0
      %v7040 = vpop.f32.mrf.mxu0
      %v7041 = vadd.f32 0.0, %v7040
      %v7042 = vpop.f32.mrf.mxu0
      %7043 = vmatprep.mubr.bf16.mxu0 0
      %7044 = vmatmul.mubr.bf16.gmra.mxu0 %v6987
      %v7045 = vpop.f32.mrf.mxu0
      %v7046 = vadd.f32 0.0, %v7045
      %v7047 = vpop.f32.mrf.mxu0
      %v7048 = vpop.f32.mrf.mxu0
      %v7049 = vadd.f32 0.0, %v7048
      %v7050 = vpop.f32.mrf.mxu0
      %7051 = vmatprep.mubr.bf16.mxu0 0
      %7052 = vmatmul.mubr.bf16.gmra.mxu0 %v6990
      %v7053 = vpop.f32.mrf.mxu0
      %v7054 = vadd.f32 0.0, %v7053
      %v7055 = vpop.f32.mrf.mxu0
      %v7056 = vpop.f32.mrf.mxu0
      %v7057 = vadd.f32 0.0, %v7056
      %v7058 = vpop.f32.mrf.mxu0
      %7059 = vdwg.mxu0
      %v7060 = vadd.f32 %v5792, %v7030
      %v7061 = vadd.f32 %v5793, %v7033
      %v7062 = vadd.f32 %v5794, %v7038
      %v7063 = vadd.f32 %v5795, %v7041
      %v7064 = vadd.f32 %v5796, %v7046
      %v7065 = vadd.f32 %v5797, %v7049
      %v7066 = vadd.f32 %v5798, %v7054
      %v7067 = vadd.f32 %v5799, %v7057
      %s7068 = scalar_lea.vmem %s6, 224
      %v7069 = vld [vmem:[%s7068] sm:$0xf]
      %v7070 = vld [vmem:[%s7068 + $0x4] sm:$0xf]
      %v7071 = vld [vmem:[%s7068 + $0x8] sm:$0xf]
      %v7072 = vld [vmem:[%s7068 + $0xc] sm:$0xf]
      %s7073 = scalar_lea.vmem %s7, 14
      %v7074 = vld [vmem:[%s7073] sm:$0x1]
      %v7076 = vlaneseq
      %v7077 = vshrl.u32 %v7076, 7
      %v7078 = vsub.s32 0, %v7077
      %v7079 = vrot.slane %v7074, %v7078
      %v7085 = vunpack.c.l.b16 %v7069
      %v7086 = vunpack.c.l.b16 %v7070
      %v7087 = vunpack.c.l.b16 %v7071
      %v7088 = vunpack.c.l.b16 %v7072
      %v7089 = vpack.c.b16 %v7086, %v7085
      %v7090 = vpack.c.b16 %v7088, %v7087
      %7093 = vmatprep.subr.bf16.mxu0 0
      %7094 = vmatpush1.bf16.msra.mxu0 0
      %7095 = vmatprep.subr.bf16.mxu0 0
      %7096 = vmatpush1.bf16.msra.mxu0 0
      %7097 = vmatprep.subr.bf16.mxu0 0
      %7098 = vmatpush1.bf16.msra.mxu0 0
      %7099 = vmatprep.subr.bf16.mxu0 0
      %7100 = vmatpush1.bf16.msra.mxu0 0
      %7101 = vmatprep.subr.bf16.mxu0 0
      %7102 = vmatpush1.bf16.msra.mxu0 0
      %7103 = vmatprep.subr.bf16.mxu0 0
      %7104 = vmatpush1.bf16.msra.mxu0 0
      %7105 = vmatprep.subr.bf16.mxu0 0
      %7106 = vmatpush1.bf16.msra.mxu0 %v7090
      %7107 = vmatprep.subr.bf16.mxu0 0
      %7108 = vmatpush1.bf16.msra.mxu0 %v7089
      %7109 = vmatprep.subr.bf16.mxu0 0
      %7110 = vmatpush2.bf16.msra.mxu0 0
      %7111 = vmatprep.subr.bf16.mxu0 0
      %7112 = vmatpush2.bf16.msra.mxu0 0
      %7113 = vmatprep.subr.bf16.mxu0 0
      %7114 = vmatpush2.bf16.msra.mxu0 0
      %7115 = vmatprep.subr.bf16.mxu0 0
      %7116 = vmatpush2.bf16.msra.mxu0 0
      %7117 = vmatprep.subr.bf16.mxu0 0
      %7118 = vmatpush2.bf16.msra.mxu0 0
      %7119 = vmatprep.subr.bf16.mxu0 0
      %7120 = vmatpush2.bf16.msra.mxu0 0
      %7121 = vmatprep.subr.bf16.mxu0 0
      %7122 = vmatpush2.bf16.msra.mxu0 0
      %7123 = vmatprep.subr.bf16.mxu0 0
      %7124 = vmatpush2.bf16.msra.mxu0 0
      %7125 = vmatprep.mubr.bf16.mxu0 0
      %7126 = vmatmul.mubr.bf16.gmra.mxu0 %v729
      %v7127 = vpop.f32.mrf.mxu0
      %v7128 = vadd.f32 %v7079, %v7127
      %v7129 = vpop.f32.mrf.mxu0
      %v7130 = vpop.f32.mrf.mxu0
      %v7131 = vadd.f32 %v7079, %v7130
      %v7132 = vpop.f32.mrf.mxu0
      %7133 = vmatprep.mubr.bf16.mxu0 0
      %7134 = vmatmul.mubr.bf16.gmra.mxu0 %v732
      %v7135 = vpop.f32.mrf.mxu0
      %v7136 = vadd.f32 %v7079, %v7135
      %v7137 = vpop.f32.mrf.mxu0
      %v7138 = vpop.f32.mrf.mxu0
      %v7139 = vadd.f32 %v7079, %v7138
      %v7140 = vpop.f32.mrf.mxu0
      %7141 = vmatprep.mubr.bf16.mxu0 0
      %7142 = vmatmul.mubr.bf16.gmra.mxu0 %v735
      %v7143 = vpop.f32.mrf.mxu0
      %v7144 = vadd.f32 %v7079, %v7143
      %v7145 = vpop.f32.mrf.mxu0
      %v7146 = vpop.f32.mrf.mxu0
      %v7147 = vadd.f32 %v7079, %v7146
      %v7148 = vpop.f32.mrf.mxu0
      %7149 = vmatprep.mubr.bf16.mxu0 0
      %7150 = vmatmul.mubr.bf16.gmra.mxu0 %v738
      %v7151 = vpop.f32.mrf.mxu0
      %v7152 = vadd.f32 %v7079, %v7151
      %v7153 = vpop.f32.mrf.mxu0
      %v7154 = vpop.f32.mrf.mxu0
      %v7155 = vadd.f32 %v7079, %v7154
      %v7156 = vpop.f32.mrf.mxu0
      %7157 = vdwg.mxu0
      %v7158 = vpack.c.bf16 %v7131, %v7128
      %v7159 = vpack.c.bf16 %v7139, %v7136
      %v7160 = vpack.c.bf16 %v7147, %v7144
      %v7161 = vpack.c.bf16 %v7155, %v7152
      %v7166 = vunpack.c.l.b16 %v7158
      %v7167 = vunpack.c.h.b16 %v7158
      %v7168 = vunpack.c.l.b16 %v7159
      %v7169 = vunpack.c.h.b16 %v7159
      %v7170 = vunpack.c.l.b16 %v7160
      %v7171 = vunpack.c.h.b16 %v7160
      %v7172 = vunpack.c.l.b16 %v7161
      %v7173 = vunpack.c.h.b16 %v7161
      %v7174 = vpack.c.b16 %v7166, %v7166
      %v7175 = vpack.c.b16 %v7167, %v7167
      %v7176 = vpack.c.b16 %v7168, %v7168
      %v7177 = vpack.c.b16 %v7169, %v7169
      %v7178 = vpack.c.b16 %v7170, %v7170
      %v7179 = vpack.c.b16 %v7171, %v7171
      %v7180 = vpack.c.b16 %v7172, %v7172
      %v7181 = vpack.c.b16 %v7173, %v7173
      %s7182 = scalar_lea.vmem %s6, 288
      %v7183 = vld [vmem:[%s7182] sm:$0xf]
      %v7184 = vld [vmem:[%s7182 + $0x4] sm:$0xf]
      %v7185 = vld [vmem:[%s7182 + $0x8] sm:$0xf]
      %v7186 = vld [vmem:[%s7182 + $0xc] sm:$0xf]
      %s7187 = scalar_lea.vmem %s7, 18
      %v7188 = vld [vmem:[%s7187] sm:$0x1]
      %v7190 = vlaneseq
      %v7191 = vshrl.u32 %v7190, 7
      %v7192 = vsub.s32 0, %v7191
      %v7193 = vrot.slane %v7188, %v7192
      %v7199 = vunpack.c.l.b16 %v7183
      %v7200 = vunpack.c.l.b16 %v7184
      %v7201 = vunpack.c.l.b16 %v7185
      %v7202 = vunpack.c.l.b16 %v7186
      %v7203 = vpack.c.b16 %v7200, %v7199
      %v7204 = vpack.c.b16 %v7202, %v7201
      %7207 = vmatprep.subr.bf16.mxu0 0
      %7208 = vmatpush1.bf16.msra.mxu0 0
      %7209 = vmatprep.subr.bf16.mxu0 0
      %7210 = vmatpush1.bf16.msra.mxu0 0
      %7211 = vmatprep.subr.bf16.mxu0 0
      %7212 = vmatpush1.bf16.msra.mxu0 0
      %7213 = vmatprep.subr.bf16.mxu0 0
      %7214 = vmatpush1.bf16.msra.mxu0 0
      %7215 = vmatprep.subr.bf16.mxu0 0
      %7216 = vmatpush1.bf16.msra.mxu0 0
      %7217 = vmatprep.subr.bf16.mxu0 0
      %7218 = vmatpush1.bf16.msra.mxu0 0
      %7219 = vmatprep.subr.bf16.mxu0 0
      %7220 = vmatpush1.bf16.msra.mxu0 %v7204
      %7221 = vmatprep.subr.bf16.mxu0 0
      %7222 = vmatpush1.bf16.msra.mxu0 %v7203
      %7223 = vmatprep.subr.bf16.mxu0 0
      %7224 = vmatpush2.bf16.msra.mxu0 0
      %7225 = vmatprep.subr.bf16.mxu0 0
      %7226 = vmatpush2.bf16.msra.mxu0 0
      %7227 = vmatprep.subr.bf16.mxu0 0
      %7228 = vmatpush2.bf16.msra.mxu0 0
      %7229 = vmatprep.subr.bf16.mxu0 0
      %7230 = vmatpush2.bf16.msra.mxu0 0
      %7231 = vmatprep.subr.bf16.mxu0 0
      %7232 = vmatpush2.bf16.msra.mxu0 0
      %7233 = vmatprep.subr.bf16.mxu0 0
      %7234 = vmatpush2.bf16.msra.mxu0 0
      %7235 = vmatprep.subr.bf16.mxu0 0
      %7236 = vmatpush2.bf16.msra.mxu0 0
      %7237 = vmatprep.subr.bf16.mxu0 0
      %7238 = vmatpush2.bf16.msra.mxu0 0
      %7239 = vmatprep.mubr.bf16.mxu0 0
      %7240 = vmatmul.mubr.bf16.gmra.mxu0 %v729
      %v7241 = vpop.f32.mrf.mxu0
      %v7242 = vadd.f32 %v7193, %v7241
      %v7243 = vpop.f32.mrf.mxu0
      %v7244 = vpop.f32.mrf.mxu0
      %v7245 = vadd.f32 %v7193, %v7244
      %v7246 = vpop.f32.mrf.mxu0
      %7247 = vmatprep.mubr.bf16.mxu0 0
      %7248 = vmatmul.mubr.bf16.gmra.mxu0 %v732
      %v7249 = vpop.f32.mrf.mxu0
      %v7250 = vadd.f32 %v7193, %v7249
      %v7251 = vpop.f32.mrf.mxu0
      %v7252 = vpop.f32.mrf.mxu0
      %v7253 = vadd.f32 %v7193, %v7252
      %v7254 = vpop.f32.mrf.mxu0
      %7255 = vmatprep.mubr.bf16.mxu0 0
      %7256 = vmatmul.mubr.bf16.gmra.mxu0 %v735
      %v7257 = vpop.f32.mrf.mxu0
      %v7258 = vadd.f32 %v7193, %v7257
      %v7259 = vpop.f32.mrf.mxu0
      %v7260 = vpop.f32.mrf.mxu0
      %v7261 = vadd.f32 %v7193, %v7260
      %v7262 = vpop.f32.mrf.mxu0
      %7263 = vmatprep.mubr.bf16.mxu0 0
      %7264 = vmatmul.mubr.bf16.gmra.mxu0 %v738
      %v7265 = vpop.f32.mrf.mxu0
      %v7266 = vadd.f32 %v7193, %v7265
      %v7267 = vpop.f32.mrf.mxu0
      %v7268 = vpop.f32.mrf.mxu0
      %v7269 = vadd.f32 %v7193, %v7268
      %v7270 = vpop.f32.mrf.mxu0
      %7271 = vdwg.mxu0
      %v7272 = vpack.c.bf16 %v7245, %v7242
      %v7273 = vpack.c.bf16 %v7253, %v7250
      %v7274 = vpack.c.bf16 %v7261, %v7258
      %v7275 = vpack.c.bf16 %v7269, %v7266
      %v7280 = vunpack.c.l.b16 %v7272
      %v7281 = vunpack.c.h.b16 %v7272
      %v7282 = vunpack.c.l.b16 %v7273
      %v7283 = vunpack.c.h.b16 %v7273
      %v7284 = vunpack.c.l.b16 %v7274
      %v7285 = vunpack.c.h.b16 %v7274
      %v7286 = vunpack.c.l.b16 %v7275
      %v7287 = vunpack.c.h.b16 %v7275
      %v7288 = vpack.c.b16 %v7280, %v7280
      %v7289 = vpack.c.b16 %v7281, %v7281
      %v7290 = vpack.c.b16 %v7282, %v7282
      %v7291 = vpack.c.b16 %v7283, %v7283
      %v7292 = vpack.c.b16 %v7284, %v7284
      %v7293 = vpack.c.b16 %v7285, %v7285
      %v7294 = vpack.c.b16 %v7286, %v7286
      %v7295 = vpack.c.b16 %v7287, %v7287
      %s7296 = scalar_lea.vmem %s6, 352
      %v7297 = vld [vmem:[%s7296] sm:$0xf]
      %v7298 = vld [vmem:[%s7296 + $0x4] sm:$0xf]
      %v7299 = vld [vmem:[%s7296 + $0x8] sm:$0xf]
      %v7300 = vld [vmem:[%s7296 + $0xc] sm:$0xf]
      %s7301 = scalar_lea.vmem %s7, 22
      %v7302 = vld [vmem:[%s7301] sm:$0x1]
      %v7304 = vlaneseq
      %v7305 = vshrl.u32 %v7304, 7
      %v7306 = vsub.s32 0, %v7305
      %v7307 = vrot.slane %v7302, %v7306
      %v7313 = vunpack.c.l.b16 %v7297
      %v7314 = vunpack.c.l.b16 %v7298
      %v7315 = vunpack.c.l.b16 %v7299
      %v7316 = vunpack.c.l.b16 %v7300
      %v7317 = vpack.c.b16 %v7314, %v7313
      %v7318 = vpack.c.b16 %v7316, %v7315
      %7321 = vmatprep.subr.bf16.mxu0 0
      %7322 = vmatpush1.bf16.msra.mxu0 0
      %7323 = vmatprep.subr.bf16.mxu0 0
      %7324 = vmatpush1.bf16.msra.mxu0 0
      %7325 = vmatprep.subr.bf16.mxu0 0
      %7326 = vmatpush1.bf16.msra.mxu0 0
      %7327 = vmatprep.subr.bf16.mxu0 0
      %7328 = vmatpush1.bf16.msra.mxu0 0
      %7329 = vmatprep.subr.bf16.mxu0 0
      %7330 = vmatpush1.bf16.msra.mxu0 0
      %7331 = vmatprep.subr.bf16.mxu0 0
      %7332 = vmatpush1.bf16.msra.mxu0 0
      %7333 = vmatprep.subr.bf16.mxu0 0
      %7334 = vmatpush1.bf16.msra.mxu0 %v7318
      %7335 = vmatprep.subr.bf16.mxu0 0
      %7336 = vmatpush1.bf16.msra.mxu0 %v7317
      %7337 = vmatprep.subr.bf16.mxu0 0
      %7338 = vmatpush2.bf16.msra.mxu0 0
      %7339 = vmatprep.subr.bf16.mxu0 0
      %7340 = vmatpush2.bf16.msra.mxu0 0
      %7341 = vmatprep.subr.bf16.mxu0 0
      %7342 = vmatpush2.bf16.msra.mxu0 0
      %7343 = vmatprep.subr.bf16.mxu0 0
      %7344 = vmatpush2.bf16.msra.mxu0 0
      %7345 = vmatprep.subr.bf16.mxu0 0
      %7346 = vmatpush2.bf16.msra.mxu0 0
      %7347 = vmatprep.subr.bf16.mxu0 0
      %7348 = vmatpush2.bf16.msra.mxu0 0
      %7349 = vmatprep.subr.bf16.mxu0 0
      %7350 = vmatpush2.bf16.msra.mxu0 0
      %7351 = vmatprep.subr.bf16.mxu0 0
      %7352 = vmatpush2.bf16.msra.mxu0 0
      %7353 = vmatprep.mubr.bf16.mxu0 0
      %7354 = vmatmul.mubr.bf16.gmra.mxu0 %v729
      %v7355 = vpop.f32.mrf.mxu0
      %v7356 = vadd.f32 %v7307, %v7355
      %v7357 = vpop.f32.mrf.mxu0
      %v7358 = vpop.f32.mrf.mxu0
      %v7359 = vadd.f32 %v7307, %v7358
      %v7360 = vpop.f32.mrf.mxu0
      %7361 = vmatprep.mubr.bf16.mxu0 0
      %7362 = vmatmul.mubr.bf16.gmra.mxu0 %v732
      %v7363 = vpop.f32.mrf.mxu0
      %v7364 = vadd.f32 %v7307, %v7363
      %v7365 = vpop.f32.mrf.mxu0
      %v7366 = vpop.f32.mrf.mxu0
      %v7367 = vadd.f32 %v7307, %v7366
      %v7368 = vpop.f32.mrf.mxu0
      %7369 = vmatprep.mubr.bf16.mxu0 0
      %7370 = vmatmul.mubr.bf16.gmra.mxu0 %v735
      %v7371 = vpop.f32.mrf.mxu0
      %v7372 = vadd.f32 %v7307, %v7371
      %v7373 = vpop.f32.mrf.mxu0
      %v7374 = vpop.f32.mrf.mxu0
      %v7375 = vadd.f32 %v7307, %v7374
      %v7376 = vpop.f32.mrf.mxu0
      %7377 = vmatprep.mubr.bf16.mxu0 0
      %7378 = vmatmul.mubr.bf16.gmra.mxu0 %v738
      %v7379 = vpop.f32.mrf.mxu0
      %v7380 = vadd.f32 %v7307, %v7379
      %v7381 = vpop.f32.mrf.mxu0
      %v7382 = vpop.f32.mrf.mxu0
      %v7383 = vadd.f32 %v7307, %v7382
      %v7384 = vpop.f32.mrf.mxu0
      %7385 = vdwg.mxu0
      %v7386 = vpack.c.bf16 %v7359, %v7356
      %v7387 = vpack.c.bf16 %v7367, %v7364
      %v7388 = vpack.c.bf16 %v7375, %v7372
      %v7389 = vpack.c.bf16 %v7383, %v7380
      %v7394 = vunpack.c.l.b16 %v7386
      %v7395 = vunpack.c.h.b16 %v7386
      %v7396 = vunpack.c.l.b16 %v7387
      %v7397 = vunpack.c.h.b16 %v7387
      %v7398 = vunpack.c.l.b16 %v7388
      %v7399 = vunpack.c.h.b16 %v7388
      %v7400 = vunpack.c.l.b16 %v7389
      %v7401 = vunpack.c.h.b16 %v7389
      %v7402 = vpack.c.b16 %v7394, %v7394
      %v7403 = vpack.c.b16 %v7395, %v7395
      %v7404 = vpack.c.b16 %v7396, %v7396
      %v7405 = vpack.c.b16 %v7397, %v7397
      %v7406 = vpack.c.b16 %v7398, %v7398
      %v7407 = vpack.c.b16 %v7399, %v7399
      %v7408 = vpack.c.b16 %v7400, %v7400
      %v7409 = vpack.c.b16 %v7401, %v7401
      %v7411 = vsel %vm1069, %v7174, 0
      %v7414 = vsel %vm1069, %v7288, 0
      %7416 = vmatprep.subr.bf16.mxu0 0
      %7417 = vmatpush1.bf16.xpose.msra.mxu0 0
      %7418 = vmatprep.subr.bf16.mxu0 0
      %7419 = vmatpush1.bf16.xpose.msra.mxu0 0
      %7420 = vmatprep.subr.bf16.mxu0 0
      %7421 = vmatpush1.bf16.xpose.msra.mxu0 0
      %7422 = vmatprep.subr.bf16.mxu0 0
      %7423 = vmatpush1.bf16.xpose.msra.mxu0 0
      %7424 = vmatprep.subr.bf16.mxu0 0
      %7425 = vmatpush1.bf16.xpose.msra.mxu0 0
      %7426 = vmatprep.subr.bf16.mxu0 0
      %7427 = vmatpush1.bf16.xpose.msra.mxu0 0
      %7428 = vmatprep.subr.bf16.mxu0 0
      %7429 = vmatpush1.bf16.xpose.msra.mxu0 0
      %7430 = vmatprep.subr.bf16.mxu0 0
      %7431 = vmatpush1.bf16.xpose.msra.mxu0 %v7414
      %7432 = vmatprep.subr.bf16.mxu0 0
      %7433 = vmatpush2.bf16.xpose.msra.mxu0 0
      %7434 = vmatprep.subr.bf16.mxu0 0
      %7435 = vmatpush2.bf16.xpose.msra.mxu0 0
      %7436 = vmatprep.subr.bf16.mxu0 0
      %7437 = vmatpush2.bf16.xpose.msra.mxu0 0
      %7438 = vmatprep.subr.bf16.mxu0 0
      %7439 = vmatpush2.bf16.xpose.msra.mxu0 0
      %7440 = vmatprep.subr.bf16.mxu0 0
      %7441 = vmatpush2.bf16.xpose.msra.mxu0 0
      %7442 = vmatprep.subr.bf16.mxu0 0
      %7443 = vmatpush2.bf16.xpose.msra.mxu0 0
      %7444 = vmatprep.subr.bf16.mxu0 0
      %7445 = vmatpush2.bf16.xpose.msra.mxu0 0
      %7446 = vmatprep.subr.bf16.mxu0 0
      %7447 = vmatpush2.bf16.xpose.msra.mxu0 0
      %7448 = vmatprep.mubr.bf16.mxu0 0
      %7449 = vmatmul.mubr.bf16.gmra.mxu0 %v7411
      %v7450 = vpop.f32.mrf.mxu0
      %v7451 = vadd.f32 %v432, %v7450
      %v7452 = vpop.f32.mrf.mxu0
      %v7453 = vpop.f32.mrf.mxu0
      %v7454 = vpop.f32.mrf.mxu0
      %7455 = vdwg.mxu0
      %v7457 = vsel %vm1069, %v7175, 0
      %v7460 = vsel %vm1069, %v7289, 0
      %7462 = vmatprep.subr.bf16.mxu0 0
      %7463 = vmatpush1.bf16.xpose.msra.mxu0 0
      %7464 = vmatprep.subr.bf16.mxu0 0
      %7465 = vmatpush1.bf16.xpose.msra.mxu0 0
      %7466 = vmatprep.subr.bf16.mxu0 0
      %7467 = vmatpush1.bf16.xpose.msra.mxu0 0
      %7468 = vmatprep.subr.bf16.mxu0 0
      %7469 = vmatpush1.bf16.xpose.msra.mxu0 0
      %7470 = vmatprep.subr.bf16.mxu0 0
      %7471 = vmatpush1.bf16.xpose.msra.mxu0 0
      %7472 = vmatprep.subr.bf16.mxu0 0
      %7473 = vmatpush1.bf16.xpose.msra.mxu0 0
      %7474 = vmatprep.subr.bf16.mxu0 0
      %7475 = vmatpush1.bf16.xpose.msra.mxu0 0
      %7476 = vmatprep.subr.bf16.mxu0 0
      %7477 = vmatpush1.bf16.xpose.msra.mxu0 %v7460
      %7478 = vmatprep.subr.bf16.mxu0 0
      %7479 = vmatpush2.bf16.xpose.msra.mxu0 0
      %7480 = vmatprep.subr.bf16.mxu0 0
      %7481 = vmatpush2.bf16.xpose.msra.mxu0 0
      %7482 = vmatprep.subr.bf16.mxu0 0
      %7483 = vmatpush2.bf16.xpose.msra.mxu0 0
      %7484 = vmatprep.subr.bf16.mxu0 0
      %7485 = vmatpush2.bf16.xpose.msra.mxu0 0
      %7486 = vmatprep.subr.bf16.mxu0 0
      %7487 = vmatpush2.bf16.xpose.msra.mxu0 0
      %7488 = vmatprep.subr.bf16.mxu0 0
      %7489 = vmatpush2.bf16.xpose.msra.mxu0 0
      %7490 = vmatprep.subr.bf16.mxu0 0
      %7491 = vmatpush2.bf16.xpose.msra.mxu0 0
      %7492 = vmatprep.subr.bf16.mxu0 0
      %7493 = vmatpush2.bf16.xpose.msra.mxu0 0
      %7494 = vmatprep.mubr.bf16.mxu0 0
      %7495 = vmatmul.mubr.bf16.gmra.mxu0 %v7457
      %v7496 = vpop.f32.mrf.mxu0
      %v7497 = vadd.f32 %v432, %v7496
      %v7498 = vpop.f32.mrf.mxu0
      %v7499 = vpop.f32.mrf.mxu0
      %v7500 = vpop.f32.mrf.mxu0
      %7501 = vdwg.mxu0
      %v7503 = vsel %vm1069, %v7176, 0
      %v7506 = vsel %vm1069, %v7290, 0
      %7508 = vmatprep.subr.bf16.mxu0 0
      %7509 = vmatpush1.bf16.xpose.msra.mxu0 0
      %7510 = vmatprep.subr.bf16.mxu0 0
      %7511 = vmatpush1.bf16.xpose.msra.mxu0 0
      %7512 = vmatprep.subr.bf16.mxu0 0
      %7513 = vmatpush1.bf16.xpose.msra.mxu0 0
      %7514 = vmatprep.subr.bf16.mxu0 0
      %7515 = vmatpush1.bf16.xpose.msra.mxu0 0
      %7516 = vmatprep.subr.bf16.mxu0 0
      %7517 = vmatpush1.bf16.xpose.msra.mxu0 0
      %7518 = vmatprep.subr.bf16.mxu0 0
      %7519 = vmatpush1.bf16.xpose.msra.mxu0 0
      %7520 = vmatprep.subr.bf16.mxu0 0
      %7521 = vmatpush1.bf16.xpose.msra.mxu0 0
      %7522 = vmatprep.subr.bf16.mxu0 0
      %7523 = vmatpush1.bf16.xpose.msra.mxu0 %v7506
      %7524 = vmatprep.subr.bf16.mxu0 0
      %7525 = vmatpush2.bf16.xpose.msra.mxu0 0
      %7526 = vmatprep.subr.bf16.mxu0 0
      %7527 = vmatpush2.bf16.xpose.msra.mxu0 0
      %7528 = vmatprep.subr.bf16.mxu0 0
      %7529 = vmatpush2.bf16.xpose.msra.mxu0 0
      %7530 = vmatprep.subr.bf16.mxu0 0
      %7531 = vmatpush2.bf16.xpose.msra.mxu0 0
      %7532 = vmatprep.subr.bf16.mxu0 0
      %7533 = vmatpush2.bf16.xpose.msra.mxu0 0
      %7534 = vmatprep.subr.bf16.mxu0 0
      %7535 = vmatpush2.bf16.xpose.msra.mxu0 0
      %7536 = vmatprep.subr.bf16.mxu0 0
      %7537 = vmatpush2.bf16.xpose.msra.mxu0 0
      %7538 = vmatprep.subr.bf16.mxu0 0
      %7539 = vmatpush2.bf16.xpose.msra.mxu0 0
      %7540 = vmatprep.mubr.bf16.mxu0 0
      %7541 = vmatmul.mubr.bf16.gmra.mxu0 %v7503
      %v7542 = vpop.f32.mrf.mxu0
      %v7543 = vadd.f32 %v432, %v7542
      %v7544 = vpop.f32.mrf.mxu0
      %v7545 = vpop.f32.mrf.mxu0
      %v7546 = vpop.f32.mrf.mxu0
      %7547 = vdwg.mxu0
      %v7549 = vsel %vm1069, %v7177, 0
      %v7552 = vsel %vm1069, %v7291, 0
      %7554 = vmatprep.subr.bf16.mxu0 0
      %7555 = vmatpush1.bf16.xpose.msra.mxu0 0
      %7556 = vmatprep.subr.bf16.mxu0 0
      %7557 = vmatpush1.bf16.xpose.msra.mxu0 0
      %7558 = vmatprep.subr.bf16.mxu0 0
      %7559 = vmatpush1.bf16.xpose.msra.mxu0 0
      %7560 = vmatprep.subr.bf16.mxu0 0
      %7561 = vmatpush1.bf16.xpose.msra.mxu0 0
      %7562 = vmatprep.subr.bf16.mxu0 0
      %7563 = vmatpush1.bf16.xpose.msra.mxu0 0
      %7564 = vmatprep.subr.bf16.mxu0 0
      %7565 = vmatpush1.bf16.xpose.msra.mxu0 0
      %7566 = vmatprep.subr.bf16.mxu0 0
      %7567 = vmatpush1.bf16.xpose.msra.mxu0 0
      %7568 = vmatprep.subr.bf16.mxu0 0
      %7569 = vmatpush1.bf16.xpose.msra.mxu0 %v7552
      %7570 = vmatprep.subr.bf16.mxu0 0
      %7571 = vmatpush2.bf16.xpose.msra.mxu0 0
      %7572 = vmatprep.subr.bf16.mxu0 0
      %7573 = vmatpush2.bf16.xpose.msra.mxu0 0
      %7574 = vmatprep.subr.bf16.mxu0 0
      %7575 = vmatpush2.bf16.xpose.msra.mxu0 0
      %7576 = vmatprep.subr.bf16.mxu0 0
      %7577 = vmatpush2.bf16.xpose.msra.mxu0 0
      %7578 = vmatprep.subr.bf16.mxu0 0
      %7579 = vmatpush2.bf16.xpose.msra.mxu0 0
      %7580 = vmatprep.subr.bf16.mxu0 0
      %7581 = vmatpush2.bf16.xpose.msra.mxu0 0
      %7582 = vmatprep.subr.bf16.mxu0 0
      %7583 = vmatpush2.bf16.xpose.msra.mxu0 0
      %7584 = vmatprep.subr.bf16.mxu0 0
      %7585 = vmatpush2.bf16.xpose.msra.mxu0 0
      %7586 = vmatprep.mubr.bf16.mxu0 0
      %7587 = vmatmul.mubr.bf16.gmra.mxu0 %v7549
      %v7588 = vpop.f32.mrf.mxu0
      %v7589 = vadd.f32 %v432, %v7588
      %v7590 = vpop.f32.mrf.mxu0
      %v7591 = vpop.f32.mrf.mxu0
      %v7592 = vpop.f32.mrf.mxu0
      %7593 = vdwg.mxu0
      %v7595 = vsel %vm1069, %v7178, 0
      %v7598 = vsel %vm1069, %v7292, 0
      %7600 = vmatprep.subr.bf16.mxu0 0
      %7601 = vmatpush1.bf16.xpose.msra.mxu0 0
      %7602 = vmatprep.subr.bf16.mxu0 0
      %7603 = vmatpush1.bf16.xpose.msra.mxu0 0
      %7604 = vmatprep.subr.bf16.mxu0 0
      %7605 = vmatpush1.bf16.xpose.msra.mxu0 0
      %7606 = vmatprep.subr.bf16.mxu0 0
      %7607 = vmatpush1.bf16.xpose.msra.mxu0 0
      %7608 = vmatprep.subr.bf16.mxu0 0
      %7609 = vmatpush1.bf16.xpose.msra.mxu0 0
      %7610 = vmatprep.subr.bf16.mxu0 0
      %7611 = vmatpush1.bf16.xpose.msra.mxu0 0
      %7612 = vmatprep.subr.bf16.mxu0 0
      %7613 = vmatpush1.bf16.xpose.msra.mxu0 0
      %7614 = vmatprep.subr.bf16.mxu0 0
      %7615 = vmatpush1.bf16.xpose.msra.mxu0 %v7598
      %7616 = vmatprep.subr.bf16.mxu0 0
      %7617 = vmatpush2.bf16.xpose.msra.mxu0 0
      %7618 = vmatprep.subr.bf16.mxu0 0
      %7619 = vmatpush2.bf16.xpose.msra.mxu0 0
      %7620 = vmatprep.subr.bf16.mxu0 0
      %7621 = vmatpush2.bf16.xpose.msra.mxu0 0
      %7622 = vmatprep.subr.bf16.mxu0 0
      %7623 = vmatpush2.bf16.xpose.msra.mxu0 0
      %7624 = vmatprep.subr.bf16.mxu0 0
      %7625 = vmatpush2.bf16.xpose.msra.mxu0 0
      %7626 = vmatprep.subr.bf16.mxu0 0
      %7627 = vmatpush2.bf16.xpose.msra.mxu0 0
      %7628 = vmatprep.subr.bf16.mxu0 0
      %7629 = vmatpush2.bf16.xpose.msra.mxu0 0
      %7630 = vmatprep.subr.bf16.mxu0 0
      %7631 = vmatpush2.bf16.xpose.msra.mxu0 0
      %7632 = vmatprep.mubr.bf16.mxu0 0
      %7633 = vmatmul.mubr.bf16.gmra.mxu0 %v7595
      %v7634 = vpop.f32.mrf.mxu0
      %v7635 = vadd.f32 %v432, %v7634
      %v7636 = vpop.f32.mrf.mxu0
      %v7637 = vpop.f32.mrf.mxu0
      %v7638 = vpop.f32.mrf.mxu0
      %7639 = vdwg.mxu0
      %v7641 = vsel %vm1069, %v7179, 0
      %v7644 = vsel %vm1069, %v7293, 0
      %7646 = vmatprep.subr.bf16.mxu0 0
      %7647 = vmatpush1.bf16.xpose.msra.mxu0 0
      %7648 = vmatprep.subr.bf16.mxu0 0
      %7649 = vmatpush1.bf16.xpose.msra.mxu0 0
      %7650 = vmatprep.subr.bf16.mxu0 0
      %7651 = vmatpush1.bf16.xpose.msra.mxu0 0
      %7652 = vmatprep.subr.bf16.mxu0 0
      %7653 = vmatpush1.bf16.xpose.msra.mxu0 0
      %7654 = vmatprep.subr.bf16.mxu0 0
      %7655 = vmatpush1.bf16.xpose.msra.mxu0 0
      %7656 = vmatprep.subr.bf16.mxu0 0
      %7657 = vmatpush1.bf16.xpose.msra.mxu0 0
      %7658 = vmatprep.subr.bf16.mxu0 0
      %7659 = vmatpush1.bf16.xpose.msra.mxu0 0
      %7660 = vmatprep.subr.bf16.mxu0 0
      %7661 = vmatpush1.bf16.xpose.msra.mxu0 %v7644
      %7662 = vmatprep.subr.bf16.mxu0 0
      %7663 = vmatpush2.bf16.xpose.msra.mxu0 0
      %7664 = vmatprep.subr.bf16.mxu0 0
      %7665 = vmatpush2.bf16.xpose.msra.mxu0 0
      %7666 = vmatprep.subr.bf16.mxu0 0
      %7667 = vmatpush2.bf16.xpose.msra.mxu0 0
      %7668 = vmatprep.subr.bf16.mxu0 0
      %7669 = vmatpush2.bf16.xpose.msra.mxu0 0
      %7670 = vmatprep.subr.bf16.mxu0 0
      %7671 = vmatpush2.bf16.xpose.msra.mxu0 0
      %7672 = vmatprep.subr.bf16.mxu0 0
      %7673 = vmatpush2.bf16.xpose.msra.mxu0 0
      %7674 = vmatprep.subr.bf16.mxu0 0
      %7675 = vmatpush2.bf16.xpose.msra.mxu0 0
      %7676 = vmatprep.subr.bf16.mxu0 0
      %7677 = vmatpush2.bf16.xpose.msra.mxu0 0
      %7678 = vmatprep.mubr.bf16.mxu0 0
      %7679 = vmatmul.mubr.bf16.gmra.mxu0 %v7641
      %v7680 = vpop.f32.mrf.mxu0
      %v7681 = vadd.f32 %v432, %v7680
      %v7682 = vpop.f32.mrf.mxu0
      %v7683 = vpop.f32.mrf.mxu0
      %v7684 = vpop.f32.mrf.mxu0
      %7685 = vdwg.mxu0
      %v7687 = vsel %vm1069, %v7180, 0
      %v7690 = vsel %vm1069, %v7294, 0
      %7692 = vmatprep.subr.bf16.mxu0 0
      %7693 = vmatpush1.bf16.xpose.msra.mxu0 0
      %7694 = vmatprep.subr.bf16.mxu0 0
      %7695 = vmatpush1.bf16.xpose.msra.mxu0 0
      %7696 = vmatprep.subr.bf16.mxu0 0
      %7697 = vmatpush1.bf16.xpose.msra.mxu0 0
      %7698 = vmatprep.subr.bf16.mxu0 0
      %7699 = vmatpush1.bf16.xpose.msra.mxu0 0
      %7700 = vmatprep.subr.bf16.mxu0 0
      %7701 = vmatpush1.bf16.xpose.msra.mxu0 0
      %7702 = vmatprep.subr.bf16.mxu0 0
      %7703 = vmatpush1.bf16.xpose.msra.mxu0 0
      %7704 = vmatprep.subr.bf16.mxu0 0
      %7705 = vmatpush1.bf16.xpose.msra.mxu0 0
      %7706 = vmatprep.subr.bf16.mxu0 0
      %7707 = vmatpush1.bf16.xpose.msra.mxu0 %v7690
      %7708 = vmatprep.subr.bf16.mxu0 0
      %7709 = vmatpush2.bf16.xpose.msra.mxu0 0
      %7710 = vmatprep.subr.bf16.mxu0 0
      %7711 = vmatpush2.bf16.xpose.msra.mxu0 0
      %7712 = vmatprep.subr.bf16.mxu0 0
      %7713 = vmatpush2.bf16.xpose.msra.mxu0 0
      %7714 = vmatprep.subr.bf16.mxu0 0
      %7715 = vmatpush2.bf16.xpose.msra.mxu0 0
      %7716 = vmatprep.subr.bf16.mxu0 0
      %7717 = vmatpush2.bf16.xpose.msra.mxu0 0
      %7718 = vmatprep.subr.bf16.mxu0 0
      %7719 = vmatpush2.bf16.xpose.msra.mxu0 0
      %7720 = vmatprep.subr.bf16.mxu0 0
      %7721 = vmatpush2.bf16.xpose.msra.mxu0 0
      %7722 = vmatprep.subr.bf16.mxu0 0
      %7723 = vmatpush2.bf16.xpose.msra.mxu0 0
      %7724 = vmatprep.mubr.bf16.mxu0 0
      %7725 = vmatmul.mubr.bf16.gmra.mxu0 %v7687
      %v7726 = vpop.f32.mrf.mxu0
      %v7727 = vadd.f32 %v432, %v7726
      %v7728 = vpop.f32.mrf.mxu0
      %v7729 = vpop.f32.mrf.mxu0
      %v7730 = vpop.f32.mrf.mxu0
      %7731 = vdwg.mxu0
      %v7733 = vsel %vm1069, %v7181, 0
      %v7736 = vsel %vm1069, %v7295, 0
      %7738 = vmatprep.subr.bf16.mxu0 0
      %7739 = vmatpush1.bf16.xpose.msra.mxu0 0
      %7740 = vmatprep.subr.bf16.mxu0 0
      %7741 = vmatpush1.bf16.xpose.msra.mxu0 0
      %7742 = vmatprep.subr.bf16.mxu0 0
      %7743 = vmatpush1.bf16.xpose.msra.mxu0 0
      %7744 = vmatprep.subr.bf16.mxu0 0
      %7745 = vmatpush1.bf16.xpose.msra.mxu0 0
      %7746 = vmatprep.subr.bf16.mxu0 0
      %7747 = vmatpush1.bf16.xpose.msra.mxu0 0
      %7748 = vmatprep.subr.bf16.mxu0 0
      %7749 = vmatpush1.bf16.xpose.msra.mxu0 0
      %7750 = vmatprep.subr.bf16.mxu0 0
      %7751 = vmatpush1.bf16.xpose.msra.mxu0 0
      %7752 = vmatprep.subr.bf16.mxu0 0
      %7753 = vmatpush1.bf16.xpose.msra.mxu0 %v7736
      %7754 = vmatprep.subr.bf16.mxu0 0
      %7755 = vmatpush2.bf16.xpose.msra.mxu0 0
      %7756 = vmatprep.subr.bf16.mxu0 0
      %7757 = vmatpush2.bf16.xpose.msra.mxu0 0
      %7758 = vmatprep.subr.bf16.mxu0 0
      %7759 = vmatpush2.bf16.xpose.msra.mxu0 0
      %7760 = vmatprep.subr.bf16.mxu0 0
      %7761 = vmatpush2.bf16.xpose.msra.mxu0 0
      %7762 = vmatprep.subr.bf16.mxu0 0
      %7763 = vmatpush2.bf16.xpose.msra.mxu0 0
      %7764 = vmatprep.subr.bf16.mxu0 0
      %7765 = vmatpush2.bf16.xpose.msra.mxu0 0
      %7766 = vmatprep.subr.bf16.mxu0 0
      %7767 = vmatpush2.bf16.xpose.msra.mxu0 0
      %7768 = vmatprep.subr.bf16.mxu0 0
      %7769 = vmatpush2.bf16.xpose.msra.mxu0 0
      %7770 = vmatprep.mubr.bf16.mxu0 0
      %7771 = vmatmul.mubr.bf16.gmra.mxu0 %v7733
      %v7772 = vpop.f32.mrf.mxu0
      %v7773 = vadd.f32 %v432, %v7772
      %v7774 = vpop.f32.mrf.mxu0
      %v7775 = vpop.f32.mrf.mxu0
      %v7776 = vpop.f32.mrf.mxu0
      %7777 = vdwg.mxu0
      %v7778 = vsel %vm1069, %v7451, -inf
      %7779 = vmax.xlane.f32.xlu0 %v7778
      %v7780 = vpop.xlane.xlu0 %7779
      %v7781 = vsel %vm1069, %v7497, -inf
      %7782 = vmax.xlane.f32.xlu0 %v7781
      %v7783 = vpop.xlane.xlu0 %7782
      %v7784 = vsel %vm1069, %v7543, -inf
      %7785 = vmax.xlane.f32.xlu0 %v7784
      %v7786 = vpop.xlane.xlu0 %7785
      %v7787 = vsel %vm1069, %v7589, -inf
      %7788 = vmax.xlane.f32.xlu0 %v7787
      %v7789 = vpop.xlane.xlu0 %7788
      %v7790 = vsel %vm1069, %v7635, -inf
      %7791 = vmax.xlane.f32.xlu0 %v7790
      %v7792 = vpop.xlane.xlu0 %7791
      %v7793 = vsel %vm1069, %v7681, -inf
      %7794 = vmax.xlane.f32.xlu0 %v7793
      %v7795 = vpop.xlane.xlu0 %7794
      %v7796 = vsel %vm1069, %v7727, -inf
      %7797 = vmax.xlane.f32.xlu0 %v7796
      %v7798 = vpop.xlane.xlu0 %7797
      %v7799 = vsel %vm1069, %v7773, -inf
      %7800 = vmax.xlane.f32.xlu0 %v7799
      %v7801 = vpop.xlane.xlu0 %7800
      %v7802 = vsub.f32 %v7451, %v7780
      %v7803 = vsub.f32 %v7497, %v7783
      %v7804 = vsub.f32 %v7543, %v7786
      %v7805 = vsub.f32 %v7589, %v7789
      %v7806 = vsub.f32 %v7635, %v7792
      %v7807 = vsub.f32 %v7681, %v7795
      %v7808 = vsub.f32 %v7727, %v7798
      %v7809 = vsub.f32 %v7773, %v7801
      %v7810 = vmul.f32 %v7802, 1.442695
      %v7811 = vpow.pop %v7810
      %v7812 = vmul.f32 %v7803, 1.442695
      %v7813 = vpow.pop %v7812
      %v7814 = vmul.f32 %v7804, 1.442695
      %v7815 = vpow.pop %v7814
      %v7816 = vmul.f32 %v7805, 1.442695
      %v7817 = vpow.pop %v7816
      %v7818 = vmul.f32 %v7806, 1.442695
      %v7819 = vpow.pop %v7818
      %v7820 = vmul.f32 %v7807, 1.442695
      %v7821 = vpow.pop %v7820
      %v7822 = vmul.f32 %v7808, 1.442695
      %v7823 = vpow.pop %v7822
      %v7824 = vmul.f32 %v7809, 1.442695
      %v7825 = vpow.pop %v7824
      %v7826 = vsel %vm1069, %v7811, 0.0
      %7827 = vadd.xlane.f32.xlu0 %v7826
      %v7828 = vpop.xlane.xlu0 %7827
      %v7829 = vsel %vm1069, %v7813, 0.0
      %7830 = vadd.xlane.f32.xlu0 %v7829
      %v7831 = vpop.xlane.xlu0 %7830
      %v7832 = vsel %vm1069, %v7815, 0.0
      %7833 = vadd.xlane.f32.xlu0 %v7832
      %v7834 = vpop.xlane.xlu0 %7833
      %v7835 = vsel %vm1069, %v7817, 0.0
      %7836 = vadd.xlane.f32.xlu0 %v7835
      %v7837 = vpop.xlane.xlu0 %7836
      %v7838 = vsel %vm1069, %v7819, 0.0
      %7839 = vadd.xlane.f32.xlu0 %v7838
      %v7840 = vpop.xlane.xlu0 %7839
      %v7841 = vsel %vm1069, %v7821, 0.0
      %7842 = vadd.xlane.f32.xlu0 %v7841
      %v7843 = vpop.xlane.xlu0 %7842
      %v7844 = vsel %vm1069, %v7823, 0.0
      %7845 = vadd.xlane.f32.xlu0 %v7844
      %v7846 = vpop.xlane.xlu0 %7845
      %v7847 = vsel %vm1069, %v7825, 0.0
      %7848 = vadd.xlane.f32.xlu0 %v7847
      %v7849 = vpop.xlane.xlu0 %7848
      %v7850 = vrcp.pop %v7828
      %v7851 = vrcp.pop %v7831
      %v7852 = vrcp.pop %v7834
      %v7853 = vrcp.pop %v7837
      %v7854 = vrcp.pop %v7840
      %v7855 = vrcp.pop %v7843
      %v7856 = vrcp.pop %v7846
      %v7857 = vrcp.pop %v7849
      %v7858 = vmul.f32 %v7811, %v7850
      %v7859 = vmul.f32 %v7813, %v7851
      %v7860 = vmul.f32 %v7815, %v7852
      %v7861 = vmul.f32 %v7817, %v7853
      %v7862 = vmul.f32 %v7819, %v7854
      %v7863 = vmul.f32 %v7821, %v7855
      %v7864 = vmul.f32 %v7823, %v7856
      %v7865 = vmul.f32 %v7825, %v7857
      %v7866 = vpack.c.bf16 %v7858, %v7858
      %v7867 = vpack.c.bf16 %v7859, %v7859
      %v7868 = vpack.c.bf16 %v7860, %v7860
      %v7869 = vpack.c.bf16 %v7861, %v7861
      %v7870 = vpack.c.bf16 %v7862, %v7862
      %v7871 = vpack.c.bf16 %v7863, %v7863
      %v7872 = vpack.c.bf16 %v7864, %v7864
      %v7873 = vpack.c.bf16 %v7865, %v7865
      %v7875 = vsel %vm1069, %v7866, 0
      %v7878 = vsel %vm1537, %v7402, 0
      %7880 = vmatprep.subr.bf16.mxu0 0
      %7881 = vmatpush1.bf16.msra.mxu0 0
      %7882 = vmatprep.subr.bf16.mxu0 0
      %7883 = vmatpush1.bf16.msra.mxu0 0
      %7884 = vmatprep.subr.bf16.mxu0 0
      %7885 = vmatpush1.bf16.msra.mxu0 0
      %7886 = vmatprep.subr.bf16.mxu0 0
      %7887 = vmatpush1.bf16.msra.mxu0 0
      %7888 = vmatprep.subr.bf16.mxu0 0
      %7889 = vmatpush1.bf16.msra.mxu0 0
      %7890 = vmatprep.subr.bf16.mxu0 0
      %7891 = vmatpush1.bf16.msra.mxu0 0
      %7892 = vmatprep.subr.bf16.mxu0 0
      %7893 = vmatpush1.bf16.msra.mxu0 0
      %7894 = vmatprep.subr.bf16.mxu0 0
      %7895 = vmatpush1.bf16.msra.mxu0 %v7878
      %7896 = vmatprep.subr.bf16.mxu0 0
      %7897 = vmatpush2.bf16.msra.mxu0 0
      %7898 = vmatprep.subr.bf16.mxu0 0
      %7899 = vmatpush2.bf16.msra.mxu0 0
      %7900 = vmatprep.subr.bf16.mxu0 0
      %7901 = vmatpush2.bf16.msra.mxu0 0
      %7902 = vmatprep.subr.bf16.mxu0 0
      %7903 = vmatpush2.bf16.msra.mxu0 0
      %7904 = vmatprep.subr.bf16.mxu0 0
      %7905 = vmatpush2.bf16.msra.mxu0 0
      %7906 = vmatprep.subr.bf16.mxu0 0
      %7907 = vmatpush2.bf16.msra.mxu0 0
      %7908 = vmatprep.subr.bf16.mxu0 0
      %7909 = vmatpush2.bf16.msra.mxu0 0
      %7910 = vmatprep.subr.bf16.mxu0 0
      %7911 = vmatpush2.bf16.msra.mxu0 0
      %7912 = vmatprep.mubr.bf16.mxu0 0
      %7913 = vmatmul.mubr.bf16.gmra.mxu0 %v7875
      %v7914 = vpop.f32.mrf.mxu0
      %v7915 = vadd.f32 0.0, %v7914
      %v7916 = vpop.f32.mrf.mxu0
      %v7917 = vpop.f32.mrf.mxu0
      %v7918 = vpop.f32.mrf.mxu0
      %7919 = vdwg.mxu0
      %v7921 = vsel %vm1069, %v7867, 0
      %v7924 = vsel %vm1537, %v7403, 0
      %7926 = vmatprep.subr.bf16.mxu0 0
      %7927 = vmatpush1.bf16.msra.mxu0 0
      %7928 = vmatprep.subr.bf16.mxu0 0
      %7929 = vmatpush1.bf16.msra.mxu0 0
      %7930 = vmatprep.subr.bf16.mxu0 0
      %7931 = vmatpush1.bf16.msra.mxu0 0
      %7932 = vmatprep.subr.bf16.mxu0 0
      %7933 = vmatpush1.bf16.msra.mxu0 0
      %7934 = vmatprep.subr.bf16.mxu0 0
      %7935 = vmatpush1.bf16.msra.mxu0 0
      %7936 = vmatprep.subr.bf16.mxu0 0
      %7937 = vmatpush1.bf16.msra.mxu0 0
      %7938 = vmatprep.subr.bf16.mxu0 0
      %7939 = vmatpush1.bf16.msra.mxu0 0
      %7940 = vmatprep.subr.bf16.mxu0 0
      %7941 = vmatpush1.bf16.msra.mxu0 %v7924
      %7942 = vmatprep.subr.bf16.mxu0 0
      %7943 = vmatpush2.bf16.msra.mxu0 0
      %7944 = vmatprep.subr.bf16.mxu0 0
      %7945 = vmatpush2.bf16.msra.mxu0 0
      %7946 = vmatprep.subr.bf16.mxu0 0
      %7947 = vmatpush2.bf16.msra.mxu0 0
      %7948 = vmatprep.subr.bf16.mxu0 0
      %7949 = vmatpush2.bf16.msra.mxu0 0
      %7950 = vmatprep.subr.bf16.mxu0 0
      %7951 = vmatpush2.bf16.msra.mxu0 0
      %7952 = vmatprep.subr.bf16.mxu0 0
      %7953 = vmatpush2.bf16.msra.mxu0 0
      %7954 = vmatprep.subr.bf16.mxu0 0
      %7955 = vmatpush2.bf16.msra.mxu0 0
      %7956 = vmatprep.subr.bf16.mxu0 0
      %7957 = vmatpush2.bf16.msra.mxu0 0
      %7958 = vmatprep.mubr.bf16.mxu0 0
      %7959 = vmatmul.mubr.bf16.gmra.mxu0 %v7921
      %v7960 = vpop.f32.mrf.mxu0
      %v7961 = vadd.f32 0.0, %v7960
      %v7962 = vpop.f32.mrf.mxu0
      %v7963 = vpop.f32.mrf.mxu0
      %v7964 = vpop.f32.mrf.mxu0
      %7965 = vdwg.mxu0
      %v7967 = vsel %vm1069, %v7868, 0
      %v7970 = vsel %vm1537, %v7404, 0
      %7972 = vmatprep.subr.bf16.mxu0 0
      %7973 = vmatpush1.bf16.msra.mxu0 0
      %7974 = vmatprep.subr.bf16.mxu0 0
      %7975 = vmatpush1.bf16.msra.mxu0 0
      %7976 = vmatprep.subr.bf16.mxu0 0
      %7977 = vmatpush1.bf16.msra.mxu0 0
      %7978 = vmatprep.subr.bf16.mxu0 0
      %7979 = vmatpush1.bf16.msra.mxu0 0
      %7980 = vmatprep.subr.bf16.mxu0 0
      %7981 = vmatpush1.bf16.msra.mxu0 0
      %7982 = vmatprep.subr.bf16.mxu0 0
      %7983 = vmatpush1.bf16.msra.mxu0 0
      %7984 = vmatprep.subr.bf16.mxu0 0
      %7985 = vmatpush1.bf16.msra.mxu0 0
      %7986 = vmatprep.subr.bf16.mxu0 0
      %7987 = vmatpush1.bf16.msra.mxu0 %v7970
      %7988 = vmatprep.subr.bf16.mxu0 0
      %7989 = vmatpush2.bf16.msra.mxu0 0
      %7990 = vmatprep.subr.bf16.mxu0 0
      %7991 = vmatpush2.bf16.msra.mxu0 0
      %7992 = vmatprep.subr.bf16.mxu0 0
      %7993 = vmatpush2.bf16.msra.mxu0 0
      %7994 = vmatprep.subr.bf16.mxu0 0
      %7995 = vmatpush2.bf16.msra.mxu0 0
      %7996 = vmatprep.subr.bf16.mxu0 0
      %7997 = vmatpush2.bf16.msra.mxu0 0
      %7998 = vmatprep.subr.bf16.mxu0 0
      %7999 = vmatpush2.bf16.msra.mxu0 0
      %8000 = vmatprep.subr.bf16.mxu0 0
      %8001 = vmatpush2.bf16.msra.mxu0 0
      %8002 = vmatprep.subr.bf16.mxu0 0
      %8003 = vmatpush2.bf16.msra.mxu0 0
      %8004 = vmatprep.mubr.bf16.mxu0 0
      %8005 = vmatmul.mubr.bf16.gmra.mxu0 %v7967
      %v8006 = vpop.f32.mrf.mxu0
      %v8007 = vadd.f32 0.0, %v8006
      %v8008 = vpop.f32.mrf.mxu0
      %v8009 = vpop.f32.mrf.mxu0
      %v8010 = vpop.f32.mrf.mxu0
      %8011 = vdwg.mxu0
      %v8013 = vsel %vm1069, %v7869, 0
      %v8016 = vsel %vm1537, %v7405, 0
      %8018 = vmatprep.subr.bf16.mxu0 0
      %8019 = vmatpush1.bf16.msra.mxu0 0
      %8020 = vmatprep.subr.bf16.mxu0 0
      %8021 = vmatpush1.bf16.msra.mxu0 0
      %8022 = vmatprep.subr.bf16.mxu0 0
      %8023 = vmatpush1.bf16.msra.mxu0 0
      %8024 = vmatprep.subr.bf16.mxu0 0
      %8025 = vmatpush1.bf16.msra.mxu0 0
      %8026 = vmatprep.subr.bf16.mxu0 0
      %8027 = vmatpush1.bf16.msra.mxu0 0
      %8028 = vmatprep.subr.bf16.mxu0 0
      %8029 = vmatpush1.bf16.msra.mxu0 0
      %8030 = vmatprep.subr.bf16.mxu0 0
      %8031 = vmatpush1.bf16.msra.mxu0 0
      %8032 = vmatprep.subr.bf16.mxu0 0
      %8033 = vmatpush1.bf16.msra.mxu0 %v8016
      %8034 = vmatprep.subr.bf16.mxu0 0
      %8035 = vmatpush2.bf16.msra.mxu0 0
      %8036 = vmatprep.subr.bf16.mxu0 0
      %8037 = vmatpush2.bf16.msra.mxu0 0
      %8038 = vmatprep.subr.bf16.mxu0 0
      %8039 = vmatpush2.bf16.msra.mxu0 0
      %8040 = vmatprep.subr.bf16.mxu0 0
      %8041 = vmatpush2.bf16.msra.mxu0 0
      %8042 = vmatprep.subr.bf16.mxu0 0
      %8043 = vmatpush2.bf16.msra.mxu0 0
      %8044 = vmatprep.subr.bf16.mxu0 0
      %8045 = vmatpush2.bf16.msra.mxu0 0
      %8046 = vmatprep.subr.bf16.mxu0 0
      %8047 = vmatpush2.bf16.msra.mxu0 0
      %8048 = vmatprep.subr.bf16.mxu0 0
      %8049 = vmatpush2.bf16.msra.mxu0 0
      %8050 = vmatprep.mubr.bf16.mxu0 0
      %8051 = vmatmul.mubr.bf16.gmra.mxu0 %v8013
      %v8052 = vpop.f32.mrf.mxu0
      %v8053 = vadd.f32 0.0, %v8052
      %v8054 = vpop.f32.mrf.mxu0
      %v8055 = vpop.f32.mrf.mxu0
      %v8056 = vpop.f32.mrf.mxu0
      %8057 = vdwg.mxu0
      %v8059 = vsel %vm1069, %v7870, 0
      %v8062 = vsel %vm1537, %v7406, 0
      %8064 = vmatprep.subr.bf16.mxu0 0
      %8065 = vmatpush1.bf16.msra.mxu0 0
      %8066 = vmatprep.subr.bf16.mxu0 0
      %8067 = vmatpush1.bf16.msra.mxu0 0
      %8068 = vmatprep.subr.bf16.mxu0 0
      %8069 = vmatpush1.bf16.msra.mxu0 0
      %8070 = vmatprep.subr.bf16.mxu0 0
      %8071 = vmatpush1.bf16.msra.mxu0 0
      %8072 = vmatprep.subr.bf16.mxu0 0
      %8073 = vmatpush1.bf16.msra.mxu0 0
      %8074 = vmatprep.subr.bf16.mxu0 0
      %8075 = vmatpush1.bf16.msra.mxu0 0
      %8076 = vmatprep.subr.bf16.mxu0 0
      %8077 = vmatpush1.bf16.msra.mxu0 0
      %8078 = vmatprep.subr.bf16.mxu0 0
      %8079 = vmatpush1.bf16.msra.mxu0 %v8062
      %8080 = vmatprep.subr.bf16.mxu0 0
      %8081 = vmatpush2.bf16.msra.mxu0 0
      %8082 = vmatprep.subr.bf16.mxu0 0
      %8083 = vmatpush2.bf16.msra.mxu0 0
      %8084 = vmatprep.subr.bf16.mxu0 0
      %8085 = vmatpush2.bf16.msra.mxu0 0
      %8086 = vmatprep.subr.bf16.mxu0 0
      %8087 = vmatpush2.bf16.msra.mxu0 0
      %8088 = vmatprep.subr.bf16.mxu0 0
      %8089 = vmatpush2.bf16.msra.mxu0 0
      %8090 = vmatprep.subr.bf16.mxu0 0
      %8091 = vmatpush2.bf16.msra.mxu0 0
      %8092 = vmatprep.subr.bf16.mxu0 0
      %8093 = vmatpush2.bf16.msra.mxu0 0
      %8094 = vmatprep.subr.bf16.mxu0 0
      %8095 = vmatpush2.bf16.msra.mxu0 0
      %8096 = vmatprep.mubr.bf16.mxu0 0
      %8097 = vmatmul.mubr.bf16.gmra.mxu0 %v8059
      %v8098 = vpop.f32.mrf.mxu0
      %v8099 = vadd.f32 0.0, %v8098
      %v8100 = vpop.f32.mrf.mxu0
      %v8101 = vpop.f32.mrf.mxu0
      %v8102 = vpop.f32.mrf.mxu0
      %8103 = vdwg.mxu0
      %v8105 = vsel %vm1069, %v7871, 0
      %v8108 = vsel %vm1537, %v7407, 0
      %8110 = vmatprep.subr.bf16.mxu0 0
      %8111 = vmatpush1.bf16.msra.mxu0 0
      %8112 = vmatprep.subr.bf16.mxu0 0
      %8113 = vmatpush1.bf16.msra.mxu0 0
      %8114 = vmatprep.subr.bf16.mxu0 0
      %8115 = vmatpush1.bf16.msra.mxu0 0
      %8116 = vmatprep.subr.bf16.mxu0 0
      %8117 = vmatpush1.bf16.msra.mxu0 0
      %8118 = vmatprep.subr.bf16.mxu0 0
      %8119 = vmatpush1.bf16.msra.mxu0 0
      %8120 = vmatprep.subr.bf16.mxu0 0
      %8121 = vmatpush1.bf16.msra.mxu0 0
      %8122 = vmatprep.subr.bf16.mxu0 0
      %8123 = vmatpush1.bf16.msra.mxu0 0
      %8124 = vmatprep.subr.bf16.mxu0 0
      %8125 = vmatpush1.bf16.msra.mxu0 %v8108
      %8126 = vmatprep.subr.bf16.mxu0 0
      %8127 = vmatpush2.bf16.msra.mxu0 0
      %8128 = vmatprep.subr.bf16.mxu0 0
      %8129 = vmatpush2.bf16.msra.mxu0 0
      %8130 = vmatprep.subr.bf16.mxu0 0
      %8131 = vmatpush2.bf16.msra.mxu0 0
      %8132 = vmatprep.subr.bf16.mxu0 0
      %8133 = vmatpush2.bf16.msra.mxu0 0
      %8134 = vmatprep.subr.bf16.mxu0 0
      %8135 = vmatpush2.bf16.msra.mxu0 0
      %8136 = vmatprep.subr.bf16.mxu0 0
      %8137 = vmatpush2.bf16.msra.mxu0 0
      %8138 = vmatprep.subr.bf16.mxu0 0
      %8139 = vmatpush2.bf16.msra.mxu0 0
      %8140 = vmatprep.subr.bf16.mxu0 0
      %8141 = vmatpush2.bf16.msra.mxu0 0
      %8142 = vmatprep.mubr.bf16.mxu0 0
      %8143 = vmatmul.mubr.bf16.gmra.mxu0 %v8105
      %v8144 = vpop.f32.mrf.mxu0
      %v8145 = vadd.f32 0.0, %v8144
      %v8146 = vpop.f32.mrf.mxu0
      %v8147 = vpop.f32.mrf.mxu0
      %v8148 = vpop.f32.mrf.mxu0
      %8149 = vdwg.mxu0
      %v8151 = vsel %vm1069, %v7872, 0
      %v8154 = vsel %vm1537, %v7408, 0
      %8156 = vmatprep.subr.bf16.mxu0 0
      %8157 = vmatpush1.bf16.msra.mxu0 0
      %8158 = vmatprep.subr.bf16.mxu0 0
      %8159 = vmatpush1.bf16.msra.mxu0 0
      %8160 = vmatprep.subr.bf16.mxu0 0
      %8161 = vmatpush1.bf16.msra.mxu0 0
      %8162 = vmatprep.subr.bf16.mxu0 0
      %8163 = vmatpush1.bf16.msra.mxu0 0
      %8164 = vmatprep.subr.bf16.mxu0 0
      %8165 = vmatpush1.bf16.msra.mxu0 0
      %8166 = vmatprep.subr.bf16.mxu0 0
      %8167 = vmatpush1.bf16.msra.mxu0 0
      %8168 = vmatprep.subr.bf16.mxu0 0
      %8169 = vmatpush1.bf16.msra.mxu0 0
      %8170 = vmatprep.subr.bf16.mxu0 0
      %8171 = vmatpush1.bf16.msra.mxu0 %v8154
      %8172 = vmatprep.subr.bf16.mxu0 0
      %8173 = vmatpush2.bf16.msra.mxu0 0
      %8174 = vmatprep.subr.bf16.mxu0 0
      %8175 = vmatpush2.bf16.msra.mxu0 0
      %8176 = vmatprep.subr.bf16.mxu0 0
      %8177 = vmatpush2.bf16.msra.mxu0 0
      %8178 = vmatprep.subr.bf16.mxu0 0
      %8179 = vmatpush2.bf16.msra.mxu0 0
      %8180 = vmatprep.subr.bf16.mxu0 0
      %8181 = vmatpush2.bf16.msra.mxu0 0
      %8182 = vmatprep.subr.bf16.mxu0 0
      %8183 = vmatpush2.bf16.msra.mxu0 0
      %8184 = vmatprep.subr.bf16.mxu0 0
      %8185 = vmatpush2.bf16.msra.mxu0 0
      %8186 = vmatprep.subr.bf16.mxu0 0
      %8187 = vmatpush2.bf16.msra.mxu0 0
      %8188 = vmatprep.mubr.bf16.mxu0 0
      %8189 = vmatmul.mubr.bf16.gmra.mxu0 %v8151
      %v8190 = vpop.f32.mrf.mxu0
      %v8191 = vadd.f32 0.0, %v8190
      %v8192 = vpop.f32.mrf.mxu0
      %v8193 = vpop.f32.mrf.mxu0
      %v8194 = vpop.f32.mrf.mxu0
      %8195 = vdwg.mxu0
      %v8197 = vsel %vm1069, %v7873, 0
      %v8200 = vsel %vm1537, %v7409, 0
      %8202 = vmatprep.subr.bf16.mxu0 0
      %8203 = vmatpush1.bf16.msra.mxu0 0
      %8204 = vmatprep.subr.bf16.mxu0 0
      %8205 = vmatpush1.bf16.msra.mxu0 0
      %8206 = vmatprep.subr.bf16.mxu0 0
      %8207 = vmatpush1.bf16.msra.mxu0 0
      %8208 = vmatprep.subr.bf16.mxu0 0
      %8209 = vmatpush1.bf16.msra.mxu0 0
      %8210 = vmatprep.subr.bf16.mxu0 0
      %8211 = vmatpush1.bf16.msra.mxu0 0
      %8212 = vmatprep.subr.bf16.mxu0 0
      %8213 = vmatpush1.bf16.msra.mxu0 0
      %8214 = vmatprep.subr.bf16.mxu0 0
      %8215 = vmatpush1.bf16.msra.mxu0 0
      %8216 = vmatprep.subr.bf16.mxu0 0
      %8217 = vmatpush1.bf16.msra.mxu0 %v8200
      %8218 = vmatprep.subr.bf16.mxu0 0
      %8219 = vmatpush2.bf16.msra.mxu0 0
      %8220 = vmatprep.subr.bf16.mxu0 0
      %8221 = vmatpush2.bf16.msra.mxu0 0
      %8222 = vmatprep.subr.bf16.mxu0 0
      %8223 = vmatpush2.bf16.msra.mxu0 0
      %8224 = vmatprep.subr.bf16.mxu0 0
      %8225 = vmatpush2.bf16.msra.mxu0 0
      %8226 = vmatprep.subr.bf16.mxu0 0
      %8227 = vmatpush2.bf16.msra.mxu0 0
      %8228 = vmatprep.subr.bf16.mxu0 0
      %8229 = vmatpush2.bf16.msra.mxu0 0
      %8230 = vmatprep.subr.bf16.mxu0 0
      %8231 = vmatpush2.bf16.msra.mxu0 0
      %8232 = vmatprep.subr.bf16.mxu0 0
      %8233 = vmatpush2.bf16.msra.mxu0 0
      %8234 = vmatprep.mubr.bf16.mxu0 0
      %8235 = vmatmul.mubr.bf16.gmra.mxu0 %v8197
      %v8236 = vpop.f32.mrf.mxu0
      %v8237 = vadd.f32 0.0, %v8236
      %v8238 = vpop.f32.mrf.mxu0
      %v8239 = vpop.f32.mrf.mxu0
      %v8240 = vpop.f32.mrf.mxu0
      %8241 = vdwg.mxu0
      %v8242 = vpack.c.bf16 %v7961, %v7915
      %v8243 = vpack.c.bf16 %v8053, %v8007
      %v8244 = vpack.c.bf16 %v8145, %v8099
      %v8245 = vpack.c.bf16 %v8237, %v8191
      %s8246 = scalar_lea.vmem %s8, 24
      %v8247 = vld [vmem:[%s8246] sm:$0xf]
      %v8249 = vsel %vm1069, %v8242, 0
      %v8252 = vsel %vm1069, %v8243, 0
      %v8255 = vsel %vm1069, %v8244, 0
      %v8258 = vsel %vm1069, %v8245, 0
      %v8261 = vsel %vm1537, %v8247, 0
      %8263 = vmatprep.subr.bf16.mxu0 0
      %8264 = vmatpush1.bf16.msra.mxu0 0
      %8265 = vmatprep.subr.bf16.mxu0 0
      %8266 = vmatpush1.bf16.msra.mxu0 0
      %8267 = vmatprep.subr.bf16.mxu0 0
      %8268 = vmatpush1.bf16.msra.mxu0 0
      %8269 = vmatprep.subr.bf16.mxu0 0
      %8270 = vmatpush1.bf16.msra.mxu0 0
      %8271 = vmatprep.subr.bf16.mxu0 0
      %8272 = vmatpush1.bf16.msra.mxu0 0
      %8273 = vmatprep.subr.bf16.mxu0 0
      %8274 = vmatpush1.bf16.msra.mxu0 0
      %8275 = vmatprep.subr.bf16.mxu0 0
      %8276 = vmatpush1.bf16.msra.mxu0 0
      %8277 = vmatprep.subr.bf16.mxu0 0
      %8278 = vmatpush1.bf16.msra.mxu0 %v8261
      %8279 = vmatprep.subr.bf16.mxu0 0
      %8280 = vmatpush2.bf16.msra.mxu0 0
      %8281 = vmatprep.subr.bf16.mxu0 0
      %8282 = vmatpush2.bf16.msra.mxu0 0
      %8283 = vmatprep.subr.bf16.mxu0 0
      %8284 = vmatpush2.bf16.msra.mxu0 0
      %8285 = vmatprep.subr.bf16.mxu0 0
      %8286 = vmatpush2.bf16.msra.mxu0 0
      %8287 = vmatprep.subr.bf16.mxu0 0
      %8288 = vmatpush2.bf16.msra.mxu0 0
      %8289 = vmatprep.subr.bf16.mxu0 0
      %8290 = vmatpush2.bf16.msra.mxu0 0
      %8291 = vmatprep.subr.bf16.mxu0 0
      %8292 = vmatpush2.bf16.msra.mxu0 0
      %8293 = vmatprep.subr.bf16.mxu0 0
      %8294 = vmatpush2.bf16.msra.mxu0 0
      %8295 = vmatprep.mubr.bf16.mxu0 0
      %8296 = vmatmul.mubr.bf16.gmra.mxu0 %v8249
      %v8297 = vpop.f32.mrf.mxu0
      %v8298 = vadd.f32 0.0, %v8297
      %v8299 = vpop.f32.mrf.mxu0
      %v8300 = vpop.f32.mrf.mxu0
      %v8301 = vadd.f32 0.0, %v8300
      %v8302 = vpop.f32.mrf.mxu0
      %8303 = vmatprep.mubr.bf16.mxu0 0
      %8304 = vmatmul.mubr.bf16.gmra.mxu0 %v8252
      %v8305 = vpop.f32.mrf.mxu0
      %v8306 = vadd.f32 0.0, %v8305
      %v8307 = vpop.f32.mrf.mxu0
      %v8308 = vpop.f32.mrf.mxu0
      %v8309 = vadd.f32 0.0, %v8308
      %v8310 = vpop.f32.mrf.mxu0
      %8311 = vmatprep.mubr.bf16.mxu0 0
      %8312 = vmatmul.mubr.bf16.gmra.mxu0 %v8255
      %v8313 = vpop.f32.mrf.mxu0
      %v8314 = vadd.f32 0.0, %v8313
      %v8315 = vpop.f32.mrf.mxu0
      %v8316 = vpop.f32.mrf.mxu0
      %v8317 = vadd.f32 0.0, %v8316
      %v8318 = vpop.f32.mrf.mxu0
      %8319 = vmatprep.mubr.bf16.mxu0 0
      %8320 = vmatmul.mubr.bf16.gmra.mxu0 %v8258
      %v8321 = vpop.f32.mrf.mxu0
      %v8322 = vadd.f32 0.0, %v8321
      %v8323 = vpop.f32.mrf.mxu0
      %v8324 = vpop.f32.mrf.mxu0
      %v8325 = vadd.f32 0.0, %v8324
      %v8326 = vpop.f32.mrf.mxu0
      %8327 = vdwg.mxu0
      %v8328 = vadd.f32 %v7060, %v8298
      %v8329 = vadd.f32 %v7061, %v8301
      %v8330 = vadd.f32 %v7062, %v8306
      %v8331 = vadd.f32 %v7063, %v8309
      %v8332 = vadd.f32 %v7064, %v8314
      %v8333 = vadd.f32 %v7065, %v8317
      %v8334 = vadd.f32 %v7066, %v8322
      %v8335 = vadd.f32 %v7067, %v8325
      %s8336 = scalar_lea.vmem %s6, 48
      %v8337 = vld [vmem:[%s8336] sm:$0xf]
      %v8338 = vld [vmem:[%s8336 + $0x4] sm:$0xf]
      %v8339 = vld [vmem:[%s8336 + $0x8] sm:$0xf]
      %v8340 = vld [vmem:[%s8336 + $0xc] sm:$0xf]
      %s8341 = scalar_lea.vmem %s7, 3
      %v8342 = vld [vmem:[%s8341] sm:$0x1]
      %v8344 = vlaneseq
      %v8345 = vshrl.u32 %v8344, 7
      %v8346 = vsub.s32 0, %v8345
      %v8347 = vrot.slane %v8342, %v8346
      %v8353 = vunpack.c.l.b16 %v8337
      %v8354 = vunpack.c.l.b16 %v8338
      %v8355 = vunpack.c.l.b16 %v8339
      %v8356 = vunpack.c.l.b16 %v8340
      %v8357 = vpack.c.b16 %v8354, %v8353
      %v8358 = vpack.c.b16 %v8356, %v8355
      %8361 = vmatprep.subr.bf16.mxu0 0
      %8362 = vmatpush1.bf16.msra.mxu0 0
      %8363 = vmatprep.subr.bf16.mxu0 0
      %8364 = vmatpush1.bf16.msra.mxu0 0
      %8365 = vmatprep.subr.bf16.mxu0 0
      %8366 = vmatpush1.bf16.msra.mxu0 0
      %8367 = vmatprep.subr.bf16.mxu0 0
      %8368 = vmatpush1.bf16.msra.mxu0 0
      %8369 = vmatprep.subr.bf16.mxu0 0
      %8370 = vmatpush1.bf16.msra.mxu0 0
      %8371 = vmatprep.subr.bf16.mxu0 0
      %8372 = vmatpush1.bf16.msra.mxu0 0
      %8373 = vmatprep.subr.bf16.mxu0 0
      %8374 = vmatpush1.bf16.msra.mxu0 %v8358
      %8375 = vmatprep.subr.bf16.mxu0 0
      %8376 = vmatpush1.bf16.msra.mxu0 %v8357
      %8377 = vmatprep.subr.bf16.mxu0 0
      %8378 = vmatpush2.bf16.msra.mxu0 0
      %8379 = vmatprep.subr.bf16.mxu0 0
      %8380 = vmatpush2.bf16.msra.mxu0 0
      %8381 = vmatprep.subr.bf16.mxu0 0
      %8382 = vmatpush2.bf16.msra.mxu0 0
      %8383 = vmatprep.subr.bf16.mxu0 0
      %8384 = vmatpush2.bf16.msra.mxu0 0
      %8385 = vmatprep.subr.bf16.mxu0 0
      %8386 = vmatpush2.bf16.msra.mxu0 0
      %8387 = vmatprep.subr.bf16.mxu0 0
      %8388 = vmatpush2.bf16.msra.mxu0 0
      %8389 = vmatprep.subr.bf16.mxu0 0
      %8390 = vmatpush2.bf16.msra.mxu0 0
      %8391 = vmatprep.subr.bf16.mxu0 0
      %8392 = vmatpush2.bf16.msra.mxu0 0
      %8393 = vmatprep.mubr.bf16.mxu0 0
      %8394 = vmatmul.mubr.bf16.gmra.mxu0 %v729
      %v8395 = vpop.f32.mrf.mxu0
      %v8396 = vadd.f32 %v8347, %v8395
      %v8397 = vpop.f32.mrf.mxu0
      %v8398 = vpop.f32.mrf.mxu0
      %v8399 = vadd.f32 %v8347, %v8398
      %v8400 = vpop.f32.mrf.mxu0
      %8401 = vmatprep.mubr.bf16.mxu0 0
      %8402 = vmatmul.mubr.bf16.gmra.mxu0 %v732
      %v8403 = vpop.f32.mrf.mxu0
      %v8404 = vadd.f32 %v8347, %v8403
      %v8405 = vpop.f32.mrf.mxu0
      %v8406 = vpop.f32.mrf.mxu0
      %v8407 = vadd.f32 %v8347, %v8406
      %v8408 = vpop.f32.mrf.mxu0
      %8409 = vmatprep.mubr.bf16.mxu0 0
      %8410 = vmatmul.mubr.bf16.gmra.mxu0 %v735
      %v8411 = vpop.f32.mrf.mxu0
      %v8412 = vadd.f32 %v8347, %v8411
      %v8413 = vpop.f32.mrf.mxu0
      %v8414 = vpop.f32.mrf.mxu0
      %v8415 = vadd.f32 %v8347, %v8414
      %v8416 = vpop.f32.mrf.mxu0
      %8417 = vmatprep.mubr.bf16.mxu0 0
      %8418 = vmatmul.mubr.bf16.gmra.mxu0 %v738
      %v8419 = vpop.f32.mrf.mxu0
      %v8420 = vadd.f32 %v8347, %v8419
      %v8421 = vpop.f32.mrf.mxu0
      %v8422 = vpop.f32.mrf.mxu0
      %v8423 = vadd.f32 %v8347, %v8422
      %v8424 = vpop.f32.mrf.mxu0
      %8425 = vdwg.mxu0
      %v8426 = vpack.c.bf16 %v8399, %v8396
      %v8427 = vpack.c.bf16 %v8407, %v8404
      %v8428 = vpack.c.bf16 %v8415, %v8412
      %v8429 = vpack.c.bf16 %v8423, %v8420
      %v8434 = vunpack.c.l.b16 %v8426
      %v8435 = vunpack.c.h.b16 %v8426
      %v8436 = vunpack.c.l.b16 %v8427
      %v8437 = vunpack.c.h.b16 %v8427
      %v8438 = vunpack.c.l.b16 %v8428
      %v8439 = vunpack.c.h.b16 %v8428
      %v8440 = vunpack.c.l.b16 %v8429
      %v8441 = vunpack.c.h.b16 %v8429
      %v8442 = vpack.c.b16 %v8434, %v8434
      %v8443 = vpack.c.b16 %v8435, %v8435
      %v8444 = vpack.c.b16 %v8436, %v8436
      %v8445 = vpack.c.b16 %v8437, %v8437
      %v8446 = vpack.c.b16 %v8438, %v8438
      %v8447 = vpack.c.b16 %v8439, %v8439
      %v8448 = vpack.c.b16 %v8440, %v8440
      %v8449 = vpack.c.b16 %v8441, %v8441
      %s8450 = scalar_lea.vmem %s6, 112
      %v8451 = vld [vmem:[%s8450] sm:$0xf]
      %v8452 = vld [vmem:[%s8450 + $0x4] sm:$0xf]
      %v8453 = vld [vmem:[%s8450 + $0x8] sm:$0xf]
      %v8454 = vld [vmem:[%s8450 + $0xc] sm:$0xf]
      %s8455 = scalar_lea.vmem %s7, 7
      %v8456 = vld [vmem:[%s8455] sm:$0x1]
      %v8458 = vlaneseq
      %v8459 = vshrl.u32 %v8458, 7
      %v8460 = vsub.s32 0, %v8459
      %v8461 = vrot.slane %v8456, %v8460
      %v8467 = vunpack.c.l.b16 %v8451
      %v8468 = vunpack.c.l.b16 %v8452
      %v8469 = vunpack.c.l.b16 %v8453
      %v8470 = vunpack.c.l.b16 %v8454
      %v8471 = vpack.c.b16 %v8468, %v8467
      %v8472 = vpack.c.b16 %v8470, %v8469
      %8475 = vmatprep.subr.bf16.mxu0 0
      %8476 = vmatpush1.bf16.msra.mxu0 0
      %8477 = vmatprep.subr.bf16.mxu0 0
      %8478 = vmatpush1.bf16.msra.mxu0 0
      %8479 = vmatprep.subr.bf16.mxu0 0
      %8480 = vmatpush1.bf16.msra.mxu0 0
      %8481 = vmatprep.subr.bf16.mxu0 0
      %8482 = vmatpush1.bf16.msra.mxu0 0
      %8483 = vmatprep.subr.bf16.mxu0 0
      %8484 = vmatpush1.bf16.msra.mxu0 0
      %8485 = vmatprep.subr.bf16.mxu0 0
      %8486 = vmatpush1.bf16.msra.mxu0 0
      %8487 = vmatprep.subr.bf16.mxu0 0
      %8488 = vmatpush1.bf16.msra.mxu0 %v8472
      %8489 = vmatprep.subr.bf16.mxu0 0
      %8490 = vmatpush1.bf16.msra.mxu0 %v8471
      %8491 = vmatprep.subr.bf16.mxu0 0
      %8492 = vmatpush2.bf16.msra.mxu0 0
      %8493 = vmatprep.subr.bf16.mxu0 0
      %8494 = vmatpush2.bf16.msra.mxu0 0
      %8495 = vmatprep.subr.bf16.mxu0 0
      %8496 = vmatpush2.bf16.msra.mxu0 0
      %8497 = vmatprep.subr.bf16.mxu0 0
      %8498 = vmatpush2.bf16.msra.mxu0 0
      %8499 = vmatprep.subr.bf16.mxu0 0
      %8500 = vmatpush2.bf16.msra.mxu0 0
      %8501 = vmatprep.subr.bf16.mxu0 0
      %8502 = vmatpush2.bf16.msra.mxu0 0
      %8503 = vmatprep.subr.bf16.mxu0 0
      %8504 = vmatpush2.bf16.msra.mxu0 0
      %8505 = vmatprep.subr.bf16.mxu0 0
      %8506 = vmatpush2.bf16.msra.mxu0 0
      %8507 = vmatprep.mubr.bf16.mxu0 0
      %8508 = vmatmul.mubr.bf16.gmra.mxu0 %v855
      %v8509 = vpop.f32.mrf.mxu0
      %v8510 = vadd.f32 %v8461, %v8509
      %v8511 = vpop.f32.mrf.mxu0
      %v8512 = vpop.f32.mrf.mxu0
      %v8513 = vadd.f32 %v8461, %v8512
      %v8514 = vpop.f32.mrf.mxu0
      %8515 = vmatprep.mubr.bf16.mxu0 0
      %8516 = vmatmul.mubr.bf16.gmra.mxu0 %v858
      %v8517 = vpop.f32.mrf.mxu0
      %v8518 = vadd.f32 %v8461, %v8517
      %v8519 = vpop.f32.mrf.mxu0
      %v8520 = vpop.f32.mrf.mxu0
      %v8521 = vadd.f32 %v8461, %v8520
      %v8522 = vpop.f32.mrf.mxu0
      %8523 = vmatprep.mubr.bf16.mxu0 0
      %8524 = vmatmul.mubr.bf16.gmra.mxu0 %v861
      %v8525 = vpop.f32.mrf.mxu0
      %v8526 = vadd.f32 %v8461, %v8525
      %v8527 = vpop.f32.mrf.mxu0
      %v8528 = vpop.f32.mrf.mxu0
      %v8529 = vadd.f32 %v8461, %v8528
      %v8530 = vpop.f32.mrf.mxu0
      %8531 = vmatprep.mubr.bf16.mxu0 0
      %8532 = vmatmul.mubr.bf16.gmra.mxu0 %v864
      %v8533 = vpop.f32.mrf.mxu0
      %v8534 = vadd.f32 %v8461, %v8533
      %v8535 = vpop.f32.mrf.mxu0
      %v8536 = vpop.f32.mrf.mxu0
      %v8537 = vadd.f32 %v8461, %v8536
      %v8538 = vpop.f32.mrf.mxu0
      %8539 = vdwg.mxu0
      %v8540 = vpack.c.bf16 %v8513, %v8510
      %v8541 = vpack.c.bf16 %v8521, %v8518
      %v8542 = vpack.c.bf16 %v8529, %v8526
      %v8543 = vpack.c.bf16 %v8537, %v8534
      %v8548 = vunpack.c.l.b16 %v8540
      %v8549 = vunpack.c.h.b16 %v8540
      %v8550 = vunpack.c.l.b16 %v8541
      %v8551 = vunpack.c.h.b16 %v8541
      %v8552 = vunpack.c.l.b16 %v8542
      %v8553 = vunpack.c.h.b16 %v8542
      %v8554 = vunpack.c.l.b16 %v8543
      %v8555 = vunpack.c.h.b16 %v8543
      %v8556 = vpack.c.b16 %v8548, %v8548
      %v8557 = vpack.c.b16 %v8549, %v8549
      %v8558 = vpack.c.b16 %v8550, %v8550
      %v8559 = vpack.c.b16 %v8551, %v8551
      %v8560 = vpack.c.b16 %v8552, %v8552
      %v8561 = vpack.c.b16 %v8553, %v8553
      %v8562 = vpack.c.b16 %v8554, %v8554
      %v8563 = vpack.c.b16 %v8555, %v8555
      %s8564 = scalar_lea.vmem %s6, 176
      %v8565 = vld [vmem:[%s8564] sm:$0xf]
      %v8566 = vld [vmem:[%s8564 + $0x4] sm:$0xf]
      %v8567 = vld [vmem:[%s8564 + $0x8] sm:$0xf]
      %v8568 = vld [vmem:[%s8564 + $0xc] sm:$0xf]
      %s8569 = scalar_lea.vmem %s7, 11
      %v8570 = vld [vmem:[%s8569] sm:$0x1]
      %v8572 = vlaneseq
      %v8573 = vshrl.u32 %v8572, 7
      %v8574 = vsub.s32 0, %v8573
      %v8575 = vrot.slane %v8570, %v8574
      %v8581 = vunpack.c.l.b16 %v8565
      %v8582 = vunpack.c.l.b16 %v8566
      %v8583 = vunpack.c.l.b16 %v8567
      %v8584 = vunpack.c.l.b16 %v8568
      %v8585 = vpack.c.b16 %v8582, %v8581
      %v8586 = vpack.c.b16 %v8584, %v8583
      %8589 = vmatprep.subr.bf16.mxu0 0
      %8590 = vmatpush1.bf16.msra.mxu0 0
      %8591 = vmatprep.subr.bf16.mxu0 0
      %8592 = vmatpush1.bf16.msra.mxu0 0
      %8593 = vmatprep.subr.bf16.mxu0 0
      %8594 = vmatpush1.bf16.msra.mxu0 0
      %8595 = vmatprep.subr.bf16.mxu0 0
      %8596 = vmatpush1.bf16.msra.mxu0 0
      %8597 = vmatprep.subr.bf16.mxu0 0
      %8598 = vmatpush1.bf16.msra.mxu0 0
      %8599 = vmatprep.subr.bf16.mxu0 0
      %8600 = vmatpush1.bf16.msra.mxu0 0
      %8601 = vmatprep.subr.bf16.mxu0 0
      %8602 = vmatpush1.bf16.msra.mxu0 %v8586
      %8603 = vmatprep.subr.bf16.mxu0 0
      %8604 = vmatpush1.bf16.msra.mxu0 %v8585
      %8605 = vmatprep.subr.bf16.mxu0 0
      %8606 = vmatpush2.bf16.msra.mxu0 0
      %8607 = vmatprep.subr.bf16.mxu0 0
      %8608 = vmatpush2.bf16.msra.mxu0 0
      %8609 = vmatprep.subr.bf16.mxu0 0
      %8610 = vmatpush2.bf16.msra.mxu0 0
      %8611 = vmatprep.subr.bf16.mxu0 0
      %8612 = vmatpush2.bf16.msra.mxu0 0
      %8613 = vmatprep.subr.bf16.mxu0 0
      %8614 = vmatpush2.bf16.msra.mxu0 0
      %8615 = vmatprep.subr.bf16.mxu0 0
      %8616 = vmatpush2.bf16.msra.mxu0 0
      %8617 = vmatprep.subr.bf16.mxu0 0
      %8618 = vmatpush2.bf16.msra.mxu0 0
      %8619 = vmatprep.subr.bf16.mxu0 0
      %8620 = vmatpush2.bf16.msra.mxu0 0
      %8621 = vmatprep.mubr.bf16.mxu0 0
      %8622 = vmatmul.mubr.bf16.gmra.mxu0 %v855
      %v8623 = vpop.f32.mrf.mxu0
      %v8624 = vadd.f32 %v8575, %v8623
      %v8625 = vpop.f32.mrf.mxu0
      %v8626 = vpop.f32.mrf.mxu0
      %v8627 = vadd.f32 %v8575, %v8626
      %v8628 = vpop.f32.mrf.mxu0
      %8629 = vmatprep.mubr.bf16.mxu0 0
      %8630 = vmatmul.mubr.bf16.gmra.mxu0 %v858
      %v8631 = vpop.f32.mrf.mxu0
      %v8632 = vadd.f32 %v8575, %v8631
      %v8633 = vpop.f32.mrf.mxu0
      %v8634 = vpop.f32.mrf.mxu0
      %v8635 = vadd.f32 %v8575, %v8634
      %v8636 = vpop.f32.mrf.mxu0
      %8637 = vmatprep.mubr.bf16.mxu0 0
      %8638 = vmatmul.mubr.bf16.gmra.mxu0 %v861
      %v8639 = vpop.f32.mrf.mxu0
      %v8640 = vadd.f32 %v8575, %v8639
      %v8641 = vpop.f32.mrf.mxu0
      %v8642 = vpop.f32.mrf.mxu0
      %v8643 = vadd.f32 %v8575, %v8642
      %v8644 = vpop.f32.mrf.mxu0
      %8645 = vmatprep.mubr.bf16.mxu0 0
      %8646 = vmatmul.mubr.bf16.gmra.mxu0 %v864
      %v8647 = vpop.f32.mrf.mxu0
      %v8648 = vadd.f32 %v8575, %v8647
      %v8649 = vpop.f32.mrf.mxu0
      %v8650 = vpop.f32.mrf.mxu0
      %v8651 = vadd.f32 %v8575, %v8650
      %v8652 = vpop.f32.mrf.mxu0
      %8653 = vdwg.mxu0
      %v8654 = vpack.c.bf16 %v8627, %v8624
      %v8655 = vpack.c.bf16 %v8635, %v8632
      %v8656 = vpack.c.bf16 %v8643, %v8640
      %v8657 = vpack.c.bf16 %v8651, %v8648
      %v8662 = vunpack.c.l.b16 %v8654
      %v8663 = vunpack.c.h.b16 %v8654
      %v8664 = vunpack.c.l.b16 %v8655
      %v8665 = vunpack.c.h.b16 %v8655
      %v8666 = vunpack.c.l.b16 %v8656
      %v8667 = vunpack.c.h.b16 %v8656
      %v8668 = vunpack.c.l.b16 %v8657
      %v8669 = vunpack.c.h.b16 %v8657
      %v8670 = vpack.c.b16 %v8662, %v8662
      %v8671 = vpack.c.b16 %v8663, %v8663
      %v8672 = vpack.c.b16 %v8664, %v8664
      %v8673 = vpack.c.b16 %v8665, %v8665
      %v8674 = vpack.c.b16 %v8666, %v8666
      %v8675 = vpack.c.b16 %v8667, %v8667
      %v8676 = vpack.c.b16 %v8668, %v8668
      %v8677 = vpack.c.b16 %v8669, %v8669
      %v8679 = vsel %vm1069, %v8442, 0
      %v8682 = vsel %vm1069, %v8556, 0
      %8684 = vmatprep.subr.bf16.mxu0 0
      %8685 = vmatpush1.bf16.xpose.msra.mxu0 0
      %8686 = vmatprep.subr.bf16.mxu0 0
      %8687 = vmatpush1.bf16.xpose.msra.mxu0 0
      %8688 = vmatprep.subr.bf16.mxu0 0
      %8689 = vmatpush1.bf16.xpose.msra.mxu0 0
      %8690 = vmatprep.subr.bf16.mxu0 0
      %8691 = vmatpush1.bf16.xpose.msra.mxu0 0
      %8692 = vmatprep.subr.bf16.mxu0 0
      %8693 = vmatpush1.bf16.xpose.msra.mxu0 0
      %8694 = vmatprep.subr.bf16.mxu0 0
      %8695 = vmatpush1.bf16.xpose.msra.mxu0 0
      %8696 = vmatprep.subr.bf16.mxu0 0
      %8697 = vmatpush1.bf16.xpose.msra.mxu0 0
      %8698 = vmatprep.subr.bf16.mxu0 0
      %8699 = vmatpush1.bf16.xpose.msra.mxu0 %v8682
      %8700 = vmatprep.subr.bf16.mxu0 0
      %8701 = vmatpush2.bf16.xpose.msra.mxu0 0
      %8702 = vmatprep.subr.bf16.mxu0 0
      %8703 = vmatpush2.bf16.xpose.msra.mxu0 0
      %8704 = vmatprep.subr.bf16.mxu0 0
      %8705 = vmatpush2.bf16.xpose.msra.mxu0 0
      %8706 = vmatprep.subr.bf16.mxu0 0
      %8707 = vmatpush2.bf16.xpose.msra.mxu0 0
      %8708 = vmatprep.subr.bf16.mxu0 0
      %8709 = vmatpush2.bf16.xpose.msra.mxu0 0
      %8710 = vmatprep.subr.bf16.mxu0 0
      %8711 = vmatpush2.bf16.xpose.msra.mxu0 0
      %8712 = vmatprep.subr.bf16.mxu0 0
      %8713 = vmatpush2.bf16.xpose.msra.mxu0 0
      %8714 = vmatprep.subr.bf16.mxu0 0
      %8715 = vmatpush2.bf16.xpose.msra.mxu0 0
      %8716 = vmatprep.mubr.bf16.mxu0 0
      %8717 = vmatmul.mubr.bf16.gmra.mxu0 %v8679
      %v8718 = vpop.f32.mrf.mxu0
      %v8719 = vadd.f32 %v431, %v8718
      %v8720 = vpop.f32.mrf.mxu0
      %v8721 = vpop.f32.mrf.mxu0
      %v8722 = vpop.f32.mrf.mxu0
      %8723 = vdwg.mxu0
      %v8725 = vsel %vm1069, %v8443, 0
      %v8728 = vsel %vm1069, %v8557, 0
      %8730 = vmatprep.subr.bf16.mxu0 0
      %8731 = vmatpush1.bf16.xpose.msra.mxu0 0
      %8732 = vmatprep.subr.bf16.mxu0 0
      %8733 = vmatpush1.bf16.xpose.msra.mxu0 0
      %8734 = vmatprep.subr.bf16.mxu0 0
      %8735 = vmatpush1.bf16.xpose.msra.mxu0 0
      %8736 = vmatprep.subr.bf16.mxu0 0
      %8737 = vmatpush1.bf16.xpose.msra.mxu0 0
      %8738 = vmatprep.subr.bf16.mxu0 0
      %8739 = vmatpush1.bf16.xpose.msra.mxu0 0
      %8740 = vmatprep.subr.bf16.mxu0 0
      %8741 = vmatpush1.bf16.xpose.msra.mxu0 0
      %8742 = vmatprep.subr.bf16.mxu0 0
      %8743 = vmatpush1.bf16.xpose.msra.mxu0 0
      %8744 = vmatprep.subr.bf16.mxu0 0
      %8745 = vmatpush1.bf16.xpose.msra.mxu0 %v8728
      %8746 = vmatprep.subr.bf16.mxu0 0
      %8747 = vmatpush2.bf16.xpose.msra.mxu0 0
      %8748 = vmatprep.subr.bf16.mxu0 0
      %8749 = vmatpush2.bf16.xpose.msra.mxu0 0
      %8750 = vmatprep.subr.bf16.mxu0 0
      %8751 = vmatpush2.bf16.xpose.msra.mxu0 0
      %8752 = vmatprep.subr.bf16.mxu0 0
      %8753 = vmatpush2.bf16.xpose.msra.mxu0 0
      %8754 = vmatprep.subr.bf16.mxu0 0
      %8755 = vmatpush2.bf16.xpose.msra.mxu0 0
      %8756 = vmatprep.subr.bf16.mxu0 0
      %8757 = vmatpush2.bf16.xpose.msra.mxu0 0
      %8758 = vmatprep.subr.bf16.mxu0 0
      %8759 = vmatpush2.bf16.xpose.msra.mxu0 0
      %8760 = vmatprep.subr.bf16.mxu0 0
      %8761 = vmatpush2.bf16.xpose.msra.mxu0 0
      %8762 = vmatprep.mubr.bf16.mxu0 0
      %8763 = vmatmul.mubr.bf16.gmra.mxu0 %v8725
      %v8764 = vpop.f32.mrf.mxu0
      %v8765 = vadd.f32 %v431, %v8764
      %v8766 = vpop.f32.mrf.mxu0
      %v8767 = vpop.f32.mrf.mxu0
      %v8768 = vpop.f32.mrf.mxu0
      %8769 = vdwg.mxu0
      %v8771 = vsel %vm1069, %v8444, 0
      %v8774 = vsel %vm1069, %v8558, 0
      %8776 = vmatprep.subr.bf16.mxu0 0
      %8777 = vmatpush1.bf16.xpose.msra.mxu0 0
      %8778 = vmatprep.subr.bf16.mxu0 0
      %8779 = vmatpush1.bf16.xpose.msra.mxu0 0
      %8780 = vmatprep.subr.bf16.mxu0 0
      %8781 = vmatpush1.bf16.xpose.msra.mxu0 0
      %8782 = vmatprep.subr.bf16.mxu0 0
      %8783 = vmatpush1.bf16.xpose.msra.mxu0 0
      %8784 = vmatprep.subr.bf16.mxu0 0
      %8785 = vmatpush1.bf16.xpose.msra.mxu0 0
      %8786 = vmatprep.subr.bf16.mxu0 0
      %8787 = vmatpush1.bf16.xpose.msra.mxu0 0
      %8788 = vmatprep.subr.bf16.mxu0 0
      %8789 = vmatpush1.bf16.xpose.msra.mxu0 0
      %8790 = vmatprep.subr.bf16.mxu0 0
      %8791 = vmatpush1.bf16.xpose.msra.mxu0 %v8774
      %8792 = vmatprep.subr.bf16.mxu0 0
      %8793 = vmatpush2.bf16.xpose.msra.mxu0 0
      %8794 = vmatprep.subr.bf16.mxu0 0
      %8795 = vmatpush2.bf16.xpose.msra.mxu0 0
      %8796 = vmatprep.subr.bf16.mxu0 0
      %8797 = vmatpush2.bf16.xpose.msra.mxu0 0
      %8798 = vmatprep.subr.bf16.mxu0 0
      %8799 = vmatpush2.bf16.xpose.msra.mxu0 0
      %8800 = vmatprep.subr.bf16.mxu0 0
      %8801 = vmatpush2.bf16.xpose.msra.mxu0 0
      %8802 = vmatprep.subr.bf16.mxu0 0
      %8803 = vmatpush2.bf16.xpose.msra.mxu0 0
      %8804 = vmatprep.subr.bf16.mxu0 0
      %8805 = vmatpush2.bf16.xpose.msra.mxu0 0
      %8806 = vmatprep.subr.bf16.mxu0 0
      %8807 = vmatpush2.bf16.xpose.msra.mxu0 0
      %8808 = vmatprep.mubr.bf16.mxu0 0
      %8809 = vmatmul.mubr.bf16.gmra.mxu0 %v8771
      %v8810 = vpop.f32.mrf.mxu0
      %v8811 = vadd.f32 %v431, %v8810
      %v8812 = vpop.f32.mrf.mxu0
      %v8813 = vpop.f32.mrf.mxu0
      %v8814 = vpop.f32.mrf.mxu0
      %8815 = vdwg.mxu0
      %v8817 = vsel %vm1069, %v8445, 0
      %v8820 = vsel %vm1069, %v8559, 0
      %8822 = vmatprep.subr.bf16.mxu0 0
      %8823 = vmatpush1.bf16.xpose.msra.mxu0 0
      %8824 = vmatprep.subr.bf16.mxu0 0
      %8825 = vmatpush1.bf16.xpose.msra.mxu0 0
      %8826 = vmatprep.subr.bf16.mxu0 0
      %8827 = vmatpush1.bf16.xpose.msra.mxu0 0
      %8828 = vmatprep.subr.bf16.mxu0 0
      %8829 = vmatpush1.bf16.xpose.msra.mxu0 0
      %8830 = vmatprep.subr.bf16.mxu0 0
      %8831 = vmatpush1.bf16.xpose.msra.mxu0 0
      %8832 = vmatprep.subr.bf16.mxu0 0
      %8833 = vmatpush1.bf16.xpose.msra.mxu0 0
      %8834 = vmatprep.subr.bf16.mxu0 0
      %8835 = vmatpush1.bf16.xpose.msra.mxu0 0
      %8836 = vmatprep.subr.bf16.mxu0 0
      %8837 = vmatpush1.bf16.xpose.msra.mxu0 %v8820
      %8838 = vmatprep.subr.bf16.mxu0 0
      %8839 = vmatpush2.bf16.xpose.msra.mxu0 0
      %8840 = vmatprep.subr.bf16.mxu0 0
      %8841 = vmatpush2.bf16.xpose.msra.mxu0 0
      %8842 = vmatprep.subr.bf16.mxu0 0
      %8843 = vmatpush2.bf16.xpose.msra.mxu0 0
      %8844 = vmatprep.subr.bf16.mxu0 0
      %8845 = vmatpush2.bf16.xpose.msra.mxu0 0
      %8846 = vmatprep.subr.bf16.mxu0 0
      %8847 = vmatpush2.bf16.xpose.msra.mxu0 0
      %8848 = vmatprep.subr.bf16.mxu0 0
      %8849 = vmatpush2.bf16.xpose.msra.mxu0 0
      %8850 = vmatprep.subr.bf16.mxu0 0
      %8851 = vmatpush2.bf16.xpose.msra.mxu0 0
      %8852 = vmatprep.subr.bf16.mxu0 0
      %8853 = vmatpush2.bf16.xpose.msra.mxu0 0
      %8854 = vmatprep.mubr.bf16.mxu0 0
      %8855 = vmatmul.mubr.bf16.gmra.mxu0 %v8817
      %v8856 = vpop.f32.mrf.mxu0
      %v8857 = vadd.f32 %v431, %v8856
      %v8858 = vpop.f32.mrf.mxu0
      %v8859 = vpop.f32.mrf.mxu0
      %v8860 = vpop.f32.mrf.mxu0
      %8861 = vdwg.mxu0
      %v8863 = vsel %vm1069, %v8446, 0
      %v8866 = vsel %vm1069, %v8560, 0
      %8868 = vmatprep.subr.bf16.mxu0 0
      %8869 = vmatpush1.bf16.xpose.msra.mxu0 0
      %8870 = vmatprep.subr.bf16.mxu0 0
      %8871 = vmatpush1.bf16.xpose.msra.mxu0 0
      %8872 = vmatprep.subr.bf16.mxu0 0
      %8873 = vmatpush1.bf16.xpose.msra.mxu0 0
      %8874 = vmatprep.subr.bf16.mxu0 0
      %8875 = vmatpush1.bf16.xpose.msra.mxu0 0
      %8876 = vmatprep.subr.bf16.mxu0 0
      %8877 = vmatpush1.bf16.xpose.msra.mxu0 0
      %8878 = vmatprep.subr.bf16.mxu0 0
      %8879 = vmatpush1.bf16.xpose.msra.mxu0 0
      %8880 = vmatprep.subr.bf16.mxu0 0
      %8881 = vmatpush1.bf16.xpose.msra.mxu0 0
      %8882 = vmatprep.subr.bf16.mxu0 0
      %8883 = vmatpush1.bf16.xpose.msra.mxu0 %v8866
      %8884 = vmatprep.subr.bf16.mxu0 0
      %8885 = vmatpush2.bf16.xpose.msra.mxu0 0
      %8886 = vmatprep.subr.bf16.mxu0 0
      %8887 = vmatpush2.bf16.xpose.msra.mxu0 0
      %8888 = vmatprep.subr.bf16.mxu0 0
      %8889 = vmatpush2.bf16.xpose.msra.mxu0 0
      %8890 = vmatprep.subr.bf16.mxu0 0
      %8891 = vmatpush2.bf16.xpose.msra.mxu0 0
      %8892 = vmatprep.subr.bf16.mxu0 0
      %8893 = vmatpush2.bf16.xpose.msra.mxu0 0
      %8894 = vmatprep.subr.bf16.mxu0 0
      %8895 = vmatpush2.bf16.xpose.msra.mxu0 0
      %8896 = vmatprep.subr.bf16.mxu0 0
      %8897 = vmatpush2.bf16.xpose.msra.mxu0 0
      %8898 = vmatprep.subr.bf16.mxu0 0
      %8899 = vmatpush2.bf16.xpose.msra.mxu0 0
      %8900 = vmatprep.mubr.bf16.mxu0 0
      %8901 = vmatmul.mubr.bf16.gmra.mxu0 %v8863
      %v8902 = vpop.f32.mrf.mxu0
      %v8903 = vadd.f32 %v431, %v8902
      %v8904 = vpop.f32.mrf.mxu0
      %v8905 = vpop.f32.mrf.mxu0
      %v8906 = vpop.f32.mrf.mxu0
      %8907 = vdwg.mxu0
      %v8909 = vsel %vm1069, %v8447, 0
      %v8912 = vsel %vm1069, %v8561, 0
      %8914 = vmatprep.subr.bf16.mxu0 0
      %8915 = vmatpush1.bf16.xpose.msra.mxu0 0
      %8916 = vmatprep.subr.bf16.mxu0 0
      %8917 = vmatpush1.bf16.xpose.msra.mxu0 0
      %8918 = vmatprep.subr.bf16.mxu0 0
      %8919 = vmatpush1.bf16.xpose.msra.mxu0 0
      %8920 = vmatprep.subr.bf16.mxu0 0
      %8921 = vmatpush1.bf16.xpose.msra.mxu0 0
      %8922 = vmatprep.subr.bf16.mxu0 0
      %8923 = vmatpush1.bf16.xpose.msra.mxu0 0
      %8924 = vmatprep.subr.bf16.mxu0 0
      %8925 = vmatpush1.bf16.xpose.msra.mxu0 0
      %8926 = vmatprep.subr.bf16.mxu0 0
      %8927 = vmatpush1.bf16.xpose.msra.mxu0 0
      %8928 = vmatprep.subr.bf16.mxu0 0
      %8929 = vmatpush1.bf16.xpose.msra.mxu0 %v8912
      %8930 = vmatprep.subr.bf16.mxu0 0
      %8931 = vmatpush2.bf16.xpose.msra.mxu0 0
      %8932 = vmatprep.subr.bf16.mxu0 0
      %8933 = vmatpush2.bf16.xpose.msra.mxu0 0
      %8934 = vmatprep.subr.bf16.mxu0 0
      %8935 = vmatpush2.bf16.xpose.msra.mxu0 0
      %8936 = vmatprep.subr.bf16.mxu0 0
      %8937 = vmatpush2.bf16.xpose.msra.mxu0 0
      %8938 = vmatprep.subr.bf16.mxu0 0
      %8939 = vmatpush2.bf16.xpose.msra.mxu0 0
      %8940 = vmatprep.subr.bf16.mxu0 0
      %8941 = vmatpush2.bf16.xpose.msra.mxu0 0
      %8942 = vmatprep.subr.bf16.mxu0 0
      %8943 = vmatpush2.bf16.xpose.msra.mxu0 0
      %8944 = vmatprep.subr.bf16.mxu0 0
      %8945 = vmatpush2.bf16.xpose.msra.mxu0 0
      %8946 = vmatprep.mubr.bf16.mxu0 0
      %8947 = vmatmul.mubr.bf16.gmra.mxu0 %v8909
      %v8948 = vpop.f32.mrf.mxu0
      %v8949 = vadd.f32 %v431, %v8948
      %v8950 = vpop.f32.mrf.mxu0
      %v8951 = vpop.f32.mrf.mxu0
      %v8952 = vpop.f32.mrf.mxu0
      %8953 = vdwg.mxu0
      %v8955 = vsel %vm1069, %v8448, 0
      %v8958 = vsel %vm1069, %v8562, 0
      %8960 = vmatprep.subr.bf16.mxu0 0
      %8961 = vmatpush1.bf16.xpose.msra.mxu0 0
      %8962 = vmatprep.subr.bf16.mxu0 0
      %8963 = vmatpush1.bf16.xpose.msra.mxu0 0
      %8964 = vmatprep.subr.bf16.mxu0 0
      %8965 = vmatpush1.bf16.xpose.msra.mxu0 0
      %8966 = vmatprep.subr.bf16.mxu0 0
      %8967 = vmatpush1.bf16.xpose.msra.mxu0 0
      %8968 = vmatprep.subr.bf16.mxu0 0
      %8969 = vmatpush1.bf16.xpose.msra.mxu0 0
      %8970 = vmatprep.subr.bf16.mxu0 0
      %8971 = vmatpush1.bf16.xpose.msra.mxu0 0
      %8972 = vmatprep.subr.bf16.mxu0 0
      %8973 = vmatpush1.bf16.xpose.msra.mxu0 0
      %8974 = vmatprep.subr.bf16.mxu0 0
      %8975 = vmatpush1.bf16.xpose.msra.mxu0 %v8958
      %8976 = vmatprep.subr.bf16.mxu0 0
      %8977 = vmatpush2.bf16.xpose.msra.mxu0 0
      %8978 = vmatprep.subr.bf16.mxu0 0
      %8979 = vmatpush2.bf16.xpose.msra.mxu0 0
      %8980 = vmatprep.subr.bf16.mxu0 0
      %8981 = vmatpush2.bf16.xpose.msra.mxu0 0
      %8982 = vmatprep.subr.bf16.mxu0 0
      %8983 = vmatpush2.bf16.xpose.msra.mxu0 0
      %8984 = vmatprep.subr.bf16.mxu0 0
      %8985 = vmatpush2.bf16.xpose.msra.mxu0 0
      %8986 = vmatprep.subr.bf16.mxu0 0
      %8987 = vmatpush2.bf16.xpose.msra.mxu0 0
      %8988 = vmatprep.subr.bf16.mxu0 0
      %8989 = vmatpush2.bf16.xpose.msra.mxu0 0
      %8990 = vmatprep.subr.bf16.mxu0 0
      %8991 = vmatpush2.bf16.xpose.msra.mxu0 0
      %8992 = vmatprep.mubr.bf16.mxu0 0
      %8993 = vmatmul.mubr.bf16.gmra.mxu0 %v8955
      %v8994 = vpop.f32.mrf.mxu0
      %v8995 = vadd.f32 %v431, %v8994
      %v8996 = vpop.f32.mrf.mxu0
      %v8997 = vpop.f32.mrf.mxu0
      %v8998 = vpop.f32.mrf.mxu0
      %8999 = vdwg.mxu0
      %v9001 = vsel %vm1069, %v8449, 0
      %v9004 = vsel %vm1069, %v8563, 0
      %9006 = vmatprep.subr.bf16.mxu0 0
      %9007 = vmatpush1.bf16.xpose.msra.mxu0 0
      %9008 = vmatprep.subr.bf16.mxu0 0
      %9009 = vmatpush1.bf16.xpose.msra.mxu0 0
      %9010 = vmatprep.subr.bf16.mxu0 0
      %9011 = vmatpush1.bf16.xpose.msra.mxu0 0
      %9012 = vmatprep.subr.bf16.mxu0 0
      %9013 = vmatpush1.bf16.xpose.msra.mxu0 0
      %9014 = vmatprep.subr.bf16.mxu0 0
      %9015 = vmatpush1.bf16.xpose.msra.mxu0 0
      %9016 = vmatprep.subr.bf16.mxu0 0
      %9017 = vmatpush1.bf16.xpose.msra.mxu0 0
      %9018 = vmatprep.subr.bf16.mxu0 0
      %9019 = vmatpush1.bf16.xpose.msra.mxu0 0
      %9020 = vmatprep.subr.bf16.mxu0 0
      %9021 = vmatpush1.bf16.xpose.msra.mxu0 %v9004
      %9022 = vmatprep.subr.bf16.mxu0 0
      %9023 = vmatpush2.bf16.xpose.msra.mxu0 0
      %9024 = vmatprep.subr.bf16.mxu0 0
      %9025 = vmatpush2.bf16.xpose.msra.mxu0 0
      %9026 = vmatprep.subr.bf16.mxu0 0
      %9027 = vmatpush2.bf16.xpose.msra.mxu0 0
      %9028 = vmatprep.subr.bf16.mxu0 0
      %9029 = vmatpush2.bf16.xpose.msra.mxu0 0
      %9030 = vmatprep.subr.bf16.mxu0 0
      %9031 = vmatpush2.bf16.xpose.msra.mxu0 0
      %9032 = vmatprep.subr.bf16.mxu0 0
      %9033 = vmatpush2.bf16.xpose.msra.mxu0 0
      %9034 = vmatprep.subr.bf16.mxu0 0
      %9035 = vmatpush2.bf16.xpose.msra.mxu0 0
      %9036 = vmatprep.subr.bf16.mxu0 0
      %9037 = vmatpush2.bf16.xpose.msra.mxu0 0
      %9038 = vmatprep.mubr.bf16.mxu0 0
      %9039 = vmatmul.mubr.bf16.gmra.mxu0 %v9001
      %v9040 = vpop.f32.mrf.mxu0
      %v9041 = vadd.f32 %v431, %v9040
      %v9042 = vpop.f32.mrf.mxu0
      %v9043 = vpop.f32.mrf.mxu0
      %v9044 = vpop.f32.mrf.mxu0
      %9045 = vdwg.mxu0
      %v9046 = vsel %vm1069, %v8719, -inf
      %9047 = vmax.xlane.f32.xlu0 %v9046
      %v9048 = vpop.xlane.xlu0 %9047
      %v9049 = vsel %vm1069, %v8765, -inf
      %9050 = vmax.xlane.f32.xlu0 %v9049
      %v9051 = vpop.xlane.xlu0 %9050
      %v9052 = vsel %vm1069, %v8811, -inf
      %9053 = vmax.xlane.f32.xlu0 %v9052
      %v9054 = vpop.xlane.xlu0 %9053
      %v9055 = vsel %vm1069, %v8857, -inf
      %9056 = vmax.xlane.f32.xlu0 %v9055
      %v9057 = vpop.xlane.xlu0 %9056
      %v9058 = vsel %vm1069, %v8903, -inf
      %9059 = vmax.xlane.f32.xlu0 %v9058
      %v9060 = vpop.xlane.xlu0 %9059
      %v9061 = vsel %vm1069, %v8949, -inf
      %9062 = vmax.xlane.f32.xlu0 %v9061
      %v9063 = vpop.xlane.xlu0 %9062
      %v9064 = vsel %vm1069, %v8995, -inf
      %9065 = vmax.xlane.f32.xlu0 %v9064
      %v9066 = vpop.xlane.xlu0 %9065
      %v9067 = vsel %vm1069, %v9041, -inf
      %9068 = vmax.xlane.f32.xlu0 %v9067
      %v9069 = vpop.xlane.xlu0 %9068
      %v9070 = vsub.f32 %v8719, %v9048
      %v9071 = vsub.f32 %v8765, %v9051
      %v9072 = vsub.f32 %v8811, %v9054
      %v9073 = vsub.f32 %v8857, %v9057
      %v9074 = vsub.f32 %v8903, %v9060
      %v9075 = vsub.f32 %v8949, %v9063
      %v9076 = vsub.f32 %v8995, %v9066
      %v9077 = vsub.f32 %v9041, %v9069
      %v9078 = vmul.f32 %v9070, 1.442695
      %v9079 = vpow.pop %v9078
      %v9080 = vmul.f32 %v9071, 1.442695
      %v9081 = vpow.pop %v9080
      %v9082 = vmul.f32 %v9072, 1.442695
      %v9083 = vpow.pop %v9082
      %v9084 = vmul.f32 %v9073, 1.442695
      %v9085 = vpow.pop %v9084
      %v9086 = vmul.f32 %v9074, 1.442695
      %v9087 = vpow.pop %v9086
      %v9088 = vmul.f32 %v9075, 1.442695
      %v9089 = vpow.pop %v9088
      %v9090 = vmul.f32 %v9076, 1.442695
      %v9091 = vpow.pop %v9090
      %v9092 = vmul.f32 %v9077, 1.442695
      %v9093 = vpow.pop %v9092
      %v9094 = vsel %vm1069, %v9079, 0.0
      %9095 = vadd.xlane.f32.xlu0 %v9094
      %v9096 = vpop.xlane.xlu0 %9095
      %v9097 = vsel %vm1069, %v9081, 0.0
      %9098 = vadd.xlane.f32.xlu0 %v9097
      %v9099 = vpop.xlane.xlu0 %9098
      %v9100 = vsel %vm1069, %v9083, 0.0
      %9101 = vadd.xlane.f32.xlu0 %v9100
      %v9102 = vpop.xlane.xlu0 %9101
      %v9103 = vsel %vm1069, %v9085, 0.0
      %9104 = vadd.xlane.f32.xlu0 %v9103
      %v9105 = vpop.xlane.xlu0 %9104
      %v9106 = vsel %vm1069, %v9087, 0.0
      %9107 = vadd.xlane.f32.xlu0 %v9106
      %v9108 = vpop.xlane.xlu0 %9107
      %v9109 = vsel %vm1069, %v9089, 0.0
      %9110 = vadd.xlane.f32.xlu0 %v9109
      %v9111 = vpop.xlane.xlu0 %9110
      %v9112 = vsel %vm1069, %v9091, 0.0
      %9113 = vadd.xlane.f32.xlu0 %v9112
      %v9114 = vpop.xlane.xlu0 %9113
      %v9115 = vsel %vm1069, %v9093, 0.0
      %9116 = vadd.xlane.f32.xlu0 %v9115
      %v9117 = vpop.xlane.xlu0 %9116
      %v9118 = vrcp.pop %v9096
      %v9119 = vrcp.pop %v9099
      %v9120 = vrcp.pop %v9102
      %v9121 = vrcp.pop %v9105
      %v9122 = vrcp.pop %v9108
      %v9123 = vrcp.pop %v9111
      %v9124 = vrcp.pop %v9114
      %v9125 = vrcp.pop %v9117
      %v9126 = vmul.f32 %v9079, %v9118
      %v9127 = vmul.f32 %v9081, %v9119
      %v9128 = vmul.f32 %v9083, %v9120
      %v9129 = vmul.f32 %v9085, %v9121
      %v9130 = vmul.f32 %v9087, %v9122
      %v9131 = vmul.f32 %v9089, %v9123
      %v9132 = vmul.f32 %v9091, %v9124
      %v9133 = vmul.f32 %v9093, %v9125
      %v9134 = vpack.c.bf16 %v9126, %v9126
      %v9135 = vpack.c.bf16 %v9127, %v9127
      %v9136 = vpack.c.bf16 %v9128, %v9128
      %v9137 = vpack.c.bf16 %v9129, %v9129
      %v9138 = vpack.c.bf16 %v9130, %v9130
      %v9139 = vpack.c.bf16 %v9131, %v9131
      %v9140 = vpack.c.bf16 %v9132, %v9132
      %v9141 = vpack.c.bf16 %v9133, %v9133
      %v9143 = vsel %vm1069, %v9134, 0
      %v9146 = vsel %vm1537, %v8670, 0
      %9148 = vmatprep.subr.bf16.mxu0 0
      %9149 = vmatpush1.bf16.msra.mxu0 0
      %9150 = vmatprep.subr.bf16.mxu0 0
      %9151 = vmatpush1.bf16.msra.mxu0 0
      %9152 = vmatprep.subr.bf16.mxu0 0
      %9153 = vmatpush1.bf16.msra.mxu0 0
      %9154 = vmatprep.subr.bf16.mxu0 0
      %9155 = vmatpush1.bf16.msra.mxu0 0
      %9156 = vmatprep.subr.bf16.mxu0 0
      %9157 = vmatpush1.bf16.msra.mxu0 0
      %9158 = vmatprep.subr.bf16.mxu0 0
      %9159 = vmatpush1.bf16.msra.mxu0 0
      %9160 = vmatprep.subr.bf16.mxu0 0
      %9161 = vmatpush1.bf16.msra.mxu0 0
      %9162 = vmatprep.subr.bf16.mxu0 0
      %9163 = vmatpush1.bf16.msra.mxu0 %v9146
      %9164 = vmatprep.subr.bf16.mxu0 0
      %9165 = vmatpush2.bf16.msra.mxu0 0
      %9166 = vmatprep.subr.bf16.mxu0 0
      %9167 = vmatpush2.bf16.msra.mxu0 0
      %9168 = vmatprep.subr.bf16.mxu0 0
      %9169 = vmatpush2.bf16.msra.mxu0 0
      %9170 = vmatprep.subr.bf16.mxu0 0
      %9171 = vmatpush2.bf16.msra.mxu0 0
      %9172 = vmatprep.subr.bf16.mxu0 0
      %9173 = vmatpush2.bf16.msra.mxu0 0
      %9174 = vmatprep.subr.bf16.mxu0 0
      %9175 = vmatpush2.bf16.msra.mxu0 0
      %9176 = vmatprep.subr.bf16.mxu0 0
      %9177 = vmatpush2.bf16.msra.mxu0 0
      %9178 = vmatprep.subr.bf16.mxu0 0
      %9179 = vmatpush2.bf16.msra.mxu0 0
      %9180 = vmatprep.mubr.bf16.mxu0 0
      %9181 = vmatmul.mubr.bf16.gmra.mxu0 %v9143
      %v9182 = vpop.f32.mrf.mxu0
      %v9183 = vadd.f32 0.0, %v9182
      %v9184 = vpop.f32.mrf.mxu0
      %v9185 = vpop.f32.mrf.mxu0
      %v9186 = vpop.f32.mrf.mxu0
      %9187 = vdwg.mxu0
      %v9189 = vsel %vm1069, %v9135, 0
      %v9192 = vsel %vm1537, %v8671, 0
      %9194 = vmatprep.subr.bf16.mxu0 0
      %9195 = vmatpush1.bf16.msra.mxu0 0
      %9196 = vmatprep.subr.bf16.mxu0 0
      %9197 = vmatpush1.bf16.msra.mxu0 0
      %9198 = vmatprep.subr.bf16.mxu0 0
      %9199 = vmatpush1.bf16.msra.mxu0 0
      %9200 = vmatprep.subr.bf16.mxu0 0
      %9201 = vmatpush1.bf16.msra.mxu0 0
      %9202 = vmatprep.subr.bf16.mxu0 0
      %9203 = vmatpush1.bf16.msra.mxu0 0
      %9204 = vmatprep.subr.bf16.mxu0 0
      %9205 = vmatpush1.bf16.msra.mxu0 0
      %9206 = vmatprep.subr.bf16.mxu0 0
      %9207 = vmatpush1.bf16.msra.mxu0 0
      %9208 = vmatprep.subr.bf16.mxu0 0
      %9209 = vmatpush1.bf16.msra.mxu0 %v9192
      %9210 = vmatprep.subr.bf16.mxu0 0
      %9211 = vmatpush2.bf16.msra.mxu0 0
      %9212 = vmatprep.subr.bf16.mxu0 0
      %9213 = vmatpush2.bf16.msra.mxu0 0
      %9214 = vmatprep.subr.bf16.mxu0 0
      %9215 = vmatpush2.bf16.msra.mxu0 0
      %9216 = vmatprep.subr.bf16.mxu0 0
      %9217 = vmatpush2.bf16.msra.mxu0 0
      %9218 = vmatprep.subr.bf16.mxu0 0
      %9219 = vmatpush2.bf16.msra.mxu0 0
      %9220 = vmatprep.subr.bf16.mxu0 0
      %9221 = vmatpush2.bf16.msra.mxu0 0
      %9222 = vmatprep.subr.bf16.mxu0 0
      %9223 = vmatpush2.bf16.msra.mxu0 0
      %9224 = vmatprep.subr.bf16.mxu0 0
      %9225 = vmatpush2.bf16.msra.mxu0 0
      %9226 = vmatprep.mubr.bf16.mxu0 0
      %9227 = vmatmul.mubr.bf16.gmra.mxu0 %v9189
      %v9228 = vpop.f32.mrf.mxu0
      %v9229 = vadd.f32 0.0, %v9228
      %v9230 = vpop.f32.mrf.mxu0
      %v9231 = vpop.f32.mrf.mxu0
      %v9232 = vpop.f32.mrf.mxu0
      %9233 = vdwg.mxu0
      %v9235 = vsel %vm1069, %v9136, 0
      %v9238 = vsel %vm1537, %v8672, 0
      %9240 = vmatprep.subr.bf16.mxu0 0
      %9241 = vmatpush1.bf16.msra.mxu0 0
      %9242 = vmatprep.subr.bf16.mxu0 0
      %9243 = vmatpush1.bf16.msra.mxu0 0
      %9244 = vmatprep.subr.bf16.mxu0 0
      %9245 = vmatpush1.bf16.msra.mxu0 0
      %9246 = vmatprep.subr.bf16.mxu0 0
      %9247 = vmatpush1.bf16.msra.mxu0 0
      %9248 = vmatprep.subr.bf16.mxu0 0
      %9249 = vmatpush1.bf16.msra.mxu0 0
      %9250 = vmatprep.subr.bf16.mxu0 0
      %9251 = vmatpush1.bf16.msra.mxu0 0
      %9252 = vmatprep.subr.bf16.mxu0 0
      %9253 = vmatpush1.bf16.msra.mxu0 0
      %9254 = vmatprep.subr.bf16.mxu0 0
      %9255 = vmatpush1.bf16.msra.mxu0 %v9238
      %9256 = vmatprep.subr.bf16.mxu0 0
      %9257 = vmatpush2.bf16.msra.mxu0 0
      %9258 = vmatprep.subr.bf16.mxu0 0
      %9259 = vmatpush2.bf16.msra.mxu0 0
      %9260 = vmatprep.subr.bf16.mxu0 0
      %9261 = vmatpush2.bf16.msra.mxu0 0
      %9262 = vmatprep.subr.bf16.mxu0 0
      %9263 = vmatpush2.bf16.msra.mxu0 0
      %9264 = vmatprep.subr.bf16.mxu0 0
      %9265 = vmatpush2.bf16.msra.mxu0 0
      %9266 = vmatprep.subr.bf16.mxu0 0
      %9267 = vmatpush2.bf16.msra.mxu0 0
      %9268 = vmatprep.subr.bf16.mxu0 0
      %9269 = vmatpush2.bf16.msra.mxu0 0
      %9270 = vmatprep.subr.bf16.mxu0 0
      %9271 = vmatpush2.bf16.msra.mxu0 0
      %9272 = vmatprep.mubr.bf16.mxu0 0
      %9273 = vmatmul.mubr.bf16.gmra.mxu0 %v9235
      %v9274 = vpop.f32.mrf.mxu0
      %v9275 = vadd.f32 0.0, %v9274
      %v9276 = vpop.f32.mrf.mxu0
      %v9277 = vpop.f32.mrf.mxu0
      %v9278 = vpop.f32.mrf.mxu0
      %9279 = vdwg.mxu0
      %v9281 = vsel %vm1069, %v9137, 0
      %v9284 = vsel %vm1537, %v8673, 0
      %9286 = vmatprep.subr.bf16.mxu0 0
      %9287 = vmatpush1.bf16.msra.mxu0 0
      %9288 = vmatprep.subr.bf16.mxu0 0
      %9289 = vmatpush1.bf16.msra.mxu0 0
      %9290 = vmatprep.subr.bf16.mxu0 0
      %9291 = vmatpush1.bf16.msra.mxu0 0
      %9292 = vmatprep.subr.bf16.mxu0 0
      %9293 = vmatpush1.bf16.msra.mxu0 0
      %9294 = vmatprep.subr.bf16.mxu0 0
      %9295 = vmatpush1.bf16.msra.mxu0 0
      %9296 = vmatprep.subr.bf16.mxu0 0
      %9297 = vmatpush1.bf16.msra.mxu0 0
      %9298 = vmatprep.subr.bf16.mxu0 0
      %9299 = vmatpush1.bf16.msra.mxu0 0
      %9300 = vmatprep.subr.bf16.mxu0 0
      %9301 = vmatpush1.bf16.msra.mxu0 %v9284
      %9302 = vmatprep.subr.bf16.mxu0 0
      %9303 = vmatpush2.bf16.msra.mxu0 0
      %9304 = vmatprep.subr.bf16.mxu0 0
      %9305 = vmatpush2.bf16.msra.mxu0 0
      %9306 = vmatprep.subr.bf16.mxu0 0
      %9307 = vmatpush2.bf16.msra.mxu0 0
      %9308 = vmatprep.subr.bf16.mxu0 0
      %9309 = vmatpush2.bf16.msra.mxu0 0
      %9310 = vmatprep.subr.bf16.mxu0 0
      %9311 = vmatpush2.bf16.msra.mxu0 0
      %9312 = vmatprep.subr.bf16.mxu0 0
      %9313 = vmatpush2.bf16.msra.mxu0 0
      %9314 = vmatprep.subr.bf16.mxu0 0
      %9315 = vmatpush2.bf16.msra.mxu0 0
      %9316 = vmatprep.subr.bf16.mxu0 0
      %9317 = vmatpush2.bf16.msra.mxu0 0
      %9318 = vmatprep.mubr.bf16.mxu0 0
      %9319 = vmatmul.mubr.bf16.gmra.mxu0 %v9281
      %v9320 = vpop.f32.mrf.mxu0
      %v9321 = vadd.f32 0.0, %v9320
      %v9322 = vpop.f32.mrf.mxu0
      %v9323 = vpop.f32.mrf.mxu0
      %v9324 = vpop.f32.mrf.mxu0
      %9325 = vdwg.mxu0
      %v9327 = vsel %vm1069, %v9138, 0
      %v9330 = vsel %vm1537, %v8674, 0
      %9332 = vmatprep.subr.bf16.mxu0 0
      %9333 = vmatpush1.bf16.msra.mxu0 0
      %9334 = vmatprep.subr.bf16.mxu0 0
      %9335 = vmatpush1.bf16.msra.mxu0 0
      %9336 = vmatprep.subr.bf16.mxu0 0
      %9337 = vmatpush1.bf16.msra.mxu0 0
      %9338 = vmatprep.subr.bf16.mxu0 0
      %9339 = vmatpush1.bf16.msra.mxu0 0
      %9340 = vmatprep.subr.bf16.mxu0 0
      %9341 = vmatpush1.bf16.msra.mxu0 0
      %9342 = vmatprep.subr.bf16.mxu0 0
      %9343 = vmatpush1.bf16.msra.mxu0 0
      %9344 = vmatprep.subr.bf16.mxu0 0
      %9345 = vmatpush1.bf16.msra.mxu0 0
      %9346 = vmatprep.subr.bf16.mxu0 0
      %9347 = vmatpush1.bf16.msra.mxu0 %v9330
      %9348 = vmatprep.subr.bf16.mxu0 0
      %9349 = vmatpush2.bf16.msra.mxu0 0
      %9350 = vmatprep.subr.bf16.mxu0 0
      %9351 = vmatpush2.bf16.msra.mxu0 0
      %9352 = vmatprep.subr.bf16.mxu0 0
      %9353 = vmatpush2.bf16.msra.mxu0 0
      %9354 = vmatprep.subr.bf16.mxu0 0
      %9355 = vmatpush2.bf16.msra.mxu0 0
      %9356 = vmatprep.subr.bf16.mxu0 0
      %9357 = vmatpush2.bf16.msra.mxu0 0
      %9358 = vmatprep.subr.bf16.mxu0 0
      %9359 = vmatpush2.bf16.msra.mxu0 0
      %9360 = vmatprep.subr.bf16.mxu0 0
      %9361 = vmatpush2.bf16.msra.mxu0 0
      %9362 = vmatprep.subr.bf16.mxu0 0
      %9363 = vmatpush2.bf16.msra.mxu0 0
      %9364 = vmatprep.mubr.bf16.mxu0 0
      %9365 = vmatmul.mubr.bf16.gmra.mxu0 %v9327
      %v9366 = vpop.f32.mrf.mxu0
      %v9367 = vadd.f32 0.0, %v9366
      %v9368 = vpop.f32.mrf.mxu0
      %v9369 = vpop.f32.mrf.mxu0
      %v9370 = vpop.f32.mrf.mxu0
      %9371 = vdwg.mxu0
      %v9373 = vsel %vm1069, %v9139, 0
      %v9376 = vsel %vm1537, %v8675, 0
      %9378 = vmatprep.subr.bf16.mxu0 0
      %9379 = vmatpush1.bf16.msra.mxu0 0
      %9380 = vmatprep.subr.bf16.mxu0 0
      %9381 = vmatpush1.bf16.msra.mxu0 0
      %9382 = vmatprep.subr.bf16.mxu0 0
      %9383 = vmatpush1.bf16.msra.mxu0 0
      %9384 = vmatprep.subr.bf16.mxu0 0
      %9385 = vmatpush1.bf16.msra.mxu0 0
      %9386 = vmatprep.subr.bf16.mxu0 0
      %9387 = vmatpush1.bf16.msra.mxu0 0
      %9388 = vmatprep.subr.bf16.mxu0 0
      %9389 = vmatpush1.bf16.msra.mxu0 0
      %9390 = vmatprep.subr.bf16.mxu0 0
      %9391 = vmatpush1.bf16.msra.mxu0 0
      %9392 = vmatprep.subr.bf16.mxu0 0
      %9393 = vmatpush1.bf16.msra.mxu0 %v9376
      %9394 = vmatprep.subr.bf16.mxu0 0
      %9395 = vmatpush2.bf16.msra.mxu0 0
      %9396 = vmatprep.subr.bf16.mxu0 0
      %9397 = vmatpush2.bf16.msra.mxu0 0
      %9398 = vmatprep.subr.bf16.mxu0 0
      %9399 = vmatpush2.bf16.msra.mxu0 0
      %9400 = vmatprep.subr.bf16.mxu0 0
      %9401 = vmatpush2.bf16.msra.mxu0 0
      %9402 = vmatprep.subr.bf16.mxu0 0
      %9403 = vmatpush2.bf16.msra.mxu0 0
      %9404 = vmatprep.subr.bf16.mxu0 0
      %9405 = vmatpush2.bf16.msra.mxu0 0
      %9406 = vmatprep.subr.bf16.mxu0 0
      %9407 = vmatpush2.bf16.msra.mxu0 0
      %9408 = vmatprep.subr.bf16.mxu0 0
      %9409 = vmatpush2.bf16.msra.mxu0 0
      %9410 = vmatprep.mubr.bf16.mxu0 0
      %9411 = vmatmul.mubr.bf16.gmra.mxu0 %v9373
      %v9412 = vpop.f32.mrf.mxu0
      %v9413 = vadd.f32 0.0, %v9412
      %v9414 = vpop.f32.mrf.mxu0
      %v9415 = vpop.f32.mrf.mxu0
      %v9416 = vpop.f32.mrf.mxu0
      %9417 = vdwg.mxu0
      %v9419 = vsel %vm1069, %v9140, 0
      %v9422 = vsel %vm1537, %v8676, 0
      %9424 = vmatprep.subr.bf16.mxu0 0
      %9425 = vmatpush1.bf16.msra.mxu0 0
      %9426 = vmatprep.subr.bf16.mxu0 0
      %9427 = vmatpush1.bf16.msra.mxu0 0
      %9428 = vmatprep.subr.bf16.mxu0 0
      %9429 = vmatpush1.bf16.msra.mxu0 0
      %9430 = vmatprep.subr.bf16.mxu0 0
      %9431 = vmatpush1.bf16.msra.mxu0 0
      %9432 = vmatprep.subr.bf16.mxu0 0
      %9433 = vmatpush1.bf16.msra.mxu0 0
      %9434 = vmatprep.subr.bf16.mxu0 0
      %9435 = vmatpush1.bf16.msra.mxu0 0
      %9436 = vmatprep.subr.bf16.mxu0 0
      %9437 = vmatpush1.bf16.msra.mxu0 0
      %9438 = vmatprep.subr.bf16.mxu0 0
      %9439 = vmatpush1.bf16.msra.mxu0 %v9422
      %9440 = vmatprep.subr.bf16.mxu0 0
      %9441 = vmatpush2.bf16.msra.mxu0 0
      %9442 = vmatprep.subr.bf16.mxu0 0
      %9443 = vmatpush2.bf16.msra.mxu0 0
      %9444 = vmatprep.subr.bf16.mxu0 0
      %9445 = vmatpush2.bf16.msra.mxu0 0
      %9446 = vmatprep.subr.bf16.mxu0 0
      %9447 = vmatpush2.bf16.msra.mxu0 0
      %9448 = vmatprep.subr.bf16.mxu0 0
      %9449 = vmatpush2.bf16.msra.mxu0 0
      %9450 = vmatprep.subr.bf16.mxu0 0
      %9451 = vmatpush2.bf16.msra.mxu0 0
      %9452 = vmatprep.subr.bf16.mxu0 0
      %9453 = vmatpush2.bf16.msra.mxu0 0
      %9454 = vmatprep.subr.bf16.mxu0 0
      %9455 = vmatpush2.bf16.msra.mxu0 0
      %9456 = vmatprep.mubr.bf16.mxu0 0
      %9457 = vmatmul.mubr.bf16.gmra.mxu0 %v9419
      %v9458 = vpop.f32.mrf.mxu0
      %v9459 = vadd.f32 0.0, %v9458
      %v9460 = vpop.f32.mrf.mxu0
      %v9461 = vpop.f32.mrf.mxu0
      %v9462 = vpop.f32.mrf.mxu0
      %9463 = vdwg.mxu0
      %v9465 = vsel %vm1069, %v9141, 0
      %v9468 = vsel %vm1537, %v8677, 0
      %9470 = vmatprep.subr.bf16.mxu0 0
      %9471 = vmatpush1.bf16.msra.mxu0 0
      %9472 = vmatprep.subr.bf16.mxu0 0
      %9473 = vmatpush1.bf16.msra.mxu0 0
      %9474 = vmatprep.subr.bf16.mxu0 0
      %9475 = vmatpush1.bf16.msra.mxu0 0
      %9476 = vmatprep.subr.bf16.mxu0 0
      %9477 = vmatpush1.bf16.msra.mxu0 0
      %9478 = vmatprep.subr.bf16.mxu0 0
      %9479 = vmatpush1.bf16.msra.mxu0 0
      %9480 = vmatprep.subr.bf16.mxu0 0
      %9481 = vmatpush1.bf16.msra.mxu0 0
      %9482 = vmatprep.subr.bf16.mxu0 0
      %9483 = vmatpush1.bf16.msra.mxu0 0
      %9484 = vmatprep.subr.bf16.mxu0 0
      %9485 = vmatpush1.bf16.msra.mxu0 %v9468
      %9486 = vmatprep.subr.bf16.mxu0 0
      %9487 = vmatpush2.bf16.msra.mxu0 0
      %9488 = vmatprep.subr.bf16.mxu0 0
      %9489 = vmatpush2.bf16.msra.mxu0 0
      %9490 = vmatprep.subr.bf16.mxu0 0
      %9491 = vmatpush2.bf16.msra.mxu0 0
      %9492 = vmatprep.subr.bf16.mxu0 0
      %9493 = vmatpush2.bf16.msra.mxu0 0
      %9494 = vmatprep.subr.bf16.mxu0 0
      %9495 = vmatpush2.bf16.msra.mxu0 0
      %9496 = vmatprep.subr.bf16.mxu0 0
      %9497 = vmatpush2.bf16.msra.mxu0 0
      %9498 = vmatprep.subr.bf16.mxu0 0
      %9499 = vmatpush2.bf16.msra.mxu0 0
      %9500 = vmatprep.subr.bf16.mxu0 0
      %9501 = vmatpush2.bf16.msra.mxu0 0
      %9502 = vmatprep.mubr.bf16.mxu0 0
      %9503 = vmatmul.mubr.bf16.gmra.mxu0 %v9465
      %v9504 = vpop.f32.mrf.mxu0
      %v9505 = vadd.f32 0.0, %v9504
      %v9506 = vpop.f32.mrf.mxu0
      %v9507 = vpop.f32.mrf.mxu0
      %v9508 = vpop.f32.mrf.mxu0
      %9509 = vdwg.mxu0
      %v9510 = vpack.c.bf16 %v9229, %v9183
      %v9511 = vpack.c.bf16 %v9321, %v9275
      %v9512 = vpack.c.bf16 %v9413, %v9367
      %v9513 = vpack.c.bf16 %v9505, %v9459
      %s9514 = scalar_lea.vmem %s8, 12
      %v9515 = vld [vmem:[%s9514] sm:$0xf]
      %v9517 = vsel %vm1069, %v9510, 0
      %v9520 = vsel %vm1069, %v9511, 0
      %v9523 = vsel %vm1069, %v9512, 0
      %v9526 = vsel %vm1069, %v9513, 0
      %v9529 = vsel %vm1537, %v9515, 0
      %9531 = vmatprep.subr.bf16.mxu0 0
      %9532 = vmatpush1.bf16.msra.mxu0 0
      %9533 = vmatprep.subr.bf16.mxu0 0
      %9534 = vmatpush1.bf16.msra.mxu0 0
      %9535 = vmatprep.subr.bf16.mxu0 0
      %9536 = vmatpush1.bf16.msra.mxu0 0
      %9537 = vmatprep.subr.bf16.mxu0 0
      %9538 = vmatpush1.bf16.msra.mxu0 0
      %9539 = vmatprep.subr.bf16.mxu0 0
      %9540 = vmatpush1.bf16.msra.mxu0 0
      %9541 = vmatprep.subr.bf16.mxu0 0
      %9542 = vmatpush1.bf16.msra.mxu0 0
      %9543 = vmatprep.subr.bf16.mxu0 0
      %9544 = vmatpush1.bf16.msra.mxu0 0
      %9545 = vmatprep.subr.bf16.mxu0 0
      %9546 = vmatpush1.bf16.msra.mxu0 %v9529
      %9547 = vmatprep.subr.bf16.mxu0 0
      %9548 = vmatpush2.bf16.msra.mxu0 0
      %9549 = vmatprep.subr.bf16.mxu0 0
      %9550 = vmatpush2.bf16.msra.mxu0 0
      %9551 = vmatprep.subr.bf16.mxu0 0
      %9552 = vmatpush2.bf16.msra.mxu0 0
      %9553 = vmatprep.subr.bf16.mxu0 0
      %9554 = vmatpush2.bf16.msra.mxu0 0
      %9555 = vmatprep.subr.bf16.mxu0 0
      %9556 = vmatpush2.bf16.msra.mxu0 0
      %9557 = vmatprep.subr.bf16.mxu0 0
      %9558 = vmatpush2.bf16.msra.mxu0 0
      %9559 = vmatprep.subr.bf16.mxu0 0
      %9560 = vmatpush2.bf16.msra.mxu0 0
      %9561 = vmatprep.subr.bf16.mxu0 0
      %9562 = vmatpush2.bf16.msra.mxu0 0
      %9563 = vmatprep.mubr.bf16.mxu0 0
      %9564 = vmatmul.mubr.bf16.gmra.mxu0 %v9517
      %v9565 = vpop.f32.mrf.mxu0
      %v9566 = vadd.f32 0.0, %v9565
      %v9567 = vpop.f32.mrf.mxu0
      %v9568 = vpop.f32.mrf.mxu0
      %v9569 = vadd.f32 0.0, %v9568
      %v9570 = vpop.f32.mrf.mxu0
      %9571 = vmatprep.mubr.bf16.mxu0 0
      %9572 = vmatmul.mubr.bf16.gmra.mxu0 %v9520
      %v9573 = vpop.f32.mrf.mxu0
      %v9574 = vadd.f32 0.0, %v9573
      %v9575 = vpop.f32.mrf.mxu0
      %v9576 = vpop.f32.mrf.mxu0
      %v9577 = vadd.f32 0.0, %v9576
      %v9578 = vpop.f32.mrf.mxu0
      %9579 = vmatprep.mubr.bf16.mxu0 0
      %9580 = vmatmul.mubr.bf16.gmra.mxu0 %v9523
      %v9581 = vpop.f32.mrf.mxu0
      %v9582 = vadd.f32 0.0, %v9581
      %v9583 = vpop.f32.mrf.mxu0
      %v9584 = vpop.f32.mrf.mxu0
      %v9585 = vadd.f32 0.0, %v9584
      %v9586 = vpop.f32.mrf.mxu0
      %9587 = vmatprep.mubr.bf16.mxu0 0
      %9588 = vmatmul.mubr.bf16.gmra.mxu0 %v9526
      %v9589 = vpop.f32.mrf.mxu0
      %v9590 = vadd.f32 0.0, %v9589
      %v9591 = vpop.f32.mrf.mxu0
      %v9592 = vpop.f32.mrf.mxu0
      %v9593 = vadd.f32 0.0, %v9592
      %v9594 = vpop.f32.mrf.mxu0
      %9595 = vdwg.mxu0
      %v9596 = vadd.f32 %v8328, %v9566
      %v9597 = vadd.f32 %v8329, %v9569
      %v9598 = vadd.f32 %v8330, %v9574
      %v9599 = vadd.f32 %v8331, %v9577
      %v9600 = vadd.f32 %v8332, %v9582
      %v9601 = vadd.f32 %v8333, %v9585
      %v9602 = vadd.f32 %v8334, %v9590
      %v9603 = vadd.f32 %v8335, %v9593
      %s9604 = scalar_lea.vmem %s6, 240
      %v9605 = vld [vmem:[%s9604] sm:$0xf]
      %v9606 = vld [vmem:[%s9604 + $0x4] sm:$0xf]
      %v9607 = vld [vmem:[%s9604 + $0x8] sm:$0xf]
      %v9608 = vld [vmem:[%s9604 + $0xc] sm:$0xf]
      %s9609 = scalar_lea.vmem %s7, 15
      %v9610 = vld [vmem:[%s9609] sm:$0x1]
      %v9612 = vlaneseq
      %v9613 = vshrl.u32 %v9612, 7
      %v9614 = vsub.s32 0, %v9613
      %v9615 = vrot.slane %v9610, %v9614
      %v9621 = vunpack.c.l.b16 %v9605
      %v9622 = vunpack.c.l.b16 %v9606
      %v9623 = vunpack.c.l.b16 %v9607
      %v9624 = vunpack.c.l.b16 %v9608
      %v9625 = vpack.c.b16 %v9622, %v9621
      %v9626 = vpack.c.b16 %v9624, %v9623
      %9629 = vmatprep.subr.bf16.mxu0 0
      %9630 = vmatpush1.bf16.msra.mxu0 0
      %9631 = vmatprep.subr.bf16.mxu0 0
      %9632 = vmatpush1.bf16.msra.mxu0 0
      %9633 = vmatprep.subr.bf16.mxu0 0
      %9634 = vmatpush1.bf16.msra.mxu0 0
      %9635 = vmatprep.subr.bf16.mxu0 0
      %9636 = vmatpush1.bf16.msra.mxu0 0
      %9637 = vmatprep.subr.bf16.mxu0 0
      %9638 = vmatpush1.bf16.msra.mxu0 0
      %9639 = vmatprep.subr.bf16.mxu0 0
      %9640 = vmatpush1.bf16.msra.mxu0 0
      %9641 = vmatprep.subr.bf16.mxu0 0
      %9642 = vmatpush1.bf16.msra.mxu0 %v9626
      %9643 = vmatprep.subr.bf16.mxu0 0
      %9644 = vmatpush1.bf16.msra.mxu0 %v9625
      %9645 = vmatprep.subr.bf16.mxu0 0
      %9646 = vmatpush2.bf16.msra.mxu0 0
      %9647 = vmatprep.subr.bf16.mxu0 0
      %9648 = vmatpush2.bf16.msra.mxu0 0
      %9649 = vmatprep.subr.bf16.mxu0 0
      %9650 = vmatpush2.bf16.msra.mxu0 0
      %9651 = vmatprep.subr.bf16.mxu0 0
      %9652 = vmatpush2.bf16.msra.mxu0 0
      %9653 = vmatprep.subr.bf16.mxu0 0
      %9654 = vmatpush2.bf16.msra.mxu0 0
      %9655 = vmatprep.subr.bf16.mxu0 0
      %9656 = vmatpush2.bf16.msra.mxu0 0
      %9657 = vmatprep.subr.bf16.mxu0 0
      %9658 = vmatpush2.bf16.msra.mxu0 0
      %9659 = vmatprep.subr.bf16.mxu0 0
      %9660 = vmatpush2.bf16.msra.mxu0 0
      %9661 = vmatprep.mubr.bf16.mxu0 0
      %9662 = vmatmul.mubr.bf16.gmra.mxu0 %v729
      %v9663 = vpop.f32.mrf.mxu0
      %v9664 = vadd.f32 %v9615, %v9663
      %v9665 = vpop.f32.mrf.mxu0
      %v9666 = vpop.f32.mrf.mxu0
      %v9667 = vadd.f32 %v9615, %v9666
      %v9668 = vpop.f32.mrf.mxu0
      %9669 = vmatprep.mubr.bf16.mxu0 0
      %9670 = vmatmul.mubr.bf16.gmra.mxu0 %v732
      %v9671 = vpop.f32.mrf.mxu0
      %v9672 = vadd.f32 %v9615, %v9671
      %v9673 = vpop.f32.mrf.mxu0
      %v9674 = vpop.f32.mrf.mxu0
      %v9675 = vadd.f32 %v9615, %v9674
      %v9676 = vpop.f32.mrf.mxu0
      %9677 = vmatprep.mubr.bf16.mxu0 0
      %9678 = vmatmul.mubr.bf16.gmra.mxu0 %v735
      %v9679 = vpop.f32.mrf.mxu0
      %v9680 = vadd.f32 %v9615, %v9679
      %v9681 = vpop.f32.mrf.mxu0
      %v9682 = vpop.f32.mrf.mxu0
      %v9683 = vadd.f32 %v9615, %v9682
      %v9684 = vpop.f32.mrf.mxu0
      %9685 = vmatprep.mubr.bf16.mxu0 0
      %9686 = vmatmul.mubr.bf16.gmra.mxu0 %v738
      %v9687 = vpop.f32.mrf.mxu0
      %v9688 = vadd.f32 %v9615, %v9687
      %v9689 = vpop.f32.mrf.mxu0
      %v9690 = vpop.f32.mrf.mxu0
      %v9691 = vadd.f32 %v9615, %v9690
      %v9692 = vpop.f32.mrf.mxu0
      %9693 = vdwg.mxu0
      %v9694 = vpack.c.bf16 %v9667, %v9664
      %v9695 = vpack.c.bf16 %v9675, %v9672
      %v9696 = vpack.c.bf16 %v9683, %v9680
      %v9697 = vpack.c.bf16 %v9691, %v9688
      %v9702 = vunpack.c.l.b16 %v9694
      %v9703 = vunpack.c.h.b16 %v9694
      %v9704 = vunpack.c.l.b16 %v9695
      %v9705 = vunpack.c.h.b16 %v9695
      %v9706 = vunpack.c.l.b16 %v9696
      %v9707 = vunpack.c.h.b16 %v9696
      %v9708 = vunpack.c.l.b16 %v9697
      %v9709 = vunpack.c.h.b16 %v9697
      %v9710 = vpack.c.b16 %v9702, %v9702
      %v9711 = vpack.c.b16 %v9703, %v9703
      %v9712 = vpack.c.b16 %v9704, %v9704
      %v9713 = vpack.c.b16 %v9705, %v9705
      %v9714 = vpack.c.b16 %v9706, %v9706
      %v9715 = vpack.c.b16 %v9707, %v9707
      %v9716 = vpack.c.b16 %v9708, %v9708
      %v9717 = vpack.c.b16 %v9709, %v9709
      %s9718 = scalar_lea.vmem %s6, 304
      %v9719 = vld [vmem:[%s9718] sm:$0xf]
      %v9720 = vld [vmem:[%s9718 + $0x4] sm:$0xf]
      %v9721 = vld [vmem:[%s9718 + $0x8] sm:$0xf]
      %v9722 = vld [vmem:[%s9718 + $0xc] sm:$0xf]
      %s9723 = scalar_lea.vmem %s7, 19
      %v9724 = vld [vmem:[%s9723] sm:$0x1]
      %v9726 = vlaneseq
      %v9727 = vshrl.u32 %v9726, 7
      %v9728 = vsub.s32 0, %v9727
      %v9729 = vrot.slane %v9724, %v9728
      %v9735 = vunpack.c.l.b16 %v9719
      %v9736 = vunpack.c.l.b16 %v9720
      %v9737 = vunpack.c.l.b16 %v9721
      %v9738 = vunpack.c.l.b16 %v9722
      %v9739 = vpack.c.b16 %v9736, %v9735
      %v9740 = vpack.c.b16 %v9738, %v9737
      %9743 = vmatprep.subr.bf16.mxu0 0
      %9744 = vmatpush1.bf16.msra.mxu0 0
      %9745 = vmatprep.subr.bf16.mxu0 0
      %9746 = vmatpush1.bf16.msra.mxu0 0
      %9747 = vmatprep.subr.bf16.mxu0 0
      %9748 = vmatpush1.bf16.msra.mxu0 0
      %9749 = vmatprep.subr.bf16.mxu0 0
      %9750 = vmatpush1.bf16.msra.mxu0 0
      %9751 = vmatprep.subr.bf16.mxu0 0
      %9752 = vmatpush1.bf16.msra.mxu0 0
      %9753 = vmatprep.subr.bf16.mxu0 0
      %9754 = vmatpush1.bf16.msra.mxu0 0
      %9755 = vmatprep.subr.bf16.mxu0 0
      %9756 = vmatpush1.bf16.msra.mxu0 %v9740
      %9757 = vmatprep.subr.bf16.mxu0 0
      %9758 = vmatpush1.bf16.msra.mxu0 %v9739
      %9759 = vmatprep.subr.bf16.mxu0 0
      %9760 = vmatpush2.bf16.msra.mxu0 0
      %9761 = vmatprep.subr.bf16.mxu0 0
      %9762 = vmatpush2.bf16.msra.mxu0 0
      %9763 = vmatprep.subr.bf16.mxu0 0
      %9764 = vmatpush2.bf16.msra.mxu0 0
      %9765 = vmatprep.subr.bf16.mxu0 0
      %9766 = vmatpush2.bf16.msra.mxu0 0
      %9767 = vmatprep.subr.bf16.mxu0 0
      %9768 = vmatpush2.bf16.msra.mxu0 0
      %9769 = vmatprep.subr.bf16.mxu0 0
      %9770 = vmatpush2.bf16.msra.mxu0 0
      %9771 = vmatprep.subr.bf16.mxu0 0
      %9772 = vmatpush2.bf16.msra.mxu0 0
      %9773 = vmatprep.subr.bf16.mxu0 0
      %9774 = vmatpush2.bf16.msra.mxu0 0
      %9775 = vmatprep.mubr.bf16.mxu0 0
      %9776 = vmatmul.mubr.bf16.gmra.mxu0 %v729
      %v9777 = vpop.f32.mrf.mxu0
      %v9778 = vadd.f32 %v9729, %v9777
      %v9779 = vpop.f32.mrf.mxu0
      %v9780 = vpop.f32.mrf.mxu0
      %v9781 = vadd.f32 %v9729, %v9780
      %v9782 = vpop.f32.mrf.mxu0
      %9783 = vmatprep.mubr.bf16.mxu0 0
      %9784 = vmatmul.mubr.bf16.gmra.mxu0 %v732
      %v9785 = vpop.f32.mrf.mxu0
      %v9786 = vadd.f32 %v9729, %v9785
      %v9787 = vpop.f32.mrf.mxu0
      %v9788 = vpop.f32.mrf.mxu0
      %v9789 = vadd.f32 %v9729, %v9788
      %v9790 = vpop.f32.mrf.mxu0
      %9791 = vmatprep.mubr.bf16.mxu0 0
      %9792 = vmatmul.mubr.bf16.gmra.mxu0 %v735
      %v9793 = vpop.f32.mrf.mxu0
      %v9794 = vadd.f32 %v9729, %v9793
      %v9795 = vpop.f32.mrf.mxu0
      %v9796 = vpop.f32.mrf.mxu0
      %v9797 = vadd.f32 %v9729, %v9796
      %v9798 = vpop.f32.mrf.mxu0
      %9799 = vmatprep.mubr.bf16.mxu0 0
      %9800 = vmatmul.mubr.bf16.gmra.mxu0 %v738
      %v9801 = vpop.f32.mrf.mxu0
      %v9802 = vadd.f32 %v9729, %v9801
      %v9803 = vpop.f32.mrf.mxu0
      %v9804 = vpop.f32.mrf.mxu0
      %v9805 = vadd.f32 %v9729, %v9804
      %v9806 = vpop.f32.mrf.mxu0
      %9807 = vdwg.mxu0
      %v9808 = vpack.c.bf16 %v9781, %v9778
      %v9809 = vpack.c.bf16 %v9789, %v9786
      %v9810 = vpack.c.bf16 %v9797, %v9794
      %v9811 = vpack.c.bf16 %v9805, %v9802
      %v9816 = vunpack.c.l.b16 %v9808
      %v9817 = vunpack.c.h.b16 %v9808
      %v9818 = vunpack.c.l.b16 %v9809
      %v9819 = vunpack.c.h.b16 %v9809
      %v9820 = vunpack.c.l.b16 %v9810
      %v9821 = vunpack.c.h.b16 %v9810
      %v9822 = vunpack.c.l.b16 %v9811
      %v9823 = vunpack.c.h.b16 %v9811
      %v9824 = vpack.c.b16 %v9816, %v9816
      %v9825 = vpack.c.b16 %v9817, %v9817
      %v9826 = vpack.c.b16 %v9818, %v9818
      %v9827 = vpack.c.b16 %v9819, %v9819
      %v9828 = vpack.c.b16 %v9820, %v9820
      %v9829 = vpack.c.b16 %v9821, %v9821
      %v9830 = vpack.c.b16 %v9822, %v9822
      %v9831 = vpack.c.b16 %v9823, %v9823
      %s9832 = scalar_lea.vmem %s6, 368
      %v9833 = vld [vmem:[%s9832] sm:$0xf]
      %v9834 = vld [vmem:[%s9832 + $0x4] sm:$0xf]
      %v9835 = vld [vmem:[%s9832 + $0x8] sm:$0xf]
      %v9836 = vld [vmem:[%s9832 + $0xc] sm:$0xf]
      %s9837 = scalar_lea.vmem %s7, 23
      %v9838 = vld [vmem:[%s9837] sm:$0x1]
      %v9840 = vlaneseq
      %v9841 = vshrl.u32 %v9840, 7
      %v9842 = vsub.s32 0, %v9841
      %v9843 = vrot.slane %v9838, %v9842
      %v9849 = vunpack.c.l.b16 %v9833
      %v9850 = vunpack.c.l.b16 %v9834
      %v9851 = vunpack.c.l.b16 %v9835
      %v9852 = vunpack.c.l.b16 %v9836
      %v9853 = vpack.c.b16 %v9850, %v9849
      %v9854 = vpack.c.b16 %v9852, %v9851
      %9857 = vmatprep.subr.bf16.mxu0 0
      %9858 = vmatpush1.bf16.msra.mxu0 0
      %9859 = vmatprep.subr.bf16.mxu0 0
      %9860 = vmatpush1.bf16.msra.mxu0 0
      %9861 = vmatprep.subr.bf16.mxu0 0
      %9862 = vmatpush1.bf16.msra.mxu0 0
      %9863 = vmatprep.subr.bf16.mxu0 0
      %9864 = vmatpush1.bf16.msra.mxu0 0
      %9865 = vmatprep.subr.bf16.mxu0 0
      %9866 = vmatpush1.bf16.msra.mxu0 0
      %9867 = vmatprep.subr.bf16.mxu0 0
      %9868 = vmatpush1.bf16.msra.mxu0 0
      %9869 = vmatprep.subr.bf16.mxu0 0
      %9870 = vmatpush1.bf16.msra.mxu0 %v9854
      %9871 = vmatprep.subr.bf16.mxu0 0
      %9872 = vmatpush1.bf16.msra.mxu0 %v9853
      %9873 = vmatprep.subr.bf16.mxu0 0
      %9874 = vmatpush2.bf16.msra.mxu0 0
      %9875 = vmatprep.subr.bf16.mxu0 0
      %9876 = vmatpush2.bf16.msra.mxu0 0
      %9877 = vmatprep.subr.bf16.mxu0 0
      %9878 = vmatpush2.bf16.msra.mxu0 0
      %9879 = vmatprep.subr.bf16.mxu0 0
      %9880 = vmatpush2.bf16.msra.mxu0 0
      %9881 = vmatprep.subr.bf16.mxu0 0
      %9882 = vmatpush2.bf16.msra.mxu0 0
      %9883 = vmatprep.subr.bf16.mxu0 0
      %9884 = vmatpush2.bf16.msra.mxu0 0
      %9885 = vmatprep.subr.bf16.mxu0 0
      %9886 = vmatpush2.bf16.msra.mxu0 0
      %9887 = vmatprep.subr.bf16.mxu0 0
      %9888 = vmatpush2.bf16.msra.mxu0 0
      %9889 = vmatprep.mubr.bf16.mxu0 0
      %9890 = vmatmul.mubr.bf16.gmra.mxu0 %v729
      %v9891 = vpop.f32.mrf.mxu0
      %v9892 = vadd.f32 %v9843, %v9891
      %v9893 = vpop.f32.mrf.mxu0
      %v9894 = vpop.f32.mrf.mxu0
      %v9895 = vadd.f32 %v9843, %v9894
      %v9896 = vpop.f32.mrf.mxu0
      %9897 = vmatprep.mubr.bf16.mxu0 0
      %9898 = vmatmul.mubr.bf16.gmra.mxu0 %v732
      %v9899 = vpop.f32.mrf.mxu0
      %v9900 = vadd.f32 %v9843, %v9899
      %v9901 = vpop.f32.mrf.mxu0
      %v9902 = vpop.f32.mrf.mxu0
      %v9903 = vadd.f32 %v9843, %v9902
      %v9904 = vpop.f32.mrf.mxu0
      %9905 = vmatprep.mubr.bf16.mxu0 0
      %9906 = vmatmul.mubr.bf16.gmra.mxu0 %v735
      %v9907 = vpop.f32.mrf.mxu0
      %v9908 = vadd.f32 %v9843, %v9907
      %v9909 = vpop.f32.mrf.mxu0
      %v9910 = vpop.f32.mrf.mxu0
      %v9911 = vadd.f32 %v9843, %v9910
      %v9912 = vpop.f32.mrf.mxu0
      %9913 = vmatprep.mubr.bf16.mxu0 0
      %9914 = vmatmul.mubr.bf16.gmra.mxu0 %v738
      %v9915 = vpop.f32.mrf.mxu0
      %v9916 = vadd.f32 %v9843, %v9915
      %v9917 = vpop.f32.mrf.mxu0
      %v9918 = vpop.f32.mrf.mxu0
      %v9919 = vadd.f32 %v9843, %v9918
      %v9920 = vpop.f32.mrf.mxu0
      %9921 = vdwg.mxu0
      %v9922 = vpack.c.bf16 %v9895, %v9892
      %v9923 = vpack.c.bf16 %v9903, %v9900
      %v9924 = vpack.c.bf16 %v9911, %v9908
      %v9925 = vpack.c.bf16 %v9919, %v9916
      %v9930 = vunpack.c.l.b16 %v9922
      %v9931 = vunpack.c.h.b16 %v9922
      %v9932 = vunpack.c.l.b16 %v9923
      %v9933 = vunpack.c.h.b16 %v9923
      %v9934 = vunpack.c.l.b16 %v9924
      %v9935 = vunpack.c.h.b16 %v9924
      %v9936 = vunpack.c.l.b16 %v9925
      %v9937 = vunpack.c.h.b16 %v9925
      %v9938 = vpack.c.b16 %v9930, %v9930
      %v9939 = vpack.c.b16 %v9931, %v9931
      %v9940 = vpack.c.b16 %v9932, %v9932
      %v9941 = vpack.c.b16 %v9933, %v9933
      %v9942 = vpack.c.b16 %v9934, %v9934
      %v9943 = vpack.c.b16 %v9935, %v9935
      %v9944 = vpack.c.b16 %v9936, %v9936
      %v9945 = vpack.c.b16 %v9937, %v9937
      %v9947 = vsel %vm1069, %v9710, 0
      %v9950 = vsel %vm1069, %v9824, 0
      %9952 = vmatprep.subr.bf16.mxu0 0
      %9953 = vmatpush1.bf16.xpose.msra.mxu0 0
      %9954 = vmatprep.subr.bf16.mxu0 0
      %9955 = vmatpush1.bf16.xpose.msra.mxu0 0
      %9956 = vmatprep.subr.bf16.mxu0 0
      %9957 = vmatpush1.bf16.xpose.msra.mxu0 0
      %9958 = vmatprep.subr.bf16.mxu0 0
      %9959 = vmatpush1.bf16.xpose.msra.mxu0 0
      %9960 = vmatprep.subr.bf16.mxu0 0
      %9961 = vmatpush1.bf16.xpose.msra.mxu0 0
      %9962 = vmatprep.subr.bf16.mxu0 0
      %9963 = vmatpush1.bf16.xpose.msra.mxu0 0
      %9964 = vmatprep.subr.bf16.mxu0 0
      %9965 = vmatpush1.bf16.xpose.msra.mxu0 0
      %9966 = vmatprep.subr.bf16.mxu0 0
      %9967 = vmatpush1.bf16.xpose.msra.mxu0 %v9950
      %9968 = vmatprep.subr.bf16.mxu0 0
      %9969 = vmatpush2.bf16.xpose.msra.mxu0 0
      %9970 = vmatprep.subr.bf16.mxu0 0
      %9971 = vmatpush2.bf16.xpose.msra.mxu0 0
      %9972 = vmatprep.subr.bf16.mxu0 0
      %9973 = vmatpush2.bf16.xpose.msra.mxu0 0
      %9974 = vmatprep.subr.bf16.mxu0 0
      %9975 = vmatpush2.bf16.xpose.msra.mxu0 0
      %9976 = vmatprep.subr.bf16.mxu0 0
      %9977 = vmatpush2.bf16.xpose.msra.mxu0 0
      %9978 = vmatprep.subr.bf16.mxu0 0
      %9979 = vmatpush2.bf16.xpose.msra.mxu0 0
      %9980 = vmatprep.subr.bf16.mxu0 0
      %9981 = vmatpush2.bf16.xpose.msra.mxu0 0
      %9982 = vmatprep.subr.bf16.mxu0 0
      %9983 = vmatpush2.bf16.xpose.msra.mxu0 0
      %9984 = vmatprep.mubr.bf16.mxu0 0
      %9985 = vmatmul.mubr.bf16.gmra.mxu0 %v9947
      %v9986 = vpop.f32.mrf.mxu0
      %v9987 = vadd.f32 %v432, %v9986
      %v9988 = vpop.f32.mrf.mxu0
      %v9989 = vpop.f32.mrf.mxu0
      %v9990 = vpop.f32.mrf.mxu0
      %9991 = vdwg.mxu0
      %v9993 = vsel %vm1069, %v9711, 0
      %v9996 = vsel %vm1069, %v9825, 0
      %9998 = vmatprep.subr.bf16.mxu0 0
      %9999 = vmatpush1.bf16.xpose.msra.mxu0 0
      %10000 = vmatprep.subr.bf16.mxu0 0
      %10001 = vmatpush1.bf16.xpose.msra.mxu0 0
      %10002 = vmatprep.subr.bf16.mxu0 0
      %10003 = vmatpush1.bf16.xpose.msra.mxu0 0
      %10004 = vmatprep.subr.bf16.mxu0 0
      %10005 = vmatpush1.bf16.xpose.msra.mxu0 0
      %10006 = vmatprep.subr.bf16.mxu0 0
      %10007 = vmatpush1.bf16.xpose.msra.mxu0 0
      %10008 = vmatprep.subr.bf16.mxu0 0
      %10009 = vmatpush1.bf16.xpose.msra.mxu0 0
      %10010 = vmatprep.subr.bf16.mxu0 0
      %10011 = vmatpush1.bf16.xpose.msra.mxu0 0
      %10012 = vmatprep.subr.bf16.mxu0 0
      %10013 = vmatpush1.bf16.xpose.msra.mxu0 %v9996
      %10014 = vmatprep.subr.bf16.mxu0 0
      %10015 = vmatpush2.bf16.xpose.msra.mxu0 0
      %10016 = vmatprep.subr.bf16.mxu0 0
      %10017 = vmatpush2.bf16.xpose.msra.mxu0 0
      %10018 = vmatprep.subr.bf16.mxu0 0
      %10019 = vmatpush2.bf16.xpose.msra.mxu0 0
      %10020 = vmatprep.subr.bf16.mxu0 0
      %10021 = vmatpush2.bf16.xpose.msra.mxu0 0
      %10022 = vmatprep.subr.bf16.mxu0 0
      %10023 = vmatpush2.bf16.xpose.msra.mxu0 0
      %10024 = vmatprep.subr.bf16.mxu0 0
      %10025 = vmatpush2.bf16.xpose.msra.mxu0 0
      %10026 = vmatprep.subr.bf16.mxu0 0
      %10027 = vmatpush2.bf16.xpose.msra.mxu0 0
      %10028 = vmatprep.subr.bf16.mxu0 0
      %10029 = vmatpush2.bf16.xpose.msra.mxu0 0
      %10030 = vmatprep.mubr.bf16.mxu0 0
      %10031 = vmatmul.mubr.bf16.gmra.mxu0 %v9993
      %v10032 = vpop.f32.mrf.mxu0
      %v10033 = vadd.f32 %v432, %v10032
      %v10034 = vpop.f32.mrf.mxu0
      %v10035 = vpop.f32.mrf.mxu0
      %v10036 = vpop.f32.mrf.mxu0
      %10037 = vdwg.mxu0
      %v10039 = vsel %vm1069, %v9712, 0
      %v10042 = vsel %vm1069, %v9826, 0
      %10044 = vmatprep.subr.bf16.mxu0 0
      %10045 = vmatpush1.bf16.xpose.msra.mxu0 0
      %10046 = vmatprep.subr.bf16.mxu0 0
      %10047 = vmatpush1.bf16.xpose.msra.mxu0 0
      %10048 = vmatprep.subr.bf16.mxu0 0
      %10049 = vmatpush1.bf16.xpose.msra.mxu0 0
      %10050 = vmatprep.subr.bf16.mxu0 0
      %10051 = vmatpush1.bf16.xpose.msra.mxu0 0
      %10052 = vmatprep.subr.bf16.mxu0 0
      %10053 = vmatpush1.bf16.xpose.msra.mxu0 0
      %10054 = vmatprep.subr.bf16.mxu0 0
      %10055 = vmatpush1.bf16.xpose.msra.mxu0 0
      %10056 = vmatprep.subr.bf16.mxu0 0
      %10057 = vmatpush1.bf16.xpose.msra.mxu0 0
      %10058 = vmatprep.subr.bf16.mxu0 0
      %10059 = vmatpush1.bf16.xpose.msra.mxu0 %v10042
      %10060 = vmatprep.subr.bf16.mxu0 0
      %10061 = vmatpush2.bf16.xpose.msra.mxu0 0
      %10062 = vmatprep.subr.bf16.mxu0 0
      %10063 = vmatpush2.bf16.xpose.msra.mxu0 0
      %10064 = vmatprep.subr.bf16.mxu0 0
      %10065 = vmatpush2.bf16.xpose.msra.mxu0 0
      %10066 = vmatprep.subr.bf16.mxu0 0
      %10067 = vmatpush2.bf16.xpose.msra.mxu0 0
      %10068 = vmatprep.subr.bf16.mxu0 0
      %10069 = vmatpush2.bf16.xpose.msra.mxu0 0
      %10070 = vmatprep.subr.bf16.mxu0 0
      %10071 = vmatpush2.bf16.xpose.msra.mxu0 0
      %10072 = vmatprep.subr.bf16.mxu0 0
      %10073 = vmatpush2.bf16.xpose.msra.mxu0 0
      %10074 = vmatprep.subr.bf16.mxu0 0
      %10075 = vmatpush2.bf16.xpose.msra.mxu0 0
      %10076 = vmatprep.mubr.bf16.mxu0 0
      %10077 = vmatmul.mubr.bf16.gmra.mxu0 %v10039
      %v10078 = vpop.f32.mrf.mxu0
      %v10079 = vadd.f32 %v432, %v10078
      %v10080 = vpop.f32.mrf.mxu0
      %v10081 = vpop.f32.mrf.mxu0
      %v10082 = vpop.f32.mrf.mxu0
      %10083 = vdwg.mxu0
      %v10085 = vsel %vm1069, %v9713, 0
      %v10088 = vsel %vm1069, %v9827, 0
      %10090 = vmatprep.subr.bf16.mxu0 0
      %10091 = vmatpush1.bf16.xpose.msra.mxu0 0
      %10092 = vmatprep.subr.bf16.mxu0 0
      %10093 = vmatpush1.bf16.xpose.msra.mxu0 0
      %10094 = vmatprep.subr.bf16.mxu0 0
      %10095 = vmatpush1.bf16.xpose.msra.mxu0 0
      %10096 = vmatprep.subr.bf16.mxu0 0
      %10097 = vmatpush1.bf16.xpose.msra.mxu0 0
      %10098 = vmatprep.subr.bf16.mxu0 0
      %10099 = vmatpush1.bf16.xpose.msra.mxu0 0
      %10100 = vmatprep.subr.bf16.mxu0 0
      %10101 = vmatpush1.bf16.xpose.msra.mxu0 0
      %10102 = vmatprep.subr.bf16.mxu0 0
      %10103 = vmatpush1.bf16.xpose.msra.mxu0 0
      %10104 = vmatprep.subr.bf16.mxu0 0
      %10105 = vmatpush1.bf16.xpose.msra.mxu0 %v10088
      %10106 = vmatprep.subr.bf16.mxu0 0
      %10107 = vmatpush2.bf16.xpose.msra.mxu0 0
      %10108 = vmatprep.subr.bf16.mxu0 0
      %10109 = vmatpush2.bf16.xpose.msra.mxu0 0
      %10110 = vmatprep.subr.bf16.mxu0 0
      %10111 = vmatpush2.bf16.xpose.msra.mxu0 0
      %10112 = vmatprep.subr.bf16.mxu0 0
      %10113 = vmatpush2.bf16.xpose.msra.mxu0 0
      %10114 = vmatprep.subr.bf16.mxu0 0
      %10115 = vmatpush2.bf16.xpose.msra.mxu0 0
      %10116 = vmatprep.subr.bf16.mxu0 0
      %10117 = vmatpush2.bf16.xpose.msra.mxu0 0
      %10118 = vmatprep.subr.bf16.mxu0 0
      %10119 = vmatpush2.bf16.xpose.msra.mxu0 0
      %10120 = vmatprep.subr.bf16.mxu0 0
      %10121 = vmatpush2.bf16.xpose.msra.mxu0 0
      %10122 = vmatprep.mubr.bf16.mxu0 0
      %10123 = vmatmul.mubr.bf16.gmra.mxu0 %v10085
      %v10124 = vpop.f32.mrf.mxu0
      %v10125 = vadd.f32 %v432, %v10124
      %v10126 = vpop.f32.mrf.mxu0
      %v10127 = vpop.f32.mrf.mxu0
      %v10128 = vpop.f32.mrf.mxu0
      %10129 = vdwg.mxu0
      %v10131 = vsel %vm1069, %v9714, 0
      %v10134 = vsel %vm1069, %v9828, 0
      %10136 = vmatprep.subr.bf16.mxu0 0
      %10137 = vmatpush1.bf16.xpose.msra.mxu0 0
      %10138 = vmatprep.subr.bf16.mxu0 0
      %10139 = vmatpush1.bf16.xpose.msra.mxu0 0
      %10140 = vmatprep.subr.bf16.mxu0 0
      %10141 = vmatpush1.bf16.xpose.msra.mxu0 0
      %10142 = vmatprep.subr.bf16.mxu0 0
      %10143 = vmatpush1.bf16.xpose.msra.mxu0 0
      %10144 = vmatprep.subr.bf16.mxu0 0
      %10145 = vmatpush1.bf16.xpose.msra.mxu0 0
      %10146 = vmatprep.subr.bf16.mxu0 0
      %10147 = vmatpush1.bf16.xpose.msra.mxu0 0
      %10148 = vmatprep.subr.bf16.mxu0 0
      %10149 = vmatpush1.bf16.xpose.msra.mxu0 0
      %10150 = vmatprep.subr.bf16.mxu0 0
      %10151 = vmatpush1.bf16.xpose.msra.mxu0 %v10134
      %10152 = vmatprep.subr.bf16.mxu0 0
      %10153 = vmatpush2.bf16.xpose.msra.mxu0 0
      %10154 = vmatprep.subr.bf16.mxu0 0
      %10155 = vmatpush2.bf16.xpose.msra.mxu0 0
      %10156 = vmatprep.subr.bf16.mxu0 0
      %10157 = vmatpush2.bf16.xpose.msra.mxu0 0
      %10158 = vmatprep.subr.bf16.mxu0 0
      %10159 = vmatpush2.bf16.xpose.msra.mxu0 0
      %10160 = vmatprep.subr.bf16.mxu0 0
      %10161 = vmatpush2.bf16.xpose.msra.mxu0 0
      %10162 = vmatprep.subr.bf16.mxu0 0
      %10163 = vmatpush2.bf16.xpose.msra.mxu0 0
      %10164 = vmatprep.subr.bf16.mxu0 0
      %10165 = vmatpush2.bf16.xpose.msra.mxu0 0
      %10166 = vmatprep.subr.bf16.mxu0 0
      %10167 = vmatpush2.bf16.xpose.msra.mxu0 0
      %10168 = vmatprep.mubr.bf16.mxu0 0
      %10169 = vmatmul.mubr.bf16.gmra.mxu0 %v10131
      %v10170 = vpop.f32.mrf.mxu0
      %v10171 = vadd.f32 %v432, %v10170
      %v10172 = vpop.f32.mrf.mxu0
      %v10173 = vpop.f32.mrf.mxu0
      %v10174 = vpop.f32.mrf.mxu0
      %10175 = vdwg.mxu0
      %v10177 = vsel %vm1069, %v9715, 0
      %v10180 = vsel %vm1069, %v9829, 0
      %10182 = vmatprep.subr.bf16.mxu0 0
      %10183 = vmatpush1.bf16.xpose.msra.mxu0 0
      %10184 = vmatprep.subr.bf16.mxu0 0
      %10185 = vmatpush1.bf16.xpose.msra.mxu0 0
      %10186 = vmatprep.subr.bf16.mxu0 0
      %10187 = vmatpush1.bf16.xpose.msra.mxu0 0
      %10188 = vmatprep.subr.bf16.mxu0 0
      %10189 = vmatpush1.bf16.xpose.msra.mxu0 0
      %10190 = vmatprep.subr.bf16.mxu0 0
      %10191 = vmatpush1.bf16.xpose.msra.mxu0 0
      %10192 = vmatprep.subr.bf16.mxu0 0
      %10193 = vmatpush1.bf16.xpose.msra.mxu0 0
      %10194 = vmatprep.subr.bf16.mxu0 0
      %10195 = vmatpush1.bf16.xpose.msra.mxu0 0
      %10196 = vmatprep.subr.bf16.mxu0 0
      %10197 = vmatpush1.bf16.xpose.msra.mxu0 %v10180
      %10198 = vmatprep.subr.bf16.mxu0 0
      %10199 = vmatpush2.bf16.xpose.msra.mxu0 0
      %10200 = vmatprep.subr.bf16.mxu0 0
      %10201 = vmatpush2.bf16.xpose.msra.mxu0 0
      %10202 = vmatprep.subr.bf16.mxu0 0
      %10203 = vmatpush2.bf16.xpose.msra.mxu0 0
      %10204 = vmatprep.subr.bf16.mxu0 0
      %10205 = vmatpush2.bf16.xpose.msra.mxu0 0
      %10206 = vmatprep.subr.bf16.mxu0 0
      %10207 = vmatpush2.bf16.xpose.msra.mxu0 0
      %10208 = vmatprep.subr.bf16.mxu0 0
      %10209 = vmatpush2.bf16.xpose.msra.mxu0 0
      %10210 = vmatprep.subr.bf16.mxu0 0
      %10211 = vmatpush2.bf16.xpose.msra.mxu0 0
      %10212 = vmatprep.subr.bf16.mxu0 0
      %10213 = vmatpush2.bf16.xpose.msra.mxu0 0
      %10214 = vmatprep.mubr.bf16.mxu0 0
      %10215 = vmatmul.mubr.bf16.gmra.mxu0 %v10177
      %v10216 = vpop.f32.mrf.mxu0
      %v10217 = vadd.f32 %v432, %v10216
      %v10218 = vpop.f32.mrf.mxu0
      %v10219 = vpop.f32.mrf.mxu0
      %v10220 = vpop.f32.mrf.mxu0
      %10221 = vdwg.mxu0
      %v10223 = vsel %vm1069, %v9716, 0
      %v10226 = vsel %vm1069, %v9830, 0
      %10228 = vmatprep.subr.bf16.mxu0 0
      %10229 = vmatpush1.bf16.xpose.msra.mxu0 0
      %10230 = vmatprep.subr.bf16.mxu0 0
      %10231 = vmatpush1.bf16.xpose.msra.mxu0 0
      %10232 = vmatprep.subr.bf16.mxu0 0
      %10233 = vmatpush1.bf16.xpose.msra.mxu0 0
      %10234 = vmatprep.subr.bf16.mxu0 0
      %10235 = vmatpush1.bf16.xpose.msra.mxu0 0
      %10236 = vmatprep.subr.bf16.mxu0 0
      %10237 = vmatpush1.bf16.xpose.msra.mxu0 0
      %10238 = vmatprep.subr.bf16.mxu0 0
      %10239 = vmatpush1.bf16.xpose.msra.mxu0 0
      %10240 = vmatprep.subr.bf16.mxu0 0
      %10241 = vmatpush1.bf16.xpose.msra.mxu0 0
      %10242 = vmatprep.subr.bf16.mxu0 0
      %10243 = vmatpush1.bf16.xpose.msra.mxu0 %v10226
      %10244 = vmatprep.subr.bf16.mxu0 0
      %10245 = vmatpush2.bf16.xpose.msra.mxu0 0
      %10246 = vmatprep.subr.bf16.mxu0 0
      %10247 = vmatpush2.bf16.xpose.msra.mxu0 0
      %10248 = vmatprep.subr.bf16.mxu0 0
      %10249 = vmatpush2.bf16.xpose.msra.mxu0 0
      %10250 = vmatprep.subr.bf16.mxu0 0
      %10251 = vmatpush2.bf16.xpose.msra.mxu0 0
      %10252 = vmatprep.subr.bf16.mxu0 0
      %10253 = vmatpush2.bf16.xpose.msra.mxu0 0
      %10254 = vmatprep.subr.bf16.mxu0 0
      %10255 = vmatpush2.bf16.xpose.msra.mxu0 0
      %10256 = vmatprep.subr.bf16.mxu0 0
      %10257 = vmatpush2.bf16.xpose.msra.mxu0 0
      %10258 = vmatprep.subr.bf16.mxu0 0
      %10259 = vmatpush2.bf16.xpose.msra.mxu0 0
      %10260 = vmatprep.mubr.bf16.mxu0 0
      %10261 = vmatmul.mubr.bf16.gmra.mxu0 %v10223
      %v10262 = vpop.f32.mrf.mxu0
      %v10263 = vadd.f32 %v432, %v10262
      %v10264 = vpop.f32.mrf.mxu0
      %v10265 = vpop.f32.mrf.mxu0
      %v10266 = vpop.f32.mrf.mxu0
      %10267 = vdwg.mxu0
      %v10269 = vsel %vm1069, %v9717, 0
      %v10272 = vsel %vm1069, %v9831, 0
      %10274 = vmatprep.subr.bf16.mxu0 0
      %10275 = vmatpush1.bf16.xpose.msra.mxu0 0
      %10276 = vmatprep.subr.bf16.mxu0 0
      %10277 = vmatpush1.bf16.xpose.msra.mxu0 0
      %10278 = vmatprep.subr.bf16.mxu0 0
      %10279 = vmatpush1.bf16.xpose.msra.mxu0 0
      %10280 = vmatprep.subr.bf16.mxu0 0
      %10281 = vmatpush1.bf16.xpose.msra.mxu0 0
      %10282 = vmatprep.subr.bf16.mxu0 0
      %10283 = vmatpush1.bf16.xpose.msra.mxu0 0
      %10284 = vmatprep.subr.bf16.mxu0 0
      %10285 = vmatpush1.bf16.xpose.msra.mxu0 0
      %10286 = vmatprep.subr.bf16.mxu0 0
      %10287 = vmatpush1.bf16.xpose.msra.mxu0 0
      %10288 = vmatprep.subr.bf16.mxu0 0
      %10289 = vmatpush1.bf16.xpose.msra.mxu0 %v10272
      %10290 = vmatprep.subr.bf16.mxu0 0
      %10291 = vmatpush2.bf16.xpose.msra.mxu0 0
      %10292 = vmatprep.subr.bf16.mxu0 0
      %10293 = vmatpush2.bf16.xpose.msra.mxu0 0
      %10294 = vmatprep.subr.bf16.mxu0 0
      %10295 = vmatpush2.bf16.xpose.msra.mxu0 0
      %10296 = vmatprep.subr.bf16.mxu0 0
      %10297 = vmatpush2.bf16.xpose.msra.mxu0 0
      %10298 = vmatprep.subr.bf16.mxu0 0
      %10299 = vmatpush2.bf16.xpose.msra.mxu0 0
      %10300 = vmatprep.subr.bf16.mxu0 0
      %10301 = vmatpush2.bf16.xpose.msra.mxu0 0
      %10302 = vmatprep.subr.bf16.mxu0 0
      %10303 = vmatpush2.bf16.xpose.msra.mxu0 0
      %10304 = vmatprep.subr.bf16.mxu0 0
      %10305 = vmatpush2.bf16.xpose.msra.mxu0 0
      %10306 = vmatprep.mubr.bf16.mxu0 0
      %10307 = vmatmul.mubr.bf16.gmra.mxu0 %v10269
      %v10308 = vpop.f32.mrf.mxu0
      %v10309 = vadd.f32 %v432, %v10308
      %v10310 = vpop.f32.mrf.mxu0
      %v10311 = vpop.f32.mrf.mxu0
      %v10312 = vpop.f32.mrf.mxu0
      %10313 = vdwg.mxu0
      %v10314 = vsel %vm1069, %v9987, -inf
      %10315 = vmax.xlane.f32.xlu0 %v10314
      %v10316 = vpop.xlane.xlu0 %10315
      %v10317 = vsel %vm1069, %v10033, -inf
      %10318 = vmax.xlane.f32.xlu0 %v10317
      %v10319 = vpop.xlane.xlu0 %10318
      %v10320 = vsel %vm1069, %v10079, -inf
      %10321 = vmax.xlane.f32.xlu0 %v10320
      %v10322 = vpop.xlane.xlu0 %10321
      %v10323 = vsel %vm1069, %v10125, -inf
      %10324 = vmax.xlane.f32.xlu0 %v10323
      %v10325 = vpop.xlane.xlu0 %10324
      %v10326 = vsel %vm1069, %v10171, -inf
      %10327 = vmax.xlane.f32.xlu0 %v10326
      %v10328 = vpop.xlane.xlu0 %10327
      %v10329 = vsel %vm1069, %v10217, -inf
      %10330 = vmax.xlane.f32.xlu0 %v10329
      %v10331 = vpop.xlane.xlu0 %10330
      %v10332 = vsel %vm1069, %v10263, -inf
      %10333 = vmax.xlane.f32.xlu0 %v10332
      %v10334 = vpop.xlane.xlu0 %10333
      %v10335 = vsel %vm1069, %v10309, -inf
      %10336 = vmax.xlane.f32.xlu0 %v10335
      %v10337 = vpop.xlane.xlu0 %10336
      %v10338 = vsub.f32 %v9987, %v10316
      %v10339 = vsub.f32 %v10033, %v10319
      %v10340 = vsub.f32 %v10079, %v10322
      %v10341 = vsub.f32 %v10125, %v10325
      %v10342 = vsub.f32 %v10171, %v10328
      %v10343 = vsub.f32 %v10217, %v10331
      %v10344 = vsub.f32 %v10263, %v10334
      %v10345 = vsub.f32 %v10309, %v10337
      %v10346 = vmul.f32 %v10338, 1.442695
      %v10347 = vpow.pop %v10346
      %v10348 = vmul.f32 %v10339, 1.442695
      %v10349 = vpow.pop %v10348
      %v10350 = vmul.f32 %v10340, 1.442695
      %v10351 = vpow.pop %v10350
      %v10352 = vmul.f32 %v10341, 1.442695
      %v10353 = vpow.pop %v10352
      %v10354 = vmul.f32 %v10342, 1.442695
      %v10355 = vpow.pop %v10354
      %v10356 = vmul.f32 %v10343, 1.442695
      %v10357 = vpow.pop %v10356
      %v10358 = vmul.f32 %v10344, 1.442695
      %v10359 = vpow.pop %v10358
      %v10360 = vmul.f32 %v10345, 1.442695
      %v10361 = vpow.pop %v10360
      %v10362 = vsel %vm1069, %v10347, 0.0
      %10363 = vadd.xlane.f32.xlu0 %v10362
      %v10364 = vpop.xlane.xlu0 %10363
      %v10365 = vsel %vm1069, %v10349, 0.0
      %10366 = vadd.xlane.f32.xlu0 %v10365
      %v10367 = vpop.xlane.xlu0 %10366
      %v10368 = vsel %vm1069, %v10351, 0.0
      %10369 = vadd.xlane.f32.xlu0 %v10368
      %v10370 = vpop.xlane.xlu0 %10369
      %v10371 = vsel %vm1069, %v10353, 0.0
      %10372 = vadd.xlane.f32.xlu0 %v10371
      %v10373 = vpop.xlane.xlu0 %10372
      %v10374 = vsel %vm1069, %v10355, 0.0
      %10375 = vadd.xlane.f32.xlu0 %v10374
      %v10376 = vpop.xlane.xlu0 %10375
      %v10377 = vsel %vm1069, %v10357, 0.0
      %10378 = vadd.xlane.f32.xlu0 %v10377
      %v10379 = vpop.xlane.xlu0 %10378
      %v10380 = vsel %vm1069, %v10359, 0.0
      %10381 = vadd.xlane.f32.xlu0 %v10380
      %v10382 = vpop.xlane.xlu0 %10381
      %v10383 = vsel %vm1069, %v10361, 0.0
      %10384 = vadd.xlane.f32.xlu0 %v10383
      %v10385 = vpop.xlane.xlu0 %10384
      %v10386 = vrcp.pop %v10364
      %v10387 = vrcp.pop %v10367
      %v10388 = vrcp.pop %v10370
      %v10389 = vrcp.pop %v10373
      %v10390 = vrcp.pop %v10376
      %v10391 = vrcp.pop %v10379
      %v10392 = vrcp.pop %v10382
      %v10393 = vrcp.pop %v10385
      %v10394 = vmul.f32 %v10347, %v10386
      %v10395 = vmul.f32 %v10349, %v10387
      %v10396 = vmul.f32 %v10351, %v10388
      %v10397 = vmul.f32 %v10353, %v10389
      %v10398 = vmul.f32 %v10355, %v10390
      %v10399 = vmul.f32 %v10357, %v10391
      %v10400 = vmul.f32 %v10359, %v10392
      %v10401 = vmul.f32 %v10361, %v10393
      %v10402 = vpack.c.bf16 %v10394, %v10394
      %v10403 = vpack.c.bf16 %v10395, %v10395
      %v10404 = vpack.c.bf16 %v10396, %v10396
      %v10405 = vpack.c.bf16 %v10397, %v10397
      %v10406 = vpack.c.bf16 %v10398, %v10398
      %v10407 = vpack.c.bf16 %v10399, %v10399
      %v10408 = vpack.c.bf16 %v10400, %v10400
      %v10409 = vpack.c.bf16 %v10401, %v10401
      %v10411 = vsel %vm1069, %v10402, 0
      %v10414 = vsel %vm1537, %v9938, 0
      %10416 = vmatprep.subr.bf16.mxu0 0
      %10417 = vmatpush1.bf16.msra.mxu0 0
      %10418 = vmatprep.subr.bf16.mxu0 0
      %10419 = vmatpush1.bf16.msra.mxu0 0
      %10420 = vmatprep.subr.bf16.mxu0 0
      %10421 = vmatpush1.bf16.msra.mxu0 0
      %10422 = vmatprep.subr.bf16.mxu0 0
      %10423 = vmatpush1.bf16.msra.mxu0 0
      %10424 = vmatprep.subr.bf16.mxu0 0
      %10425 = vmatpush1.bf16.msra.mxu0 0
      %10426 = vmatprep.subr.bf16.mxu0 0
      %10427 = vmatpush1.bf16.msra.mxu0 0
      %10428 = vmatprep.subr.bf16.mxu0 0
      %10429 = vmatpush1.bf16.msra.mxu0 0
      %10430 = vmatprep.subr.bf16.mxu0 0
      %10431 = vmatpush1.bf16.msra.mxu0 %v10414
      %10432 = vmatprep.subr.bf16.mxu0 0
      %10433 = vmatpush2.bf16.msra.mxu0 0
      %10434 = vmatprep.subr.bf16.mxu0 0
      %10435 = vmatpush2.bf16.msra.mxu0 0
      %10436 = vmatprep.subr.bf16.mxu0 0
      %10437 = vmatpush2.bf16.msra.mxu0 0
      %10438 = vmatprep.subr.bf16.mxu0 0
      %10439 = vmatpush2.bf16.msra.mxu0 0
      %10440 = vmatprep.subr.bf16.mxu0 0
      %10441 = vmatpush2.bf16.msra.mxu0 0
      %10442 = vmatprep.subr.bf16.mxu0 0
      %10443 = vmatpush2.bf16.msra.mxu0 0
      %10444 = vmatprep.subr.bf16.mxu0 0
      %10445 = vmatpush2.bf16.msra.mxu0 0
      %10446 = vmatprep.subr.bf16.mxu0 0
      %10447 = vmatpush2.bf16.msra.mxu0 0
      %10448 = vmatprep.mubr.bf16.mxu0 0
      %10449 = vmatmul.mubr.bf16.gmra.mxu0 %v10411
      %v10450 = vpop.f32.mrf.mxu0
      %v10451 = vadd.f32 0.0, %v10450
      %v10452 = vpop.f32.mrf.mxu0
      %v10453 = vpop.f32.mrf.mxu0
      %v10454 = vpop.f32.mrf.mxu0
      %10455 = vdwg.mxu0
      %v10457 = vsel %vm1069, %v10403, 0
      %v10460 = vsel %vm1537, %v9939, 0
      %10462 = vmatprep.subr.bf16.mxu0 0
      %10463 = vmatpush1.bf16.msra.mxu0 0
      %10464 = vmatprep.subr.bf16.mxu0 0
      %10465 = vmatpush1.bf16.msra.mxu0 0
      %10466 = vmatprep.subr.bf16.mxu0 0
      %10467 = vmatpush1.bf16.msra.mxu0 0
      %10468 = vmatprep.subr.bf16.mxu0 0
      %10469 = vmatpush1.bf16.msra.mxu0 0
      %10470 = vmatprep.subr.bf16.mxu0 0
      %10471 = vmatpush1.bf16.msra.mxu0 0
      %10472 = vmatprep.subr.bf16.mxu0 0
      %10473 = vmatpush1.bf16.msra.mxu0 0
      %10474 = vmatprep.subr.bf16.mxu0 0
      %10475 = vmatpush1.bf16.msra.mxu0 0
      %10476 = vmatprep.subr.bf16.mxu0 0
      %10477 = vmatpush1.bf16.msra.mxu0 %v10460
      %10478 = vmatprep.subr.bf16.mxu0 0
      %10479 = vmatpush2.bf16.msra.mxu0 0
      %10480 = vmatprep.subr.bf16.mxu0 0
      %10481 = vmatpush2.bf16.msra.mxu0 0
      %10482 = vmatprep.subr.bf16.mxu0 0
      %10483 = vmatpush2.bf16.msra.mxu0 0
      %10484 = vmatprep.subr.bf16.mxu0 0
      %10485 = vmatpush2.bf16.msra.mxu0 0
      %10486 = vmatprep.subr.bf16.mxu0 0
      %10487 = vmatpush2.bf16.msra.mxu0 0
      %10488 = vmatprep.subr.bf16.mxu0 0
      %10489 = vmatpush2.bf16.msra.mxu0 0
      %10490 = vmatprep.subr.bf16.mxu0 0
      %10491 = vmatpush2.bf16.msra.mxu0 0
      %10492 = vmatprep.subr.bf16.mxu0 0
      %10493 = vmatpush2.bf16.msra.mxu0 0
      %10494 = vmatprep.mubr.bf16.mxu0 0
      %10495 = vmatmul.mubr.bf16.gmra.mxu0 %v10457
      %v10496 = vpop.f32.mrf.mxu0
      %v10497 = vadd.f32 0.0, %v10496
      %v10498 = vpop.f32.mrf.mxu0
      %v10499 = vpop.f32.mrf.mxu0
      %v10500 = vpop.f32.mrf.mxu0
      %10501 = vdwg.mxu0
      %v10503 = vsel %vm1069, %v10404, 0
      %v10506 = vsel %vm1537, %v9940, 0
      %10508 = vmatprep.subr.bf16.mxu0 0
      %10509 = vmatpush1.bf16.msra.mxu0 0
      %10510 = vmatprep.subr.bf16.mxu0 0
      %10511 = vmatpush1.bf16.msra.mxu0 0
      %10512 = vmatprep.subr.bf16.mxu0 0
      %10513 = vmatpush1.bf16.msra.mxu0 0
      %10514 = vmatprep.subr.bf16.mxu0 0
      %10515 = vmatpush1.bf16.msra.mxu0 0
      %10516 = vmatprep.subr.bf16.mxu0 0
      %10517 = vmatpush1.bf16.msra.mxu0 0
      %10518 = vmatprep.subr.bf16.mxu0 0
      %10519 = vmatpush1.bf16.msra.mxu0 0
      %10520 = vmatprep.subr.bf16.mxu0 0
      %10521 = vmatpush1.bf16.msra.mxu0 0
      %10522 = vmatprep.subr.bf16.mxu0 0
      %10523 = vmatpush1.bf16.msra.mxu0 %v10506
      %10524 = vmatprep.subr.bf16.mxu0 0
      %10525 = vmatpush2.bf16.msra.mxu0 0
      %10526 = vmatprep.subr.bf16.mxu0 0
      %10527 = vmatpush2.bf16.msra.mxu0 0
      %10528 = vmatprep.subr.bf16.mxu0 0
      %10529 = vmatpush2.bf16.msra.mxu0 0
      %10530 = vmatprep.subr.bf16.mxu0 0
      %10531 = vmatpush2.bf16.msra.mxu0 0
      %10532 = vmatprep.subr.bf16.mxu0 0
      %10533 = vmatpush2.bf16.msra.mxu0 0
      %10534 = vmatprep.subr.bf16.mxu0 0
      %10535 = vmatpush2.bf16.msra.mxu0 0
      %10536 = vmatprep.subr.bf16.mxu0 0
      %10537 = vmatpush2.bf16.msra.mxu0 0
      %10538 = vmatprep.subr.bf16.mxu0 0
      %10539 = vmatpush2.bf16.msra.mxu0 0
      %10540 = vmatprep.mubr.bf16.mxu0 0
      %10541 = vmatmul.mubr.bf16.gmra.mxu0 %v10503
      %v10542 = vpop.f32.mrf.mxu0
      %v10543 = vadd.f32 0.0, %v10542
      %v10544 = vpop.f32.mrf.mxu0
      %v10545 = vpop.f32.mrf.mxu0
      %v10546 = vpop.f32.mrf.mxu0
      %10547 = vdwg.mxu0
      %v10549 = vsel %vm1069, %v10405, 0
      %v10552 = vsel %vm1537, %v9941, 0
      %10554 = vmatprep.subr.bf16.mxu0 0
      %10555 = vmatpush1.bf16.msra.mxu0 0
      %10556 = vmatprep.subr.bf16.mxu0 0
      %10557 = vmatpush1.bf16.msra.mxu0 0
      %10558 = vmatprep.subr.bf16.mxu0 0
      %10559 = vmatpush1.bf16.msra.mxu0 0
      %10560 = vmatprep.subr.bf16.mxu0 0
      %10561 = vmatpush1.bf16.msra.mxu0 0
      %10562 = vmatprep.subr.bf16.mxu0 0
      %10563 = vmatpush1.bf16.msra.mxu0 0
      %10564 = vmatprep.subr.bf16.mxu0 0
      %10565 = vmatpush1.bf16.msra.mxu0 0
      %10566 = vmatprep.subr.bf16.mxu0 0
      %10567 = vmatpush1.bf16.msra.mxu0 0
      %10568 = vmatprep.subr.bf16.mxu0 0
      %10569 = vmatpush1.bf16.msra.mxu0 %v10552
      %10570 = vmatprep.subr.bf16.mxu0 0
      %10571 = vmatpush2.bf16.msra.mxu0 0
      %10572 = vmatprep.subr.bf16.mxu0 0
      %10573 = vmatpush2.bf16.msra.mxu0 0
      %10574 = vmatprep.subr.bf16.mxu0 0
      %10575 = vmatpush2.bf16.msra.mxu0 0
      %10576 = vmatprep.subr.bf16.mxu0 0
      %10577 = vmatpush2.bf16.msra.mxu0 0
      %10578 = vmatprep.subr.bf16.mxu0 0
      %10579 = vmatpush2.bf16.msra.mxu0 0
      %10580 = vmatprep.subr.bf16.mxu0 0
      %10581 = vmatpush2.bf16.msra.mxu0 0
      %10582 = vmatprep.subr.bf16.mxu0 0
      %10583 = vmatpush2.bf16.msra.mxu0 0
      %10584 = vmatprep.subr.bf16.mxu0 0
      %10585 = vmatpush2.bf16.msra.mxu0 0
      %10586 = vmatprep.mubr.bf16.mxu0 0
      %10587 = vmatmul.mubr.bf16.gmra.mxu0 %v10549
      %v10588 = vpop.f32.mrf.mxu0
      %v10589 = vadd.f32 0.0, %v10588
      %v10590 = vpop.f32.mrf.mxu0
      %v10591 = vpop.f32.mrf.mxu0
      %v10592 = vpop.f32.mrf.mxu0
      %10593 = vdwg.mxu0
      %v10595 = vsel %vm1069, %v10406, 0
      %v10598 = vsel %vm1537, %v9942, 0
      %10600 = vmatprep.subr.bf16.mxu0 0
      %10601 = vmatpush1.bf16.msra.mxu0 0
      %10602 = vmatprep.subr.bf16.mxu0 0
      %10603 = vmatpush1.bf16.msra.mxu0 0
      %10604 = vmatprep.subr.bf16.mxu0 0
      %10605 = vmatpush1.bf16.msra.mxu0 0
      %10606 = vmatprep.subr.bf16.mxu0 0
      %10607 = vmatpush1.bf16.msra.mxu0 0
      %10608 = vmatprep.subr.bf16.mxu0 0
      %10609 = vmatpush1.bf16.msra.mxu0 0
      %10610 = vmatprep.subr.bf16.mxu0 0
      %10611 = vmatpush1.bf16.msra.mxu0 0
      %10612 = vmatprep.subr.bf16.mxu0 0
      %10613 = vmatpush1.bf16.msra.mxu0 0
      %10614 = vmatprep.subr.bf16.mxu0 0
      %10615 = vmatpush1.bf16.msra.mxu0 %v10598
      %10616 = vmatprep.subr.bf16.mxu0 0
      %10617 = vmatpush2.bf16.msra.mxu0 0
      %10618 = vmatprep.subr.bf16.mxu0 0
      %10619 = vmatpush2.bf16.msra.mxu0 0
      %10620 = vmatprep.subr.bf16.mxu0 0
      %10621 = vmatpush2.bf16.msra.mxu0 0
      %10622 = vmatprep.subr.bf16.mxu0 0
      %10623 = vmatpush2.bf16.msra.mxu0 0
      %10624 = vmatprep.subr.bf16.mxu0 0
      %10625 = vmatpush2.bf16.msra.mxu0 0
      %10626 = vmatprep.subr.bf16.mxu0 0
      %10627 = vmatpush2.bf16.msra.mxu0 0
      %10628 = vmatprep.subr.bf16.mxu0 0
      %10629 = vmatpush2.bf16.msra.mxu0 0
      %10630 = vmatprep.subr.bf16.mxu0 0
      %10631 = vmatpush2.bf16.msra.mxu0 0
      %10632 = vmatprep.mubr.bf16.mxu0 0
      %10633 = vmatmul.mubr.bf16.gmra.mxu0 %v10595
      %v10634 = vpop.f32.mrf.mxu0
      %v10635 = vadd.f32 0.0, %v10634
      %v10636 = vpop.f32.mrf.mxu0
      %v10637 = vpop.f32.mrf.mxu0
      %v10638 = vpop.f32.mrf.mxu0
      %10639 = vdwg.mxu0
      %v10641 = vsel %vm1069, %v10407, 0
      %v10644 = vsel %vm1537, %v9943, 0
      %10646 = vmatprep.subr.bf16.mxu0 0
      %10647 = vmatpush1.bf16.msra.mxu0 0
      %10648 = vmatprep.subr.bf16.mxu0 0
      %10649 = vmatpush1.bf16.msra.mxu0 0
      %10650 = vmatprep.subr.bf16.mxu0 0
      %10651 = vmatpush1.bf16.msra.mxu0 0
      %10652 = vmatprep.subr.bf16.mxu0 0
      %10653 = vmatpush1.bf16.msra.mxu0 0
      %10654 = vmatprep.subr.bf16.mxu0 0
      %10655 = vmatpush1.bf16.msra.mxu0 0
      %10656 = vmatprep.subr.bf16.mxu0 0
      %10657 = vmatpush1.bf16.msra.mxu0 0
      %10658 = vmatprep.subr.bf16.mxu0 0
      %10659 = vmatpush1.bf16.msra.mxu0 0
      %10660 = vmatprep.subr.bf16.mxu0 0
      %10661 = vmatpush1.bf16.msra.mxu0 %v10644
      %10662 = vmatprep.subr.bf16.mxu0 0
      %10663 = vmatpush2.bf16.msra.mxu0 0
      %10664 = vmatprep.subr.bf16.mxu0 0
      %10665 = vmatpush2.bf16.msra.mxu0 0
      %10666 = vmatprep.subr.bf16.mxu0 0
      %10667 = vmatpush2.bf16.msra.mxu0 0
      %10668 = vmatprep.subr.bf16.mxu0 0
      %10669 = vmatpush2.bf16.msra.mxu0 0
      %10670 = vmatprep.subr.bf16.mxu0 0
      %10671 = vmatpush2.bf16.msra.mxu0 0
      %10672 = vmatprep.subr.bf16.mxu0 0
      %10673 = vmatpush2.bf16.msra.mxu0 0
      %10674 = vmatprep.subr.bf16.mxu0 0
      %10675 = vmatpush2.bf16.msra.mxu0 0
      %10676 = vmatprep.subr.bf16.mxu0 0
      %10677 = vmatpush2.bf16.msra.mxu0 0
      %10678 = vmatprep.mubr.bf16.mxu0 0
      %10679 = vmatmul.mubr.bf16.gmra.mxu0 %v10641
      %v10680 = vpop.f32.mrf.mxu0
      %v10681 = vadd.f32 0.0, %v10680
      %v10682 = vpop.f32.mrf.mxu0
      %v10683 = vpop.f32.mrf.mxu0
      %v10684 = vpop.f32.mrf.mxu0
      %10685 = vdwg.mxu0
      %v10687 = vsel %vm1069, %v10408, 0
      %v10690 = vsel %vm1537, %v9944, 0
      %10692 = vmatprep.subr.bf16.mxu0 0
      %10693 = vmatpush1.bf16.msra.mxu0 0
      %10694 = vmatprep.subr.bf16.mxu0 0
      %10695 = vmatpush1.bf16.msra.mxu0 0
      %10696 = vmatprep.subr.bf16.mxu0 0
      %10697 = vmatpush1.bf16.msra.mxu0 0
      %10698 = vmatprep.subr.bf16.mxu0 0
      %10699 = vmatpush1.bf16.msra.mxu0 0
      %10700 = vmatprep.subr.bf16.mxu0 0
      %10701 = vmatpush1.bf16.msra.mxu0 0
      %10702 = vmatprep.subr.bf16.mxu0 0
      %10703 = vmatpush1.bf16.msra.mxu0 0
      %10704 = vmatprep.subr.bf16.mxu0 0
      %10705 = vmatpush1.bf16.msra.mxu0 0
      %10706 = vmatprep.subr.bf16.mxu0 0
      %10707 = vmatpush1.bf16.msra.mxu0 %v10690
      %10708 = vmatprep.subr.bf16.mxu0 0
      %10709 = vmatpush2.bf16.msra.mxu0 0
      %10710 = vmatprep.subr.bf16.mxu0 0
      %10711 = vmatpush2.bf16.msra.mxu0 0
      %10712 = vmatprep.subr.bf16.mxu0 0
      %10713 = vmatpush2.bf16.msra.mxu0 0
      %10714 = vmatprep.subr.bf16.mxu0 0
      %10715 = vmatpush2.bf16.msra.mxu0 0
      %10716 = vmatprep.subr.bf16.mxu0 0
      %10717 = vmatpush2.bf16.msra.mxu0 0
      %10718 = vmatprep.subr.bf16.mxu0 0
      %10719 = vmatpush2.bf16.msra.mxu0 0
      %10720 = vmatprep.subr.bf16.mxu0 0
      %10721 = vmatpush2.bf16.msra.mxu0 0
      %10722 = vmatprep.subr.bf16.mxu0 0
      %10723 = vmatpush2.bf16.msra.mxu0 0
      %10724 = vmatprep.mubr.bf16.mxu0 0
      %10725 = vmatmul.mubr.bf16.gmra.mxu0 %v10687
      %v10726 = vpop.f32.mrf.mxu0
      %v10727 = vadd.f32 0.0, %v10726
      %v10728 = vpop.f32.mrf.mxu0
      %v10729 = vpop.f32.mrf.mxu0
      %v10730 = vpop.f32.mrf.mxu0
      %10731 = vdwg.mxu0
      %v10733 = vsel %vm1069, %v10409, 0
      %v10736 = vsel %vm1537, %v9945, 0
      %10738 = vmatprep.subr.bf16.mxu0 0
      %10739 = vmatpush1.bf16.msra.mxu0 0
      %10740 = vmatprep.subr.bf16.mxu0 0
      %10741 = vmatpush1.bf16.msra.mxu0 0
      %10742 = vmatprep.subr.bf16.mxu0 0
      %10743 = vmatpush1.bf16.msra.mxu0 0
      %10744 = vmatprep.subr.bf16.mxu0 0
      %10745 = vmatpush1.bf16.msra.mxu0 0
      %10746 = vmatprep.subr.bf16.mxu0 0
      %10747 = vmatpush1.bf16.msra.mxu0 0
      %10748 = vmatprep.subr.bf16.mxu0 0
      %10749 = vmatpush1.bf16.msra.mxu0 0
      %10750 = vmatprep.subr.bf16.mxu0 0
      %10751 = vmatpush1.bf16.msra.mxu0 0
      %10752 = vmatprep.subr.bf16.mxu0 0
      %10753 = vmatpush1.bf16.msra.mxu0 %v10736
      %10754 = vmatprep.subr.bf16.mxu0 0
      %10755 = vmatpush2.bf16.msra.mxu0 0
      %10756 = vmatprep.subr.bf16.mxu0 0
      %10757 = vmatpush2.bf16.msra.mxu0 0
      %10758 = vmatprep.subr.bf16.mxu0 0
      %10759 = vmatpush2.bf16.msra.mxu0 0
      %10760 = vmatprep.subr.bf16.mxu0 0
      %10761 = vmatpush2.bf16.msra.mxu0 0
      %10762 = vmatprep.subr.bf16.mxu0 0
      %10763 = vmatpush2.bf16.msra.mxu0 0
      %10764 = vmatprep.subr.bf16.mxu0 0
      %10765 = vmatpush2.bf16.msra.mxu0 0
      %10766 = vmatprep.subr.bf16.mxu0 0
      %10767 = vmatpush2.bf16.msra.mxu0 0
      %10768 = vmatprep.subr.bf16.mxu0 0
      %10769 = vmatpush2.bf16.msra.mxu0 0
      %10770 = vmatprep.mubr.bf16.mxu0 0
      %10771 = vmatmul.mubr.bf16.gmra.mxu0 %v10733
      %v10772 = vpop.f32.mrf.mxu0
      %v10773 = vadd.f32 0.0, %v10772
      %v10774 = vpop.f32.mrf.mxu0
      %v10775 = vpop.f32.mrf.mxu0
      %v10776 = vpop.f32.mrf.mxu0
      %10777 = vdwg.mxu0
      %v10778 = vpack.c.bf16 %v10497, %v10451
      %v10779 = vpack.c.bf16 %v10589, %v10543
      %v10780 = vpack.c.bf16 %v10681, %v10635
      %v10781 = vpack.c.bf16 %v10773, %v10727
      %s10782 = scalar_lea.vmem %s8, 28
      %v10783 = vld [vmem:[%s10782] sm:$0xf]
      %v10785 = vsel %vm1069, %v10778, 0
      %v10788 = vsel %vm1069, %v10779, 0
      %v10791 = vsel %vm1069, %v10780, 0
      %v10794 = vsel %vm1069, %v10781, 0
      %v10797 = vsel %vm1537, %v10783, 0
      %10799 = vmatprep.subr.bf16.mxu0 0
      %10800 = vmatpush1.bf16.msra.mxu0 0
      %10801 = vmatprep.subr.bf16.mxu0 0
      %10802 = vmatpush1.bf16.msra.mxu0 0
      %10803 = vmatprep.subr.bf16.mxu0 0
      %10804 = vmatpush1.bf16.msra.mxu0 0
      %10805 = vmatprep.subr.bf16.mxu0 0
      %10806 = vmatpush1.bf16.msra.mxu0 0
      %10807 = vmatprep.subr.bf16.mxu0 0
      %10808 = vmatpush1.bf16.msra.mxu0 0
      %10809 = vmatprep.subr.bf16.mxu0 0
      %10810 = vmatpush1.bf16.msra.mxu0 0
      %10811 = vmatprep.subr.bf16.mxu0 0
      %10812 = vmatpush1.bf16.msra.mxu0 0
      %10813 = vmatprep.subr.bf16.mxu0 0
      %10814 = vmatpush1.bf16.msra.mxu0 %v10797
      %10815 = vmatprep.subr.bf16.mxu0 0
      %10816 = vmatpush2.bf16.msra.mxu0 0
      %10817 = vmatprep.subr.bf16.mxu0 0
      %10818 = vmatpush2.bf16.msra.mxu0 0
      %10819 = vmatprep.subr.bf16.mxu0 0
      %10820 = vmatpush2.bf16.msra.mxu0 0
      %10821 = vmatprep.subr.bf16.mxu0 0
      %10822 = vmatpush2.bf16.msra.mxu0 0
      %10823 = vmatprep.subr.bf16.mxu0 0
      %10824 = vmatpush2.bf16.msra.mxu0 0
      %10825 = vmatprep.subr.bf16.mxu0 0
      %10826 = vmatpush2.bf16.msra.mxu0 0
      %10827 = vmatprep.subr.bf16.mxu0 0
      %10828 = vmatpush2.bf16.msra.mxu0 0
      %10829 = vmatprep.subr.bf16.mxu0 0
      %10830 = vmatpush2.bf16.msra.mxu0 0
      %10831 = vmatprep.mubr.bf16.mxu0 0
      %10832 = vmatmul.mubr.bf16.gmra.mxu0 %v10785
      %v10833 = vpop.f32.mrf.mxu0
      %v10834 = vadd.f32 0.0, %v10833
      %v10835 = vpop.f32.mrf.mxu0
      %v10836 = vpop.f32.mrf.mxu0
      %v10837 = vadd.f32 0.0, %v10836
      %v10838 = vpop.f32.mrf.mxu0
      %10839 = vmatprep.mubr.bf16.mxu0 0
      %10840 = vmatmul.mubr.bf16.gmra.mxu0 %v10788
      %v10841 = vpop.f32.mrf.mxu0
      %v10842 = vadd.f32 0.0, %v10841
      %v10843 = vpop.f32.mrf.mxu0
      %v10844 = vpop.f32.mrf.mxu0
      %v10845 = vadd.f32 0.0, %v10844
      %v10846 = vpop.f32.mrf.mxu0
      %10847 = vmatprep.mubr.bf16.mxu0 0
      %10848 = vmatmul.mubr.bf16.gmra.mxu0 %v10791
      %v10849 = vpop.f32.mrf.mxu0
      %v10850 = vadd.f32 0.0, %v10849
      %v10851 = vpop.f32.mrf.mxu0
      %v10852 = vpop.f32.mrf.mxu0
      %v10853 = vadd.f32 0.0, %v10852
      %v10854 = vpop.f32.mrf.mxu0
      %10855 = vmatprep.mubr.bf16.mxu0 0
      %10856 = vmatmul.mubr.bf16.gmra.mxu0 %v10794
      %v10857 = vpop.f32.mrf.mxu0
      %v10858 = vadd.f32 0.0, %v10857
      %v10859 = vpop.f32.mrf.mxu0
      %v10860 = vpop.f32.mrf.mxu0
      %v10861 = vadd.f32 0.0, %v10860
      %v10862 = vpop.f32.mrf.mxu0
      %10863 = vdwg.mxu0
      %v10864 = vadd.f32 %v9596, %v10834
      %v10865 = vadd.f32 %v9597, %v10837
      %v10866 = vadd.f32 %v9598, %v10842
      %v10867 = vadd.f32 %v9599, %v10845
      %v10868 = vadd.f32 %v9600, %v10850
      %v10869 = vadd.f32 %v9601, %v10853
      %v10870 = vadd.f32 %v9602, %v10858
      %v10871 = vadd.f32 %v9603, %v10861
      %10872 = vst.msk [vmem:[%s413] sm:$0xff] %vm435, %v10864
      %10873 = vst.msk [vmem:[%s413 + $0x8] sm:$0xff] %vm435, %v10865
      %10874 = vst.msk [vmem:[%s413 + $0x10] sm:$0xff] %vm435, %v10866
      %10875 = vst.msk [vmem:[%s413 + $0x18] sm:$0xff] %vm435, %v10867
      %10876 = vst.msk [vmem:[%s413 + $0x20] sm:$0xff] %vm435, %v10868
      %10877 = vst.msk [vmem:[%s413 + $0x28] sm:$0xff] %vm435, %v10869
      %10878 = vst.msk [vmem:[%s413 + $0x30] sm:$0xff] %vm435, %v10870
      %10879 = vst.msk [vmem:[%s413 + $0x38] sm:$0xff] %vm435, %v10871
      %p10880 = scmp.lt.s32.totalorder %s21, 1
      %s10881 = scalar_select %p10880, %s21, 1
      %s10882 = smul.addr %s10881, 8
      %s10883 = smul.addr %s10882, 8
      %s10884 = scalar_lea.vmem %s10, %s10883
      // Predicated region
      $region61: #{axial_attention_pallas.1} parent=59 // pred_check
        %p10885 = pneg %p269
      $region62: #{axial_attention_pallas.1} parent=59 // pred_check_branch
        %10887 = sbr.rel (%p10885) target = $region64
      $region63: #{axial_attention_pallas.1} parent=59 // pred_region
        _
      $region64: #{axial_attention_pallas.1} parent=59 // pred_fallthru
        _
    $region60: #{axial_attention_pallas.1} parent=5 // pred_fallthru
      _
    %p10888 = scmp.le.s32.totalorder 2, %s16
    // Predicated region
    $region65: #{axial_attention_pallas.1} parent=5 // pred_check
      %p10889 = pneg %p10888
    $region66: #{axial_attention_pallas.1} parent=5 // pred_check_branch
      %10891 = sbr.rel (%p10889) target = $region68
    $region67: #{axial_attention_pallas.1} parent=5 // pred_region
      %s10892 = ssub.s32 %s16, 2
      // Predicated region
      $region69: #{axial_attention_pallas.1} parent=67 // pred_check
        %p10893 = pneg %p275
      $region70: #{axial_attention_pallas.1} parent=67 // pred_check_branch
        %10895 = sbr.rel (%p10893) target = $region72
      $region71: #{axial_attention_pallas.1} parent=67 // pred_region
        %p10896 = scmp.lt.s32.totalorder %s22, 1
        %s10897 = scalar_select %p10896, %s22, 1
        %s10898 = smul.addr %s10897, 8
        %s10899 = smul.addr %s10898, 8
        %s10900 = scalar_lea.vmem %s10, %s10899
      $region72: #{axial_attention_pallas.1} parent=67 // pred_fallthru
        _
    $region68: #{axial_attention_pallas.1} parent=5 // pred_fallthru
      _
  $region6: #{axial_attention_pallas.1} parent=0 // loop_footer
    %s20 = sadd.s32 1, %s16
  $region7: #{axial_attention_pallas.1} parent=0 // loop_footer_branch
    %15 = sbr.rel target = $region3
  $region8: #{axial_attention_pallas.1} parent=0 // loop_exit
    _

</llo_original>
